<compile_context>
chip_gen: v5e
topology: v5e:2x2
jax: 0.10.0
libtpu: 0.0.40
codegen_flags: <defaults>
</compile_context>

<pallas_src>
import jax
import jax.numpy as jnp
from jax.experimental import pallas as pl
from jax.experimental.pallas import tpu as pltpu

# ---------------- configuration ----------------
D = 8
W = 256
FLAME_IN = 16
FLAME_HID = 12
BASE_IN = 4                      # [x, y, z, t]
IN_DIM = BASE_IN + FLAME_IN      # fused kernel input width (flame_net folded)
N_MID = D - 1                    # 7 hidden (ReLU, Linear) pairs in feature_out
HEAD_DIMS = (3, 3, 4, 1)         # pos, scales, rotations, opacity
HEAD_OFFS = (0, 3, 6, 10)
OUT_TOT = sum(HEAD_DIMS)         # 11
OUT_PAD = 128                    # lane-dense packed output width
HCAT = 4 * W                     # merged head hidden width
TN_MAX = 2048                    # points per grid step (preferred)
TN_MIN = 256                     # smallest tile we will shrink to


# ---------------- Pallas kernel ----------------
def deform_kernel(x_ref,
                  w0_ref, b0_ref,
                  wmid_ref, bmid_ref,
                  wh1_ref, bh1_ref,
                  wh2_ref, bpk_ref,
                  out_ref):
    # Layer 0: fused [base | flame] input, flame_net algebraically folded in:
    #   h = [base, flame] @ [W0a ; Wf @ W0b] + (bf @ W0b + b0)
    # bf16 operands, f32 accumulation.
    h = (jnp.dot(x_ref[...], w0_ref[...],
                 preferred_element_type=jnp.float32) + b0_ref[...])

    # feature_out layers 1..D-1: (ReLU, Linear(W, W)) x (D-1); no ReLU at end.
    # ReLU / bias stay f32; cast to bf16 only right before the MXU dot.
    for i in range(N_MID):
        h = (jnp.dot(jnp.maximum(h, 0.0).astype(jnp.bfloat16), wmid_ref[i],
                     preferred_element_type=jnp.float32) + bmid_ref[i])

    # Four heads merged: one [W, 4W] matmul, ReLU, then one block-structured
    # [4W, OUT_PAD] matmul whose per-head rows feed disjoint output columns
    # (lane-dense packed slab).
    hr = jnp.maximum(h, 0.0).astype(jnp.bfloat16)
    z = jnp.maximum(
        jnp.dot(hr, wh1_ref[...], preferred_element_type=jnp.float32)
        + bh1_ref[...], 0.0).astype(jnp.bfloat16)
    out_ref[...] = (jnp.dot(z, wh2_ref[...],
                            preferred_element_type=jnp.float32)
                    + bpk_ref[...])


# ---------------- pallas_call construction ----------------
def _choose_tn(n):
    # Prefer big tiles to amortize per-step overhead / per-layer MXU weight
    # pushes (9 serial matmuls per step), but shrink for tiny N so we keep
    # >= 2 grid steps (v7x megacore).
    tn = TN_MAX
    while tn > TN_MIN and pl.cdiv(n, tn) < 2:
        tn //= 2
    # v7x: the two TensorCores shard the ("parallel",) grid axis; a small,
    # odd step count leaves one core idle for up to a full step.  Halve the
    # tile until the step count is even (or large enough that imbalance is
    # noise).  No effect on v5e/v6e (single TC).
    while tn > TN_MIN and pl.cdiv(n, tn) < 8 and pl.cdiv(n, tn) % 2 == 1:
        tn //= 2
    return tn


def _build_pallas_call(n_pad, tn):
    def tile_spec(width):
        return pl.BlockSpec((tn, width), lambda i: (i, 0))

    def const_spec(shape):
        idx = (lambda i: (0, 0, 0)) if len(shape) == 3 else (lambda i: (0, 0))
        return pl.BlockSpec(shape, idx)   # grid-invariant block

    in_specs = [
        tile_spec(IN_DIM),                  # x      [tn, 20]  bf16
        const_spec((IN_DIM, W)),            # w0cat  bf16 (flame_net folded)
        const_spec((1, W)),                 # b0'    f32
        const_spec((N_MID, W, W)),          # wmid   bf16
        const_spec((N_MID, W)),             # bmid   f32
        const_spec((W, HCAT)),              # wh1cat bf16
        const_spec((1, HCAT)),              # bh1cat f32
        const_spec((HCAT, OUT_PAD)),        # wh2blk bf16
        const_spec((1, OUT_PAD)),           # bpk    f32
    ]
    out_specs = pl.BlockSpec((tn, OUT_PAD), lambda i: (i, 0))

    return pl.pallas_call(
        deform_kernel,
        out_shape=jax.ShapeDtypeStruct((n_pad, OUT_PAD), jnp.float32),
        grid_spec=pltpu.PrefetchScalarGridSpec(
            num_scalar_prefetch=0,
            grid=(n_pad // tn,),
            in_specs=in_specs,
            out_specs=out_specs,
        ),
        compiler_params=pltpu.CompilerParams(
            dimension_semantics=("parallel",),
            vmem_limit_bytes=40 << 20,
        ),
    )


def _run_pallas(xin, params, n):
    tn = _choose_tn(n)
    n_pad = pl.cdiv(n, tn) * tn
    if n_pad != n:
        xin = jnp.pad(xin, ((0, n_pad - n), (0, 0)))
    out = _build_pallas_call(n_pad, tn)(xin, *params)
    return out[:n]


# ---------------- parameter construction ----------------
def _linear(key, fan_in, fan_out):
    kw, kb = jax.random.split(key)
    s = 1.0 / jnp.sqrt(jnp.float32(fan_in))
    w = jax.random.uniform(kw, (fan_in, fan_out), jnp.float32, -s, s)
    b = jax.random.uniform(kb, (fan_out,), jnp.float32, -s, s)
    return w, b


def make_params(key):
    keys = jax.random.split(key, 2 + N_MID + 8)
    ki = iter(keys)

    wf, bf = _linear(next(ki), FLAME_IN, FLAME_HID)
    w0, b0 = _linear(next(ki), BASE_IN + FLAME_HID, W)
    w0a, w0b = w0[:BASE_IN], w0[BASE_IN:]
    # Fold flame_net (Linear) into layer 0 — exact in f32 — and fuse with the
    # base columns into a single [IN_DIM, W] weight.
    w0cat = jnp.concatenate([w0a, wf @ w0b], axis=0)   # [20, W]
    b0p = bf @ w0b + b0                                # [W]

    wmid_l, bmid_l = [], []
    for _ in range(N_MID):
        w, b = _linear(next(ki), W, W)
        wmid_l.append(w)
        bmid_l.append(b)
    wmid = jnp.stack(wmid_l)
    bmid = jnp.stack(bmid_l)

    wh1_l, bh1_l, wh2_l, bh2_l = [], [], [], []
    wh2blk = jnp.zeros((HCAT, OUT_PAD), jnp.float32)
    bpk = jnp.zeros((1, OUT_PAD), jnp.float32)
    for hd, (dim, off) in enumerate(zip(HEAD_DIMS, HEAD_OFFS)):
        w1, b1 = _linear(next(ki), W, W)
        w2, b2 = _linear(next(ki), W, dim)
        wh1_l.append(w1)
        bh1_l.append(b1)
        wh2_l.append(w2)
        bh2_l.append(b2)
        wh2blk = wh2blk.at[hd * W:(hd + 1) * W, off:off + dim].set(w2)
        bpk = bpk.at[0, off:off + dim].set(b2)
    wh1cat = jnp.concatenate(wh1_l, axis=1)            # [W, 4W]
    bh1cat = jnp.concatenate(bh1_l).reshape(1, -1)     # [1, 4W]

    bf16 = jnp.bfloat16
    kernel_params = (w0cat.astype(bf16), b0p.reshape(1, -1),
                     wmid.astype(bf16), bmid,
                     wh1cat.astype(bf16), bh1cat,
                     wh2blk.astype(bf16), bpk)
    ref_params = (wf, bf, w0, b0, wmid, bmid, wh1_l, bh1_l, wh2_l, bh2_l)
    return kernel_params, ref_params


# ---------------- public forward (matches forward_dynamic) ----------------
def deformation_forward(kernel_params, rays_pts_emb, scales_emb, rotations_emb,
                        opacity_emb, time_emb, flame_emb):
    n = rays_pts_emb.shape[0]
    # Fused kernel input: [x, y, z, t | flame(16)]  (flame_net folded into W0).
    xin = jnp.concatenate(
        [rays_pts_emb[:, :3], time_emb[:, :1], flame_emb], axis=-1)
    out = _run_pallas(xin.astype(jnp.bfloat16), kernel_params, n)
    dx = out[:, 0:3]
    ds = out[:, 3:6]
    dr = out[:, 6:10]
    do = out[:, 10:11]
    return (rays_pts_emb[:, :3] + dx,
            scales_emb[:, :3] + ds,
            rotations_emb[:, :4] + dr,
            opacity_emb[:, :1] + do)


# ---------------- references ----------------
def reference_forward_bf16(kernel_params, rays_pts_emb, scales_emb,
                           rotations_emb, opacity_emb, time_emb, flame_emb):
    # Pure-JAX mirror of the kernel math (bf16 matmuls, f32 accumulation).
    (w0cat, b0p, wmid, bmid, wh1cat, bh1cat, wh2blk, bpk) = kernel_params
    xin = jnp.concatenate(
        [rays_pts_emb[:, :3], time_emb[:, :1], flame_emb],
        axis=-1).astype(jnp.bfloat16)
    h = jnp.dot(xin, w0cat, preferred_element_type=jnp.float32) + b0p
    for i in range(N_MID):
        h = (jnp.dot(jnp.maximum(h, 0.0).astype(jnp.bfloat16), wmid[i],
                     preferred_element_type=jnp.float32) + bmid[i])
    hr = jnp.maximum(h, 0.0).astype(jnp.bfloat16)
    z = jnp.maximum(jnp.dot(hr, wh1cat, preferred_element_type=jnp.float32)
                    + bh1cat, 0.0).astype(jnp.bfloat16)
    out = jnp.dot(z, wh2blk, preferred_element_type=jnp.float32) + bpk
    return (rays_pts_emb[:, :3] + out[:, 0:3],
            scales_emb[:, :3] + out[:, 3:6],
            rotations_emb[:, :4] + out[:, 6:10],
            opacity_emb[:, :1] + out[:, 10:11])


def reference_forward_f32(ref_params, rays_pts_emb, scales_emb, rotations_emb,
                          opacity_emb, time_emb, flame_emb):
    # Exact f32 transcription of the PyTorch module's forward_dynamic.
    (wf, bf, w0, b0, wmid, bmid, wh1_l, bh1_l, wh2_l, bh2_l) = ref_params
    flame_out = flame_emb @ wf + bf
    h = jnp.concatenate(
        [rays_pts_emb[:, :3], time_emb[:, :1], flame_out], axis=-1)
    h = h @ w0 + b0
    for i in range(N_MID):
        h = jnp.maximum(h, 0.0) @ wmid[i] + bmid[i]
    hr = jnp.maximum(h, 0.0)
    outs = []
    for hd in range(4):
        z = jnp.maximum(hr @ wh1_l[hd] + bh1_l[hd], 0.0)
        outs.append(z @ wh2_l[hd] + bh2_l[hd])
    dx, ds, dr, do = outs
    return (rays_pts_emb[:, :3] + dx,
            scales_emb[:, :3] + ds,
            rotations_emb[:, :4] + dr,
            opacity_emb[:, :1] + do)


if __name__ == "__main__":
    key = jax.random.PRNGKey(0)
    kp, kx = jax.random.split(key)
    kernel_params, ref_params = make_params(kp)

    N = 300   # deliberately NOT a multiple of the point tile -> padded tail
    ks = jax.random.split(kx, 6)
    rays_pts_emb = jax.random.normal(ks[0], (N, 27), jnp.float32)
    scales_emb = jax.random.normal(ks[1], (N, 3), jnp.float32)
    rotations_emb = jax.random.normal(ks[2], (N, 4), jnp.float32)
    opacity_emb = jax.random.normal(ks[3], (N, 1), jnp.float32)
    time_emb = jax.random.normal(ks[4], (N, 9), jnp.float32)
    flame_emb = jax.random.normal(ks[5], (N, FLAME_IN), jnp.float32)

    got = deformation_forward(kernel_params, rays_pts_emb, scales_emb,
                              rotations_emb, opacity_emb, time_emb, flame_emb)
    jax.block_until_ready(got)

    # Tight check: kernel vs bf16-mirrored JAX reference (same quantization).
    ref_b = reference_forward_bf16(kernel_params, rays_pts_emb, scales_emb,
                                   rotations_emb, opacity_emb, time_emb,
                                   flame_emb)
    for g, w in zip(got, ref_b):
        assert g.shape == w.shape
        assert jnp.allclose(g, w, rtol=2e-3, atol=2e-3), (
            float(jnp.max(jnp.abs(g - w))))

    # Loose check: bf16 kernel vs full-f32 module math (quantization error).
    ref_g = reference_forward_f32(ref_params, rays_pts_emb, scales_emb,
                                  rotations_emb, opacity_emb, time_emb,
                                  flame_emb)
    for g, w in zip(got, ref_g):
        assert g.shape == w.shape
        assert jnp.allclose(g, w, rtol=3e-2, atol=3e-2), (
            float(jnp.max(jnp.abs(g - w))))

    print("KERNEL_OK")
</pallas_src>

<mosaic_0001>
module attributes {stable_mosaic.version = 11 : i64} {
  func.func @deform_kernel(%arg0: i32, %arg1: memref<256x20xbf16, #tpu.memory_space<vmem>>, %arg2: memref<20x256xbf16, #tpu.memory_space<vmem>>, %arg3: memref<1x256xf32, #tpu.memory_space<vmem>>, %arg4: memref<7x256x256xbf16, #tpu.memory_space<vmem>>, %arg5: memref<7x256xf32, #tpu.memory_space<vmem>>, %arg6: memref<256x1024xbf16, #tpu.memory_space<vmem>>, %arg7: memref<1x1024xf32, #tpu.memory_space<vmem>>, %arg8: memref<1024x128xbf16, #tpu.memory_space<vmem>>, %arg9: memref<1x128xf32, #tpu.memory_space<vmem>>, %arg10: memref<256x128xf32, #tpu.memory_space<vmem>>) attributes {dimension_semantics = [#tpu.dimension_semantics<parallel>], iteration_bounds = array<i64: 2>, scalar_prefetch = 0 : i64, scratch_operands = 0 : i64, tpu.core_type = #tpu.core_type<tc>, window_params = [{transform_indices = @transform_0, window_bounds = array<i64: 256, 20>}, {pipeline_mode = #tpu.pipeline_mode<synchronous>, transform_indices = @transform_1, window_bounds = array<i64: 20, 256>}, {pipeline_mode = #tpu.pipeline_mode<synchronous>, transform_indices = @transform_2, window_bounds = array<i64: 1, 256>}, {pipeline_mode = #tpu.pipeline_mode<synchronous>, transform_indices = @transform_3, window_bounds = array<i64: 7, 256, 256>}, {pipeline_mode = #tpu.pipeline_mode<synchronous>, transform_indices = @transform_4, window_bounds = array<i64: 7, 256>}, {pipeline_mode = #tpu.pipeline_mode<synchronous>, transform_indices = @transform_5, window_bounds = array<i64: 256, 1024>}, {pipeline_mode = #tpu.pipeline_mode<synchronous>, transform_indices = @transform_6, window_bounds = array<i64: 1, 1024>}, {pipeline_mode = #tpu.pipeline_mode<synchronous>, transform_indices = @transform_7, window_bounds = array<i64: 1024, 128>}, {pipeline_mode = #tpu.pipeline_mode<synchronous>, transform_indices = @transform_8, window_bounds = array<i64: 1, 128>}, {transform_indices = @transform_9, window_bounds = array<i64: 256, 128>}]} {
    %c0 = arith.constant 0 : index
    %c0_0 = arith.constant 0 : index
    %0 = vector.load %arg1[%c0, %c0_0] : memref<256x20xbf16, #tpu.memory_space<vmem>>, vector<256x20xbf16>
    %c0_1 = arith.constant 0 : index
    %c0_2 = arith.constant 0 : index
    %1 = vector.load %arg2[%c0_1, %c0_2] : memref<20x256xbf16, #tpu.memory_space<vmem>>, vector<20x256xbf16>
    %cst = arith.constant dense<0.000000e+00> : vector<256x256xf32>
    %2 = tpu.matmul %0, %1, %cst {dimension_numbers = #tpu.dot_dimension_numbers<[1], [0], [0], [1], [0, 0, 1, 1], [], []>} : vector<256x20xbf16>, vector<20x256xbf16>, vector<256x256xf32> -> vector<256x256xf32>
    %c0_3 = arith.constant 0 : index
    %c0_4 = arith.constant 0 : index
    %3 = vector.load %arg3[%c0_3, %c0_4] : memref<1x256xf32, #tpu.memory_space<vmem>>, vector<1x256xf32>
    %4 = vector.broadcast %3 : vector<1x256xf32> to vector<256x256xf32>
    %5 = arith.addf %2, %4 : vector<256x256xf32>
    %cst_5 = arith.constant 0.000000e+00 : f32
    %6 = vector.broadcast %cst_5 : f32 to vector<256x256xf32>
    %7 = arith.maximumf %5, %6 : vector<256x256xf32>
    %8 = arith.truncf %7 : vector<256x256xf32> to vector<256x256xbf16>
    %c0_6 = arith.constant 0 : index
    %c0_7 = arith.constant 0 : index
    %c0_8 = arith.constant 0 : index
    %9 = vector.load %arg4[%c0_6, %c0_7, %c0_8] : memref<7x256x256xbf16, #tpu.memory_space<vmem>>, vector<1x256x256xbf16>
    %10 = vector.shape_cast %9 : vector<1x256x256xbf16> to vector<256x256xbf16>
    %cst_9 = arith.constant dense<0.000000e+00> : vector<256x256xf32>
    %11 = tpu.matmul %8, %10, %cst_9 {dimension_numbers = #tpu.dot_dimension_numbers<[1], [0], [0], [1], [0, 0, 1, 1], [], []>} : vector<256x256xbf16>, vector<256x256xbf16>, vector<256x256xf32> -> vector<256x256xf32>
    %c0_10 = arith.constant 0 : index
    %c0_11 = arith.constant 0 : index
    %12 = vector.load %arg5[%c0_10, %c0_11] : memref<7x256xf32, #tpu.memory_space<vmem>>, vector<1x256xf32>
    %13 = vector.shape_cast %12 : vector<1x256xf32> to vector<256xf32>
    %14 = vector.shape_cast %13 : vector<256xf32> to vector<1x256xf32>
    %15 = vector.broadcast %14 : vector<1x256xf32> to vector<256x256xf32>
    %16 = arith.addf %11, %15 : vector<256x256xf32>
    %cst_12 = arith.constant 0.000000e+00 : f32
    %17 = vector.broadcast %cst_12 : f32 to vector<256x256xf32>
    %18 = arith.maximumf %16, %17 : vector<256x256xf32>
    %19 = arith.truncf %18 : vector<256x256xf32> to vector<256x256xbf16>
    %c1 = arith.constant 1 : index
    %c0_13 = arith.constant 0 : index
    %c0_14 = arith.constant 0 : index
    %20 = vector.load %arg4[%c1, %c0_13, %c0_14] : memref<7x256x256xbf16, #tpu.memory_space<vmem>>, vector<1x256x256xbf16>
    %21 = vector.shape_cast %20 : vector<1x256x256xbf16> to vector<256x256xbf16>
    %cst_15 = arith.constant dense<0.000000e+00> : vector<256x256xf32>
    %22 = tpu.matmul %19, %21, %cst_15 {dimension_numbers = #tpu.dot_dimension_numbers<[1], [0], [0], [1], [0, 0, 1, 1], [], []>} : vector<256x256xbf16>, vector<256x256xbf16>, vector<256x256xf32> -> vector<256x256xf32>
    %c1_16 = arith.constant 1 : index
    %c0_17 = arith.constant 0 : index
    %23 = vector.load %arg5[%c1_16, %c0_17] : memref<7x256xf32, #tpu.memory_space<vmem>>, vector<1x256xf32>
    %24 = vector.shape_cast %23 : vector<1x256xf32> to vector<256xf32>
    %25 = vector.shape_cast %24 : vector<256xf32> to vector<1x256xf32>
    %26 = vector.broadcast %25 : vector<1x256xf32> to vector<256x256xf32>
    %27 = arith.addf %22, %26 : vector<256x256xf32>
    %cst_18 = arith.constant 0.000000e+00 : f32
    %28 = vector.broadcast %cst_18 : f32 to vector<256x256xf32>
    %29 = arith.maximumf %27, %28 : vector<256x256xf32>
    %30 = arith.truncf %29 : vector<256x256xf32> to vector<256x256xbf16>
    %c2 = arith.constant 2 : index
    %c0_19 = arith.constant 0 : index
    %c0_20 = arith.constant 0 : index
    %31 = vector.load %arg4[%c2, %c0_19, %c0_20] : memref<7x256x256xbf16, #tpu.memory_space<vmem>>, vector<1x256x256xbf16>
    %32 = vector.shape_cast %31 : vector<1x256x256xbf16> to vector<256x256xbf16>
    %cst_21 = arith.constant dense<0.000000e+00> : vector<256x256xf32>
    %33 = tpu.matmul %30, %32, %cst_21 {dimension_numbers = #tpu.dot_dimension_numbers<[1], [0], [0], [1], [0, 0, 1, 1], [], []>} : vector<256x256xbf16>, vector<256x256xbf16>, vector<256x256xf32> -> vector<256x256xf32>
    %c2_22 = arith.constant 2 : index
    %c0_23 = arith.constant 0 : index
    %34 = vector.load %arg5[%c2_22, %c0_23] : memref<7x256xf32, #tpu.memory_space<vmem>>, vector<1x256xf32>
    %35 = vector.shape_cast %34 : vector<1x256xf32> to vector<256xf32>
    %36 = vector.shape_cast %35 : vector<256xf32> to vector<1x256xf32>
    %37 = vector.broadcast %36 : vector<1x256xf32> to vector<256x256xf32>
    %38 = arith.addf %33, %37 : vector<256x256xf32>
    %cst_24 = arith.constant 0.000000e+00 : f32
    %39 = vector.broadcast %cst_24 : f32 to vector<256x256xf32>
    %40 = arith.maximumf %38, %39 : vector<256x256xf32>
    %41 = arith.truncf %40 : vector<256x256xf32> to vector<256x256xbf16>
    %c3 = arith.constant 3 : index
    %c0_25 = arith.constant 0 : index
    %c0_26 = arith.constant 0 : index
    %42 = vector.load %arg4[%c3, %c0_25, %c0_26] : memref<7x256x256xbf16, #tpu.memory_space<vmem>>, vector<1x256x256xbf16>
    %43 = vector.shape_cast %42 : vector<1x256x256xbf16> to vector<256x256xbf16>
    %cst_27 = arith.constant dense<0.000000e+00> : vector<256x256xf32>
    %44 = tpu.matmul %41, %43, %cst_27 {dimension_numbers = #tpu.dot_dimension_numbers<[1], [0], [0], [1], [0, 0, 1, 1], [], []>} : vector<256x256xbf16>, vector<256x256xbf16>, vector<256x256xf32> -> vector<256x256xf32>
    %c3_28 = arith.constant 3 : index
    %c0_29 = arith.constant 0 : index
    %45 = vector.load %arg5[%c3_28, %c0_29] : memref<7x256xf32, #tpu.memory_space<vmem>>, vector<1x256xf32>
    %46 = vector.shape_cast %45 : vector<1x256xf32> to vector<256xf32>
    %47 = vector.shape_cast %46 : vector<256xf32> to vector<1x256xf32>
    %48 = vector.broadcast %47 : vector<1x256xf32> to vector<256x256xf32>
    %49 = arith.addf %44, %48 : vector<256x256xf32>
    %cst_30 = arith.constant 0.000000e+00 : f32
    %50 = vector.broadcast %cst_30 : f32 to vector<256x256xf32>
    %51 = arith.maximumf %49, %50 : vector<256x256xf32>
    %52 = arith.truncf %51 : vector<256x256xf32> to vector<256x256xbf16>
    %c4 = arith.constant 4 : index
    %c0_31 = arith.constant 0 : index
    %c0_32 = arith.constant 0 : index
    %53 = vector.load %arg4[%c4, %c0_31, %c0_32] : memref<7x256x256xbf16, #tpu.memory_space<vmem>>, vector<1x256x256xbf16>
    %54 = vector.shape_cast %53 : vector<1x256x256xbf16> to vector<256x256xbf16>
    %cst_33 = arith.constant dense<0.000000e+00> : vector<256x256xf32>
    %55 = tpu.matmul %52, %54, %cst_33 {dimension_numbers = #tpu.dot_dimension_numbers<[1], [0], [0], [1], [0, 0, 1, 1], [], []>} : vector<256x256xbf16>, vector<256x256xbf16>, vector<256x256xf32> -> vector<256x256xf32>
    %c4_34 = arith.constant 4 : index
    %c0_35 = arith.constant 0 : index
    %56 = vector.load %arg5[%c4_34, %c0_35] : memref<7x256xf32, #tpu.memory_space<vmem>>, vector<1x256xf32>
    %57 = vector.shape_cast %56 : vector<1x256xf32> to vector<256xf32>
    %58 = vector.shape_cast %57 : vector<256xf32> to vector<1x256xf32>
    %59 = vector.broadcast %58 : vector<1x256xf32> to vector<256x256xf32>
    %60 = arith.addf %55, %59 : vector<256x256xf32>
    %cst_36 = arith.constant 0.000000e+00 : f32
    %61 = vector.broadcast %cst_36 : f32 to vector<256x256xf32>
    %62 = arith.maximumf %60, %61 : vector<256x256xf32>
    %63 = arith.truncf %62 : vector<256x256xf32> to vector<256x256xbf16>
    %c5 = arith.constant 5 : index
    %c0_37 = arith.constant 0 : index
    %c0_38 = arith.constant 0 : index
    %64 = vector.load %arg4[%c5, %c0_37, %c0_38] : memref<7x256x256xbf16, #tpu.memory_space<vmem>>, vector<1x256x256xbf16>
    %65 = vector.shape_cast %64 : vector<1x256x256xbf16> to vector<256x256xbf16>
    %cst_39 = arith.constant dense<0.000000e+00> : vector<256x256xf32>
    %66 = tpu.matmul %63, %65, %cst_39 {dimension_numbers = #tpu.dot_dimension_numbers<[1], [0], [0], [1], [0, 0, 1, 1], [], []>} : vector<256x256xbf16>, vector<256x256xbf16>, vector<256x256xf32> -> vector<256x256xf32>
    %c5_40 = arith.constant 5 : index
    %c0_41 = arith.constant 0 : index
    %67 = vector.load %arg5[%c5_40, %c0_41] : memref<7x256xf32, #tpu.memory_space<vmem>>, vector<1x256xf32>
    %68 = vector.shape_cast %67 : vector<1x256xf32> to vector<256xf32>
    %69 = vector.shape_cast %68 : vector<256xf32> to vector<1x256xf32>
    %70 = vector.broadcast %69 : vector<1x256xf32> to vector<256x256xf32>
    %71 = arith.addf %66, %70 : vector<256x256xf32>
    %cst_42 = arith.constant 0.000000e+00 : f32
    %72 = vector.broadcast %cst_42 : f32 to vector<256x256xf32>
    %73 = arith.maximumf %71, %72 : vector<256x256xf32>
    %74 = arith.truncf %73 : vector<256x256xf32> to vector<256x256xbf16>
    %c6 = arith.constant 6 : index
    %c0_43 = arith.constant 0 : index
    %c0_44 = arith.constant 0 : index
    %75 = vector.load %arg4[%c6, %c0_43, %c0_44] : memref<7x256x256xbf16, #tpu.memory_space<vmem>>, vector<1x256x256xbf16>
    %76 = vector.shape_cast %75 : vector<1x256x256xbf16> to vector<256x256xbf16>
    %cst_45 = arith.constant dense<0.000000e+00> : vector<256x256xf32>
    %77 = tpu.matmul %74, %76, %cst_45 {dimension_numbers = #tpu.dot_dimension_numbers<[1], [0], [0], [1], [0, 0, 1, 1], [], []>} : vector<256x256xbf16>, vector<256x256xbf16>, vector<256x256xf32> -> vector<256x256xf32>
    %c6_46 = arith.constant 6 : index
    %c0_47 = arith.constant 0 : index
    %78 = vector.load %arg5[%c6_46, %c0_47] : memref<7x256xf32, #tpu.memory_space<vmem>>, vector<1x256xf32>
    %79 = vector.shape_cast %78 : vector<1x256xf32> to vector<256xf32>
    %80 = vector.shape_cast %79 : vector<256xf32> to vector<1x256xf32>
    %81 = vector.broadcast %80 : vector<1x256xf32> to vector<256x256xf32>
    %82 = arith.addf %77, %81 : vector<256x256xf32>
    %cst_48 = arith.constant 0.000000e+00 : f32
    %83 = vector.broadcast %cst_48 : f32 to vector<256x256xf32>
    %84 = arith.maximumf %82, %83 : vector<256x256xf32>
    %85 = arith.truncf %84 : vector<256x256xf32> to vector<256x256xbf16>
    %c0_49 = arith.constant 0 : index
    %c0_50 = arith.constant 0 : index
    %86 = vector.load %arg6[%c0_49, %c0_50] : memref<256x1024xbf16, #tpu.memory_space<vmem>>, vector<256x1024xbf16>
    %cst_51 = arith.constant dense<0.000000e+00> : vector<256x1024xf32>
    %87 = tpu.matmul %85, %86, %cst_51 {dimension_numbers = #tpu.dot_dimension_numbers<[1], [0], [0], [1], [0, 0, 1, 1], [], []>} : vector<256x256xbf16>, vector<256x1024xbf16>, vector<256x1024xf32> -> vector<256x1024xf32>
    %c0_52 = arith.constant 0 : index
    %c0_53 = arith.constant 0 : index
    %88 = vector.load %arg7[%c0_52, %c0_53] : memref<1x1024xf32, #tpu.memory_space<vmem>>, vector<1x1024xf32>
    %89 = vector.broadcast %88 : vector<1x1024xf32> to vector<256x1024xf32>
    %90 = arith.addf %87, %89 : vector<256x1024xf32>
    %cst_54 = arith.constant 0.000000e+00 : f32
    %91 = vector.broadcast %cst_54 : f32 to vector<256x1024xf32>
    %92 = arith.maximumf %90, %91 : vector<256x1024xf32>
    %93 = arith.truncf %92 : vector<256x1024xf32> to vector<256x1024xbf16>
    %c0_55 = arith.constant 0 : index
    %c0_56 = arith.constant 0 : index
    %94 = vector.load %arg8[%c0_55, %c0_56] : memref<1024x128xbf16, #tpu.memory_space<vmem>>, vector<1024x128xbf16>
    %cst_57 = arith.constant dense<0.000000e+00> : vector<256x128xf32>
    %95 = tpu.matmul %93, %94, %cst_57 {dimension_numbers = #tpu.dot_dimension_numbers<[1], [0], [0], [1], [0, 0, 1, 1], [], []>} : vector<256x1024xbf16>, vector<1024x128xbf16>, vector<256x128xf32> -> vector<256x128xf32>
    %c0_58 = arith.constant 0 : index
    %c0_59 = arith.constant 0 : index
    %96 = vector.load %arg9[%c0_58, %c0_59] : memref<1x128xf32, #tpu.memory_space<vmem>>, vector<1x128xf32>
    %97 = vector.broadcast %96 : vector<1x128xf32> to vector<256x128xf32>
    %98 = arith.addf %95, %97 : vector<256x128xf32>
    %c0_60 = arith.constant 0 : index
    %c0_61 = arith.constant 0 : index
    %99 = vector.load %arg10[%c0_60, %c0_61] : memref<256x128xf32, #tpu.memory_space<vmem>>, vector<256x128xf32>
    tpu.vector_store %arg10[%c0_60, %c0_61], %98 {strides = array<i32>} : memref<256x128xf32, #tpu.memory_space<vmem>>, vector<256x128xf32>,
    return
  }
  func.func @transform_0(%arg0: i32) -> (i32, i32) {
    %c0_i32 = arith.constant 0 : i32
    %c0_i32_0 = arith.constant 0 : i32
    return %arg0, %c0_i32 : i32, i32
  }
  func.func @transform_1(%arg0: i32) -> (i32, i32) {
    %c0_i32 = arith.constant 0 : i32
    %c0_i32_0 = arith.constant 0 : i32
    %c0_i32_1 = arith.constant 0 : i32
    return %c0_i32, %c0_i32_0 : i32, i32
  }
  func.func @transform_2(%arg0: i32) -> (i32, i32) {
    %c0_i32 = arith.constant 0 : i32
    %c0_i32_0 = arith.constant 0 : i32
    %c0_i32_1 = arith.constant 0 : i32
    return %c0_i32, %c0_i32_0 : i32, i32
  }
  func.func @transform_3(%arg0: i32) -> (i32, i32, i32) {
    %c0_i32 = arith.constant 0 : i32
    %c0_i32_0 = arith.constant 0 : i32
    %c0_i32_1 = arith.constant 0 : i32
    %c0_i32_2 = arith.constant 0 : i32
    return %c0_i32, %c0_i32_0, %c0_i32_1 : i32, i32, i32
  }
  func.func @transform_4(%arg0: i32) -> (i32, i32) {
    %c0_i32 = arith.constant 0 : i32
    %c0_i32_0 = arith.constant 0 : i32
    %c0_i32_1 = arith.constant 0 : i32
    return %c0_i32, %c0_i32_0 : i32, i32
  }
  func.func @transform_5(%arg0: i32) -> (i32, i32) {
    %c0_i32 = arith.constant 0 : i32
    %c0_i32_0 = arith.constant 0 : i32
    %c0_i32_1 = arith.constant 0 : i32
    return %c0_i32, %c0_i32_0 : i32, i32
  }
  func.func @transform_6(%arg0: i32) -> (i32, i32) {
    %c0_i32 = arith.constant 0 : i32
    %c0_i32_0 = arith.constant 0 : i32
    %c0_i32_1 = arith.constant 0 : i32
    return %c0_i32, %c0_i32_0 : i32, i32
  }
  func.func @transform_7(%arg0: i32) -> (i32, i32) {
    %c0_i32 = arith.constant 0 : i32
    %c0_i32_0 = arith.constant 0 : i32
    %c0_i32_1 = arith.constant 0 : i32
    return %c0_i32, %c0_i32_0 : i32, i32
  }
  func.func @transform_8(%arg0: i32) -> (i32, i32) {
    %c0_i32 = arith.constant 0 : i32
    %c0_i32_0 = arith.constant 0 : i32
    %c0_i32_1 = arith.constant 0 : i32
    return %c0_i32, %c0_i32_0 : i32, i32
  }
  func.func @transform_9(%arg0: i32) -> (i32, i32) {
    %c0_i32 = arith.constant 0 : i32
    %c0_i32_0 = arith.constant 0 : i32
    return %arg0, %c0_i32 : i32, i32
  }
}

</mosaic_0001>

<llo_original>
// kernel: tpu_custom_call.1
$region0: #{tpu_custom_call.1}
  #allocation0 [shape = 'u32[]', space=smem, size = 0x4, offset = 0x4, fixed_abs, tag = 'smem constant byte address 0x4 - core index']
  #allocation1 [shape = 'u32[72,128]{1,0:T(1,128)}', space=vmem, size = 0x9000, scoped, tag = 'internal scratch']
  %s0 = inlined_call_operand.vmem [shape: bf16[512,20], index: 0, kind: input, shape index: {}]
  %s1 = inlined_call_operand.vmem [shape: bf16[20,256], index: 1, kind: input, shape index: {}]
  %s2 = inlined_call_operand.vmem [shape: f32[1,256], index: 2, kind: input, shape index: {}]
  %s3 = inlined_call_operand.hbm [shape: bf16[7,256,256], index: 3, kind: input, shape index: {}]
  %s4 = inlined_call_operand.vmem [shape: f32[7,256], index: 4, kind: input, shape index: {}]
  %s5 = inlined_call_operand.hbm [shape: bf16[256,1024], index: 5, kind: input, shape index: {}]
  %s6 = inlined_call_operand.vmem [shape: f32[1,1024], index: 6, kind: input, shape index: {}]
  %s7 = inlined_call_operand.hbm [shape: bf16[1024,128], index: 7, kind: input, shape index: {}]
  %s8 = inlined_call_operand.vmem [shape: f32[1,128], index: 8, kind: input, shape index: {}]
  %s9 = inlined_call_operand.hbm [shape: f32[512,128], index: 9, kind: output, shape index: {}]
  %s10 = sld [smem:[#allocation0]]
  $region81: #{tpu_custom_call.1} parent=0
    _
  %s12 = ssub.s32 1, %s10
  %s13 = scalar_select 0, %s12, %s10
  $region1: #{tpu_custom_call.1} parent=0
    #allocation2 [shape = 'u8[917504]{0}', space=vmem, size = 0xe0000, scoped, tag = 'input window, operand 3, single buffered']
    #allocation3 [shape = 's32[2]{0}', space=sflag, size = 0x8, scoped, tag = 'scoped memory for tpu_custom_call.1']
    #allocation4 [shape = 's32[2]{0}', space=sflag, size = 0x8, scoped, tag = 'scoped memory for tpu_custom_call.1']
    #allocation5 [shape = 'u8[524288]{0}', space=vmem, size = 0x80000, scoped, tag = 'input window, operand 5, single buffered']
    #allocation6 [shape = 's32[1]{0}', space=sflag, size = 0x4, scoped, tag = 'scoped memory for tpu_custom_call.1']
    #allocation7 [shape = 'u8[262144]{0}', space=vmem, size = 0x40000, scoped, tag = 'input window, operand 7, single buffered']
    #allocation8 [shape = 'u8[262144]{0}', space=vmem, size = 0x40000, scoped, tag = 'output window, operand 0']
    %14 = vsyncpa [#allocation3], 0
    %15 = vsyncpa [#allocation6], 0
    %16 = vsyncpa [#allocation4], 0
    %s17 = scalar_lea.sflag [#allocation4], 1
    %18 = vsyncpa %s17, 0
    loop: start=0, step=1, limit=4
    $region2: #{tpu_custom_call.1} parent=1 // loop_pre_header
      _
    $region3: #{tpu_custom_call.1} parent=1 // loop_header
      %s20 = sphi 0, %s24
      %p21 = scmp.ge.s32.totalorder %s20, 4
      %s30 = sphi 0, %s32
      %s33 = sphi 0, %s30
      %s34 = sphi 0, %s33
      %s50 = sphi 0, %s34
      %s54 = sphi 0, %s54
      %s56 = sphi 0, %s54
      %s57 = sphi 0, %s56
      %s71 = sphi 0, %s57
      %s75 = sphi 0, %s75
      %s77 = sphi 0, %s75
      %s78 = sphi 0, %s77
      %s92 = sphi 0, %s78
      %s96 = sphi 0, %s96
      %s98 = sphi 0, %s96
      %s99 = sphi 0, %s98
      %s113 = sphi 0, %s99
      %s117 = sphi 0, %s117
      %s119 = sphi 0, %s117
      %s120 = sphi 0, %s119
      %s134 = sphi 0, %s120
      %s138 = sphi 0, %s138
      %s140 = sphi 0, %s138
      %s141 = sphi 0, %s140
      %s155 = sphi 0, %s141
      %s159 = sphi 0, %s159
      %s161 = sphi 0, %s159
      %s162 = sphi 0, %s161
      %s176 = sphi 0, %s162
      %s180 = sphi 0, %s180
      %s182 = sphi 0, %s180
      %s183 = sphi 0, %s182
      %s197 = sphi 0, %s183
      %s201 = sphi 0, %s201
      %s203 = sphi 0, %s201
      %s204 = sphi 0, %s203
      %s218 = sphi 0, %s204
      %s224 = sphi 0, %s226
      %s227 = sphi 0, %s224
      %s228 = sphi 0, %s227
      %s244 = sphi 0, %s228
    $region4: #{tpu_custom_call.1} parent=1 // loop_header_branch
      %23 = sbr.rel (%p21) target = $region8
    $region5: #{tpu_custom_call.1} parent=1 // loop_body
      %s25 = ssub.s32 %s20, 1
      %s26 = ssub.s32 %s20, 2
      %s27 = sadd.s32 %s20, 1
      %s28 = ssub.s32 %s20, %s27
      %p29 = scmp.eq.s32.totalorder %s28, 0
      %s31 = sadd.s32 %s30, 1
      %s32 = scalar_select %p29, %s30, %s31
      %p35 = pneg %p29
      %p36 = scmp.eq.s32.totalorder %s20, 1
      %p37 = por %p35, %p36
      %p38 = scmp.ne.s32.totalorder %s30, %s33
      %p39 = scmp.eq.s32.totalorder %s20, 0
      %p40 = por %p38, %p39
      %p41 = scmp.ne.s32.totalorder %s30, %s33
      %p42 = scmp.eq.s32.totalorder %s25, 1
      %p43 = por %p41, %p42
      %p44 = scmp.ne.s32.totalorder %s33, %s34
      %p45 = scmp.eq.s32.totalorder %s25, 0
      %p46 = por %p44, %p45
      %p47 = scmp.ne.s32.totalorder %s33, %s34
      %p48 = scmp.eq.s32.totalorder %s26, 1
      %p49 = por %p47, %p48
      %p51 = scmp.ne.s32.totalorder %s34, %s50
      %p52 = scmp.eq.s32.totalorder %s26, 0
      %p53 = por %p51, %p52
      %s55 = sadd.s32 %s54, 1
      %p58 = scmp.eq.s32.totalorder %s20, 1
      %p59 = scmp.ne.s32.totalorder %s54, %s56
      %p60 = scmp.eq.s32.totalorder %s20, 0
      %p61 = por %p59, %p60
      %p62 = scmp.ne.s32.totalorder %s54, %s56
      %p63 = scmp.eq.s32.totalorder %s25, 1
      %p64 = por %p62, %p63
      %p65 = scmp.ne.s32.totalorder %s56, %s57
      %p66 = scmp.eq.s32.totalorder %s25, 0
      %p67 = por %p65, %p66
      %p68 = scmp.ne.s32.totalorder %s56, %s57
      %p69 = scmp.eq.s32.totalorder %s26, 1
      %p70 = por %p68, %p69
      %p72 = scmp.ne.s32.totalorder %s57, %s71
      %p73 = scmp.eq.s32.totalorder %s26, 0
      %p74 = por %p72, %p73
      %s76 = sadd.s32 %s75, 1
      %p79 = scmp.eq.s32.totalorder %s20, 1
      %p80 = scmp.ne.s32.totalorder %s75, %s77
      %p81 = scmp.eq.s32.totalorder %s20, 0
      %p82 = por %p80, %p81
      %p83 = scmp.ne.s32.totalorder %s75, %s77
      %p84 = scmp.eq.s32.totalorder %s25, 1
      %p85 = por %p83, %p84
      %p86 = scmp.ne.s32.totalorder %s77, %s78
      %p87 = scmp.eq.s32.totalorder %s25, 0
      %p88 = por %p86, %p87
      %p89 = scmp.ne.s32.totalorder %s77, %s78
      %p90 = scmp.eq.s32.totalorder %s26, 1
      %p91 = por %p89, %p90
      %p93 = scmp.ne.s32.totalorder %s78, %s92
      %p94 = scmp.eq.s32.totalorder %s26, 0
      %p95 = por %p93, %p94
      %s97 = sadd.s32 %s96, 1
      %p100 = scmp.eq.s32.totalorder %s20, 1
      %p101 = scmp.ne.s32.totalorder %s96, %s98
      %p102 = scmp.eq.s32.totalorder %s20, 0
      %p103 = por %p101, %p102
      %p104 = scmp.ne.s32.totalorder %s96, %s98
      %p105 = scmp.eq.s32.totalorder %s25, 1
      %p106 = por %p104, %p105
      %p107 = scmp.ne.s32.totalorder %s98, %s99
      %p108 = scmp.eq.s32.totalorder %s25, 0
      %p109 = por %p107, %p108
      %p110 = scmp.ne.s32.totalorder %s98, %s99
      %p111 = scmp.eq.s32.totalorder %s26, 1
      %p112 = por %p110, %p111
      %p114 = scmp.ne.s32.totalorder %s99, %s113
      %p115 = scmp.eq.s32.totalorder %s26, 0
      %p116 = por %p114, %p115
      %s118 = sadd.s32 %s117, 1
      %p121 = scmp.eq.s32.totalorder %s20, 1
      %p122 = scmp.ne.s32.totalorder %s117, %s119
      %p123 = scmp.eq.s32.totalorder %s20, 0
      %p124 = por %p122, %p123
      %p125 = scmp.ne.s32.totalorder %s117, %s119
      %p126 = scmp.eq.s32.totalorder %s25, 1
      %p127 = por %p125, %p126
      %p128 = scmp.ne.s32.totalorder %s119, %s120
      %p129 = scmp.eq.s32.totalorder %s25, 0
      %p130 = por %p128, %p129
      %p131 = scmp.ne.s32.totalorder %s119, %s120
      %p132 = scmp.eq.s32.totalorder %s26, 1
      %p133 = por %p131, %p132
      %p135 = scmp.ne.s32.totalorder %s120, %s134
      %p136 = scmp.eq.s32.totalorder %s26, 0
      %p137 = por %p135, %p136
      %s139 = sadd.s32 %s138, 1
      %p142 = scmp.eq.s32.totalorder %s20, 1
      %p143 = scmp.ne.s32.totalorder %s138, %s140
      %p144 = scmp.eq.s32.totalorder %s20, 0
      %p145 = por %p143, %p144
      %p146 = scmp.ne.s32.totalorder %s138, %s140
      %p147 = scmp.eq.s32.totalorder %s25, 1
      %p148 = por %p146, %p147
      %p149 = scmp.ne.s32.totalorder %s140, %s141
      %p150 = scmp.eq.s32.totalorder %s25, 0
      %p151 = por %p149, %p150
      %p152 = scmp.ne.s32.totalorder %s140, %s141
      %p153 = scmp.eq.s32.totalorder %s26, 1
      %p154 = por %p152, %p153
      %p156 = scmp.ne.s32.totalorder %s141, %s155
      %p157 = scmp.eq.s32.totalorder %s26, 0
      %p158 = por %p156, %p157
      %s160 = sadd.s32 %s159, 1
      %p163 = scmp.eq.s32.totalorder %s20, 1
      %p164 = scmp.ne.s32.totalorder %s159, %s161
      %p165 = scmp.eq.s32.totalorder %s20, 0
      %p166 = por %p164, %p165
      %p167 = scmp.ne.s32.totalorder %s159, %s161
      %p168 = scmp.eq.s32.totalorder %s25, 1
      %p169 = por %p167, %p168
      %p170 = scmp.ne.s32.totalorder %s161, %s162
      %p171 = scmp.eq.s32.totalorder %s25, 0
      %p172 = por %p170, %p171
      %p173 = scmp.ne.s32.totalorder %s161, %s162
      %p174 = scmp.eq.s32.totalorder %s26, 1
      %p175 = por %p173, %p174
      %p177 = scmp.ne.s32.totalorder %s162, %s176
      %p178 = scmp.eq.s32.totalorder %s26, 0
      %p179 = por %p177, %p178
      %s181 = sadd.s32 %s180, 1
      %p184 = scmp.eq.s32.totalorder %s20, 1
      %p185 = scmp.ne.s32.totalorder %s180, %s182
      %p186 = scmp.eq.s32.totalorder %s20, 0
      %p187 = por %p185, %p186
      %p188 = scmp.ne.s32.totalorder %s180, %s182
      %p189 = scmp.eq.s32.totalorder %s25, 1
      %p190 = por %p188, %p189
      %p191 = scmp.ne.s32.totalorder %s182, %s183
      %p192 = scmp.eq.s32.totalorder %s25, 0
      %p193 = por %p191, %p192
      %p194 = scmp.ne.s32.totalorder %s182, %s183
      %p195 = scmp.eq.s32.totalorder %s26, 1
      %p196 = por %p194, %p195
      %p198 = scmp.ne.s32.totalorder %s183, %s197
      %p199 = scmp.eq.s32.totalorder %s26, 0
      %p200 = por %p198, %p199
      %s202 = sadd.s32 %s201, 1
      %p205 = scmp.eq.s32.totalorder %s20, 1
      %p206 = scmp.ne.s32.totalorder %s201, %s203
      %p207 = scmp.eq.s32.totalorder %s20, 0
      %p208 = por %p206, %p207
      %p209 = scmp.ne.s32.totalorder %s201, %s203
      %p210 = scmp.eq.s32.totalorder %s25, 1
      %p211 = por %p209, %p210
      %p212 = scmp.ne.s32.totalorder %s203, %s204
      %p213 = scmp.eq.s32.totalorder %s25, 0
      %p214 = por %p212, %p213
      %p215 = scmp.ne.s32.totalorder %s203, %s204
      %p216 = scmp.eq.s32.totalorder %s26, 1
      %p217 = por %p215, %p216
      %p219 = scmp.ne.s32.totalorder %s204, %s218
      %p220 = scmp.eq.s32.totalorder %s26, 0
      %p221 = por %p219, %p220
      %s222 = ssub.s32 %s20, %s27
      %p223 = scmp.eq.s32.totalorder %s222, 0
      %s225 = sadd.s32 %s224, 1
      %s226 = scalar_select %p223, %s224, %s225
      %p229 = pneg %p223
      %p230 = scmp.eq.s32.totalorder %s20, 1
      %p231 = por %p229, %p230
      %p232 = scmp.ne.s32.totalorder %s224, %s227
      %p233 = scmp.eq.s32.totalorder %s20, 0
      %p234 = por %p232, %p233
      %p235 = scmp.ne.s32.totalorder %s224, %s227
      %p236 = scmp.eq.s32.totalorder %s25, 1
      %p237 = por %p235, %p236
      %p238 = scmp.ne.s32.totalorder %s227, %s228
      %p239 = scmp.eq.s32.totalorder %s25, 0
      %p240 = por %p238, %p239
      %p241 = scmp.ne.s32.totalorder %s227, %s228
      %p242 = scmp.eq.s32.totalorder %s26, 1
      %p243 = por %p241, %p242
      %p245 = scmp.ne.s32.totalorder %s228, %s244
      %p246 = scmp.eq.s32.totalorder %s26, 0
      %p247 = por %p245, %p246
      %p248 = scmp.le.s32.totalorder 1, %s20
      %p249 = scmp.lt.s32.totalorder %s20, 3
      %p250 = pnand %p248, %p249
      %p251 = pneg %p250
      // Predicated region
      $region9: #{tpu_custom_call.1} parent=5 // pred_check
        _
      $region10: #{tpu_custom_call.1} parent=5 // pred_check_branch
        %253 = sbr.rel (%p250) target = $region12
      $region11: #{tpu_custom_call.1} parent=5 // pred_region
        %s254 = ssub.s32 %s20, 1
        // Predicated region
        $region13: #{tpu_custom_call.1} parent=11 // pred_check
          %p255 = pneg %p67
        $region14: #{tpu_custom_call.1} parent=11 // pred_check_branch
          %257 = sbr.rel (%p255) target = $region16
        $region15: #{tpu_custom_call.1} parent=11 // pred_region
          _
        $region16: #{tpu_custom_call.1} parent=11 // pred_fallthru
          _
        // Predicated region
        $region17: #{tpu_custom_call.1} parent=11 // pred_check
          %p258 = pneg %p88
        $region18: #{tpu_custom_call.1} parent=11 // pred_check_branch
          %260 = sbr.rel (%p258) target = $region20
        $region19: #{tpu_custom_call.1} parent=11 // pred_region
          _
        $region20: #{tpu_custom_call.1} parent=11 // pred_fallthru
          _
        // Predicated region
        $region21: #{tpu_custom_call.1} parent=11 // pred_check
          %p261 = pneg %p109
        $region22: #{tpu_custom_call.1} parent=11 // pred_check_branch
          %263 = sbr.rel (%p261) target = $region24
        $region23: #{tpu_custom_call.1} parent=11 // pred_region
          %265 = vsyncadd [#allocation3], 0
          %s266 = sshll.u32 %s3, 4
          %s267 = int_to_ptr.hbm [resolvable:$true] %s266
          %s268 = sshll.u32 [#allocation2], 4
          %s269 = int_to_ptr.vmem [resolvable:$true] %s268
          %274 = dma.hbm_to_vmem [thread:$0]  %s267, 28672, %s269, [#allocation3], 128, 128, 8
        $region24: #{tpu_custom_call.1} parent=11 // pred_fallthru
          _
        // Predicated region
        $region25: #{tpu_custom_call.1} parent=11 // pred_check
          %p275 = pneg %p130
        $region26: #{tpu_custom_call.1} parent=11 // pred_check_branch
          %277 = sbr.rel (%p275) target = $region28
        $region27: #{tpu_custom_call.1} parent=11 // pred_region
          _
        $region28: #{tpu_custom_call.1} parent=11 // pred_fallthru
          _
        // Predicated region
        $region29: #{tpu_custom_call.1} parent=11 // pred_check
          %p278 = pneg %p151
        $region30: #{tpu_custom_call.1} parent=11 // pred_check_branch
          %280 = sbr.rel (%p278) target = $region32
        $region31: #{tpu_custom_call.1} parent=11 // pred_region
          %282 = vsyncadd [#allocation6], 0
          %s283 = sshll.u32 %s5, 4
          %s284 = int_to_ptr.hbm [resolvable:$true] %s283
          %s285 = sshll.u32 [#allocation5], 4
          %s286 = int_to_ptr.vmem [resolvable:$true] %s285
          %291 = dma.hbm_to_vmem [thread:$0]  %s284, 16384, %s286, [#allocation6], 512, 512, 32
        $region32: #{tpu_custom_call.1} parent=11 // pred_fallthru
          _
        // Predicated region
        $region33: #{tpu_custom_call.1} parent=11 // pred_check
          %p292 = pneg %p172
        $region34: #{tpu_custom_call.1} parent=11 // pred_check_branch
          %294 = sbr.rel (%p292) target = $region36
        $region35: #{tpu_custom_call.1} parent=11 // pred_region
          _
        $region36: #{tpu_custom_call.1} parent=11 // pred_fallthru
          _
        // Predicated region
        $region37: #{tpu_custom_call.1} parent=11 // pred_check
          %p295 = pneg %p193
        $region38: #{tpu_custom_call.1} parent=11 // pred_check_branch
          %297 = sbr.rel (%p295) target = $region40
        $region39: #{tpu_custom_call.1} parent=11 // pred_region
          %299 = vsyncadd [#allocation6], 0
          %s300 = sshll.u32 %s7, 4
          %s301 = int_to_ptr.hbm [resolvable:$true] %s300
          %s302 = sshll.u32 [#allocation7], 4
          %s303 = int_to_ptr.vmem [resolvable:$true] %s302
          %308 = dma.hbm_to_vmem [thread:$0]  %s301, 8192, %s303, [#allocation6], 64, 64, 4
        $region40: #{tpu_custom_call.1} parent=11 // pred_fallthru
          _
        // Predicated region
        $region41: #{tpu_custom_call.1} parent=11 // pred_check
          %p309 = pneg %p214
        $region42: #{tpu_custom_call.1} parent=11 // pred_check_branch
          %311 = sbr.rel (%p309) target = $region44
        $region43: #{tpu_custom_call.1} parent=11 // pred_region
          _
        $region44: #{tpu_custom_call.1} parent=11 // pred_fallthru
          _
      $region12: #{tpu_custom_call.1} parent=5 // pred_fallthru
        _
      %p312 = scmp.lt.s32.totalorder %s20, 2
      // Predicated region
      $region45: #{tpu_custom_call.1} parent=5 // pred_check
        %p313 = pneg %p312
      $region46: #{tpu_custom_call.1} parent=5 // pred_check_branch
        %315 = sbr.rel (%p313) target = $region48
      $region47: #{tpu_custom_call.1} parent=5 // pred_region
        // Predicated region
        $region49: #{tpu_custom_call.1} parent=47 // pred_check
          %p316 = pneg %p40
        $region50: #{tpu_custom_call.1} parent=47 // pred_check_branch
          %318 = sbr.rel (%p316) target = $region52
        $region51: #{tpu_custom_call.1} parent=47 // pred_region
          %s319 = smul.u32 32, %s20
          %p320 = scmp.lt.s32.totalorder %s319, 63
          %s321 = scalar_select %p320, %s319, 63
          %s322 = smul.addr %s321, 4
          %s323 = scalar_lea.vmem %s0, %s322
          %s324 = smul.u32 32, %s20
        $region52: #{tpu_custom_call.1} parent=47 // pred_fallthru
          _
      $region48: #{tpu_custom_call.1} parent=5 // pred_fallthru
        _
      %p325 = scmp.le.s32.totalorder 1, %s20
      %p326 = scmp.lt.s32.totalorder %s20, 3
      %p327 = pnand %p325, %p326
      %p328 = pneg %p327
      // Predicated region
      $region53: #{tpu_custom_call.1} parent=5 // pred_check
        _
      $region54: #{tpu_custom_call.1} parent=5 // pred_check_branch
        %330 = sbr.rel (%p327) target = $region56
      $region55: #{tpu_custom_call.1} parent=5 // pred_region
        %s331 = ssub.s32 %s20, 1
        // Predicated region
        $region57: #{tpu_custom_call.1} parent=55 // pred_check
          %p332 = pneg %p109
        $region58: #{tpu_custom_call.1} parent=55 // pred_check_branch
          %334 = sbr.rel (%p332) target = $region60
        $region59: #{tpu_custom_call.1} parent=55 // pred_region
          %336 = dma.done [#allocation3], 28672
        $region60: #{tpu_custom_call.1} parent=55 // pred_fallthru
          _
        // Predicated region
        $region61: #{tpu_custom_call.1} parent=55 // pred_check
          %p337 = pneg %p151
        $region62: #{tpu_custom_call.1} parent=55 // pred_check_branch
          %339 = sbr.rel (%p337) target = $region64
        $region63: #{tpu_custom_call.1} parent=55 // pred_region
          %341 = dma.done [#allocation6], 16384
        $region64: #{tpu_custom_call.1} parent=55 // pred_fallthru
          _
        // Predicated region
        $region65: #{tpu_custom_call.1} parent=55 // pred_check
          %p342 = pneg %p193
        $region66: #{tpu_custom_call.1} parent=55 // pred_check_branch
          %344 = sbr.rel (%p342) target = $region68
        $region67: #{tpu_custom_call.1} parent=55 // pred_region
          %346 = dma.done [#allocation6], 8192
        $region68: #{tpu_custom_call.1} parent=55 // pred_fallthru
          _
        %s347 = smul.u32 32, %s25
        %p348 = scmp.lt.s32.totalorder %s347, 63
        %s349 = scalar_select %p348, %s347, 63
        %s350 = smul.addr %s349, 4
        %s351 = scalar_lea.vmem %s0, %s350
        %p352 = pneg %p46
        %p353 = pneg %p43
        %p354 = pneg %p67
        %p355 = pneg %p64
        %p356 = pneg %p88
        %p357 = pneg %p85
        %p358 = pneg %p109
        %p359 = pneg %p106
        %p360 = pneg %p130
        %p361 = pneg %p127
        %p362 = pneg %p151
        %p363 = pneg %p148
        %p364 = pneg %p172
        %p365 = pneg %p169
        %p366 = pneg %p193
        %p367 = pneg %p190
        %p368 = pneg %p214
        %p369 = pneg %p211
        %p370 = pneg %p240
        %p371 = pneg %p237
        %s372 = sand.u32 %s227, 1
        %s373 = scalar_lea.sflag [#allocation4], %s372
        %s374 = sand.u32 %s227, 1
        %s375 = smul.addr %s374, 256
        %s376 = scalar_lea.vmem [#allocation8], %s375
        %s377 = smul.u32 32, %s25
        %p378 = scmp.lt.s32.totalorder %s377, 63
        %s379 = scalar_select %p378, %s377, 63
        %s380 = smul.addr %s379, 4
        %s381 = scalar_lea.vmem %s0, %s380
        %s382 = smul.u32 32, %s25
        %s383 = smul.u32 32, %s25
        %v385 = vld [vmem:[%s381] sm:$0xf]
        %v386 = vld [vmem:[%s381 + $0x4] sm:$0xf]
        %v387 = vld [vmem:[%s381 + $0x8] sm:$0xf]
        %v388 = vld [vmem:[%s381 + $0xc] sm:$0xf]
        %v389 = vld [vmem:[%s381 + $0x10] sm:$0xf]
        %v390 = vld [vmem:[%s381 + $0x14] sm:$0xf]
        %v391 = vld [vmem:[%s381 + $0x18] sm:$0xf]
        %v392 = vld [vmem:[%s381 + $0x1c] sm:$0xf]
        %v393 = vld [vmem:[%s381 + $0x20] sm:$0xf]
        %v394 = vld [vmem:[%s381 + $0x24] sm:$0xf]
        %v395 = vld [vmem:[%s381 + $0x28] sm:$0xf]
        %v396 = vld [vmem:[%s381 + $0x2c] sm:$0xf]
        %v397 = vld [vmem:[%s381 + $0x30] sm:$0xf]
        %v398 = vld [vmem:[%s381 + $0x34] sm:$0xf]
        %v399 = vld [vmem:[%s381 + $0x38] sm:$0xf]
        %v400 = vld [vmem:[%s381 + $0x3c] sm:$0xf]
        %v401 = vld [vmem:[%s381 + $0x40] sm:$0xf]
        %v402 = vld [vmem:[%s381 + $0x44] sm:$0xf]
        %v403 = vld [vmem:[%s381 + $0x48] sm:$0xf]
        %v404 = vld [vmem:[%s381 + $0x4c] sm:$0xf]
        %v405 = vld [vmem:[%s381 + $0x50] sm:$0xf]
        %v406 = vld [vmem:[%s381 + $0x54] sm:$0xf]
        %v407 = vld [vmem:[%s381 + $0x58] sm:$0xf]
        %v408 = vld [vmem:[%s381 + $0x5c] sm:$0xf]
        %v409 = vld [vmem:[%s381 + $0x60] sm:$0xf]
        %v410 = vld [vmem:[%s381 + $0x64] sm:$0xf]
        %v411 = vld [vmem:[%s381 + $0x68] sm:$0xf]
        %v412 = vld [vmem:[%s381 + $0x6c] sm:$0xf]
        %v413 = vld [vmem:[%s381 + $0x70] sm:$0xf]
        %v414 = vld [vmem:[%s381 + $0x74] sm:$0xf]
        %v415 = vld [vmem:[%s381 + $0x78] sm:$0xf]
        %v416 = vld [vmem:[%s381 + $0x7c] sm:$0xf]
        %v417 = vld [vmem:[%s1] sm:$0xff]
        %v418 = vld [vmem:[%s1 + $0x8] sm:$0xff]
        %v419 = vld [vmem:[%s1 + $0x10] sm:$0x33]
        %v420 = vld [vmem:[%s2] sm:$0x3]
        %v422 = vperm.slane %v420, 0
        %v423 = vperm.slane %v420, 1
        %v458 = vunpack.c.l.b16 %v385
        %v459 = vunpack.c.l.b16 %v386
        %v460 = vunpack.c.l.b16 %v387
        %v461 = vunpack.c.l.b16 %v388
        %v462 = vunpack.c.l.b16 %v389
        %v463 = vunpack.c.l.b16 %v390
        %v464 = vunpack.c.l.b16 %v391
        %v465 = vunpack.c.l.b16 %v392
        %v466 = vunpack.c.l.b16 %v393
        %v467 = vunpack.c.l.b16 %v394
        %v468 = vunpack.c.l.b16 %v395
        %v469 = vunpack.c.l.b16 %v396
        %v470 = vunpack.c.l.b16 %v397
        %v471 = vunpack.c.l.b16 %v398
        %v472 = vunpack.c.l.b16 %v399
        %v473 = vunpack.c.l.b16 %v400
        %v474 = vunpack.c.l.b16 %v401
        %v475 = vunpack.c.l.b16 %v402
        %v476 = vunpack.c.l.b16 %v403
        %v477 = vunpack.c.l.b16 %v404
        %v478 = vunpack.c.l.b16 %v405
        %v479 = vunpack.c.l.b16 %v406
        %v480 = vunpack.c.l.b16 %v407
        %v481 = vunpack.c.l.b16 %v408
        %v482 = vunpack.c.l.b16 %v409
        %v483 = vunpack.c.l.b16 %v410
        %v484 = vunpack.c.l.b16 %v411
        %v485 = vunpack.c.l.b16 %v412
        %v486 = vunpack.c.l.b16 %v413
        %v487 = vunpack.c.l.b16 %v414
        %v488 = vunpack.c.l.b16 %v415
        %v489 = vunpack.c.l.b16 %v416
        %v490 = vpack.c.b16 %v459, %v458
        %v491 = vpack.c.b16 %v461, %v460
        %v492 = vpack.c.b16 %v463, %v462
        %v493 = vpack.c.b16 %v465, %v464
        %v494 = vpack.c.b16 %v467, %v466
        %v495 = vpack.c.b16 %v469, %v468
        %v496 = vpack.c.b16 %v471, %v470
        %v497 = vpack.c.b16 %v473, %v472
        %v498 = vpack.c.b16 %v475, %v474
        %v499 = vpack.c.b16 %v477, %v476
        %v500 = vpack.c.b16 %v479, %v478
        %v501 = vpack.c.b16 %v481, %v480
        %v502 = vpack.c.b16 %v483, %v482
        %v503 = vpack.c.b16 %v485, %v484
        %v504 = vpack.c.b16 %v487, %v486
        %v505 = vpack.c.b16 %v489, %v488
        %v509 = vunpack.c.l.b16 %v417
        %v510 = vunpack.c.h.b16 %v417
        %v511 = vunpack.c.l.b16 %v418
        %v512 = vunpack.c.h.b16 %v418
        %v513 = vunpack.c.l.b16 %v419
        %v514 = vunpack.c.h.b16 %v419
        %v515 = vpack.c.b16 %v511, %v509
        %v516 = vpack.c.b16 %v512, %v510
        %v517 = vpack.c.b16 %v513, %v513
        %v518 = vpack.c.b16 %v514, %v514
        %vm521 = vcmask 162816
        %v523 = vsel %vm521, %v490, 0
        %v526 = vsel %vm521, %v491, 0
        %v529 = vsel %vm521, %v492, 0
        %v532 = vsel %vm521, %v493, 0
        %v535 = vsel %vm521, %v494, 0
        %v538 = vsel %vm521, %v495, 0
        %v541 = vsel %vm521, %v496, 0
        %v544 = vsel %vm521, %v497, 0
        %v547 = vsel %vm521, %v498, 0
        %v550 = vsel %vm521, %v499, 0
        %v553 = vsel %vm521, %v500, 0
        %v556 = vsel %vm521, %v501, 0
        %v559 = vsel %vm521, %v502, 0
        %v562 = vsel %vm521, %v503, 0
        %v565 = vsel %vm521, %v504, 0
        %v568 = vsel %vm521, %v505, 0
        %vm570 = vcmask 1041408
        %v572 = vsel %vm570, %v517, 0
        %v575 = vsel %vm570, %v518, 0
        %577 = vmatpush.bf16.msra.mxu0 0
        %578 = vmatpush.bf16.msra.mxu0 0
        %579 = vmatpush.bf16.msra.mxu0 0
        %580 = vmatpush.bf16.msra.mxu0 0
        %581 = vmatpush.bf16.msra.mxu0 0
        %582 = vmatpush.bf16.msra.mxu0 0
        %583 = vmatpush.bf16.msra.mxu0 %v572
        %584 = vmatpush.bf16.msra.mxu0 %v515
        %585 = vmatmul.bf16.gmra.mxu0 %v523
        %v586 = vpop.f32.mrf.mxu0
        %v587 = vadd.f32 %v422, %v586
        %v588 = vpop.f32.mrf.mxu0
        %v589 = vadd.f32 %v422, %v588
        %590 = vmatmul.bf16.gmra.mxu0 %v526
        %v591 = vpop.f32.mrf.mxu0
        %v592 = vadd.f32 %v422, %v591
        %v593 = vpop.f32.mrf.mxu0
        %v594 = vadd.f32 %v422, %v593
        %595 = vmatmul.bf16.gmra.mxu0 %v529
        %v596 = vpop.f32.mrf.mxu0
        %v597 = vadd.f32 %v422, %v596
        %v598 = vpop.f32.mrf.mxu0
        %v599 = vadd.f32 %v422, %v598
        %600 = vmatmul.bf16.gmra.mxu0 %v532
        %v601 = vpop.f32.mrf.mxu0
        %v602 = vadd.f32 %v422, %v601
        %v603 = vpop.f32.mrf.mxu0
        %v604 = vadd.f32 %v422, %v603
        %605 = vmatmul.bf16.gmra.mxu0 %v535
        %v606 = vpop.f32.mrf.mxu0
        %v607 = vadd.f32 %v422, %v606
        %v608 = vpop.f32.mrf.mxu0
        %v609 = vadd.f32 %v422, %v608
        %610 = vmatmul.bf16.gmra.mxu0 %v538
        %v611 = vpop.f32.mrf.mxu0
        %v612 = vadd.f32 %v422, %v611
        %v613 = vpop.f32.mrf.mxu0
        %v614 = vadd.f32 %v422, %v613
        %615 = vmatmul.bf16.gmra.mxu0 %v541
        %v616 = vpop.f32.mrf.mxu0
        %v617 = vadd.f32 %v422, %v616
        %v618 = vpop.f32.mrf.mxu0
        %v619 = vadd.f32 %v422, %v618
        %620 = vmatmul.bf16.gmra.mxu0 %v544
        %v621 = vpop.f32.mrf.mxu0
        %v622 = vadd.f32 %v422, %v621
        %v623 = vpop.f32.mrf.mxu0
        %v624 = vadd.f32 %v422, %v623
        %625 = vmatmul.bf16.gmra.mxu0 %v547
        %v626 = vpop.f32.mrf.mxu0
        %v627 = vadd.f32 %v422, %v626
        %v628 = vpop.f32.mrf.mxu0
        %v629 = vadd.f32 %v422, %v628
        %630 = vmatmul.bf16.gmra.mxu0 %v550
        %v631 = vpop.f32.mrf.mxu0
        %v632 = vadd.f32 %v422, %v631
        %v633 = vpop.f32.mrf.mxu0
        %v634 = vadd.f32 %v422, %v633
        %635 = vmatmul.bf16.gmra.mxu0 %v553
        %v636 = vpop.f32.mrf.mxu0
        %v637 = vadd.f32 %v422, %v636
        %v638 = vpop.f32.mrf.mxu0
        %v639 = vadd.f32 %v422, %v638
        %640 = vmatmul.bf16.gmra.mxu0 %v556
        %v641 = vpop.f32.mrf.mxu0
        %v642 = vadd.f32 %v422, %v641
        %v643 = vpop.f32.mrf.mxu0
        %v644 = vadd.f32 %v422, %v643
        %645 = vmatmul.bf16.gmra.mxu0 %v559
        %v646 = vpop.f32.mrf.mxu0
        %v647 = vadd.f32 %v422, %v646
        %v648 = vpop.f32.mrf.mxu0
        %v649 = vadd.f32 %v422, %v648
        %650 = vmatmul.bf16.gmra.mxu0 %v562
        %v651 = vpop.f32.mrf.mxu0
        %v652 = vadd.f32 %v422, %v651
        %v653 = vpop.f32.mrf.mxu0
        %v654 = vadd.f32 %v422, %v653
        %655 = vmatmul.bf16.gmra.mxu0 %v565
        %v656 = vpop.f32.mrf.mxu0
        %v657 = vadd.f32 %v422, %v656
        %v658 = vpop.f32.mrf.mxu0
        %v659 = vadd.f32 %v422, %v658
        %660 = vmatmul.bf16.gmra.mxu0 %v568
        %v661 = vpop.f32.mrf.mxu0
        %v662 = vadd.f32 %v422, %v661
        %v663 = vpop.f32.mrf.mxu0
        %v664 = vadd.f32 %v422, %v663
        %665 = vdwg.mxu0
        %666 = vmatpush.bf16.msra.mxu0 0
        %667 = vmatpush.bf16.msra.mxu0 0
        %668 = vmatpush.bf16.msra.mxu0 0
        %669 = vmatpush.bf16.msra.mxu0 0
        %670 = vmatpush.bf16.msra.mxu0 0
        %671 = vmatpush.bf16.msra.mxu0 0
        %672 = vmatpush.bf16.msra.mxu0 %v575
        %673 = vmatpush.bf16.msra.mxu0 %v516
        %674 = vmatmul.bf16.gmra.mxu0 %v523
        %v675 = vpop.f32.mrf.mxu0
        %v676 = vadd.f32 %v423, %v675
        %v677 = vpop.f32.mrf.mxu0
        %v678 = vadd.f32 %v423, %v677
        %679 = vmatmul.bf16.gmra.mxu0 %v526
        %v680 = vpop.f32.mrf.mxu0
        %v681 = vadd.f32 %v423, %v680
        %v682 = vpop.f32.mrf.mxu0
        %v683 = vadd.f32 %v423, %v682
        %684 = vmatmul.bf16.gmra.mxu0 %v529
        %v685 = vpop.f32.mrf.mxu0
        %v686 = vadd.f32 %v423, %v685
        %v687 = vpop.f32.mrf.mxu0
        %v688 = vadd.f32 %v423, %v687
        %689 = vmatmul.bf16.gmra.mxu0 %v532
        %v690 = vpop.f32.mrf.mxu0
        %v691 = vadd.f32 %v423, %v690
        %v692 = vpop.f32.mrf.mxu0
        %v693 = vadd.f32 %v423, %v692
        %694 = vmatmul.bf16.gmra.mxu0 %v535
        %v695 = vpop.f32.mrf.mxu0
        %v696 = vadd.f32 %v423, %v695
        %v697 = vpop.f32.mrf.mxu0
        %v698 = vadd.f32 %v423, %v697
        %699 = vmatmul.bf16.gmra.mxu0 %v538
        %v700 = vpop.f32.mrf.mxu0
        %v701 = vadd.f32 %v423, %v700
        %v702 = vpop.f32.mrf.mxu0
        %v703 = vadd.f32 %v423, %v702
        %704 = vmatmul.bf16.gmra.mxu0 %v541
        %v705 = vpop.f32.mrf.mxu0
        %v706 = vadd.f32 %v423, %v705
        %v707 = vpop.f32.mrf.mxu0
        %v708 = vadd.f32 %v423, %v707
        %709 = vmatmul.bf16.gmra.mxu0 %v544
        %v710 = vpop.f32.mrf.mxu0
        %v711 = vadd.f32 %v423, %v710
        %v712 = vpop.f32.mrf.mxu0
        %v713 = vadd.f32 %v423, %v712
        %714 = vmatmul.bf16.gmra.mxu0 %v547
        %v715 = vpop.f32.mrf.mxu0
        %v716 = vadd.f32 %v423, %v715
        %v717 = vpop.f32.mrf.mxu0
        %v718 = vadd.f32 %v423, %v717
        %719 = vmatmul.bf16.gmra.mxu0 %v550
        %v720 = vpop.f32.mrf.mxu0
        %v721 = vadd.f32 %v423, %v720
        %v722 = vpop.f32.mrf.mxu0
        %v723 = vadd.f32 %v423, %v722
        %724 = vmatmul.bf16.gmra.mxu0 %v553
        %v725 = vpop.f32.mrf.mxu0
        %v726 = vadd.f32 %v423, %v725
        %v727 = vpop.f32.mrf.mxu0
        %v728 = vadd.f32 %v423, %v727
        %729 = vmatmul.bf16.gmra.mxu0 %v556
        %v730 = vpop.f32.mrf.mxu0
        %v731 = vadd.f32 %v423, %v730
        %v732 = vpop.f32.mrf.mxu0
        %v733 = vadd.f32 %v423, %v732
        %734 = vmatmul.bf16.gmra.mxu0 %v559
        %v735 = vpop.f32.mrf.mxu0
        %v736 = vadd.f32 %v423, %v735
        %v737 = vpop.f32.mrf.mxu0
        %v738 = vadd.f32 %v423, %v737
        %739 = vmatmul.bf16.gmra.mxu0 %v562
        %v740 = vpop.f32.mrf.mxu0
        %v741 = vadd.f32 %v423, %v740
        %v742 = vpop.f32.mrf.mxu0
        %v743 = vadd.f32 %v423, %v742
        %744 = vmatmul.bf16.gmra.mxu0 %v565
        %v745 = vpop.f32.mrf.mxu0
        %v746 = vadd.f32 %v423, %v745
        %v747 = vpop.f32.mrf.mxu0
        %v748 = vadd.f32 %v423, %v747
        %749 = vmatmul.bf16.gmra.mxu0 %v568
        %v750 = vpop.f32.mrf.mxu0
        %v751 = vadd.f32 %v423, %v750
        %v752 = vpop.f32.mrf.mxu0
        %v753 = vadd.f32 %v423, %v752
        %754 = vdwg.mxu0
        %v755 = vmax.f32 %v587, 0.0
        %v756 = vmax.f32 %v676, 0.0
        %v757 = vmax.f32 %v589, 0.0
        %v758 = vmax.f32 %v678, 0.0
        %v759 = vmax.f32 %v592, 0.0
        %v760 = vmax.f32 %v681, 0.0
        %v761 = vmax.f32 %v594, 0.0
        %v762 = vmax.f32 %v683, 0.0
        %v763 = vmax.f32 %v597, 0.0
        %v764 = vmax.f32 %v686, 0.0
        %v765 = vmax.f32 %v599, 0.0
        %v766 = vmax.f32 %v688, 0.0
        %v767 = vmax.f32 %v602, 0.0
        %v768 = vmax.f32 %v691, 0.0
        %v769 = vmax.f32 %v604, 0.0
        %v770 = vmax.f32 %v693, 0.0
        %v771 = vmax.f32 %v607, 0.0
        %v772 = vmax.f32 %v696, 0.0
        %v773 = vmax.f32 %v609, 0.0
        %v774 = vmax.f32 %v698, 0.0
        %v775 = vmax.f32 %v612, 0.0
        %v776 = vmax.f32 %v701, 0.0
        %v777 = vmax.f32 %v614, 0.0
        %v778 = vmax.f32 %v703, 0.0
        %v779 = vmax.f32 %v617, 0.0
        %v780 = vmax.f32 %v706, 0.0
        %v781 = vmax.f32 %v619, 0.0
        %v782 = vmax.f32 %v708, 0.0
        %v783 = vmax.f32 %v622, 0.0
        %v784 = vmax.f32 %v711, 0.0
        %v785 = vmax.f32 %v624, 0.0
        %v786 = vmax.f32 %v713, 0.0
        %v787 = vmax.f32 %v627, 0.0
        %v788 = vmax.f32 %v716, 0.0
        %v789 = vmax.f32 %v629, 0.0
        %v790 = vmax.f32 %v718, 0.0
        %v791 = vmax.f32 %v632, 0.0
        %v792 = vmax.f32 %v721, 0.0
        %v793 = vmax.f32 %v634, 0.0
        %v794 = vmax.f32 %v723, 0.0
        %v795 = vmax.f32 %v637, 0.0
        %v796 = vmax.f32 %v726, 0.0
        %v797 = vmax.f32 %v639, 0.0
        %v798 = vmax.f32 %v728, 0.0
        %v799 = vmax.f32 %v642, 0.0
        %v800 = vmax.f32 %v731, 0.0
        %v801 = vmax.f32 %v644, 0.0
        %v802 = vmax.f32 %v733, 0.0
        %v803 = vmax.f32 %v647, 0.0
        %v804 = vmax.f32 %v736, 0.0
        %v805 = vmax.f32 %v649, 0.0
        %v806 = vmax.f32 %v738, 0.0
        %v807 = vmax.f32 %v652, 0.0
        %v808 = vmax.f32 %v741, 0.0
        %v809 = vmax.f32 %v654, 0.0
        %v810 = vmax.f32 %v743, 0.0
        %v811 = vmax.f32 %v657, 0.0
        %v812 = vmax.f32 %v746, 0.0
        %v813 = vmax.f32 %v659, 0.0
        %v814 = vmax.f32 %v748, 0.0
        %v815 = vmax.f32 %v662, 0.0
        %v816 = vmax.f32 %v751, 0.0
        %v817 = vmax.f32 %v664, 0.0
        %v818 = vmax.f32 %v753, 0.0
        %v819 = vpack.c.bf16 %v757, %v755
        %v820 = vpack.c.bf16 %v758, %v756
        %v821 = vpack.c.bf16 %v761, %v759
        %v822 = vpack.c.bf16 %v762, %v760
        %v823 = vpack.c.bf16 %v765, %v763
        %v824 = vpack.c.bf16 %v766, %v764
        %v825 = vpack.c.bf16 %v769, %v767
        %v826 = vpack.c.bf16 %v770, %v768
        %v827 = vpack.c.bf16 %v773, %v771
        %v828 = vpack.c.bf16 %v774, %v772
        %v829 = vpack.c.bf16 %v777, %v775
        %v830 = vpack.c.bf16 %v778, %v776
        %v831 = vpack.c.bf16 %v781, %v779
        %v832 = vpack.c.bf16 %v782, %v780
        %v833 = vpack.c.bf16 %v785, %v783
        %v834 = vpack.c.bf16 %v786, %v784
        %v835 = vpack.c.bf16 %v789, %v787
        %v836 = vpack.c.bf16 %v790, %v788
        %v837 = vpack.c.bf16 %v793, %v791
        %v838 = vpack.c.bf16 %v794, %v792
        %v839 = vpack.c.bf16 %v797, %v795
        %v840 = vpack.c.bf16 %v798, %v796
        %v841 = vpack.c.bf16 %v801, %v799
        %v842 = vpack.c.bf16 %v802, %v800
        %v843 = vpack.c.bf16 %v805, %v803
        %v844 = vpack.c.bf16 %v806, %v804
        %v845 = vpack.c.bf16 %v809, %v807
        %v846 = vpack.c.bf16 %v810, %v808
        %v847 = vpack.c.bf16 %v813, %v811
        %v848 = vpack.c.bf16 %v814, %v812
        %v849 = vpack.c.bf16 %v817, %v815
        %v850 = vpack.c.bf16 %v818, %v816
        %v851 = vld [vmem:[#allocation2] sm:$0xff]
        %v852 = vld [vmem:[#allocation2 + $0x8] sm:$0xff]
        %v853 = vld [vmem:[#allocation2 + $0x10] sm:$0xff]
        %v854 = vld [vmem:[#allocation2 + $0x18] sm:$0xff]
        %v855 = vld [vmem:[#allocation2 + $0x20] sm:$0xff]
        %v856 = vld [vmem:[#allocation2 + $0x28] sm:$0xff]
        %v857 = vld [vmem:[#allocation2 + $0x30] sm:$0xff]
        %v858 = vld [vmem:[#allocation2 + $0x38] sm:$0xff]
        %v859 = vld [vmem:[#allocation2 + $0x40] sm:$0xff]
        %v860 = vld [vmem:[#allocation2 + $0x48] sm:$0xff]
        %v861 = vld [vmem:[#allocation2 + $0x50] sm:$0xff]
        %v862 = vld [vmem:[#allocation2 + $0x58] sm:$0xff]
        %v863 = vld [vmem:[#allocation2 + $0x60] sm:$0xff]
        %v864 = vld [vmem:[#allocation2 + $0x68] sm:$0xff]
        %v865 = vld [vmem:[#allocation2 + $0x70] sm:$0xff]
        %v866 = vld [vmem:[#allocation2 + $0x78] sm:$0xff]
        %v867 = vld [vmem:[#allocation2 + $0x80] sm:$0xff]
        %v868 = vld [vmem:[#allocation2 + $0x88] sm:$0xff]
        %v869 = vld [vmem:[#allocation2 + $0x90] sm:$0xff]
        %v870 = vld [vmem:[#allocation2 + $0x98] sm:$0xff]
        %v871 = vld [vmem:[#allocation2 + $0xa0] sm:$0xff]
        %v872 = vld [vmem:[#allocation2 + $0xa8] sm:$0xff]
        %v873 = vld [vmem:[#allocation2 + $0xb0] sm:$0xff]
        %v874 = vld [vmem:[#allocation2 + $0xb8] sm:$0xff]
        %v875 = vld [vmem:[#allocation2 + $0xc0] sm:$0xff]
        %v876 = vld [vmem:[#allocation2 + $0xc8] sm:$0xff]
        %v877 = vld [vmem:[#allocation2 + $0xd0] sm:$0xff]
        %v878 = vld [vmem:[#allocation2 + $0xd8] sm:$0xff]
        %v879 = vld [vmem:[#allocation2 + $0xe0] sm:$0xff]
        %v880 = vld [vmem:[#allocation2 + $0xe8] sm:$0xff]
        %v881 = vld [vmem:[#allocation2 + $0xf0] sm:$0xff]
        %v882 = vld [vmem:[#allocation2 + $0xf8] sm:$0xff]
        %v883 = vld [vmem:[%s4] ss:$8 sm:$0x3]
        %v885 = vperm.slane %v883, 0
        %v886 = vperm.slane %v883, 1
        %v921 = vunpack.c.l.b16 %v851
        %v922 = vunpack.c.h.b16 %v851
        %v923 = vunpack.c.l.b16 %v852
        %v924 = vunpack.c.h.b16 %v852
        %v925 = vunpack.c.l.b16 %v853
        %v926 = vunpack.c.h.b16 %v853
        %v927 = vunpack.c.l.b16 %v854
        %v928 = vunpack.c.h.b16 %v854
        %v929 = vunpack.c.l.b16 %v855
        %v930 = vunpack.c.h.b16 %v855
        %v931 = vunpack.c.l.b16 %v856
        %v932 = vunpack.c.h.b16 %v856
        %v933 = vunpack.c.l.b16 %v857
        %v934 = vunpack.c.h.b16 %v857
        %v935 = vunpack.c.l.b16 %v858
        %v936 = vunpack.c.h.b16 %v858
        %v937 = vunpack.c.l.b16 %v859
        %v938 = vunpack.c.h.b16 %v859
        %v939 = vunpack.c.l.b16 %v860
        %v940 = vunpack.c.h.b16 %v860
        %v941 = vunpack.c.l.b16 %v861
        %v942 = vunpack.c.h.b16 %v861
        %v943 = vunpack.c.l.b16 %v862
        %v944 = vunpack.c.h.b16 %v862
        %v945 = vunpack.c.l.b16 %v863
        %v946 = vunpack.c.h.b16 %v863
        %v947 = vunpack.c.l.b16 %v864
        %v948 = vunpack.c.h.b16 %v864
        %v949 = vunpack.c.l.b16 %v865
        %v950 = vunpack.c.h.b16 %v865
        %v951 = vunpack.c.l.b16 %v866
        %v952 = vunpack.c.h.b16 %v866
        %v953 = vunpack.c.l.b16 %v867
        %v954 = vunpack.c.h.b16 %v867
        %v955 = vunpack.c.l.b16 %v868
        %v956 = vunpack.c.h.b16 %v868
        %v957 = vunpack.c.l.b16 %v869
        %v958 = vunpack.c.h.b16 %v869
        %v959 = vunpack.c.l.b16 %v870
        %v960 = vunpack.c.h.b16 %v870
        %v961 = vunpack.c.l.b16 %v871
        %v962 = vunpack.c.h.b16 %v871
        %v963 = vunpack.c.l.b16 %v872
        %v964 = vunpack.c.h.b16 %v872
        %v965 = vunpack.c.l.b16 %v873
        %v966 = vunpack.c.h.b16 %v873
        %v967 = vunpack.c.l.b16 %v874
        %v968 = vunpack.c.h.b16 %v874
        %v969 = vunpack.c.l.b16 %v875
        %v970 = vunpack.c.h.b16 %v875
        %v971 = vunpack.c.l.b16 %v876
        %v972 = vunpack.c.h.b16 %v876
        %v973 = vunpack.c.l.b16 %v877
        %v974 = vunpack.c.h.b16 %v877
        %v975 = vunpack.c.l.b16 %v878
        %v976 = vunpack.c.h.b16 %v878
        %v977 = vunpack.c.l.b16 %v879
        %v978 = vunpack.c.h.b16 %v879
        %v979 = vunpack.c.l.b16 %v880
        %v980 = vunpack.c.h.b16 %v880
        %v981 = vunpack.c.l.b16 %v881
        %v982 = vunpack.c.h.b16 %v881
        %v983 = vunpack.c.l.b16 %v882
        %v984 = vunpack.c.h.b16 %v882
        %v985 = vpack.c.b16 %v923, %v921
        %v986 = vpack.c.b16 %v924, %v922
        %v987 = vpack.c.b16 %v927, %v925
        %v988 = vpack.c.b16 %v928, %v926
        %v989 = vpack.c.b16 %v931, %v929
        %v990 = vpack.c.b16 %v932, %v930
        %v991 = vpack.c.b16 %v935, %v933
        %v992 = vpack.c.b16 %v936, %v934
        %v993 = vpack.c.b16 %v939, %v937
        %v994 = vpack.c.b16 %v940, %v938
        %v995 = vpack.c.b16 %v943, %v941
        %v996 = vpack.c.b16 %v944, %v942
        %v997 = vpack.c.b16 %v947, %v945
        %v998 = vpack.c.b16 %v948, %v946
        %v999 = vpack.c.b16 %v951, %v949
        %v1000 = vpack.c.b16 %v952, %v950
        %v1001 = vpack.c.b16 %v955, %v953
        %v1002 = vpack.c.b16 %v956, %v954
        %v1003 = vpack.c.b16 %v959, %v957
        %v1004 = vpack.c.b16 %v960, %v958
        %v1005 = vpack.c.b16 %v963, %v961
        %v1006 = vpack.c.b16 %v964, %v962
        %v1007 = vpack.c.b16 %v967, %v965
        %v1008 = vpack.c.b16 %v968, %v966
        %v1009 = vpack.c.b16 %v971, %v969
        %v1010 = vpack.c.b16 %v972, %v970
        %v1011 = vpack.c.b16 %v975, %v973
        %v1012 = vpack.c.b16 %v976, %v974
        %v1013 = vpack.c.b16 %v979, %v977
        %v1014 = vpack.c.b16 %v980, %v978
        %v1015 = vpack.c.b16 %v983, %v981
        %v1016 = vpack.c.b16 %v984, %v982
        %1049 = vmatpush.bf16.msra.mxu0 %v999
        %1050 = vmatpush.bf16.msra.mxu0 %v997
        %1051 = vmatpush.bf16.msra.mxu0 %v995
        %1052 = vmatpush.bf16.msra.mxu0 %v993
        %1053 = vmatpush.bf16.msra.mxu0 %v991
        %1054 = vmatpush.bf16.msra.mxu0 %v989
        %1055 = vmatpush.bf16.msra.mxu0 %v987
        %1056 = vmatpush.bf16.msra.mxu0 %v985
        %1057 = vmatmul.bf16.gmra.mxu0 %v819
        %v1058 = vpop.f32.mrf.mxu0
        %v1059 = vadd.f32 %v885, %v1058
        %v1060 = vpop.f32.mrf.mxu0
        %v1061 = vadd.f32 %v885, %v1060
        %1062 = vmatmul.bf16.gmra.mxu0 %v821
        %v1063 = vpop.f32.mrf.mxu0
        %v1064 = vadd.f32 %v885, %v1063
        %v1065 = vpop.f32.mrf.mxu0
        %v1066 = vadd.f32 %v885, %v1065
        %1067 = vmatmul.bf16.gmra.mxu0 %v823
        %v1068 = vpop.f32.mrf.mxu0
        %v1069 = vadd.f32 %v885, %v1068
        %v1070 = vpop.f32.mrf.mxu0
        %v1071 = vadd.f32 %v885, %v1070
        %1072 = vmatmul.bf16.gmra.mxu0 %v825
        %v1073 = vpop.f32.mrf.mxu0
        %v1074 = vadd.f32 %v885, %v1073
        %v1075 = vpop.f32.mrf.mxu0
        %v1076 = vadd.f32 %v885, %v1075
        %1077 = vmatmul.bf16.gmra.mxu0 %v827
        %v1078 = vpop.f32.mrf.mxu0
        %v1079 = vadd.f32 %v885, %v1078
        %v1080 = vpop.f32.mrf.mxu0
        %v1081 = vadd.f32 %v885, %v1080
        %1082 = vmatmul.bf16.gmra.mxu0 %v829
        %v1083 = vpop.f32.mrf.mxu0
        %v1084 = vadd.f32 %v885, %v1083
        %v1085 = vpop.f32.mrf.mxu0
        %v1086 = vadd.f32 %v885, %v1085
        %1087 = vmatmul.bf16.gmra.mxu0 %v831
        %v1088 = vpop.f32.mrf.mxu0
        %v1089 = vadd.f32 %v885, %v1088
        %v1090 = vpop.f32.mrf.mxu0
        %v1091 = vadd.f32 %v885, %v1090
        %1092 = vmatmul.bf16.gmra.mxu0 %v833
        %v1093 = vpop.f32.mrf.mxu0
        %v1094 = vadd.f32 %v885, %v1093
        %v1095 = vpop.f32.mrf.mxu0
        %v1096 = vadd.f32 %v885, %v1095
        %1097 = vmatmul.bf16.gmra.mxu0 %v835
        %v1098 = vpop.f32.mrf.mxu0
        %v1099 = vadd.f32 %v885, %v1098
        %v1100 = vpop.f32.mrf.mxu0
        %v1101 = vadd.f32 %v885, %v1100
        %1102 = vmatmul.bf16.gmra.mxu0 %v837
        %v1103 = vpop.f32.mrf.mxu0
        %v1104 = vadd.f32 %v885, %v1103
        %v1105 = vpop.f32.mrf.mxu0
        %v1106 = vadd.f32 %v885, %v1105
        %1107 = vmatmul.bf16.gmra.mxu0 %v839
        %v1108 = vpop.f32.mrf.mxu0
        %v1109 = vadd.f32 %v885, %v1108
        %v1110 = vpop.f32.mrf.mxu0
        %v1111 = vadd.f32 %v885, %v1110
        %1112 = vmatmul.bf16.gmra.mxu0 %v841
        %v1113 = vpop.f32.mrf.mxu0
        %v1114 = vadd.f32 %v885, %v1113
        %v1115 = vpop.f32.mrf.mxu0
        %v1116 = vadd.f32 %v885, %v1115
        %1117 = vmatmul.bf16.gmra.mxu0 %v843
        %v1118 = vpop.f32.mrf.mxu0
        %v1119 = vadd.f32 %v885, %v1118
        %v1120 = vpop.f32.mrf.mxu0
        %v1121 = vadd.f32 %v885, %v1120
        %1122 = vmatmul.bf16.gmra.mxu0 %v845
        %v1123 = vpop.f32.mrf.mxu0
        %v1124 = vadd.f32 %v885, %v1123
        %v1125 = vpop.f32.mrf.mxu0
        %v1126 = vadd.f32 %v885, %v1125
        %1127 = vmatmul.bf16.gmra.mxu0 %v847
        %v1128 = vpop.f32.mrf.mxu0
        %v1129 = vadd.f32 %v885, %v1128
        %v1130 = vpop.f32.mrf.mxu0
        %v1131 = vadd.f32 %v885, %v1130
        %1132 = vmatmul.bf16.gmra.mxu0 %v849
        %v1133 = vpop.f32.mrf.mxu0
        %v1134 = vadd.f32 %v885, %v1133
        %v1135 = vpop.f32.mrf.mxu0
        %v1136 = vadd.f32 %v885, %v1135
        %1137 = vdwg.mxu0
        %1138 = vmatpush.bf16.msra.mxu0 %v1015
        %1139 = vmatpush.bf16.msra.mxu0 %v1013
        %1140 = vmatpush.bf16.msra.mxu0 %v1011
        %1141 = vmatpush.bf16.msra.mxu0 %v1009
        %1142 = vmatpush.bf16.msra.mxu0 %v1007
        %1143 = vmatpush.bf16.msra.mxu0 %v1005
        %1144 = vmatpush.bf16.msra.mxu0 %v1003
        %1145 = vmatpush.bf16.msra.mxu0 %v1001
        %1146 = vmatmul.bf16.gmra.mxu0 %v820
        %v1147 = vpop.f32.mrf.mxu0
        %v1148 = vadd.f32 %v1059, %v1147
        %v1149 = vpop.f32.mrf.mxu0
        %v1150 = vadd.f32 %v1061, %v1149
        %1151 = vmatmul.bf16.gmra.mxu0 %v822
        %v1152 = vpop.f32.mrf.mxu0
        %v1153 = vadd.f32 %v1064, %v1152
        %v1154 = vpop.f32.mrf.mxu0
        %v1155 = vadd.f32 %v1066, %v1154
        %1156 = vmatmul.bf16.gmra.mxu0 %v824
        %v1157 = vpop.f32.mrf.mxu0
        %v1158 = vadd.f32 %v1069, %v1157
        %v1159 = vpop.f32.mrf.mxu0
        %v1160 = vadd.f32 %v1071, %v1159
        %1161 = vmatmul.bf16.gmra.mxu0 %v826
        %v1162 = vpop.f32.mrf.mxu0
        %v1163 = vadd.f32 %v1074, %v1162
        %v1164 = vpop.f32.mrf.mxu0
        %v1165 = vadd.f32 %v1076, %v1164
        %1166 = vmatmul.bf16.gmra.mxu0 %v828
        %v1167 = vpop.f32.mrf.mxu0
        %v1168 = vadd.f32 %v1079, %v1167
        %v1169 = vpop.f32.mrf.mxu0
        %v1170 = vadd.f32 %v1081, %v1169
        %1171 = vmatmul.bf16.gmra.mxu0 %v830
        %v1172 = vpop.f32.mrf.mxu0
        %v1173 = vadd.f32 %v1084, %v1172
        %v1174 = vpop.f32.mrf.mxu0
        %v1175 = vadd.f32 %v1086, %v1174
        %1176 = vmatmul.bf16.gmra.mxu0 %v832
        %v1177 = vpop.f32.mrf.mxu0
        %v1178 = vadd.f32 %v1089, %v1177
        %v1179 = vpop.f32.mrf.mxu0
        %v1180 = vadd.f32 %v1091, %v1179
        %1181 = vmatmul.bf16.gmra.mxu0 %v834
        %v1182 = vpop.f32.mrf.mxu0
        %v1183 = vadd.f32 %v1094, %v1182
        %v1184 = vpop.f32.mrf.mxu0
        %v1185 = vadd.f32 %v1096, %v1184
        %1186 = vmatmul.bf16.gmra.mxu0 %v836
        %v1187 = vpop.f32.mrf.mxu0
        %v1188 = vadd.f32 %v1099, %v1187
        %v1189 = vpop.f32.mrf.mxu0
        %v1190 = vadd.f32 %v1101, %v1189
        %1191 = vmatmul.bf16.gmra.mxu0 %v838
        %v1192 = vpop.f32.mrf.mxu0
        %v1193 = vadd.f32 %v1104, %v1192
        %v1194 = vpop.f32.mrf.mxu0
        %v1195 = vadd.f32 %v1106, %v1194
        %1196 = vmatmul.bf16.gmra.mxu0 %v840
        %v1197 = vpop.f32.mrf.mxu0
        %v1198 = vadd.f32 %v1109, %v1197
        %v1199 = vpop.f32.mrf.mxu0
        %v1200 = vadd.f32 %v1111, %v1199
        %1201 = vmatmul.bf16.gmra.mxu0 %v842
        %v1202 = vpop.f32.mrf.mxu0
        %v1203 = vadd.f32 %v1114, %v1202
        %v1204 = vpop.f32.mrf.mxu0
        %v1205 = vadd.f32 %v1116, %v1204
        %1206 = vmatmul.bf16.gmra.mxu0 %v844
        %v1207 = vpop.f32.mrf.mxu0
        %v1208 = vadd.f32 %v1119, %v1207
        %v1209 = vpop.f32.mrf.mxu0
        %v1210 = vadd.f32 %v1121, %v1209
        %1211 = vmatmul.bf16.gmra.mxu0 %v846
        %v1212 = vpop.f32.mrf.mxu0
        %v1213 = vadd.f32 %v1124, %v1212
        %v1214 = vpop.f32.mrf.mxu0
        %v1215 = vadd.f32 %v1126, %v1214
        %1216 = vmatmul.bf16.gmra.mxu0 %v848
        %v1217 = vpop.f32.mrf.mxu0
        %v1218 = vadd.f32 %v1129, %v1217
        %v1219 = vpop.f32.mrf.mxu0
        %v1220 = vadd.f32 %v1131, %v1219
        %1221 = vmatmul.bf16.gmra.mxu0 %v850
        %v1222 = vpop.f32.mrf.mxu0
        %v1223 = vadd.f32 %v1134, %v1222
        %v1224 = vpop.f32.mrf.mxu0
        %v1225 = vadd.f32 %v1136, %v1224
        %1226 = vdwg.mxu0
        %1227 = vmatpush.bf16.msra.mxu0 %v1000
        %1228 = vmatpush.bf16.msra.mxu0 %v998
        %1229 = vmatpush.bf16.msra.mxu0 %v996
        %1230 = vmatpush.bf16.msra.mxu0 %v994
        %1231 = vmatpush.bf16.msra.mxu0 %v992
        %1232 = vmatpush.bf16.msra.mxu0 %v990
        %1233 = vmatpush.bf16.msra.mxu0 %v988
        %1234 = vmatpush.bf16.msra.mxu0 %v986
        %1235 = vmatmul.bf16.gmra.mxu0 %v819
        %v1236 = vpop.f32.mrf.mxu0
        %v1237 = vadd.f32 %v886, %v1236
        %v1238 = vpop.f32.mrf.mxu0
        %v1239 = vadd.f32 %v886, %v1238
        %1240 = vmatmul.bf16.gmra.mxu0 %v821
        %v1241 = vpop.f32.mrf.mxu0
        %v1242 = vadd.f32 %v886, %v1241
        %v1243 = vpop.f32.mrf.mxu0
        %v1244 = vadd.f32 %v886, %v1243
        %1245 = vmatmul.bf16.gmra.mxu0 %v823
        %v1246 = vpop.f32.mrf.mxu0
        %v1247 = vadd.f32 %v886, %v1246
        %v1248 = vpop.f32.mrf.mxu0
        %v1249 = vadd.f32 %v886, %v1248
        %1250 = vmatmul.bf16.gmra.mxu0 %v825
        %v1251 = vpop.f32.mrf.mxu0
        %v1252 = vadd.f32 %v886, %v1251
        %v1253 = vpop.f32.mrf.mxu0
        %v1254 = vadd.f32 %v886, %v1253
        %1255 = vmatmul.bf16.gmra.mxu0 %v827
        %v1256 = vpop.f32.mrf.mxu0
        %v1257 = vadd.f32 %v886, %v1256
        %v1258 = vpop.f32.mrf.mxu0
        %v1259 = vadd.f32 %v886, %v1258
        %1260 = vmatmul.bf16.gmra.mxu0 %v829
        %v1261 = vpop.f32.mrf.mxu0
        %v1262 = vadd.f32 %v886, %v1261
        %v1263 = vpop.f32.mrf.mxu0
        %v1264 = vadd.f32 %v886, %v1263
        %1265 = vmatmul.bf16.gmra.mxu0 %v831
        %v1266 = vpop.f32.mrf.mxu0
        %v1267 = vadd.f32 %v886, %v1266
        %v1268 = vpop.f32.mrf.mxu0
        %v1269 = vadd.f32 %v886, %v1268
        %1270 = vmatmul.bf16.gmra.mxu0 %v833
        %v1271 = vpop.f32.mrf.mxu0
        %v1272 = vadd.f32 %v886, %v1271
        %v1273 = vpop.f32.mrf.mxu0
        %v1274 = vadd.f32 %v886, %v1273
        %1275 = vmatmul.bf16.gmra.mxu0 %v835
        %v1276 = vpop.f32.mrf.mxu0
        %v1277 = vadd.f32 %v886, %v1276
        %v1278 = vpop.f32.mrf.mxu0
        %v1279 = vadd.f32 %v886, %v1278
        %1280 = vmatmul.bf16.gmra.mxu0 %v837
        %v1281 = vpop.f32.mrf.mxu0
        %v1282 = vadd.f32 %v886, %v1281
        %v1283 = vpop.f32.mrf.mxu0
        %v1284 = vadd.f32 %v886, %v1283
        %1285 = vmatmul.bf16.gmra.mxu0 %v839
        %v1286 = vpop.f32.mrf.mxu0
        %v1287 = vadd.f32 %v886, %v1286
        %v1288 = vpop.f32.mrf.mxu0
        %v1289 = vadd.f32 %v886, %v1288
        %1290 = vmatmul.bf16.gmra.mxu0 %v841
        %v1291 = vpop.f32.mrf.mxu0
        %v1292 = vadd.f32 %v886, %v1291
        %v1293 = vpop.f32.mrf.mxu0
        %v1294 = vadd.f32 %v886, %v1293
        %1295 = vmatmul.bf16.gmra.mxu0 %v843
        %v1296 = vpop.f32.mrf.mxu0
        %v1297 = vadd.f32 %v886, %v1296
        %v1298 = vpop.f32.mrf.mxu0
        %v1299 = vadd.f32 %v886, %v1298
        %1300 = vmatmul.bf16.gmra.mxu0 %v845
        %v1301 = vpop.f32.mrf.mxu0
        %v1302 = vadd.f32 %v886, %v1301
        %v1303 = vpop.f32.mrf.mxu0
        %v1304 = vadd.f32 %v886, %v1303
        %1305 = vmatmul.bf16.gmra.mxu0 %v847
        %v1306 = vpop.f32.mrf.mxu0
        %v1307 = vadd.f32 %v886, %v1306
        %v1308 = vpop.f32.mrf.mxu0
        %v1309 = vadd.f32 %v886, %v1308
        %1310 = vmatmul.bf16.gmra.mxu0 %v849
        %v1311 = vpop.f32.mrf.mxu0
        %v1312 = vadd.f32 %v886, %v1311
        %v1313 = vpop.f32.mrf.mxu0
        %v1314 = vadd.f32 %v886, %v1313
        %1315 = vdwg.mxu0
        %1316 = vmatpush.bf16.msra.mxu0 %v1016
        %1317 = vmatpush.bf16.msra.mxu0 %v1014
        %1318 = vmatpush.bf16.msra.mxu0 %v1012
        %1319 = vmatpush.bf16.msra.mxu0 %v1010
        %1320 = vmatpush.bf16.msra.mxu0 %v1008
        %1321 = vmatpush.bf16.msra.mxu0 %v1006
        %1322 = vmatpush.bf16.msra.mxu0 %v1004
        %1323 = vmatpush.bf16.msra.mxu0 %v1002
        %1324 = vmatmul.bf16.gmra.mxu0 %v820
        %v1325 = vpop.f32.mrf.mxu0
        %v1326 = vadd.f32 %v1237, %v1325
        %v1327 = vpop.f32.mrf.mxu0
        %v1328 = vadd.f32 %v1239, %v1327
        %1329 = vmatmul.bf16.gmra.mxu0 %v822
        %v1330 = vpop.f32.mrf.mxu0
        %v1331 = vadd.f32 %v1242, %v1330
        %v1332 = vpop.f32.mrf.mxu0
        %v1333 = vadd.f32 %v1244, %v1332
        %1334 = vmatmul.bf16.gmra.mxu0 %v824
        %v1335 = vpop.f32.mrf.mxu0
        %v1336 = vadd.f32 %v1247, %v1335
        %v1337 = vpop.f32.mrf.mxu0
        %v1338 = vadd.f32 %v1249, %v1337
        %1339 = vmatmul.bf16.gmra.mxu0 %v826
        %v1340 = vpop.f32.mrf.mxu0
        %v1341 = vadd.f32 %v1252, %v1340
        %v1342 = vpop.f32.mrf.mxu0
        %v1343 = vadd.f32 %v1254, %v1342
        %1344 = vmatmul.bf16.gmra.mxu0 %v828
        %v1345 = vpop.f32.mrf.mxu0
        %v1346 = vadd.f32 %v1257, %v1345
        %v1347 = vpop.f32.mrf.mxu0
        %v1348 = vadd.f32 %v1259, %v1347
        %1349 = vmatmul.bf16.gmra.mxu0 %v830
        %v1350 = vpop.f32.mrf.mxu0
        %v1351 = vadd.f32 %v1262, %v1350
        %v1352 = vpop.f32.mrf.mxu0
        %v1353 = vadd.f32 %v1264, %v1352
        %1354 = vmatmul.bf16.gmra.mxu0 %v832
        %v1355 = vpop.f32.mrf.mxu0
        %v1356 = vadd.f32 %v1267, %v1355
        %v1357 = vpop.f32.mrf.mxu0
        %v1358 = vadd.f32 %v1269, %v1357
        %1359 = vmatmul.bf16.gmra.mxu0 %v834
        %v1360 = vpop.f32.mrf.mxu0
        %v1361 = vadd.f32 %v1272, %v1360
        %v1362 = vpop.f32.mrf.mxu0
        %v1363 = vadd.f32 %v1274, %v1362
        %1364 = vmatmul.bf16.gmra.mxu0 %v836
        %v1365 = vpop.f32.mrf.mxu0
        %v1366 = vadd.f32 %v1277, %v1365
        %v1367 = vpop.f32.mrf.mxu0
        %v1368 = vadd.f32 %v1279, %v1367
        %1369 = vmatmul.bf16.gmra.mxu0 %v838
        %v1370 = vpop.f32.mrf.mxu0
        %v1371 = vadd.f32 %v1282, %v1370
        %v1372 = vpop.f32.mrf.mxu0
        %v1373 = vadd.f32 %v1284, %v1372
        %1374 = vmatmul.bf16.gmra.mxu0 %v840
        %v1375 = vpop.f32.mrf.mxu0
        %v1376 = vadd.f32 %v1287, %v1375
        %v1377 = vpop.f32.mrf.mxu0
        %v1378 = vadd.f32 %v1289, %v1377
        %1379 = vmatmul.bf16.gmra.mxu0 %v842
        %v1380 = vpop.f32.mrf.mxu0
        %v1381 = vadd.f32 %v1292, %v1380
        %v1382 = vpop.f32.mrf.mxu0
        %v1383 = vadd.f32 %v1294, %v1382
        %1384 = vmatmul.bf16.gmra.mxu0 %v844
        %v1385 = vpop.f32.mrf.mxu0
        %v1386 = vadd.f32 %v1297, %v1385
        %v1387 = vpop.f32.mrf.mxu0
        %v1388 = vadd.f32 %v1299, %v1387
        %1389 = vmatmul.bf16.gmra.mxu0 %v846
        %v1390 = vpop.f32.mrf.mxu0
        %v1391 = vadd.f32 %v1302, %v1390
        %v1392 = vpop.f32.mrf.mxu0
        %v1393 = vadd.f32 %v1304, %v1392
        %1394 = vmatmul.bf16.gmra.mxu0 %v848
        %v1395 = vpop.f32.mrf.mxu0
        %v1396 = vadd.f32 %v1307, %v1395
        %v1397 = vpop.f32.mrf.mxu0
        %v1398 = vadd.f32 %v1309, %v1397
        %1399 = vmatmul.bf16.gmra.mxu0 %v850
        %v1400 = vpop.f32.mrf.mxu0
        %v1401 = vadd.f32 %v1312, %v1400
        %v1402 = vpop.f32.mrf.mxu0
        %v1403 = vadd.f32 %v1314, %v1402
        %1404 = vdwg.mxu0
        %v1405 = vmax.f32 %v1148, 0.0
        %v1406 = vmax.f32 %v1326, 0.0
        %v1407 = vmax.f32 %v1150, 0.0
        %v1408 = vmax.f32 %v1328, 0.0
        %v1409 = vmax.f32 %v1153, 0.0
        %v1410 = vmax.f32 %v1331, 0.0
        %v1411 = vmax.f32 %v1155, 0.0
        %v1412 = vmax.f32 %v1333, 0.0
        %v1413 = vmax.f32 %v1158, 0.0
        %v1414 = vmax.f32 %v1336, 0.0
        %v1415 = vmax.f32 %v1160, 0.0
        %v1416 = vmax.f32 %v1338, 0.0
        %v1417 = vmax.f32 %v1163, 0.0
        %v1418 = vmax.f32 %v1341, 0.0
        %v1419 = vmax.f32 %v1165, 0.0
        %v1420 = vmax.f32 %v1343, 0.0
        %v1421 = vmax.f32 %v1168, 0.0
        %v1422 = vmax.f32 %v1346, 0.0
        %v1423 = vmax.f32 %v1170, 0.0
        %v1424 = vmax.f32 %v1348, 0.0
        %v1425 = vmax.f32 %v1173, 0.0
        %v1426 = vmax.f32 %v1351, 0.0
        %v1427 = vmax.f32 %v1175, 0.0
        %v1428 = vmax.f32 %v1353, 0.0
        %v1429 = vmax.f32 %v1178, 0.0
        %v1430 = vmax.f32 %v1356, 0.0
        %v1431 = vmax.f32 %v1180, 0.0
        %v1432 = vmax.f32 %v1358, 0.0
        %v1433 = vmax.f32 %v1183, 0.0
        %v1434 = vmax.f32 %v1361, 0.0
        %v1435 = vmax.f32 %v1185, 0.0
        %v1436 = vmax.f32 %v1363, 0.0
        %v1437 = vmax.f32 %v1188, 0.0
        %v1438 = vmax.f32 %v1366, 0.0
        %v1439 = vmax.f32 %v1190, 0.0
        %v1440 = vmax.f32 %v1368, 0.0
        %v1441 = vmax.f32 %v1193, 0.0
        %v1442 = vmax.f32 %v1371, 0.0
        %v1443 = vmax.f32 %v1195, 0.0
        %v1444 = vmax.f32 %v1373, 0.0
        %v1445 = vmax.f32 %v1198, 0.0
        %v1446 = vmax.f32 %v1376, 0.0
        %v1447 = vmax.f32 %v1200, 0.0
        %v1448 = vmax.f32 %v1378, 0.0
        %v1449 = vmax.f32 %v1203, 0.0
        %v1450 = vmax.f32 %v1381, 0.0
        %v1451 = vmax.f32 %v1205, 0.0
        %v1452 = vmax.f32 %v1383, 0.0
        %v1453 = vmax.f32 %v1208, 0.0
        %v1454 = vmax.f32 %v1386, 0.0
        %v1455 = vmax.f32 %v1210, 0.0
        %v1456 = vmax.f32 %v1388, 0.0
        %v1457 = vmax.f32 %v1213, 0.0
        %v1458 = vmax.f32 %v1391, 0.0
        %v1459 = vmax.f32 %v1215, 0.0
        %v1460 = vmax.f32 %v1393, 0.0
        %v1461 = vmax.f32 %v1218, 0.0
        %v1462 = vmax.f32 %v1396, 0.0
        %v1463 = vmax.f32 %v1220, 0.0
        %v1464 = vmax.f32 %v1398, 0.0
        %v1465 = vmax.f32 %v1223, 0.0
        %v1466 = vmax.f32 %v1401, 0.0
        %v1467 = vmax.f32 %v1225, 0.0
        %v1468 = vmax.f32 %v1403, 0.0
        %v1469 = vpack.c.bf16 %v1407, %v1405
        %v1470 = vpack.c.bf16 %v1408, %v1406
        %v1471 = vpack.c.bf16 %v1411, %v1409
        %v1472 = vpack.c.bf16 %v1412, %v1410
        %v1473 = vpack.c.bf16 %v1415, %v1413
        %v1474 = vpack.c.bf16 %v1416, %v1414
        %v1475 = vpack.c.bf16 %v1419, %v1417
        %v1476 = vpack.c.bf16 %v1420, %v1418
        %v1477 = vpack.c.bf16 %v1423, %v1421
        %v1478 = vpack.c.bf16 %v1424, %v1422
        %v1479 = vpack.c.bf16 %v1427, %v1425
        %v1480 = vpack.c.bf16 %v1428, %v1426
        %v1481 = vpack.c.bf16 %v1431, %v1429
        %v1482 = vpack.c.bf16 %v1432, %v1430
        %v1483 = vpack.c.bf16 %v1435, %v1433
        %v1484 = vpack.c.bf16 %v1436, %v1434
        %v1485 = vpack.c.bf16 %v1439, %v1437
        %v1486 = vpack.c.bf16 %v1440, %v1438
        %v1487 = vpack.c.bf16 %v1443, %v1441
        %v1488 = vpack.c.bf16 %v1444, %v1442
        %v1489 = vpack.c.bf16 %v1447, %v1445
        %v1490 = vpack.c.bf16 %v1448, %v1446
        %v1491 = vpack.c.bf16 %v1451, %v1449
        %v1492 = vpack.c.bf16 %v1452, %v1450
        %v1493 = vpack.c.bf16 %v1455, %v1453
        %v1494 = vpack.c.bf16 %v1456, %v1454
        %v1495 = vpack.c.bf16 %v1459, %v1457
        %v1496 = vpack.c.bf16 %v1460, %v1458
        %v1497 = vpack.c.bf16 %v1463, %v1461
        %v1498 = vpack.c.bf16 %v1464, %v1462
        %v1499 = vpack.c.bf16 %v1467, %v1465
        %v1500 = vpack.c.bf16 %v1468, %v1466
        %s1501 = scalar_lea.vmem [#allocation2], 256
        %v1502 = vld [vmem:[%s1501] sm:$0xff]
        %v1503 = vld [vmem:[%s1501 + $0x8] sm:$0xff]
        %v1504 = vld [vmem:[%s1501 + $0x10] sm:$0xff]
        %v1505 = vld [vmem:[%s1501 + $0x18] sm:$0xff]
        %v1506 = vld [vmem:[%s1501 + $0x20] sm:$0xff]
        %v1507 = vld [vmem:[%s1501 + $0x28] sm:$0xff]
        %v1508 = vld [vmem:[%s1501 + $0x30] sm:$0xff]
        %v1509 = vld [vmem:[%s1501 + $0x38] sm:$0xff]
        %v1510 = vld [vmem:[%s1501 + $0x40] sm:$0xff]
        %v1511 = vld [vmem:[%s1501 + $0x48] sm:$0xff]
        %v1512 = vld [vmem:[%s1501 + $0x50] sm:$0xff]
        %v1513 = vld [vmem:[%s1501 + $0x58] sm:$0xff]
        %v1514 = vld [vmem:[%s1501 + $0x60] sm:$0xff]
        %v1515 = vld [vmem:[%s1501 + $0x68] sm:$0xff]
        %v1516 = vld [vmem:[%s1501 + $0x70] sm:$0xff]
        %v1517 = vld [vmem:[%s1501 + $0x78] sm:$0xff]
        %v1518 = vld [vmem:[%s1501 + $0x80] sm:$0xff]
        %v1519 = vld [vmem:[%s1501 + $0x88] sm:$0xff]
        %v1520 = vld [vmem:[%s1501 + $0x90] sm:$0xff]
        %v1521 = vld [vmem:[%s1501 + $0x98] sm:$0xff]
        %v1522 = vld [vmem:[%s1501 + $0xa0] sm:$0xff]
        %v1523 = vld [vmem:[%s1501 + $0xa8] sm:$0xff]
        %v1524 = vld [vmem:[%s1501 + $0xb0] sm:$0xff]
        %v1525 = vld [vmem:[%s1501 + $0xb8] sm:$0xff]
        %v1526 = vld [vmem:[%s1501 + $0xc0] sm:$0xff]
        %v1527 = vld [vmem:[%s1501 + $0xc8] sm:$0xff]
        %v1528 = vld [vmem:[%s1501 + $0xd0] sm:$0xff]
        %v1529 = vld [vmem:[%s1501 + $0xd8] sm:$0xff]
        %v1530 = vld [vmem:[%s1501 + $0xe0] sm:$0xff]
        %v1531 = vld [vmem:[%s1501 + $0xe8] sm:$0xff]
        %v1532 = vld [vmem:[%s1501 + $0xf0] sm:$0xff]
        %v1533 = vld [vmem:[%s1501 + $0xf8] sm:$0xff]
        %s1534 = scalar_lea.vmem %s4, 1
        %v1535 = vld [vmem:[%s1534] ss:$8 sm:$0x3]
        %v1537 = vperm.slane %v1535, 0
        %v1538 = vperm.slane %v1535, 1
        %v1573 = vunpack.c.l.b16 %v1502
        %v1574 = vunpack.c.h.b16 %v1502
        %v1575 = vunpack.c.l.b16 %v1503
        %v1576 = vunpack.c.h.b16 %v1503
        %v1577 = vunpack.c.l.b16 %v1504
        %v1578 = vunpack.c.h.b16 %v1504
        %v1579 = vunpack.c.l.b16 %v1505
        %v1580 = vunpack.c.h.b16 %v1505
        %v1581 = vunpack.c.l.b16 %v1506
        %v1582 = vunpack.c.h.b16 %v1506
        %v1583 = vunpack.c.l.b16 %v1507
        %v1584 = vunpack.c.h.b16 %v1507
        %v1585 = vunpack.c.l.b16 %v1508
        %v1586 = vunpack.c.h.b16 %v1508
        %v1587 = vunpack.c.l.b16 %v1509
        %v1588 = vunpack.c.h.b16 %v1509
        %v1589 = vunpack.c.l.b16 %v1510
        %v1590 = vunpack.c.h.b16 %v1510
        %v1591 = vunpack.c.l.b16 %v1511
        %v1592 = vunpack.c.h.b16 %v1511
        %v1593 = vunpack.c.l.b16 %v1512
        %v1594 = vunpack.c.h.b16 %v1512
        %v1595 = vunpack.c.l.b16 %v1513
        %v1596 = vunpack.c.h.b16 %v1513
        %v1597 = vunpack.c.l.b16 %v1514
        %v1598 = vunpack.c.h.b16 %v1514
        %v1599 = vunpack.c.l.b16 %v1515
        %v1600 = vunpack.c.h.b16 %v1515
        %v1601 = vunpack.c.l.b16 %v1516
        %v1602 = vunpack.c.h.b16 %v1516
        %v1603 = vunpack.c.l.b16 %v1517
        %v1604 = vunpack.c.h.b16 %v1517
        %v1605 = vunpack.c.l.b16 %v1518
        %v1606 = vunpack.c.h.b16 %v1518
        %v1607 = vunpack.c.l.b16 %v1519
        %v1608 = vunpack.c.h.b16 %v1519
        %v1609 = vunpack.c.l.b16 %v1520
        %v1610 = vunpack.c.h.b16 %v1520
        %v1611 = vunpack.c.l.b16 %v1521
        %v1612 = vunpack.c.h.b16 %v1521
        %v1613 = vunpack.c.l.b16 %v1522
        %v1614 = vunpack.c.h.b16 %v1522
        %v1615 = vunpack.c.l.b16 %v1523
        %v1616 = vunpack.c.h.b16 %v1523
        %v1617 = vunpack.c.l.b16 %v1524
        %v1618 = vunpack.c.h.b16 %v1524
        %v1619 = vunpack.c.l.b16 %v1525
        %v1620 = vunpack.c.h.b16 %v1525
        %v1621 = vunpack.c.l.b16 %v1526
        %v1622 = vunpack.c.h.b16 %v1526
        %v1623 = vunpack.c.l.b16 %v1527
        %v1624 = vunpack.c.h.b16 %v1527
        %v1625 = vunpack.c.l.b16 %v1528
        %v1626 = vunpack.c.h.b16 %v1528
        %v1627 = vunpack.c.l.b16 %v1529
        %v1628 = vunpack.c.h.b16 %v1529
        %v1629 = vunpack.c.l.b16 %v1530
        %v1630 = vunpack.c.h.b16 %v1530
        %v1631 = vunpack.c.l.b16 %v1531
        %v1632 = vunpack.c.h.b16 %v1531
        %v1633 = vunpack.c.l.b16 %v1532
        %v1634 = vunpack.c.h.b16 %v1532
        %v1635 = vunpack.c.l.b16 %v1533
        %v1636 = vunpack.c.h.b16 %v1533
        %v1637 = vpack.c.b16 %v1575, %v1573
        %v1638 = vpack.c.b16 %v1576, %v1574
        %v1639 = vpack.c.b16 %v1579, %v1577
        %v1640 = vpack.c.b16 %v1580, %v1578
        %v1641 = vpack.c.b16 %v1583, %v1581
        %v1642 = vpack.c.b16 %v1584, %v1582
        %v1643 = vpack.c.b16 %v1587, %v1585
        %v1644 = vpack.c.b16 %v1588, %v1586
        %v1645 = vpack.c.b16 %v1591, %v1589
        %v1646 = vpack.c.b16 %v1592, %v1590
        %v1647 = vpack.c.b16 %v1595, %v1593
        %v1648 = vpack.c.b16 %v1596, %v1594
        %v1649 = vpack.c.b16 %v1599, %v1597
        %v1650 = vpack.c.b16 %v1600, %v1598
        %v1651 = vpack.c.b16 %v1603, %v1601
        %v1652 = vpack.c.b16 %v1604, %v1602
        %v1653 = vpack.c.b16 %v1607, %v1605
        %v1654 = vpack.c.b16 %v1608, %v1606
        %v1655 = vpack.c.b16 %v1611, %v1609
        %v1656 = vpack.c.b16 %v1612, %v1610
        %v1657 = vpack.c.b16 %v1615, %v1613
        %v1658 = vpack.c.b16 %v1616, %v1614
        %v1659 = vpack.c.b16 %v1619, %v1617
        %v1660 = vpack.c.b16 %v1620, %v1618
        %v1661 = vpack.c.b16 %v1623, %v1621
        %v1662 = vpack.c.b16 %v1624, %v1622
        %v1663 = vpack.c.b16 %v1627, %v1625
        %v1664 = vpack.c.b16 %v1628, %v1626
        %v1665 = vpack.c.b16 %v1631, %v1629
        %v1666 = vpack.c.b16 %v1632, %v1630
        %v1667 = vpack.c.b16 %v1635, %v1633
        %v1668 = vpack.c.b16 %v1636, %v1634
        %1701 = vmatpush.bf16.msra.mxu0 %v1651
        %1702 = vmatpush.bf16.msra.mxu0 %v1649
        %1703 = vmatpush.bf16.msra.mxu0 %v1647
        %1704 = vmatpush.bf16.msra.mxu0 %v1645
        %1705 = vmatpush.bf16.msra.mxu0 %v1643
        %1706 = vmatpush.bf16.msra.mxu0 %v1641
        %1707 = vmatpush.bf16.msra.mxu0 %v1639
        %1708 = vmatpush.bf16.msra.mxu0 %v1637
        %1709 = vmatmul.bf16.gmra.mxu0 %v1469
        %v1710 = vpop.f32.mrf.mxu0
        %v1711 = vadd.f32 %v1537, %v1710
        %v1712 = vpop.f32.mrf.mxu0
        %v1713 = vadd.f32 %v1537, %v1712
        %1714 = vmatmul.bf16.gmra.mxu0 %v1471
        %v1715 = vpop.f32.mrf.mxu0
        %v1716 = vadd.f32 %v1537, %v1715
        %v1717 = vpop.f32.mrf.mxu0
        %v1718 = vadd.f32 %v1537, %v1717
        %1719 = vmatmul.bf16.gmra.mxu0 %v1473
        %v1720 = vpop.f32.mrf.mxu0
        %v1721 = vadd.f32 %v1537, %v1720
        %v1722 = vpop.f32.mrf.mxu0
        %v1723 = vadd.f32 %v1537, %v1722
        %1724 = vmatmul.bf16.gmra.mxu0 %v1475
        %v1725 = vpop.f32.mrf.mxu0
        %v1726 = vadd.f32 %v1537, %v1725
        %v1727 = vpop.f32.mrf.mxu0
        %v1728 = vadd.f32 %v1537, %v1727
        %1729 = vmatmul.bf16.gmra.mxu0 %v1477
        %v1730 = vpop.f32.mrf.mxu0
        %v1731 = vadd.f32 %v1537, %v1730
        %v1732 = vpop.f32.mrf.mxu0
        %v1733 = vadd.f32 %v1537, %v1732
        %1734 = vmatmul.bf16.gmra.mxu0 %v1479
        %v1735 = vpop.f32.mrf.mxu0
        %v1736 = vadd.f32 %v1537, %v1735
        %v1737 = vpop.f32.mrf.mxu0
        %v1738 = vadd.f32 %v1537, %v1737
        %1739 = vmatmul.bf16.gmra.mxu0 %v1481
        %v1740 = vpop.f32.mrf.mxu0
        %v1741 = vadd.f32 %v1537, %v1740
        %v1742 = vpop.f32.mrf.mxu0
        %v1743 = vadd.f32 %v1537, %v1742
        %1744 = vmatmul.bf16.gmra.mxu0 %v1483
        %v1745 = vpop.f32.mrf.mxu0
        %v1746 = vadd.f32 %v1537, %v1745
        %v1747 = vpop.f32.mrf.mxu0
        %v1748 = vadd.f32 %v1537, %v1747
        %1749 = vmatmul.bf16.gmra.mxu0 %v1485
        %v1750 = vpop.f32.mrf.mxu0
        %v1751 = vadd.f32 %v1537, %v1750
        %v1752 = vpop.f32.mrf.mxu0
        %v1753 = vadd.f32 %v1537, %v1752
        %1754 = vmatmul.bf16.gmra.mxu0 %v1487
        %v1755 = vpop.f32.mrf.mxu0
        %v1756 = vadd.f32 %v1537, %v1755
        %v1757 = vpop.f32.mrf.mxu0
        %v1758 = vadd.f32 %v1537, %v1757
        %1759 = vmatmul.bf16.gmra.mxu0 %v1489
        %v1760 = vpop.f32.mrf.mxu0
        %v1761 = vadd.f32 %v1537, %v1760
        %v1762 = vpop.f32.mrf.mxu0
        %v1763 = vadd.f32 %v1537, %v1762
        %1764 = vmatmul.bf16.gmra.mxu0 %v1491
        %v1765 = vpop.f32.mrf.mxu0
        %v1766 = vadd.f32 %v1537, %v1765
        %v1767 = vpop.f32.mrf.mxu0
        %v1768 = vadd.f32 %v1537, %v1767
        %1769 = vmatmul.bf16.gmra.mxu0 %v1493
        %v1770 = vpop.f32.mrf.mxu0
        %v1771 = vadd.f32 %v1537, %v1770
        %v1772 = vpop.f32.mrf.mxu0
        %v1773 = vadd.f32 %v1537, %v1772
        %1774 = vmatmul.bf16.gmra.mxu0 %v1495
        %v1775 = vpop.f32.mrf.mxu0
        %v1776 = vadd.f32 %v1537, %v1775
        %v1777 = vpop.f32.mrf.mxu0
        %v1778 = vadd.f32 %v1537, %v1777
        %1779 = vmatmul.bf16.gmra.mxu0 %v1497
        %v1780 = vpop.f32.mrf.mxu0
        %v1781 = vadd.f32 %v1537, %v1780
        %v1782 = vpop.f32.mrf.mxu0
        %v1783 = vadd.f32 %v1537, %v1782
        %1784 = vmatmul.bf16.gmra.mxu0 %v1499
        %v1785 = vpop.f32.mrf.mxu0
        %v1786 = vadd.f32 %v1537, %v1785
        %v1787 = vpop.f32.mrf.mxu0
        %v1788 = vadd.f32 %v1537, %v1787
        %1789 = vdwg.mxu0
        %1790 = vmatpush.bf16.msra.mxu0 %v1667
        %1791 = vmatpush.bf16.msra.mxu0 %v1665
        %1792 = vmatpush.bf16.msra.mxu0 %v1663
        %1793 = vmatpush.bf16.msra.mxu0 %v1661
        %1794 = vmatpush.bf16.msra.mxu0 %v1659
        %1795 = vmatpush.bf16.msra.mxu0 %v1657
        %1796 = vmatpush.bf16.msra.mxu0 %v1655
        %1797 = vmatpush.bf16.msra.mxu0 %v1653
        %1798 = vmatmul.bf16.gmra.mxu0 %v1470
        %v1799 = vpop.f32.mrf.mxu0
        %v1800 = vadd.f32 %v1711, %v1799
        %v1801 = vpop.f32.mrf.mxu0
        %v1802 = vadd.f32 %v1713, %v1801
        %1803 = vmatmul.bf16.gmra.mxu0 %v1472
        %v1804 = vpop.f32.mrf.mxu0
        %v1805 = vadd.f32 %v1716, %v1804
        %v1806 = vpop.f32.mrf.mxu0
        %v1807 = vadd.f32 %v1718, %v1806
        %1808 = vmatmul.bf16.gmra.mxu0 %v1474
        %v1809 = vpop.f32.mrf.mxu0
        %v1810 = vadd.f32 %v1721, %v1809
        %v1811 = vpop.f32.mrf.mxu0
        %v1812 = vadd.f32 %v1723, %v1811
        %1813 = vmatmul.bf16.gmra.mxu0 %v1476
        %v1814 = vpop.f32.mrf.mxu0
        %v1815 = vadd.f32 %v1726, %v1814
        %v1816 = vpop.f32.mrf.mxu0
        %v1817 = vadd.f32 %v1728, %v1816
        %1818 = vmatmul.bf16.gmra.mxu0 %v1478
        %v1819 = vpop.f32.mrf.mxu0
        %v1820 = vadd.f32 %v1731, %v1819
        %v1821 = vpop.f32.mrf.mxu0
        %v1822 = vadd.f32 %v1733, %v1821
        %1823 = vmatmul.bf16.gmra.mxu0 %v1480
        %v1824 = vpop.f32.mrf.mxu0
        %v1825 = vadd.f32 %v1736, %v1824
        %v1826 = vpop.f32.mrf.mxu0
        %v1827 = vadd.f32 %v1738, %v1826
        %1828 = vmatmul.bf16.gmra.mxu0 %v1482
        %v1829 = vpop.f32.mrf.mxu0
        %v1830 = vadd.f32 %v1741, %v1829
        %v1831 = vpop.f32.mrf.mxu0
        %v1832 = vadd.f32 %v1743, %v1831
        %1833 = vmatmul.bf16.gmra.mxu0 %v1484
        %v1834 = vpop.f32.mrf.mxu0
        %v1835 = vadd.f32 %v1746, %v1834
        %v1836 = vpop.f32.mrf.mxu0
        %v1837 = vadd.f32 %v1748, %v1836
        %1838 = vmatmul.bf16.gmra.mxu0 %v1486
        %v1839 = vpop.f32.mrf.mxu0
        %v1840 = vadd.f32 %v1751, %v1839
        %v1841 = vpop.f32.mrf.mxu0
        %v1842 = vadd.f32 %v1753, %v1841
        %1843 = vmatmul.bf16.gmra.mxu0 %v1488
        %v1844 = vpop.f32.mrf.mxu0
        %v1845 = vadd.f32 %v1756, %v1844
        %v1846 = vpop.f32.mrf.mxu0
        %v1847 = vadd.f32 %v1758, %v1846
        %1848 = vmatmul.bf16.gmra.mxu0 %v1490
        %v1849 = vpop.f32.mrf.mxu0
        %v1850 = vadd.f32 %v1761, %v1849
        %v1851 = vpop.f32.mrf.mxu0
        %v1852 = vadd.f32 %v1763, %v1851
        %1853 = vmatmul.bf16.gmra.mxu0 %v1492
        %v1854 = vpop.f32.mrf.mxu0
        %v1855 = vadd.f32 %v1766, %v1854
        %v1856 = vpop.f32.mrf.mxu0
        %v1857 = vadd.f32 %v1768, %v1856
        %1858 = vmatmul.bf16.gmra.mxu0 %v1494
        %v1859 = vpop.f32.mrf.mxu0
        %v1860 = vadd.f32 %v1771, %v1859
        %v1861 = vpop.f32.mrf.mxu0
        %v1862 = vadd.f32 %v1773, %v1861
        %1863 = vmatmul.bf16.gmra.mxu0 %v1496
        %v1864 = vpop.f32.mrf.mxu0
        %v1865 = vadd.f32 %v1776, %v1864
        %v1866 = vpop.f32.mrf.mxu0
        %v1867 = vadd.f32 %v1778, %v1866
        %1868 = vmatmul.bf16.gmra.mxu0 %v1498
        %v1869 = vpop.f32.mrf.mxu0
        %v1870 = vadd.f32 %v1781, %v1869
        %v1871 = vpop.f32.mrf.mxu0
        %v1872 = vadd.f32 %v1783, %v1871
        %1873 = vmatmul.bf16.gmra.mxu0 %v1500
        %v1874 = vpop.f32.mrf.mxu0
        %v1875 = vadd.f32 %v1786, %v1874
        %v1876 = vpop.f32.mrf.mxu0
        %v1877 = vadd.f32 %v1788, %v1876
        %1878 = vdwg.mxu0
        %1879 = vmatpush.bf16.msra.mxu0 %v1652
        %1880 = vmatpush.bf16.msra.mxu0 %v1650
        %1881 = vmatpush.bf16.msra.mxu0 %v1648
        %1882 = vmatpush.bf16.msra.mxu0 %v1646
        %1883 = vmatpush.bf16.msra.mxu0 %v1644
        %1884 = vmatpush.bf16.msra.mxu0 %v1642
        %1885 = vmatpush.bf16.msra.mxu0 %v1640
        %1886 = vmatpush.bf16.msra.mxu0 %v1638
        %1887 = vmatmul.bf16.gmra.mxu0 %v1469
        %v1888 = vpop.f32.mrf.mxu0
        %v1889 = vadd.f32 %v1538, %v1888
        %v1890 = vpop.f32.mrf.mxu0
        %v1891 = vadd.f32 %v1538, %v1890
        %1892 = vmatmul.bf16.gmra.mxu0 %v1471
        %v1893 = vpop.f32.mrf.mxu0
        %v1894 = vadd.f32 %v1538, %v1893
        %v1895 = vpop.f32.mrf.mxu0
        %v1896 = vadd.f32 %v1538, %v1895
        %1897 = vmatmul.bf16.gmra.mxu0 %v1473
        %v1898 = vpop.f32.mrf.mxu0
        %v1899 = vadd.f32 %v1538, %v1898
        %v1900 = vpop.f32.mrf.mxu0
        %v1901 = vadd.f32 %v1538, %v1900
        %1902 = vmatmul.bf16.gmra.mxu0 %v1475
        %v1903 = vpop.f32.mrf.mxu0
        %v1904 = vadd.f32 %v1538, %v1903
        %v1905 = vpop.f32.mrf.mxu0
        %v1906 = vadd.f32 %v1538, %v1905
        %1907 = vmatmul.bf16.gmra.mxu0 %v1477
        %v1908 = vpop.f32.mrf.mxu0
        %v1909 = vadd.f32 %v1538, %v1908
        %v1910 = vpop.f32.mrf.mxu0
        %v1911 = vadd.f32 %v1538, %v1910
        %1912 = vmatmul.bf16.gmra.mxu0 %v1479
        %v1913 = vpop.f32.mrf.mxu0
        %v1914 = vadd.f32 %v1538, %v1913
        %v1915 = vpop.f32.mrf.mxu0
        %v1916 = vadd.f32 %v1538, %v1915
        %1917 = vmatmul.bf16.gmra.mxu0 %v1481
        %v1918 = vpop.f32.mrf.mxu0
        %v1919 = vadd.f32 %v1538, %v1918
        %v1920 = vpop.f32.mrf.mxu0
        %v1921 = vadd.f32 %v1538, %v1920
        %1922 = vmatmul.bf16.gmra.mxu0 %v1483
        %v1923 = vpop.f32.mrf.mxu0
        %v1924 = vadd.f32 %v1538, %v1923
        %v1925 = vpop.f32.mrf.mxu0
        %v1926 = vadd.f32 %v1538, %v1925
        %1927 = vmatmul.bf16.gmra.mxu0 %v1485
        %v1928 = vpop.f32.mrf.mxu0
        %v1929 = vadd.f32 %v1538, %v1928
        %v1930 = vpop.f32.mrf.mxu0
        %v1931 = vadd.f32 %v1538, %v1930
        %1932 = vmatmul.bf16.gmra.mxu0 %v1487
        %v1933 = vpop.f32.mrf.mxu0
        %v1934 = vadd.f32 %v1538, %v1933
        %v1935 = vpop.f32.mrf.mxu0
        %v1936 = vadd.f32 %v1538, %v1935
        %1937 = vmatmul.bf16.gmra.mxu0 %v1489
        %v1938 = vpop.f32.mrf.mxu0
        %v1939 = vadd.f32 %v1538, %v1938
        %v1940 = vpop.f32.mrf.mxu0
        %v1941 = vadd.f32 %v1538, %v1940
        %1942 = vmatmul.bf16.gmra.mxu0 %v1491
        %v1943 = vpop.f32.mrf.mxu0
        %v1944 = vadd.f32 %v1538, %v1943
        %v1945 = vpop.f32.mrf.mxu0
        %v1946 = vadd.f32 %v1538, %v1945
        %1947 = vmatmul.bf16.gmra.mxu0 %v1493
        %v1948 = vpop.f32.mrf.mxu0
        %v1949 = vadd.f32 %v1538, %v1948
        %v1950 = vpop.f32.mrf.mxu0
        %v1951 = vadd.f32 %v1538, %v1950
        %1952 = vmatmul.bf16.gmra.mxu0 %v1495
        %v1953 = vpop.f32.mrf.mxu0
        %v1954 = vadd.f32 %v1538, %v1953
        %v1955 = vpop.f32.mrf.mxu0
        %v1956 = vadd.f32 %v1538, %v1955
        %1957 = vmatmul.bf16.gmra.mxu0 %v1497
        %v1958 = vpop.f32.mrf.mxu0
        %v1959 = vadd.f32 %v1538, %v1958
        %v1960 = vpop.f32.mrf.mxu0
        %v1961 = vadd.f32 %v1538, %v1960
        %1962 = vmatmul.bf16.gmra.mxu0 %v1499
        %v1963 = vpop.f32.mrf.mxu0
        %v1964 = vadd.f32 %v1538, %v1963
        %v1965 = vpop.f32.mrf.mxu0
        %v1966 = vadd.f32 %v1538, %v1965
        %1967 = vdwg.mxu0
        %1968 = vmatpush.bf16.msra.mxu0 %v1668
        %1969 = vmatpush.bf16.msra.mxu0 %v1666
        %1970 = vmatpush.bf16.msra.mxu0 %v1664
        %1971 = vmatpush.bf16.msra.mxu0 %v1662
        %1972 = vmatpush.bf16.msra.mxu0 %v1660
        %1973 = vmatpush.bf16.msra.mxu0 %v1658
        %1974 = vmatpush.bf16.msra.mxu0 %v1656
        %1975 = vmatpush.bf16.msra.mxu0 %v1654
        %1976 = vmatmul.bf16.gmra.mxu0 %v1470
        %v1977 = vpop.f32.mrf.mxu0
        %v1978 = vadd.f32 %v1889, %v1977
        %v1979 = vpop.f32.mrf.mxu0
        %v1980 = vadd.f32 %v1891, %v1979
        %1981 = vmatmul.bf16.gmra.mxu0 %v1472
        %v1982 = vpop.f32.mrf.mxu0
        %v1983 = vadd.f32 %v1894, %v1982
        %v1984 = vpop.f32.mrf.mxu0
        %v1985 = vadd.f32 %v1896, %v1984
        %1986 = vmatmul.bf16.gmra.mxu0 %v1474
        %v1987 = vpop.f32.mrf.mxu0
        %v1988 = vadd.f32 %v1899, %v1987
        %v1989 = vpop.f32.mrf.mxu0
        %v1990 = vadd.f32 %v1901, %v1989
        %1991 = vmatmul.bf16.gmra.mxu0 %v1476
        %v1992 = vpop.f32.mrf.mxu0
        %v1993 = vadd.f32 %v1904, %v1992
        %v1994 = vpop.f32.mrf.mxu0
        %v1995 = vadd.f32 %v1906, %v1994
        %1996 = vmatmul.bf16.gmra.mxu0 %v1478
        %v1997 = vpop.f32.mrf.mxu0
        %v1998 = vadd.f32 %v1909, %v1997
        %v1999 = vpop.f32.mrf.mxu0
        %v2000 = vadd.f32 %v1911, %v1999
        %2001 = vmatmul.bf16.gmra.mxu0 %v1480
        %v2002 = vpop.f32.mrf.mxu0
        %v2003 = vadd.f32 %v1914, %v2002
        %v2004 = vpop.f32.mrf.mxu0
        %v2005 = vadd.f32 %v1916, %v2004
        %2006 = vmatmul.bf16.gmra.mxu0 %v1482
        %v2007 = vpop.f32.mrf.mxu0
        %v2008 = vadd.f32 %v1919, %v2007
        %v2009 = vpop.f32.mrf.mxu0
        %v2010 = vadd.f32 %v1921, %v2009
        %2011 = vmatmul.bf16.gmra.mxu0 %v1484
        %v2012 = vpop.f32.mrf.mxu0
        %v2013 = vadd.f32 %v1924, %v2012
        %v2014 = vpop.f32.mrf.mxu0
        %v2015 = vadd.f32 %v1926, %v2014
        %2016 = vmatmul.bf16.gmra.mxu0 %v1486
        %v2017 = vpop.f32.mrf.mxu0
        %v2018 = vadd.f32 %v1929, %v2017
        %v2019 = vpop.f32.mrf.mxu0
        %v2020 = vadd.f32 %v1931, %v2019
        %2021 = vmatmul.bf16.gmra.mxu0 %v1488
        %v2022 = vpop.f32.mrf.mxu0
        %v2023 = vadd.f32 %v1934, %v2022
        %v2024 = vpop.f32.mrf.mxu0
        %v2025 = vadd.f32 %v1936, %v2024
        %2026 = vmatmul.bf16.gmra.mxu0 %v1490
        %v2027 = vpop.f32.mrf.mxu0
        %v2028 = vadd.f32 %v1939, %v2027
        %v2029 = vpop.f32.mrf.mxu0
        %v2030 = vadd.f32 %v1941, %v2029
        %2031 = vmatmul.bf16.gmra.mxu0 %v1492
        %v2032 = vpop.f32.mrf.mxu0
        %v2033 = vadd.f32 %v1944, %v2032
        %v2034 = vpop.f32.mrf.mxu0
        %v2035 = vadd.f32 %v1946, %v2034
        %2036 = vmatmul.bf16.gmra.mxu0 %v1494
        %v2037 = vpop.f32.mrf.mxu0
        %v2038 = vadd.f32 %v1949, %v2037
        %v2039 = vpop.f32.mrf.mxu0
        %v2040 = vadd.f32 %v1951, %v2039
        %2041 = vmatmul.bf16.gmra.mxu0 %v1496
        %v2042 = vpop.f32.mrf.mxu0
        %v2043 = vadd.f32 %v1954, %v2042
        %v2044 = vpop.f32.mrf.mxu0
        %v2045 = vadd.f32 %v1956, %v2044
        %2046 = vmatmul.bf16.gmra.mxu0 %v1498
        %v2047 = vpop.f32.mrf.mxu0
        %v2048 = vadd.f32 %v1959, %v2047
        %v2049 = vpop.f32.mrf.mxu0
        %v2050 = vadd.f32 %v1961, %v2049
        %2051 = vmatmul.bf16.gmra.mxu0 %v1500
        %v2052 = vpop.f32.mrf.mxu0
        %v2053 = vadd.f32 %v1964, %v2052
        %v2054 = vpop.f32.mrf.mxu0
        %v2055 = vadd.f32 %v1966, %v2054
        %2056 = vdwg.mxu0
        %v2057 = vmax.f32 %v1800, 0.0
        %v2058 = vmax.f32 %v1978, 0.0
        %v2059 = vmax.f32 %v1802, 0.0
        %v2060 = vmax.f32 %v1980, 0.0
        %v2061 = vmax.f32 %v1805, 0.0
        %v2062 = vmax.f32 %v1983, 0.0
        %v2063 = vmax.f32 %v1807, 0.0
        %v2064 = vmax.f32 %v1985, 0.0
        %v2065 = vmax.f32 %v1810, 0.0
        %v2066 = vmax.f32 %v1988, 0.0
        %v2067 = vmax.f32 %v1812, 0.0
        %v2068 = vmax.f32 %v1990, 0.0
        %v2069 = vmax.f32 %v1815, 0.0
        %v2070 = vmax.f32 %v1993, 0.0
        %v2071 = vmax.f32 %v1817, 0.0
        %v2072 = vmax.f32 %v1995, 0.0
        %v2073 = vmax.f32 %v1820, 0.0
        %v2074 = vmax.f32 %v1998, 0.0
        %v2075 = vmax.f32 %v1822, 0.0
        %v2076 = vmax.f32 %v2000, 0.0
        %v2077 = vmax.f32 %v1825, 0.0
        %v2078 = vmax.f32 %v2003, 0.0
        %v2079 = vmax.f32 %v1827, 0.0
        %v2080 = vmax.f32 %v2005, 0.0
        %v2081 = vmax.f32 %v1830, 0.0
        %v2082 = vmax.f32 %v2008, 0.0
        %v2083 = vmax.f32 %v1832, 0.0
        %v2084 = vmax.f32 %v2010, 0.0
        %v2085 = vmax.f32 %v1835, 0.0
        %v2086 = vmax.f32 %v2013, 0.0
        %v2087 = vmax.f32 %v1837, 0.0
        %v2088 = vmax.f32 %v2015, 0.0
        %v2089 = vmax.f32 %v1840, 0.0
        %v2090 = vmax.f32 %v2018, 0.0
        %v2091 = vmax.f32 %v1842, 0.0
        %v2092 = vmax.f32 %v2020, 0.0
        %v2093 = vmax.f32 %v1845, 0.0
        %v2094 = vmax.f32 %v2023, 0.0
        %v2095 = vmax.f32 %v1847, 0.0
        %v2096 = vmax.f32 %v2025, 0.0
        %v2097 = vmax.f32 %v1850, 0.0
        %v2098 = vmax.f32 %v2028, 0.0
        %v2099 = vmax.f32 %v1852, 0.0
        %v2100 = vmax.f32 %v2030, 0.0
        %v2101 = vmax.f32 %v1855, 0.0
        %v2102 = vmax.f32 %v2033, 0.0
        %v2103 = vmax.f32 %v1857, 0.0
        %v2104 = vmax.f32 %v2035, 0.0
        %v2105 = vmax.f32 %v1860, 0.0
        %v2106 = vmax.f32 %v2038, 0.0
        %v2107 = vmax.f32 %v1862, 0.0
        %v2108 = vmax.f32 %v2040, 0.0
        %v2109 = vmax.f32 %v1865, 0.0
        %v2110 = vmax.f32 %v2043, 0.0
        %v2111 = vmax.f32 %v1867, 0.0
        %v2112 = vmax.f32 %v2045, 0.0
        %v2113 = vmax.f32 %v1870, 0.0
        %v2114 = vmax.f32 %v2048, 0.0
        %v2115 = vmax.f32 %v1872, 0.0
        %v2116 = vmax.f32 %v2050, 0.0
        %v2117 = vmax.f32 %v1875, 0.0
        %v2118 = vmax.f32 %v2053, 0.0
        %v2119 = vmax.f32 %v1877, 0.0
        %v2120 = vmax.f32 %v2055, 0.0
        %v2121 = vpack.c.bf16 %v2059, %v2057
        %v2122 = vpack.c.bf16 %v2060, %v2058
        %v2123 = vpack.c.bf16 %v2063, %v2061
        %v2124 = vpack.c.bf16 %v2064, %v2062
        %v2125 = vpack.c.bf16 %v2067, %v2065
        %v2126 = vpack.c.bf16 %v2068, %v2066
        %v2127 = vpack.c.bf16 %v2071, %v2069
        %v2128 = vpack.c.bf16 %v2072, %v2070
        %v2129 = vpack.c.bf16 %v2075, %v2073
        %v2130 = vpack.c.bf16 %v2076, %v2074
        %v2131 = vpack.c.bf16 %v2079, %v2077
        %v2132 = vpack.c.bf16 %v2080, %v2078
        %v2133 = vpack.c.bf16 %v2083, %v2081
        %v2134 = vpack.c.bf16 %v2084, %v2082
        %v2135 = vpack.c.bf16 %v2087, %v2085
        %v2136 = vpack.c.bf16 %v2088, %v2086
        %v2137 = vpack.c.bf16 %v2091, %v2089
        %v2138 = vpack.c.bf16 %v2092, %v2090
        %v2139 = vpack.c.bf16 %v2095, %v2093
        %v2140 = vpack.c.bf16 %v2096, %v2094
        %v2141 = vpack.c.bf16 %v2099, %v2097
        %v2142 = vpack.c.bf16 %v2100, %v2098
        %v2143 = vpack.c.bf16 %v2103, %v2101
        %v2144 = vpack.c.bf16 %v2104, %v2102
        %v2145 = vpack.c.bf16 %v2107, %v2105
        %v2146 = vpack.c.bf16 %v2108, %v2106
        %v2147 = vpack.c.bf16 %v2111, %v2109
        %v2148 = vpack.c.bf16 %v2112, %v2110
        %v2149 = vpack.c.bf16 %v2115, %v2113
        %v2150 = vpack.c.bf16 %v2116, %v2114
        %v2151 = vpack.c.bf16 %v2119, %v2117
        %v2152 = vpack.c.bf16 %v2120, %v2118
        %s2153 = scalar_lea.vmem [#allocation2], 512
        %v2154 = vld [vmem:[%s2153] sm:$0xff]
        %v2155 = vld [vmem:[%s2153 + $0x8] sm:$0xff]
        %v2156 = vld [vmem:[%s2153 + $0x10] sm:$0xff]
        %v2157 = vld [vmem:[%s2153 + $0x18] sm:$0xff]
        %v2158 = vld [vmem:[%s2153 + $0x20] sm:$0xff]
        %v2159 = vld [vmem:[%s2153 + $0x28] sm:$0xff]
        %v2160 = vld [vmem:[%s2153 + $0x30] sm:$0xff]
        %v2161 = vld [vmem:[%s2153 + $0x38] sm:$0xff]
        %v2162 = vld [vmem:[%s2153 + $0x40] sm:$0xff]
        %v2163 = vld [vmem:[%s2153 + $0x48] sm:$0xff]
        %v2164 = vld [vmem:[%s2153 + $0x50] sm:$0xff]
        %v2165 = vld [vmem:[%s2153 + $0x58] sm:$0xff]
        %v2166 = vld [vmem:[%s2153 + $0x60] sm:$0xff]
        %v2167 = vld [vmem:[%s2153 + $0x68] sm:$0xff]
        %v2168 = vld [vmem:[%s2153 + $0x70] sm:$0xff]
        %v2169 = vld [vmem:[%s2153 + $0x78] sm:$0xff]
        %v2170 = vld [vmem:[%s2153 + $0x80] sm:$0xff]
        %v2171 = vld [vmem:[%s2153 + $0x88] sm:$0xff]
        %v2172 = vld [vmem:[%s2153 + $0x90] sm:$0xff]
        %v2173 = vld [vmem:[%s2153 + $0x98] sm:$0xff]
        %v2174 = vld [vmem:[%s2153 + $0xa0] sm:$0xff]
        %v2175 = vld [vmem:[%s2153 + $0xa8] sm:$0xff]
        %v2176 = vld [vmem:[%s2153 + $0xb0] sm:$0xff]
        %v2177 = vld [vmem:[%s2153 + $0xb8] sm:$0xff]
        %v2178 = vld [vmem:[%s2153 + $0xc0] sm:$0xff]
        %v2179 = vld [vmem:[%s2153 + $0xc8] sm:$0xff]
        %v2180 = vld [vmem:[%s2153 + $0xd0] sm:$0xff]
        %v2181 = vld [vmem:[%s2153 + $0xd8] sm:$0xff]
        %v2182 = vld [vmem:[%s2153 + $0xe0] sm:$0xff]
        %v2183 = vld [vmem:[%s2153 + $0xe8] sm:$0xff]
        %v2184 = vld [vmem:[%s2153 + $0xf0] sm:$0xff]
        %v2185 = vld [vmem:[%s2153 + $0xf8] sm:$0xff]
        %s2186 = scalar_lea.vmem %s4, 2
        %v2187 = vld [vmem:[%s2186] ss:$8 sm:$0x3]
        %v2189 = vperm.slane %v2187, 0
        %v2190 = vperm.slane %v2187, 1
        %v2225 = vunpack.c.l.b16 %v2154
        %v2226 = vunpack.c.h.b16 %v2154
        %v2227 = vunpack.c.l.b16 %v2155
        %v2228 = vunpack.c.h.b16 %v2155
        %v2229 = vunpack.c.l.b16 %v2156
        %v2230 = vunpack.c.h.b16 %v2156
        %v2231 = vunpack.c.l.b16 %v2157
        %v2232 = vunpack.c.h.b16 %v2157
        %v2233 = vunpack.c.l.b16 %v2158
        %v2234 = vunpack.c.h.b16 %v2158
        %v2235 = vunpack.c.l.b16 %v2159
        %v2236 = vunpack.c.h.b16 %v2159
        %v2237 = vunpack.c.l.b16 %v2160
        %v2238 = vunpack.c.h.b16 %v2160
        %v2239 = vunpack.c.l.b16 %v2161
        %v2240 = vunpack.c.h.b16 %v2161
        %v2241 = vunpack.c.l.b16 %v2162
        %v2242 = vunpack.c.h.b16 %v2162
        %v2243 = vunpack.c.l.b16 %v2163
        %v2244 = vunpack.c.h.b16 %v2163
        %v2245 = vunpack.c.l.b16 %v2164
        %v2246 = vunpack.c.h.b16 %v2164
        %v2247 = vunpack.c.l.b16 %v2165
        %v2248 = vunpack.c.h.b16 %v2165
        %v2249 = vunpack.c.l.b16 %v2166
        %v2250 = vunpack.c.h.b16 %v2166
        %v2251 = vunpack.c.l.b16 %v2167
        %v2252 = vunpack.c.h.b16 %v2167
        %v2253 = vunpack.c.l.b16 %v2168
        %v2254 = vunpack.c.h.b16 %v2168
        %v2255 = vunpack.c.l.b16 %v2169
        %v2256 = vunpack.c.h.b16 %v2169
        %v2257 = vunpack.c.l.b16 %v2170
        %v2258 = vunpack.c.h.b16 %v2170
        %v2259 = vunpack.c.l.b16 %v2171
        %v2260 = vunpack.c.h.b16 %v2171
        %v2261 = vunpack.c.l.b16 %v2172
        %v2262 = vunpack.c.h.b16 %v2172
        %v2263 = vunpack.c.l.b16 %v2173
        %v2264 = vunpack.c.h.b16 %v2173
        %v2265 = vunpack.c.l.b16 %v2174
        %v2266 = vunpack.c.h.b16 %v2174
        %v2267 = vunpack.c.l.b16 %v2175
        %v2268 = vunpack.c.h.b16 %v2175
        %v2269 = vunpack.c.l.b16 %v2176
        %v2270 = vunpack.c.h.b16 %v2176
        %v2271 = vunpack.c.l.b16 %v2177
        %v2272 = vunpack.c.h.b16 %v2177
        %v2273 = vunpack.c.l.b16 %v2178
        %v2274 = vunpack.c.h.b16 %v2178
        %v2275 = vunpack.c.l.b16 %v2179
        %v2276 = vunpack.c.h.b16 %v2179
        %v2277 = vunpack.c.l.b16 %v2180
        %v2278 = vunpack.c.h.b16 %v2180
        %v2279 = vunpack.c.l.b16 %v2181
        %v2280 = vunpack.c.h.b16 %v2181
        %v2281 = vunpack.c.l.b16 %v2182
        %v2282 = vunpack.c.h.b16 %v2182
        %v2283 = vunpack.c.l.b16 %v2183
        %v2284 = vunpack.c.h.b16 %v2183
        %v2285 = vunpack.c.l.b16 %v2184
        %v2286 = vunpack.c.h.b16 %v2184
        %v2287 = vunpack.c.l.b16 %v2185
        %v2288 = vunpack.c.h.b16 %v2185
        %v2289 = vpack.c.b16 %v2227, %v2225
        %v2290 = vpack.c.b16 %v2228, %v2226
        %v2291 = vpack.c.b16 %v2231, %v2229
        %v2292 = vpack.c.b16 %v2232, %v2230
        %v2293 = vpack.c.b16 %v2235, %v2233
        %v2294 = vpack.c.b16 %v2236, %v2234
        %v2295 = vpack.c.b16 %v2239, %v2237
        %v2296 = vpack.c.b16 %v2240, %v2238
        %v2297 = vpack.c.b16 %v2243, %v2241
        %v2298 = vpack.c.b16 %v2244, %v2242
        %v2299 = vpack.c.b16 %v2247, %v2245
        %v2300 = vpack.c.b16 %v2248, %v2246
        %v2301 = vpack.c.b16 %v2251, %v2249
        %v2302 = vpack.c.b16 %v2252, %v2250
        %v2303 = vpack.c.b16 %v2255, %v2253
        %v2304 = vpack.c.b16 %v2256, %v2254
        %v2305 = vpack.c.b16 %v2259, %v2257
        %v2306 = vpack.c.b16 %v2260, %v2258
        %v2307 = vpack.c.b16 %v2263, %v2261
        %v2308 = vpack.c.b16 %v2264, %v2262
        %v2309 = vpack.c.b16 %v2267, %v2265
        %v2310 = vpack.c.b16 %v2268, %v2266
        %v2311 = vpack.c.b16 %v2271, %v2269
        %v2312 = vpack.c.b16 %v2272, %v2270
        %v2313 = vpack.c.b16 %v2275, %v2273
        %v2314 = vpack.c.b16 %v2276, %v2274
        %v2315 = vpack.c.b16 %v2279, %v2277
        %v2316 = vpack.c.b16 %v2280, %v2278
        %v2317 = vpack.c.b16 %v2283, %v2281
        %v2318 = vpack.c.b16 %v2284, %v2282
        %v2319 = vpack.c.b16 %v2287, %v2285
        %v2320 = vpack.c.b16 %v2288, %v2286
        %2353 = vmatpush.bf16.msra.mxu0 %v2303
        %2354 = vmatpush.bf16.msra.mxu0 %v2301
        %2355 = vmatpush.bf16.msra.mxu0 %v2299
        %2356 = vmatpush.bf16.msra.mxu0 %v2297
        %2357 = vmatpush.bf16.msra.mxu0 %v2295
        %2358 = vmatpush.bf16.msra.mxu0 %v2293
        %2359 = vmatpush.bf16.msra.mxu0 %v2291
        %2360 = vmatpush.bf16.msra.mxu0 %v2289
        %2361 = vmatmul.bf16.gmra.mxu0 %v2121
        %v2362 = vpop.f32.mrf.mxu0
        %v2363 = vadd.f32 %v2189, %v2362
        %v2364 = vpop.f32.mrf.mxu0
        %v2365 = vadd.f32 %v2189, %v2364
        %2366 = vmatmul.bf16.gmra.mxu0 %v2123
        %v2367 = vpop.f32.mrf.mxu0
        %v2368 = vadd.f32 %v2189, %v2367
        %v2369 = vpop.f32.mrf.mxu0
        %v2370 = vadd.f32 %v2189, %v2369
        %2371 = vmatmul.bf16.gmra.mxu0 %v2125
        %v2372 = vpop.f32.mrf.mxu0
        %v2373 = vadd.f32 %v2189, %v2372
        %v2374 = vpop.f32.mrf.mxu0
        %v2375 = vadd.f32 %v2189, %v2374
        %2376 = vmatmul.bf16.gmra.mxu0 %v2127
        %v2377 = vpop.f32.mrf.mxu0
        %v2378 = vadd.f32 %v2189, %v2377
        %v2379 = vpop.f32.mrf.mxu0
        %v2380 = vadd.f32 %v2189, %v2379
        %2381 = vmatmul.bf16.gmra.mxu0 %v2129
        %v2382 = vpop.f32.mrf.mxu0
        %v2383 = vadd.f32 %v2189, %v2382
        %v2384 = vpop.f32.mrf.mxu0
        %v2385 = vadd.f32 %v2189, %v2384
        %2386 = vmatmul.bf16.gmra.mxu0 %v2131
        %v2387 = vpop.f32.mrf.mxu0
        %v2388 = vadd.f32 %v2189, %v2387
        %v2389 = vpop.f32.mrf.mxu0
        %v2390 = vadd.f32 %v2189, %v2389
        %2391 = vmatmul.bf16.gmra.mxu0 %v2133
        %v2392 = vpop.f32.mrf.mxu0
        %v2393 = vadd.f32 %v2189, %v2392
        %v2394 = vpop.f32.mrf.mxu0
        %v2395 = vadd.f32 %v2189, %v2394
        %2396 = vmatmul.bf16.gmra.mxu0 %v2135
        %v2397 = vpop.f32.mrf.mxu0
        %v2398 = vadd.f32 %v2189, %v2397
        %v2399 = vpop.f32.mrf.mxu0
        %v2400 = vadd.f32 %v2189, %v2399
        %2401 = vmatmul.bf16.gmra.mxu0 %v2137
        %v2402 = vpop.f32.mrf.mxu0
        %v2403 = vadd.f32 %v2189, %v2402
        %v2404 = vpop.f32.mrf.mxu0
        %v2405 = vadd.f32 %v2189, %v2404
        %2406 = vmatmul.bf16.gmra.mxu0 %v2139
        %v2407 = vpop.f32.mrf.mxu0
        %v2408 = vadd.f32 %v2189, %v2407
        %v2409 = vpop.f32.mrf.mxu0
        %v2410 = vadd.f32 %v2189, %v2409
        %2411 = vmatmul.bf16.gmra.mxu0 %v2141
        %v2412 = vpop.f32.mrf.mxu0
        %v2413 = vadd.f32 %v2189, %v2412
        %v2414 = vpop.f32.mrf.mxu0
        %v2415 = vadd.f32 %v2189, %v2414
        %2416 = vmatmul.bf16.gmra.mxu0 %v2143
        %v2417 = vpop.f32.mrf.mxu0
        %v2418 = vadd.f32 %v2189, %v2417
        %v2419 = vpop.f32.mrf.mxu0
        %v2420 = vadd.f32 %v2189, %v2419
        %2421 = vmatmul.bf16.gmra.mxu0 %v2145
        %v2422 = vpop.f32.mrf.mxu0
        %v2423 = vadd.f32 %v2189, %v2422
        %v2424 = vpop.f32.mrf.mxu0
        %v2425 = vadd.f32 %v2189, %v2424
        %2426 = vmatmul.bf16.gmra.mxu0 %v2147
        %v2427 = vpop.f32.mrf.mxu0
        %v2428 = vadd.f32 %v2189, %v2427
        %v2429 = vpop.f32.mrf.mxu0
        %v2430 = vadd.f32 %v2189, %v2429
        %2431 = vmatmul.bf16.gmra.mxu0 %v2149
        %v2432 = vpop.f32.mrf.mxu0
        %v2433 = vadd.f32 %v2189, %v2432
        %v2434 = vpop.f32.mrf.mxu0
        %v2435 = vadd.f32 %v2189, %v2434
        %2436 = vmatmul.bf16.gmra.mxu0 %v2151
        %v2437 = vpop.f32.mrf.mxu0
        %v2438 = vadd.f32 %v2189, %v2437
        %v2439 = vpop.f32.mrf.mxu0
        %v2440 = vadd.f32 %v2189, %v2439
        %2441 = vdwg.mxu0
        %2442 = vmatpush.bf16.msra.mxu0 %v2319
        %2443 = vmatpush.bf16.msra.mxu0 %v2317
        %2444 = vmatpush.bf16.msra.mxu0 %v2315
        %2445 = vmatpush.bf16.msra.mxu0 %v2313
        %2446 = vmatpush.bf16.msra.mxu0 %v2311
        %2447 = vmatpush.bf16.msra.mxu0 %v2309
        %2448 = vmatpush.bf16.msra.mxu0 %v2307
        %2449 = vmatpush.bf16.msra.mxu0 %v2305
        %2450 = vmatmul.bf16.gmra.mxu0 %v2122
        %v2451 = vpop.f32.mrf.mxu0
        %v2452 = vadd.f32 %v2363, %v2451
        %v2453 = vpop.f32.mrf.mxu0
        %v2454 = vadd.f32 %v2365, %v2453
        %2455 = vmatmul.bf16.gmra.mxu0 %v2124
        %v2456 = vpop.f32.mrf.mxu0
        %v2457 = vadd.f32 %v2368, %v2456
        %v2458 = vpop.f32.mrf.mxu0
        %v2459 = vadd.f32 %v2370, %v2458
        %2460 = vmatmul.bf16.gmra.mxu0 %v2126
        %v2461 = vpop.f32.mrf.mxu0
        %v2462 = vadd.f32 %v2373, %v2461
        %v2463 = vpop.f32.mrf.mxu0
        %v2464 = vadd.f32 %v2375, %v2463
        %2465 = vmatmul.bf16.gmra.mxu0 %v2128
        %v2466 = vpop.f32.mrf.mxu0
        %v2467 = vadd.f32 %v2378, %v2466
        %v2468 = vpop.f32.mrf.mxu0
        %v2469 = vadd.f32 %v2380, %v2468
        %2470 = vmatmul.bf16.gmra.mxu0 %v2130
        %v2471 = vpop.f32.mrf.mxu0
        %v2472 = vadd.f32 %v2383, %v2471
        %v2473 = vpop.f32.mrf.mxu0
        %v2474 = vadd.f32 %v2385, %v2473
        %2475 = vmatmul.bf16.gmra.mxu0 %v2132
        %v2476 = vpop.f32.mrf.mxu0
        %v2477 = vadd.f32 %v2388, %v2476
        %v2478 = vpop.f32.mrf.mxu0
        %v2479 = vadd.f32 %v2390, %v2478
        %2480 = vmatmul.bf16.gmra.mxu0 %v2134
        %v2481 = vpop.f32.mrf.mxu0
        %v2482 = vadd.f32 %v2393, %v2481
        %v2483 = vpop.f32.mrf.mxu0
        %v2484 = vadd.f32 %v2395, %v2483
        %2485 = vmatmul.bf16.gmra.mxu0 %v2136
        %v2486 = vpop.f32.mrf.mxu0
        %v2487 = vadd.f32 %v2398, %v2486
        %v2488 = vpop.f32.mrf.mxu0
        %v2489 = vadd.f32 %v2400, %v2488
        %2490 = vmatmul.bf16.gmra.mxu0 %v2138
        %v2491 = vpop.f32.mrf.mxu0
        %v2492 = vadd.f32 %v2403, %v2491
        %v2493 = vpop.f32.mrf.mxu0
        %v2494 = vadd.f32 %v2405, %v2493
        %2495 = vmatmul.bf16.gmra.mxu0 %v2140
        %v2496 = vpop.f32.mrf.mxu0
        %v2497 = vadd.f32 %v2408, %v2496
        %v2498 = vpop.f32.mrf.mxu0
        %v2499 = vadd.f32 %v2410, %v2498
        %2500 = vmatmul.bf16.gmra.mxu0 %v2142
        %v2501 = vpop.f32.mrf.mxu0
        %v2502 = vadd.f32 %v2413, %v2501
        %v2503 = vpop.f32.mrf.mxu0
        %v2504 = vadd.f32 %v2415, %v2503
        %2505 = vmatmul.bf16.gmra.mxu0 %v2144
        %v2506 = vpop.f32.mrf.mxu0
        %v2507 = vadd.f32 %v2418, %v2506
        %v2508 = vpop.f32.mrf.mxu0
        %v2509 = vadd.f32 %v2420, %v2508
        %2510 = vmatmul.bf16.gmra.mxu0 %v2146
        %v2511 = vpop.f32.mrf.mxu0
        %v2512 = vadd.f32 %v2423, %v2511
        %v2513 = vpop.f32.mrf.mxu0
        %v2514 = vadd.f32 %v2425, %v2513
        %2515 = vmatmul.bf16.gmra.mxu0 %v2148
        %v2516 = vpop.f32.mrf.mxu0
        %v2517 = vadd.f32 %v2428, %v2516
        %v2518 = vpop.f32.mrf.mxu0
        %v2519 = vadd.f32 %v2430, %v2518
        %2520 = vmatmul.bf16.gmra.mxu0 %v2150
        %v2521 = vpop.f32.mrf.mxu0
        %v2522 = vadd.f32 %v2433, %v2521
        %v2523 = vpop.f32.mrf.mxu0
        %v2524 = vadd.f32 %v2435, %v2523
        %2525 = vmatmul.bf16.gmra.mxu0 %v2152
        %v2526 = vpop.f32.mrf.mxu0
        %v2527 = vadd.f32 %v2438, %v2526
        %v2528 = vpop.f32.mrf.mxu0
        %v2529 = vadd.f32 %v2440, %v2528
        %2530 = vdwg.mxu0
        %2531 = vmatpush.bf16.msra.mxu0 %v2304
        %2532 = vmatpush.bf16.msra.mxu0 %v2302
        %2533 = vmatpush.bf16.msra.mxu0 %v2300
        %2534 = vmatpush.bf16.msra.mxu0 %v2298
        %2535 = vmatpush.bf16.msra.mxu0 %v2296
        %2536 = vmatpush.bf16.msra.mxu0 %v2294
        %2537 = vmatpush.bf16.msra.mxu0 %v2292
        %2538 = vmatpush.bf16.msra.mxu0 %v2290
        %2539 = vmatmul.bf16.gmra.mxu0 %v2121
        %v2540 = vpop.f32.mrf.mxu0
        %v2541 = vadd.f32 %v2190, %v2540
        %v2542 = vpop.f32.mrf.mxu0
        %v2543 = vadd.f32 %v2190, %v2542
        %2544 = vmatmul.bf16.gmra.mxu0 %v2123
        %v2545 = vpop.f32.mrf.mxu0
        %v2546 = vadd.f32 %v2190, %v2545
        %v2547 = vpop.f32.mrf.mxu0
        %v2548 = vadd.f32 %v2190, %v2547
        %2549 = vmatmul.bf16.gmra.mxu0 %v2125
        %v2550 = vpop.f32.mrf.mxu0
        %v2551 = vadd.f32 %v2190, %v2550
        %v2552 = vpop.f32.mrf.mxu0
        %v2553 = vadd.f32 %v2190, %v2552
        %2554 = vmatmul.bf16.gmra.mxu0 %v2127
        %v2555 = vpop.f32.mrf.mxu0
        %v2556 = vadd.f32 %v2190, %v2555
        %v2557 = vpop.f32.mrf.mxu0
        %v2558 = vadd.f32 %v2190, %v2557
        %2559 = vmatmul.bf16.gmra.mxu0 %v2129
        %v2560 = vpop.f32.mrf.mxu0
        %v2561 = vadd.f32 %v2190, %v2560
        %v2562 = vpop.f32.mrf.mxu0
        %v2563 = vadd.f32 %v2190, %v2562
        %2564 = vmatmul.bf16.gmra.mxu0 %v2131
        %v2565 = vpop.f32.mrf.mxu0
        %v2566 = vadd.f32 %v2190, %v2565
        %v2567 = vpop.f32.mrf.mxu0
        %v2568 = vadd.f32 %v2190, %v2567
        %2569 = vmatmul.bf16.gmra.mxu0 %v2133
        %v2570 = vpop.f32.mrf.mxu0
        %v2571 = vadd.f32 %v2190, %v2570
        %v2572 = vpop.f32.mrf.mxu0
        %v2573 = vadd.f32 %v2190, %v2572
        %2574 = vmatmul.bf16.gmra.mxu0 %v2135
        %v2575 = vpop.f32.mrf.mxu0
        %v2576 = vadd.f32 %v2190, %v2575
        %v2577 = vpop.f32.mrf.mxu0
        %v2578 = vadd.f32 %v2190, %v2577
        %2579 = vmatmul.bf16.gmra.mxu0 %v2137
        %v2580 = vpop.f32.mrf.mxu0
        %v2581 = vadd.f32 %v2190, %v2580
        %v2582 = vpop.f32.mrf.mxu0
        %v2583 = vadd.f32 %v2190, %v2582
        %2584 = vmatmul.bf16.gmra.mxu0 %v2139
        %v2585 = vpop.f32.mrf.mxu0
        %v2586 = vadd.f32 %v2190, %v2585
        %v2587 = vpop.f32.mrf.mxu0
        %v2588 = vadd.f32 %v2190, %v2587
        %2589 = vmatmul.bf16.gmra.mxu0 %v2141
        %v2590 = vpop.f32.mrf.mxu0
        %v2591 = vadd.f32 %v2190, %v2590
        %v2592 = vpop.f32.mrf.mxu0
        %v2593 = vadd.f32 %v2190, %v2592
        %2594 = vmatmul.bf16.gmra.mxu0 %v2143
        %v2595 = vpop.f32.mrf.mxu0
        %v2596 = vadd.f32 %v2190, %v2595
        %v2597 = vpop.f32.mrf.mxu0
        %v2598 = vadd.f32 %v2190, %v2597
        %2599 = vmatmul.bf16.gmra.mxu0 %v2145
        %v2600 = vpop.f32.mrf.mxu0
        %v2601 = vadd.f32 %v2190, %v2600
        %v2602 = vpop.f32.mrf.mxu0
        %v2603 = vadd.f32 %v2190, %v2602
        %2604 = vmatmul.bf16.gmra.mxu0 %v2147
        %v2605 = vpop.f32.mrf.mxu0
        %v2606 = vadd.f32 %v2190, %v2605
        %v2607 = vpop.f32.mrf.mxu0
        %v2608 = vadd.f32 %v2190, %v2607
        %2609 = vmatmul.bf16.gmra.mxu0 %v2149
        %v2610 = vpop.f32.mrf.mxu0
        %v2611 = vadd.f32 %v2190, %v2610
        %v2612 = vpop.f32.mrf.mxu0
        %v2613 = vadd.f32 %v2190, %v2612
        %2614 = vmatmul.bf16.gmra.mxu0 %v2151
        %v2615 = vpop.f32.mrf.mxu0
        %v2616 = vadd.f32 %v2190, %v2615
        %v2617 = vpop.f32.mrf.mxu0
        %v2618 = vadd.f32 %v2190, %v2617
        %2619 = vdwg.mxu0
        %2620 = vmatpush.bf16.msra.mxu0 %v2320
        %2621 = vmatpush.bf16.msra.mxu0 %v2318
        %2622 = vmatpush.bf16.msra.mxu0 %v2316
        %2623 = vmatpush.bf16.msra.mxu0 %v2314
        %2624 = vmatpush.bf16.msra.mxu0 %v2312
        %2625 = vmatpush.bf16.msra.mxu0 %v2310
        %2626 = vmatpush.bf16.msra.mxu0 %v2308
        %2627 = vmatpush.bf16.msra.mxu0 %v2306
        %2628 = vmatmul.bf16.gmra.mxu0 %v2122
        %v2629 = vpop.f32.mrf.mxu0
        %v2630 = vadd.f32 %v2541, %v2629
        %v2631 = vpop.f32.mrf.mxu0
        %v2632 = vadd.f32 %v2543, %v2631
        %2633 = vmatmul.bf16.gmra.mxu0 %v2124
        %v2634 = vpop.f32.mrf.mxu0
        %v2635 = vadd.f32 %v2546, %v2634
        %v2636 = vpop.f32.mrf.mxu0
        %v2637 = vadd.f32 %v2548, %v2636
        %2638 = vmatmul.bf16.gmra.mxu0 %v2126
        %v2639 = vpop.f32.mrf.mxu0
        %v2640 = vadd.f32 %v2551, %v2639
        %v2641 = vpop.f32.mrf.mxu0
        %v2642 = vadd.f32 %v2553, %v2641
        %2643 = vmatmul.bf16.gmra.mxu0 %v2128
        %v2644 = vpop.f32.mrf.mxu0
        %v2645 = vadd.f32 %v2556, %v2644
        %v2646 = vpop.f32.mrf.mxu0
        %v2647 = vadd.f32 %v2558, %v2646
        %2648 = vmatmul.bf16.gmra.mxu0 %v2130
        %v2649 = vpop.f32.mrf.mxu0
        %v2650 = vadd.f32 %v2561, %v2649
        %v2651 = vpop.f32.mrf.mxu0
        %v2652 = vadd.f32 %v2563, %v2651
        %2653 = vmatmul.bf16.gmra.mxu0 %v2132
        %v2654 = vpop.f32.mrf.mxu0
        %v2655 = vadd.f32 %v2566, %v2654
        %v2656 = vpop.f32.mrf.mxu0
        %v2657 = vadd.f32 %v2568, %v2656
        %2658 = vmatmul.bf16.gmra.mxu0 %v2134
        %v2659 = vpop.f32.mrf.mxu0
        %v2660 = vadd.f32 %v2571, %v2659
        %v2661 = vpop.f32.mrf.mxu0
        %v2662 = vadd.f32 %v2573, %v2661
        %2663 = vmatmul.bf16.gmra.mxu0 %v2136
        %v2664 = vpop.f32.mrf.mxu0
        %v2665 = vadd.f32 %v2576, %v2664
        %v2666 = vpop.f32.mrf.mxu0
        %v2667 = vadd.f32 %v2578, %v2666
        %2668 = vmatmul.bf16.gmra.mxu0 %v2138
        %v2669 = vpop.f32.mrf.mxu0
        %v2670 = vadd.f32 %v2581, %v2669
        %v2671 = vpop.f32.mrf.mxu0
        %v2672 = vadd.f32 %v2583, %v2671
        %2673 = vmatmul.bf16.gmra.mxu0 %v2140
        %v2674 = vpop.f32.mrf.mxu0
        %v2675 = vadd.f32 %v2586, %v2674
        %v2676 = vpop.f32.mrf.mxu0
        %v2677 = vadd.f32 %v2588, %v2676
        %2678 = vmatmul.bf16.gmra.mxu0 %v2142
        %v2679 = vpop.f32.mrf.mxu0
        %v2680 = vadd.f32 %v2591, %v2679
        %v2681 = vpop.f32.mrf.mxu0
        %v2682 = vadd.f32 %v2593, %v2681
        %2683 = vmatmul.bf16.gmra.mxu0 %v2144
        %v2684 = vpop.f32.mrf.mxu0
        %v2685 = vadd.f32 %v2596, %v2684
        %v2686 = vpop.f32.mrf.mxu0
        %v2687 = vadd.f32 %v2598, %v2686
        %2688 = vmatmul.bf16.gmra.mxu0 %v2146
        %v2689 = vpop.f32.mrf.mxu0
        %v2690 = vadd.f32 %v2601, %v2689
        %v2691 = vpop.f32.mrf.mxu0
        %v2692 = vadd.f32 %v2603, %v2691
        %2693 = vmatmul.bf16.gmra.mxu0 %v2148
        %v2694 = vpop.f32.mrf.mxu0
        %v2695 = vadd.f32 %v2606, %v2694
        %v2696 = vpop.f32.mrf.mxu0
        %v2697 = vadd.f32 %v2608, %v2696
        %2698 = vmatmul.bf16.gmra.mxu0 %v2150
        %v2699 = vpop.f32.mrf.mxu0
        %v2700 = vadd.f32 %v2611, %v2699
        %v2701 = vpop.f32.mrf.mxu0
        %v2702 = vadd.f32 %v2613, %v2701
        %2703 = vmatmul.bf16.gmra.mxu0 %v2152
        %v2704 = vpop.f32.mrf.mxu0
        %v2705 = vadd.f32 %v2616, %v2704
        %v2706 = vpop.f32.mrf.mxu0
        %v2707 = vadd.f32 %v2618, %v2706
        %2708 = vdwg.mxu0
        %v2709 = vmax.f32 %v2452, 0.0
        %v2710 = vmax.f32 %v2630, 0.0
        %v2711 = vmax.f32 %v2454, 0.0
        %v2712 = vmax.f32 %v2632, 0.0
        %v2713 = vmax.f32 %v2457, 0.0
        %v2714 = vmax.f32 %v2635, 0.0
        %v2715 = vmax.f32 %v2459, 0.0
        %v2716 = vmax.f32 %v2637, 0.0
        %v2717 = vmax.f32 %v2462, 0.0
        %v2718 = vmax.f32 %v2640, 0.0
        %v2719 = vmax.f32 %v2464, 0.0
        %v2720 = vmax.f32 %v2642, 0.0
        %v2721 = vmax.f32 %v2467, 0.0
        %v2722 = vmax.f32 %v2645, 0.0
        %v2723 = vmax.f32 %v2469, 0.0
        %v2724 = vmax.f32 %v2647, 0.0
        %v2725 = vmax.f32 %v2472, 0.0
        %v2726 = vmax.f32 %v2650, 0.0
        %v2727 = vmax.f32 %v2474, 0.0
        %v2728 = vmax.f32 %v2652, 0.0
        %v2729 = vmax.f32 %v2477, 0.0
        %v2730 = vmax.f32 %v2655, 0.0
        %v2731 = vmax.f32 %v2479, 0.0
        %v2732 = vmax.f32 %v2657, 0.0
        %v2733 = vmax.f32 %v2482, 0.0
        %v2734 = vmax.f32 %v2660, 0.0
        %v2735 = vmax.f32 %v2484, 0.0
        %v2736 = vmax.f32 %v2662, 0.0
        %v2737 = vmax.f32 %v2487, 0.0
        %v2738 = vmax.f32 %v2665, 0.0
        %v2739 = vmax.f32 %v2489, 0.0
        %v2740 = vmax.f32 %v2667, 0.0
        %v2741 = vmax.f32 %v2492, 0.0
        %v2742 = vmax.f32 %v2670, 0.0
        %v2743 = vmax.f32 %v2494, 0.0
        %v2744 = vmax.f32 %v2672, 0.0
        %v2745 = vmax.f32 %v2497, 0.0
        %v2746 = vmax.f32 %v2675, 0.0
        %v2747 = vmax.f32 %v2499, 0.0
        %v2748 = vmax.f32 %v2677, 0.0
        %v2749 = vmax.f32 %v2502, 0.0
        %v2750 = vmax.f32 %v2680, 0.0
        %v2751 = vmax.f32 %v2504, 0.0
        %v2752 = vmax.f32 %v2682, 0.0
        %v2753 = vmax.f32 %v2507, 0.0
        %v2754 = vmax.f32 %v2685, 0.0
        %v2755 = vmax.f32 %v2509, 0.0
        %v2756 = vmax.f32 %v2687, 0.0
        %v2757 = vmax.f32 %v2512, 0.0
        %v2758 = vmax.f32 %v2690, 0.0
        %v2759 = vmax.f32 %v2514, 0.0
        %v2760 = vmax.f32 %v2692, 0.0
        %v2761 = vmax.f32 %v2517, 0.0
        %v2762 = vmax.f32 %v2695, 0.0
        %v2763 = vmax.f32 %v2519, 0.0
        %v2764 = vmax.f32 %v2697, 0.0
        %v2765 = vmax.f32 %v2522, 0.0
        %v2766 = vmax.f32 %v2700, 0.0
        %v2767 = vmax.f32 %v2524, 0.0
        %v2768 = vmax.f32 %v2702, 0.0
        %v2769 = vmax.f32 %v2527, 0.0
        %v2770 = vmax.f32 %v2705, 0.0
        %v2771 = vmax.f32 %v2529, 0.0
        %v2772 = vmax.f32 %v2707, 0.0
        %v2773 = vpack.c.bf16 %v2711, %v2709
        %v2774 = vpack.c.bf16 %v2712, %v2710
        %v2775 = vpack.c.bf16 %v2715, %v2713
        %v2776 = vpack.c.bf16 %v2716, %v2714
        %v2777 = vpack.c.bf16 %v2719, %v2717
        %v2778 = vpack.c.bf16 %v2720, %v2718
        %v2779 = vpack.c.bf16 %v2723, %v2721
        %v2780 = vpack.c.bf16 %v2724, %v2722
        %v2781 = vpack.c.bf16 %v2727, %v2725
        %v2782 = vpack.c.bf16 %v2728, %v2726
        %v2783 = vpack.c.bf16 %v2731, %v2729
        %v2784 = vpack.c.bf16 %v2732, %v2730
        %v2785 = vpack.c.bf16 %v2735, %v2733
        %v2786 = vpack.c.bf16 %v2736, %v2734
        %v2787 = vpack.c.bf16 %v2739, %v2737
        %v2788 = vpack.c.bf16 %v2740, %v2738
        %v2789 = vpack.c.bf16 %v2743, %v2741
        %v2790 = vpack.c.bf16 %v2744, %v2742
        %v2791 = vpack.c.bf16 %v2747, %v2745
        %v2792 = vpack.c.bf16 %v2748, %v2746
        %v2793 = vpack.c.bf16 %v2751, %v2749
        %v2794 = vpack.c.bf16 %v2752, %v2750
        %v2795 = vpack.c.bf16 %v2755, %v2753
        %v2796 = vpack.c.bf16 %v2756, %v2754
        %v2797 = vpack.c.bf16 %v2759, %v2757
        %v2798 = vpack.c.bf16 %v2760, %v2758
        %v2799 = vpack.c.bf16 %v2763, %v2761
        %v2800 = vpack.c.bf16 %v2764, %v2762
        %v2801 = vpack.c.bf16 %v2767, %v2765
        %v2802 = vpack.c.bf16 %v2768, %v2766
        %v2803 = vpack.c.bf16 %v2771, %v2769
        %v2804 = vpack.c.bf16 %v2772, %v2770
        %s2805 = scalar_lea.vmem [#allocation2], 768
        %v2806 = vld [vmem:[%s2805] sm:$0xff]
        %v2807 = vld [vmem:[%s2805 + $0x8] sm:$0xff]
        %v2808 = vld [vmem:[%s2805 + $0x10] sm:$0xff]
        %v2809 = vld [vmem:[%s2805 + $0x18] sm:$0xff]
        %v2810 = vld [vmem:[%s2805 + $0x20] sm:$0xff]
        %v2811 = vld [vmem:[%s2805 + $0x28] sm:$0xff]
        %v2812 = vld [vmem:[%s2805 + $0x30] sm:$0xff]
        %v2813 = vld [vmem:[%s2805 + $0x38] sm:$0xff]
        %v2814 = vld [vmem:[%s2805 + $0x40] sm:$0xff]
        %v2815 = vld [vmem:[%s2805 + $0x48] sm:$0xff]
        %v2816 = vld [vmem:[%s2805 + $0x50] sm:$0xff]
        %v2817 = vld [vmem:[%s2805 + $0x58] sm:$0xff]
        %v2818 = vld [vmem:[%s2805 + $0x60] sm:$0xff]
        %v2819 = vld [vmem:[%s2805 + $0x68] sm:$0xff]
        %v2820 = vld [vmem:[%s2805 + $0x70] sm:$0xff]
        %v2821 = vld [vmem:[%s2805 + $0x78] sm:$0xff]
        %v2822 = vld [vmem:[%s2805 + $0x80] sm:$0xff]
        %v2823 = vld [vmem:[%s2805 + $0x88] sm:$0xff]
        %v2824 = vld [vmem:[%s2805 + $0x90] sm:$0xff]
        %v2825 = vld [vmem:[%s2805 + $0x98] sm:$0xff]
        %v2826 = vld [vmem:[%s2805 + $0xa0] sm:$0xff]
        %v2827 = vld [vmem:[%s2805 + $0xa8] sm:$0xff]
        %v2828 = vld [vmem:[%s2805 + $0xb0] sm:$0xff]
        %v2829 = vld [vmem:[%s2805 + $0xb8] sm:$0xff]
        %v2830 = vld [vmem:[%s2805 + $0xc0] sm:$0xff]
        %v2831 = vld [vmem:[%s2805 + $0xc8] sm:$0xff]
        %v2832 = vld [vmem:[%s2805 + $0xd0] sm:$0xff]
        %v2833 = vld [vmem:[%s2805 + $0xd8] sm:$0xff]
        %v2834 = vld [vmem:[%s2805 + $0xe0] sm:$0xff]
        %v2835 = vld [vmem:[%s2805 + $0xe8] sm:$0xff]
        %v2836 = vld [vmem:[%s2805 + $0xf0] sm:$0xff]
        %v2837 = vld [vmem:[%s2805 + $0xf8] sm:$0xff]
        %s2838 = scalar_lea.vmem %s4, 3
        %v2839 = vld [vmem:[%s2838] ss:$8 sm:$0x3]
        %v2841 = vperm.slane %v2839, 0
        %v2842 = vperm.slane %v2839, 1
        %v2877 = vunpack.c.l.b16 %v2806
        %v2878 = vunpack.c.h.b16 %v2806
        %v2879 = vunpack.c.l.b16 %v2807
        %v2880 = vunpack.c.h.b16 %v2807
        %v2881 = vunpack.c.l.b16 %v2808
        %v2882 = vunpack.c.h.b16 %v2808
        %v2883 = vunpack.c.l.b16 %v2809
        %v2884 = vunpack.c.h.b16 %v2809
        %v2885 = vunpack.c.l.b16 %v2810
        %v2886 = vunpack.c.h.b16 %v2810
        %v2887 = vunpack.c.l.b16 %v2811
        %v2888 = vunpack.c.h.b16 %v2811
        %v2889 = vunpack.c.l.b16 %v2812
        %v2890 = vunpack.c.h.b16 %v2812
        %v2891 = vunpack.c.l.b16 %v2813
        %v2892 = vunpack.c.h.b16 %v2813
        %v2893 = vunpack.c.l.b16 %v2814
        %v2894 = vunpack.c.h.b16 %v2814
        %v2895 = vunpack.c.l.b16 %v2815
        %v2896 = vunpack.c.h.b16 %v2815
        %v2897 = vunpack.c.l.b16 %v2816
        %v2898 = vunpack.c.h.b16 %v2816
        %v2899 = vunpack.c.l.b16 %v2817
        %v2900 = vunpack.c.h.b16 %v2817
        %v2901 = vunpack.c.l.b16 %v2818
        %v2902 = vunpack.c.h.b16 %v2818
        %v2903 = vunpack.c.l.b16 %v2819
        %v2904 = vunpack.c.h.b16 %v2819
        %v2905 = vunpack.c.l.b16 %v2820
        %v2906 = vunpack.c.h.b16 %v2820
        %v2907 = vunpack.c.l.b16 %v2821
        %v2908 = vunpack.c.h.b16 %v2821
        %v2909 = vunpack.c.l.b16 %v2822
        %v2910 = vunpack.c.h.b16 %v2822
        %v2911 = vunpack.c.l.b16 %v2823
        %v2912 = vunpack.c.h.b16 %v2823
        %v2913 = vunpack.c.l.b16 %v2824
        %v2914 = vunpack.c.h.b16 %v2824
        %v2915 = vunpack.c.l.b16 %v2825
        %v2916 = vunpack.c.h.b16 %v2825
        %v2917 = vunpack.c.l.b16 %v2826
        %v2918 = vunpack.c.h.b16 %v2826
        %v2919 = vunpack.c.l.b16 %v2827
        %v2920 = vunpack.c.h.b16 %v2827
        %v2921 = vunpack.c.l.b16 %v2828
        %v2922 = vunpack.c.h.b16 %v2828
        %v2923 = vunpack.c.l.b16 %v2829
        %v2924 = vunpack.c.h.b16 %v2829
        %v2925 = vunpack.c.l.b16 %v2830
        %v2926 = vunpack.c.h.b16 %v2830
        %v2927 = vunpack.c.l.b16 %v2831
        %v2928 = vunpack.c.h.b16 %v2831
        %v2929 = vunpack.c.l.b16 %v2832
        %v2930 = vunpack.c.h.b16 %v2832
        %v2931 = vunpack.c.l.b16 %v2833
        %v2932 = vunpack.c.h.b16 %v2833
        %v2933 = vunpack.c.l.b16 %v2834
        %v2934 = vunpack.c.h.b16 %v2834
        %v2935 = vunpack.c.l.b16 %v2835
        %v2936 = vunpack.c.h.b16 %v2835
        %v2937 = vunpack.c.l.b16 %v2836
        %v2938 = vunpack.c.h.b16 %v2836
        %v2939 = vunpack.c.l.b16 %v2837
        %v2940 = vunpack.c.h.b16 %v2837
        %v2941 = vpack.c.b16 %v2879, %v2877
        %v2942 = vpack.c.b16 %v2880, %v2878
        %v2943 = vpack.c.b16 %v2883, %v2881
        %v2944 = vpack.c.b16 %v2884, %v2882
        %v2945 = vpack.c.b16 %v2887, %v2885
        %v2946 = vpack.c.b16 %v2888, %v2886
        %v2947 = vpack.c.b16 %v2891, %v2889
        %v2948 = vpack.c.b16 %v2892, %v2890
        %v2949 = vpack.c.b16 %v2895, %v2893
        %v2950 = vpack.c.b16 %v2896, %v2894
        %v2951 = vpack.c.b16 %v2899, %v2897
        %v2952 = vpack.c.b16 %v2900, %v2898
        %v2953 = vpack.c.b16 %v2903, %v2901
        %v2954 = vpack.c.b16 %v2904, %v2902
        %v2955 = vpack.c.b16 %v2907, %v2905
        %v2956 = vpack.c.b16 %v2908, %v2906
        %v2957 = vpack.c.b16 %v2911, %v2909
        %v2958 = vpack.c.b16 %v2912, %v2910
        %v2959 = vpack.c.b16 %v2915, %v2913
        %v2960 = vpack.c.b16 %v2916, %v2914
        %v2961 = vpack.c.b16 %v2919, %v2917
        %v2962 = vpack.c.b16 %v2920, %v2918
        %v2963 = vpack.c.b16 %v2923, %v2921
        %v2964 = vpack.c.b16 %v2924, %v2922
        %v2965 = vpack.c.b16 %v2927, %v2925
        %v2966 = vpack.c.b16 %v2928, %v2926
        %v2967 = vpack.c.b16 %v2931, %v2929
        %v2968 = vpack.c.b16 %v2932, %v2930
        %v2969 = vpack.c.b16 %v2935, %v2933
        %v2970 = vpack.c.b16 %v2936, %v2934
        %v2971 = vpack.c.b16 %v2939, %v2937
        %v2972 = vpack.c.b16 %v2940, %v2938
        %3005 = vmatpush.bf16.msra.mxu0 %v2955
        %3006 = vmatpush.bf16.msra.mxu0 %v2953
        %3007 = vmatpush.bf16.msra.mxu0 %v2951
        %3008 = vmatpush.bf16.msra.mxu0 %v2949
        %3009 = vmatpush.bf16.msra.mxu0 %v2947
        %3010 = vmatpush.bf16.msra.mxu0 %v2945
        %3011 = vmatpush.bf16.msra.mxu0 %v2943
        %3012 = vmatpush.bf16.msra.mxu0 %v2941
        %3013 = vmatmul.bf16.gmra.mxu0 %v2773
        %v3014 = vpop.f32.mrf.mxu0
        %v3015 = vadd.f32 %v2841, %v3014
        %v3016 = vpop.f32.mrf.mxu0
        %v3017 = vadd.f32 %v2841, %v3016
        %3018 = vmatmul.bf16.gmra.mxu0 %v2775
        %v3019 = vpop.f32.mrf.mxu0
        %v3020 = vadd.f32 %v2841, %v3019
        %v3021 = vpop.f32.mrf.mxu0
        %v3022 = vadd.f32 %v2841, %v3021
        %3023 = vmatmul.bf16.gmra.mxu0 %v2777
        %v3024 = vpop.f32.mrf.mxu0
        %v3025 = vadd.f32 %v2841, %v3024
        %v3026 = vpop.f32.mrf.mxu0
        %v3027 = vadd.f32 %v2841, %v3026
        %3028 = vmatmul.bf16.gmra.mxu0 %v2779
        %v3029 = vpop.f32.mrf.mxu0
        %v3030 = vadd.f32 %v2841, %v3029
        %v3031 = vpop.f32.mrf.mxu0
        %v3032 = vadd.f32 %v2841, %v3031
        %3033 = vmatmul.bf16.gmra.mxu0 %v2781
        %v3034 = vpop.f32.mrf.mxu0
        %v3035 = vadd.f32 %v2841, %v3034
        %v3036 = vpop.f32.mrf.mxu0
        %v3037 = vadd.f32 %v2841, %v3036
        %3038 = vmatmul.bf16.gmra.mxu0 %v2783
        %v3039 = vpop.f32.mrf.mxu0
        %v3040 = vadd.f32 %v2841, %v3039
        %v3041 = vpop.f32.mrf.mxu0
        %v3042 = vadd.f32 %v2841, %v3041
        %3043 = vmatmul.bf16.gmra.mxu0 %v2785
        %v3044 = vpop.f32.mrf.mxu0
        %v3045 = vadd.f32 %v2841, %v3044
        %v3046 = vpop.f32.mrf.mxu0
        %v3047 = vadd.f32 %v2841, %v3046
        %3048 = vmatmul.bf16.gmra.mxu0 %v2787
        %v3049 = vpop.f32.mrf.mxu0
        %v3050 = vadd.f32 %v2841, %v3049
        %v3051 = vpop.f32.mrf.mxu0
        %v3052 = vadd.f32 %v2841, %v3051
        %3053 = vmatmul.bf16.gmra.mxu0 %v2789
        %v3054 = vpop.f32.mrf.mxu0
        %v3055 = vadd.f32 %v2841, %v3054
        %v3056 = vpop.f32.mrf.mxu0
        %v3057 = vadd.f32 %v2841, %v3056
        %3058 = vmatmul.bf16.gmra.mxu0 %v2791
        %v3059 = vpop.f32.mrf.mxu0
        %v3060 = vadd.f32 %v2841, %v3059
        %v3061 = vpop.f32.mrf.mxu0
        %v3062 = vadd.f32 %v2841, %v3061
        %3063 = vmatmul.bf16.gmra.mxu0 %v2793
        %v3064 = vpop.f32.mrf.mxu0
        %v3065 = vadd.f32 %v2841, %v3064
        %v3066 = vpop.f32.mrf.mxu0
        %v3067 = vadd.f32 %v2841, %v3066
        %3068 = vmatmul.bf16.gmra.mxu0 %v2795
        %v3069 = vpop.f32.mrf.mxu0
        %v3070 = vadd.f32 %v2841, %v3069
        %v3071 = vpop.f32.mrf.mxu0
        %v3072 = vadd.f32 %v2841, %v3071
        %3073 = vmatmul.bf16.gmra.mxu0 %v2797
        %v3074 = vpop.f32.mrf.mxu0
        %v3075 = vadd.f32 %v2841, %v3074
        %v3076 = vpop.f32.mrf.mxu0
        %v3077 = vadd.f32 %v2841, %v3076
        %3078 = vmatmul.bf16.gmra.mxu0 %v2799
        %v3079 = vpop.f32.mrf.mxu0
        %v3080 = vadd.f32 %v2841, %v3079
        %v3081 = vpop.f32.mrf.mxu0
        %v3082 = vadd.f32 %v2841, %v3081
        %3083 = vmatmul.bf16.gmra.mxu0 %v2801
        %v3084 = vpop.f32.mrf.mxu0
        %v3085 = vadd.f32 %v2841, %v3084
        %v3086 = vpop.f32.mrf.mxu0
        %v3087 = vadd.f32 %v2841, %v3086
        %3088 = vmatmul.bf16.gmra.mxu0 %v2803
        %v3089 = vpop.f32.mrf.mxu0
        %v3090 = vadd.f32 %v2841, %v3089
        %v3091 = vpop.f32.mrf.mxu0
        %v3092 = vadd.f32 %v2841, %v3091
        %3093 = vdwg.mxu0
        %3094 = vmatpush.bf16.msra.mxu0 %v2971
        %3095 = vmatpush.bf16.msra.mxu0 %v2969
        %3096 = vmatpush.bf16.msra.mxu0 %v2967
        %3097 = vmatpush.bf16.msra.mxu0 %v2965
        %3098 = vmatpush.bf16.msra.mxu0 %v2963
        %3099 = vmatpush.bf16.msra.mxu0 %v2961
        %3100 = vmatpush.bf16.msra.mxu0 %v2959
        %3101 = vmatpush.bf16.msra.mxu0 %v2957
        %3102 = vmatmul.bf16.gmra.mxu0 %v2774
        %v3103 = vpop.f32.mrf.mxu0
        %v3104 = vadd.f32 %v3015, %v3103
        %v3105 = vpop.f32.mrf.mxu0
        %v3106 = vadd.f32 %v3017, %v3105
        %3107 = vmatmul.bf16.gmra.mxu0 %v2776
        %v3108 = vpop.f32.mrf.mxu0
        %v3109 = vadd.f32 %v3020, %v3108
        %v3110 = vpop.f32.mrf.mxu0
        %v3111 = vadd.f32 %v3022, %v3110
        %3112 = vmatmul.bf16.gmra.mxu0 %v2778
        %v3113 = vpop.f32.mrf.mxu0
        %v3114 = vadd.f32 %v3025, %v3113
        %v3115 = vpop.f32.mrf.mxu0
        %v3116 = vadd.f32 %v3027, %v3115
        %3117 = vmatmul.bf16.gmra.mxu0 %v2780
        %v3118 = vpop.f32.mrf.mxu0
        %v3119 = vadd.f32 %v3030, %v3118
        %v3120 = vpop.f32.mrf.mxu0
        %v3121 = vadd.f32 %v3032, %v3120
        %3122 = vmatmul.bf16.gmra.mxu0 %v2782
        %v3123 = vpop.f32.mrf.mxu0
        %v3124 = vadd.f32 %v3035, %v3123
        %v3125 = vpop.f32.mrf.mxu0
        %v3126 = vadd.f32 %v3037, %v3125
        %3127 = vmatmul.bf16.gmra.mxu0 %v2784
        %v3128 = vpop.f32.mrf.mxu0
        %v3129 = vadd.f32 %v3040, %v3128
        %v3130 = vpop.f32.mrf.mxu0
        %v3131 = vadd.f32 %v3042, %v3130
        %3132 = vmatmul.bf16.gmra.mxu0 %v2786
        %v3133 = vpop.f32.mrf.mxu0
        %v3134 = vadd.f32 %v3045, %v3133
        %v3135 = vpop.f32.mrf.mxu0
        %v3136 = vadd.f32 %v3047, %v3135
        %3137 = vmatmul.bf16.gmra.mxu0 %v2788
        %v3138 = vpop.f32.mrf.mxu0
        %v3139 = vadd.f32 %v3050, %v3138
        %v3140 = vpop.f32.mrf.mxu0
        %v3141 = vadd.f32 %v3052, %v3140
        %3142 = vmatmul.bf16.gmra.mxu0 %v2790
        %v3143 = vpop.f32.mrf.mxu0
        %v3144 = vadd.f32 %v3055, %v3143
        %v3145 = vpop.f32.mrf.mxu0
        %v3146 = vadd.f32 %v3057, %v3145
        %3147 = vmatmul.bf16.gmra.mxu0 %v2792
        %v3148 = vpop.f32.mrf.mxu0
        %v3149 = vadd.f32 %v3060, %v3148
        %v3150 = vpop.f32.mrf.mxu0
        %v3151 = vadd.f32 %v3062, %v3150
        %3152 = vmatmul.bf16.gmra.mxu0 %v2794
        %v3153 = vpop.f32.mrf.mxu0
        %v3154 = vadd.f32 %v3065, %v3153
        %v3155 = vpop.f32.mrf.mxu0
        %v3156 = vadd.f32 %v3067, %v3155
        %3157 = vmatmul.bf16.gmra.mxu0 %v2796
        %v3158 = vpop.f32.mrf.mxu0
        %v3159 = vadd.f32 %v3070, %v3158
        %v3160 = vpop.f32.mrf.mxu0
        %v3161 = vadd.f32 %v3072, %v3160
        %3162 = vmatmul.bf16.gmra.mxu0 %v2798
        %v3163 = vpop.f32.mrf.mxu0
        %v3164 = vadd.f32 %v3075, %v3163
        %v3165 = vpop.f32.mrf.mxu0
        %v3166 = vadd.f32 %v3077, %v3165
        %3167 = vmatmul.bf16.gmra.mxu0 %v2800
        %v3168 = vpop.f32.mrf.mxu0
        %v3169 = vadd.f32 %v3080, %v3168
        %v3170 = vpop.f32.mrf.mxu0
        %v3171 = vadd.f32 %v3082, %v3170
        %3172 = vmatmul.bf16.gmra.mxu0 %v2802
        %v3173 = vpop.f32.mrf.mxu0
        %v3174 = vadd.f32 %v3085, %v3173
        %v3175 = vpop.f32.mrf.mxu0
        %v3176 = vadd.f32 %v3087, %v3175
        %3177 = vmatmul.bf16.gmra.mxu0 %v2804
        %v3178 = vpop.f32.mrf.mxu0
        %v3179 = vadd.f32 %v3090, %v3178
        %v3180 = vpop.f32.mrf.mxu0
        %v3181 = vadd.f32 %v3092, %v3180
        %3182 = vdwg.mxu0
        %3183 = vmatpush.bf16.msra.mxu0 %v2956
        %3184 = vmatpush.bf16.msra.mxu0 %v2954
        %3185 = vmatpush.bf16.msra.mxu0 %v2952
        %3186 = vmatpush.bf16.msra.mxu0 %v2950
        %3187 = vmatpush.bf16.msra.mxu0 %v2948
        %3188 = vmatpush.bf16.msra.mxu0 %v2946
        %3189 = vmatpush.bf16.msra.mxu0 %v2944
        %3190 = vmatpush.bf16.msra.mxu0 %v2942
        %3191 = vmatmul.bf16.gmra.mxu0 %v2773
        %v3192 = vpop.f32.mrf.mxu0
        %v3193 = vadd.f32 %v2842, %v3192
        %v3194 = vpop.f32.mrf.mxu0
        %v3195 = vadd.f32 %v2842, %v3194
        %3196 = vmatmul.bf16.gmra.mxu0 %v2775
        %v3197 = vpop.f32.mrf.mxu0
        %v3198 = vadd.f32 %v2842, %v3197
        %v3199 = vpop.f32.mrf.mxu0
        %v3200 = vadd.f32 %v2842, %v3199
        %3201 = vmatmul.bf16.gmra.mxu0 %v2777
        %v3202 = vpop.f32.mrf.mxu0
        %v3203 = vadd.f32 %v2842, %v3202
        %v3204 = vpop.f32.mrf.mxu0
        %v3205 = vadd.f32 %v2842, %v3204
        %3206 = vmatmul.bf16.gmra.mxu0 %v2779
        %v3207 = vpop.f32.mrf.mxu0
        %v3208 = vadd.f32 %v2842, %v3207
        %v3209 = vpop.f32.mrf.mxu0
        %v3210 = vadd.f32 %v2842, %v3209
        %3211 = vmatmul.bf16.gmra.mxu0 %v2781
        %v3212 = vpop.f32.mrf.mxu0
        %v3213 = vadd.f32 %v2842, %v3212
        %v3214 = vpop.f32.mrf.mxu0
        %v3215 = vadd.f32 %v2842, %v3214
        %3216 = vmatmul.bf16.gmra.mxu0 %v2783
        %v3217 = vpop.f32.mrf.mxu0
        %v3218 = vadd.f32 %v2842, %v3217
        %v3219 = vpop.f32.mrf.mxu0
        %v3220 = vadd.f32 %v2842, %v3219
        %3221 = vmatmul.bf16.gmra.mxu0 %v2785
        %v3222 = vpop.f32.mrf.mxu0
        %v3223 = vadd.f32 %v2842, %v3222
        %v3224 = vpop.f32.mrf.mxu0
        %v3225 = vadd.f32 %v2842, %v3224
        %3226 = vmatmul.bf16.gmra.mxu0 %v2787
        %v3227 = vpop.f32.mrf.mxu0
        %v3228 = vadd.f32 %v2842, %v3227
        %v3229 = vpop.f32.mrf.mxu0
        %v3230 = vadd.f32 %v2842, %v3229
        %3231 = vmatmul.bf16.gmra.mxu0 %v2789
        %v3232 = vpop.f32.mrf.mxu0
        %v3233 = vadd.f32 %v2842, %v3232
        %v3234 = vpop.f32.mrf.mxu0
        %v3235 = vadd.f32 %v2842, %v3234
        %3236 = vmatmul.bf16.gmra.mxu0 %v2791
        %v3237 = vpop.f32.mrf.mxu0
        %v3238 = vadd.f32 %v2842, %v3237
        %v3239 = vpop.f32.mrf.mxu0
        %v3240 = vadd.f32 %v2842, %v3239
        %3241 = vmatmul.bf16.gmra.mxu0 %v2793
        %v3242 = vpop.f32.mrf.mxu0
        %v3243 = vadd.f32 %v2842, %v3242
        %v3244 = vpop.f32.mrf.mxu0
        %v3245 = vadd.f32 %v2842, %v3244
        %3246 = vmatmul.bf16.gmra.mxu0 %v2795
        %v3247 = vpop.f32.mrf.mxu0
        %v3248 = vadd.f32 %v2842, %v3247
        %v3249 = vpop.f32.mrf.mxu0
        %v3250 = vadd.f32 %v2842, %v3249
        %3251 = vmatmul.bf16.gmra.mxu0 %v2797
        %v3252 = vpop.f32.mrf.mxu0
        %v3253 = vadd.f32 %v2842, %v3252
        %v3254 = vpop.f32.mrf.mxu0
        %v3255 = vadd.f32 %v2842, %v3254
        %3256 = vmatmul.bf16.gmra.mxu0 %v2799
        %v3257 = vpop.f32.mrf.mxu0
        %v3258 = vadd.f32 %v2842, %v3257
        %v3259 = vpop.f32.mrf.mxu0
        %v3260 = vadd.f32 %v2842, %v3259
        %3261 = vmatmul.bf16.gmra.mxu0 %v2801
        %v3262 = vpop.f32.mrf.mxu0
        %v3263 = vadd.f32 %v2842, %v3262
        %v3264 = vpop.f32.mrf.mxu0
        %v3265 = vadd.f32 %v2842, %v3264
        %3266 = vmatmul.bf16.gmra.mxu0 %v2803
        %v3267 = vpop.f32.mrf.mxu0
        %v3268 = vadd.f32 %v2842, %v3267
        %v3269 = vpop.f32.mrf.mxu0
        %v3270 = vadd.f32 %v2842, %v3269
        %3271 = vdwg.mxu0
        %3272 = vmatpush.bf16.msra.mxu0 %v2972
        %3273 = vmatpush.bf16.msra.mxu0 %v2970
        %3274 = vmatpush.bf16.msra.mxu0 %v2968
        %3275 = vmatpush.bf16.msra.mxu0 %v2966
        %3276 = vmatpush.bf16.msra.mxu0 %v2964
        %3277 = vmatpush.bf16.msra.mxu0 %v2962
        %3278 = vmatpush.bf16.msra.mxu0 %v2960
        %3279 = vmatpush.bf16.msra.mxu0 %v2958
        %3280 = vmatmul.bf16.gmra.mxu0 %v2774
        %v3281 = vpop.f32.mrf.mxu0
        %v3282 = vadd.f32 %v3193, %v3281
        %v3283 = vpop.f32.mrf.mxu0
        %v3284 = vadd.f32 %v3195, %v3283
        %3285 = vmatmul.bf16.gmra.mxu0 %v2776
        %v3286 = vpop.f32.mrf.mxu0
        %v3287 = vadd.f32 %v3198, %v3286
        %v3288 = vpop.f32.mrf.mxu0
        %v3289 = vadd.f32 %v3200, %v3288
        %3290 = vmatmul.bf16.gmra.mxu0 %v2778
        %v3291 = vpop.f32.mrf.mxu0
        %v3292 = vadd.f32 %v3203, %v3291
        %v3293 = vpop.f32.mrf.mxu0
        %v3294 = vadd.f32 %v3205, %v3293
        %3295 = vmatmul.bf16.gmra.mxu0 %v2780
        %v3296 = vpop.f32.mrf.mxu0
        %v3297 = vadd.f32 %v3208, %v3296
        %v3298 = vpop.f32.mrf.mxu0
        %v3299 = vadd.f32 %v3210, %v3298
        %3300 = vmatmul.bf16.gmra.mxu0 %v2782
        %v3301 = vpop.f32.mrf.mxu0
        %v3302 = vadd.f32 %v3213, %v3301
        %v3303 = vpop.f32.mrf.mxu0
        %v3304 = vadd.f32 %v3215, %v3303
        %3305 = vmatmul.bf16.gmra.mxu0 %v2784
        %v3306 = vpop.f32.mrf.mxu0
        %v3307 = vadd.f32 %v3218, %v3306
        %v3308 = vpop.f32.mrf.mxu0
        %v3309 = vadd.f32 %v3220, %v3308
        %3310 = vmatmul.bf16.gmra.mxu0 %v2786
        %v3311 = vpop.f32.mrf.mxu0
        %v3312 = vadd.f32 %v3223, %v3311
        %v3313 = vpop.f32.mrf.mxu0
        %v3314 = vadd.f32 %v3225, %v3313
        %3315 = vmatmul.bf16.gmra.mxu0 %v2788
        %v3316 = vpop.f32.mrf.mxu0
        %v3317 = vadd.f32 %v3228, %v3316
        %v3318 = vpop.f32.mrf.mxu0
        %v3319 = vadd.f32 %v3230, %v3318
        %3320 = vmatmul.bf16.gmra.mxu0 %v2790
        %v3321 = vpop.f32.mrf.mxu0
        %v3322 = vadd.f32 %v3233, %v3321
        %v3323 = vpop.f32.mrf.mxu0
        %v3324 = vadd.f32 %v3235, %v3323
        %3325 = vmatmul.bf16.gmra.mxu0 %v2792
        %v3326 = vpop.f32.mrf.mxu0
        %v3327 = vadd.f32 %v3238, %v3326
        %v3328 = vpop.f32.mrf.mxu0
        %v3329 = vadd.f32 %v3240, %v3328
        %3330 = vmatmul.bf16.gmra.mxu0 %v2794
        %v3331 = vpop.f32.mrf.mxu0
        %v3332 = vadd.f32 %v3243, %v3331
        %v3333 = vpop.f32.mrf.mxu0
        %v3334 = vadd.f32 %v3245, %v3333
        %3335 = vmatmul.bf16.gmra.mxu0 %v2796
        %v3336 = vpop.f32.mrf.mxu0
        %v3337 = vadd.f32 %v3248, %v3336
        %v3338 = vpop.f32.mrf.mxu0
        %v3339 = vadd.f32 %v3250, %v3338
        %3340 = vmatmul.bf16.gmra.mxu0 %v2798
        %v3341 = vpop.f32.mrf.mxu0
        %v3342 = vadd.f32 %v3253, %v3341
        %v3343 = vpop.f32.mrf.mxu0
        %v3344 = vadd.f32 %v3255, %v3343
        %3345 = vmatmul.bf16.gmra.mxu0 %v2800
        %v3346 = vpop.f32.mrf.mxu0
        %v3347 = vadd.f32 %v3258, %v3346
        %v3348 = vpop.f32.mrf.mxu0
        %v3349 = vadd.f32 %v3260, %v3348
        %3350 = vmatmul.bf16.gmra.mxu0 %v2802
        %v3351 = vpop.f32.mrf.mxu0
        %v3352 = vadd.f32 %v3263, %v3351
        %v3353 = vpop.f32.mrf.mxu0
        %v3354 = vadd.f32 %v3265, %v3353
        %3355 = vmatmul.bf16.gmra.mxu0 %v2804
        %v3356 = vpop.f32.mrf.mxu0
        %v3357 = vadd.f32 %v3268, %v3356
        %v3358 = vpop.f32.mrf.mxu0
        %v3359 = vadd.f32 %v3270, %v3358
        %3360 = vdwg.mxu0
        %v3361 = vmax.f32 %v3104, 0.0
        %v3362 = vmax.f32 %v3282, 0.0
        %v3363 = vmax.f32 %v3106, 0.0
        %v3364 = vmax.f32 %v3284, 0.0
        %v3365 = vmax.f32 %v3109, 0.0
        %v3366 = vmax.f32 %v3287, 0.0
        %v3367 = vmax.f32 %v3111, 0.0
        %v3368 = vmax.f32 %v3289, 0.0
        %v3369 = vmax.f32 %v3114, 0.0
        %v3370 = vmax.f32 %v3292, 0.0
        %v3371 = vmax.f32 %v3116, 0.0
        %v3372 = vmax.f32 %v3294, 0.0
        %v3373 = vmax.f32 %v3119, 0.0
        %v3374 = vmax.f32 %v3297, 0.0
        %v3375 = vmax.f32 %v3121, 0.0
        %v3376 = vmax.f32 %v3299, 0.0
        %v3377 = vmax.f32 %v3124, 0.0
        %v3378 = vmax.f32 %v3302, 0.0
        %v3379 = vmax.f32 %v3126, 0.0
        %v3380 = vmax.f32 %v3304, 0.0
        %v3381 = vmax.f32 %v3129, 0.0
        %v3382 = vmax.f32 %v3307, 0.0
        %v3383 = vmax.f32 %v3131, 0.0
        %v3384 = vmax.f32 %v3309, 0.0
        %v3385 = vmax.f32 %v3134, 0.0
        %v3386 = vmax.f32 %v3312, 0.0
        %v3387 = vmax.f32 %v3136, 0.0
        %v3388 = vmax.f32 %v3314, 0.0
        %v3389 = vmax.f32 %v3139, 0.0
        %v3390 = vmax.f32 %v3317, 0.0
        %v3391 = vmax.f32 %v3141, 0.0
        %v3392 = vmax.f32 %v3319, 0.0
        %v3393 = vmax.f32 %v3144, 0.0
        %v3394 = vmax.f32 %v3322, 0.0
        %v3395 = vmax.f32 %v3146, 0.0
        %v3396 = vmax.f32 %v3324, 0.0
        %v3397 = vmax.f32 %v3149, 0.0
        %v3398 = vmax.f32 %v3327, 0.0
        %v3399 = vmax.f32 %v3151, 0.0
        %v3400 = vmax.f32 %v3329, 0.0
        %v3401 = vmax.f32 %v3154, 0.0
        %v3402 = vmax.f32 %v3332, 0.0
        %v3403 = vmax.f32 %v3156, 0.0
        %v3404 = vmax.f32 %v3334, 0.0
        %v3405 = vmax.f32 %v3159, 0.0
        %v3406 = vmax.f32 %v3337, 0.0
        %v3407 = vmax.f32 %v3161, 0.0
        %v3408 = vmax.f32 %v3339, 0.0
        %v3409 = vmax.f32 %v3164, 0.0
        %v3410 = vmax.f32 %v3342, 0.0
        %v3411 = vmax.f32 %v3166, 0.0
        %v3412 = vmax.f32 %v3344, 0.0
        %v3413 = vmax.f32 %v3169, 0.0
        %v3414 = vmax.f32 %v3347, 0.0
        %v3415 = vmax.f32 %v3171, 0.0
        %v3416 = vmax.f32 %v3349, 0.0
        %v3417 = vmax.f32 %v3174, 0.0
        %v3418 = vmax.f32 %v3352, 0.0
        %v3419 = vmax.f32 %v3176, 0.0
        %v3420 = vmax.f32 %v3354, 0.0
        %v3421 = vmax.f32 %v3179, 0.0
        %v3422 = vmax.f32 %v3357, 0.0
        %v3423 = vmax.f32 %v3181, 0.0
        %v3424 = vmax.f32 %v3359, 0.0
        %v3425 = vpack.c.bf16 %v3363, %v3361
        %v3426 = vpack.c.bf16 %v3364, %v3362
        %v3427 = vpack.c.bf16 %v3367, %v3365
        %v3428 = vpack.c.bf16 %v3368, %v3366
        %v3429 = vpack.c.bf16 %v3371, %v3369
        %v3430 = vpack.c.bf16 %v3372, %v3370
        %v3431 = vpack.c.bf16 %v3375, %v3373
        %v3432 = vpack.c.bf16 %v3376, %v3374
        %v3433 = vpack.c.bf16 %v3379, %v3377
        %v3434 = vpack.c.bf16 %v3380, %v3378
        %v3435 = vpack.c.bf16 %v3383, %v3381
        %v3436 = vpack.c.bf16 %v3384, %v3382
        %v3437 = vpack.c.bf16 %v3387, %v3385
        %v3438 = vpack.c.bf16 %v3388, %v3386
        %v3439 = vpack.c.bf16 %v3391, %v3389
        %v3440 = vpack.c.bf16 %v3392, %v3390
        %v3441 = vpack.c.bf16 %v3395, %v3393
        %v3442 = vpack.c.bf16 %v3396, %v3394
        %v3443 = vpack.c.bf16 %v3399, %v3397
        %v3444 = vpack.c.bf16 %v3400, %v3398
        %v3445 = vpack.c.bf16 %v3403, %v3401
        %v3446 = vpack.c.bf16 %v3404, %v3402
        %v3447 = vpack.c.bf16 %v3407, %v3405
        %v3448 = vpack.c.bf16 %v3408, %v3406
        %v3449 = vpack.c.bf16 %v3411, %v3409
        %v3450 = vpack.c.bf16 %v3412, %v3410
        %v3451 = vpack.c.bf16 %v3415, %v3413
        %v3452 = vpack.c.bf16 %v3416, %v3414
        %v3453 = vpack.c.bf16 %v3419, %v3417
        %v3454 = vpack.c.bf16 %v3420, %v3418
        %v3455 = vpack.c.bf16 %v3423, %v3421
        %v3456 = vpack.c.bf16 %v3424, %v3422
        %s3457 = scalar_lea.vmem [#allocation2], 1024
        %v3458 = vld [vmem:[%s3457] sm:$0xff]
        %v3459 = vld [vmem:[%s3457 + $0x8] sm:$0xff]
        %v3460 = vld [vmem:[%s3457 + $0x10] sm:$0xff]
        %v3461 = vld [vmem:[%s3457 + $0x18] sm:$0xff]
        %v3462 = vld [vmem:[%s3457 + $0x20] sm:$0xff]
        %v3463 = vld [vmem:[%s3457 + $0x28] sm:$0xff]
        %v3464 = vld [vmem:[%s3457 + $0x30] sm:$0xff]
        %v3465 = vld [vmem:[%s3457 + $0x38] sm:$0xff]
        %v3466 = vld [vmem:[%s3457 + $0x40] sm:$0xff]
        %v3467 = vld [vmem:[%s3457 + $0x48] sm:$0xff]
        %v3468 = vld [vmem:[%s3457 + $0x50] sm:$0xff]
        %v3469 = vld [vmem:[%s3457 + $0x58] sm:$0xff]
        %v3470 = vld [vmem:[%s3457 + $0x60] sm:$0xff]
        %v3471 = vld [vmem:[%s3457 + $0x68] sm:$0xff]
        %v3472 = vld [vmem:[%s3457 + $0x70] sm:$0xff]
        %v3473 = vld [vmem:[%s3457 + $0x78] sm:$0xff]
        %v3474 = vld [vmem:[%s3457 + $0x80] sm:$0xff]
        %v3475 = vld [vmem:[%s3457 + $0x88] sm:$0xff]
        %v3476 = vld [vmem:[%s3457 + $0x90] sm:$0xff]
        %v3477 = vld [vmem:[%s3457 + $0x98] sm:$0xff]
        %v3478 = vld [vmem:[%s3457 + $0xa0] sm:$0xff]
        %v3479 = vld [vmem:[%s3457 + $0xa8] sm:$0xff]
        %v3480 = vld [vmem:[%s3457 + $0xb0] sm:$0xff]
        %v3481 = vld [vmem:[%s3457 + $0xb8] sm:$0xff]
        %v3482 = vld [vmem:[%s3457 + $0xc0] sm:$0xff]
        %v3483 = vld [vmem:[%s3457 + $0xc8] sm:$0xff]
        %v3484 = vld [vmem:[%s3457 + $0xd0] sm:$0xff]
        %v3485 = vld [vmem:[%s3457 + $0xd8] sm:$0xff]
        %v3486 = vld [vmem:[%s3457 + $0xe0] sm:$0xff]
        %v3487 = vld [vmem:[%s3457 + $0xe8] sm:$0xff]
        %v3488 = vld [vmem:[%s3457 + $0xf0] sm:$0xff]
        %v3489 = vld [vmem:[%s3457 + $0xf8] sm:$0xff]
        %s3490 = scalar_lea.vmem %s4, 4
        %v3491 = vld [vmem:[%s3490] ss:$8 sm:$0x3]
        %v3493 = vperm.slane %v3491, 0
        %v3494 = vperm.slane %v3491, 1
        %v3529 = vunpack.c.l.b16 %v3458
        %v3530 = vunpack.c.h.b16 %v3458
        %v3531 = vunpack.c.l.b16 %v3459
        %v3532 = vunpack.c.h.b16 %v3459
        %v3533 = vunpack.c.l.b16 %v3460
        %v3534 = vunpack.c.h.b16 %v3460
        %v3535 = vunpack.c.l.b16 %v3461
        %v3536 = vunpack.c.h.b16 %v3461
        %v3537 = vunpack.c.l.b16 %v3462
        %v3538 = vunpack.c.h.b16 %v3462
        %v3539 = vunpack.c.l.b16 %v3463
        %v3540 = vunpack.c.h.b16 %v3463
        %v3541 = vunpack.c.l.b16 %v3464
        %v3542 = vunpack.c.h.b16 %v3464
        %v3543 = vunpack.c.l.b16 %v3465
        %v3544 = vunpack.c.h.b16 %v3465
        %v3545 = vunpack.c.l.b16 %v3466
        %v3546 = vunpack.c.h.b16 %v3466
        %v3547 = vunpack.c.l.b16 %v3467
        %v3548 = vunpack.c.h.b16 %v3467
        %v3549 = vunpack.c.l.b16 %v3468
        %v3550 = vunpack.c.h.b16 %v3468
        %v3551 = vunpack.c.l.b16 %v3469
        %v3552 = vunpack.c.h.b16 %v3469
        %v3553 = vunpack.c.l.b16 %v3470
        %v3554 = vunpack.c.h.b16 %v3470
        %v3555 = vunpack.c.l.b16 %v3471
        %v3556 = vunpack.c.h.b16 %v3471
        %v3557 = vunpack.c.l.b16 %v3472
        %v3558 = vunpack.c.h.b16 %v3472
        %v3559 = vunpack.c.l.b16 %v3473
        %v3560 = vunpack.c.h.b16 %v3473
        %v3561 = vunpack.c.l.b16 %v3474
        %v3562 = vunpack.c.h.b16 %v3474
        %v3563 = vunpack.c.l.b16 %v3475
        %v3564 = vunpack.c.h.b16 %v3475
        %v3565 = vunpack.c.l.b16 %v3476
        %v3566 = vunpack.c.h.b16 %v3476
        %v3567 = vunpack.c.l.b16 %v3477
        %v3568 = vunpack.c.h.b16 %v3477
        %v3569 = vunpack.c.l.b16 %v3478
        %v3570 = vunpack.c.h.b16 %v3478
        %v3571 = vunpack.c.l.b16 %v3479
        %v3572 = vunpack.c.h.b16 %v3479
        %v3573 = vunpack.c.l.b16 %v3480
        %v3574 = vunpack.c.h.b16 %v3480
        %v3575 = vunpack.c.l.b16 %v3481
        %v3576 = vunpack.c.h.b16 %v3481
        %v3577 = vunpack.c.l.b16 %v3482
        %v3578 = vunpack.c.h.b16 %v3482
        %v3579 = vunpack.c.l.b16 %v3483
        %v3580 = vunpack.c.h.b16 %v3483
        %v3581 = vunpack.c.l.b16 %v3484
        %v3582 = vunpack.c.h.b16 %v3484
        %v3583 = vunpack.c.l.b16 %v3485
        %v3584 = vunpack.c.h.b16 %v3485
        %v3585 = vunpack.c.l.b16 %v3486
        %v3586 = vunpack.c.h.b16 %v3486
        %v3587 = vunpack.c.l.b16 %v3487
        %v3588 = vunpack.c.h.b16 %v3487
        %v3589 = vunpack.c.l.b16 %v3488
        %v3590 = vunpack.c.h.b16 %v3488
        %v3591 = vunpack.c.l.b16 %v3489
        %v3592 = vunpack.c.h.b16 %v3489
        %v3593 = vpack.c.b16 %v3531, %v3529
        %v3594 = vpack.c.b16 %v3532, %v3530
        %v3595 = vpack.c.b16 %v3535, %v3533
        %v3596 = vpack.c.b16 %v3536, %v3534
        %v3597 = vpack.c.b16 %v3539, %v3537
        %v3598 = vpack.c.b16 %v3540, %v3538
        %v3599 = vpack.c.b16 %v3543, %v3541
        %v3600 = vpack.c.b16 %v3544, %v3542
        %v3601 = vpack.c.b16 %v3547, %v3545
        %v3602 = vpack.c.b16 %v3548, %v3546
        %v3603 = vpack.c.b16 %v3551, %v3549
        %v3604 = vpack.c.b16 %v3552, %v3550
        %v3605 = vpack.c.b16 %v3555, %v3553
        %v3606 = vpack.c.b16 %v3556, %v3554
        %v3607 = vpack.c.b16 %v3559, %v3557
        %v3608 = vpack.c.b16 %v3560, %v3558
        %v3609 = vpack.c.b16 %v3563, %v3561
        %v3610 = vpack.c.b16 %v3564, %v3562
        %v3611 = vpack.c.b16 %v3567, %v3565
        %v3612 = vpack.c.b16 %v3568, %v3566
        %v3613 = vpack.c.b16 %v3571, %v3569
        %v3614 = vpack.c.b16 %v3572, %v3570
        %v3615 = vpack.c.b16 %v3575, %v3573
        %v3616 = vpack.c.b16 %v3576, %v3574
        %v3617 = vpack.c.b16 %v3579, %v3577
        %v3618 = vpack.c.b16 %v3580, %v3578
        %v3619 = vpack.c.b16 %v3583, %v3581
        %v3620 = vpack.c.b16 %v3584, %v3582
        %v3621 = vpack.c.b16 %v3587, %v3585
        %v3622 = vpack.c.b16 %v3588, %v3586
        %v3623 = vpack.c.b16 %v3591, %v3589
        %v3624 = vpack.c.b16 %v3592, %v3590
        %3657 = vmatpush.bf16.msra.mxu0 %v3607
        %3658 = vmatpush.bf16.msra.mxu0 %v3605
        %3659 = vmatpush.bf16.msra.mxu0 %v3603
        %3660 = vmatpush.bf16.msra.mxu0 %v3601
        %3661 = vmatpush.bf16.msra.mxu0 %v3599
        %3662 = vmatpush.bf16.msra.mxu0 %v3597
        %3663 = vmatpush.bf16.msra.mxu0 %v3595
        %3664 = vmatpush.bf16.msra.mxu0 %v3593
        %3665 = vmatmul.bf16.gmra.mxu0 %v3425
        %v3666 = vpop.f32.mrf.mxu0
        %v3667 = vadd.f32 %v3493, %v3666
        %v3668 = vpop.f32.mrf.mxu0
        %v3669 = vadd.f32 %v3493, %v3668
        %3670 = vmatmul.bf16.gmra.mxu0 %v3427
        %v3671 = vpop.f32.mrf.mxu0
        %v3672 = vadd.f32 %v3493, %v3671
        %v3673 = vpop.f32.mrf.mxu0
        %v3674 = vadd.f32 %v3493, %v3673
        %3675 = vmatmul.bf16.gmra.mxu0 %v3429
        %v3676 = vpop.f32.mrf.mxu0
        %v3677 = vadd.f32 %v3493, %v3676
        %v3678 = vpop.f32.mrf.mxu0
        %v3679 = vadd.f32 %v3493, %v3678
        %3680 = vmatmul.bf16.gmra.mxu0 %v3431
        %v3681 = vpop.f32.mrf.mxu0
        %v3682 = vadd.f32 %v3493, %v3681
        %v3683 = vpop.f32.mrf.mxu0
        %v3684 = vadd.f32 %v3493, %v3683
        %3685 = vmatmul.bf16.gmra.mxu0 %v3433
        %v3686 = vpop.f32.mrf.mxu0
        %v3687 = vadd.f32 %v3493, %v3686
        %v3688 = vpop.f32.mrf.mxu0
        %v3689 = vadd.f32 %v3493, %v3688
        %3690 = vmatmul.bf16.gmra.mxu0 %v3435
        %v3691 = vpop.f32.mrf.mxu0
        %v3692 = vadd.f32 %v3493, %v3691
        %v3693 = vpop.f32.mrf.mxu0
        %v3694 = vadd.f32 %v3493, %v3693
        %3695 = vmatmul.bf16.gmra.mxu0 %v3437
        %v3696 = vpop.f32.mrf.mxu0
        %v3697 = vadd.f32 %v3493, %v3696
        %v3698 = vpop.f32.mrf.mxu0
        %v3699 = vadd.f32 %v3493, %v3698
        %3700 = vmatmul.bf16.gmra.mxu0 %v3439
        %v3701 = vpop.f32.mrf.mxu0
        %v3702 = vadd.f32 %v3493, %v3701
        %v3703 = vpop.f32.mrf.mxu0
        %v3704 = vadd.f32 %v3493, %v3703
        %3705 = vmatmul.bf16.gmra.mxu0 %v3441
        %v3706 = vpop.f32.mrf.mxu0
        %v3707 = vadd.f32 %v3493, %v3706
        %v3708 = vpop.f32.mrf.mxu0
        %v3709 = vadd.f32 %v3493, %v3708
        %3710 = vmatmul.bf16.gmra.mxu0 %v3443
        %v3711 = vpop.f32.mrf.mxu0
        %v3712 = vadd.f32 %v3493, %v3711
        %v3713 = vpop.f32.mrf.mxu0
        %v3714 = vadd.f32 %v3493, %v3713
        %3715 = vmatmul.bf16.gmra.mxu0 %v3445
        %v3716 = vpop.f32.mrf.mxu0
        %v3717 = vadd.f32 %v3493, %v3716
        %v3718 = vpop.f32.mrf.mxu0
        %v3719 = vadd.f32 %v3493, %v3718
        %3720 = vmatmul.bf16.gmra.mxu0 %v3447
        %v3721 = vpop.f32.mrf.mxu0
        %v3722 = vadd.f32 %v3493, %v3721
        %v3723 = vpop.f32.mrf.mxu0
        %v3724 = vadd.f32 %v3493, %v3723
        %3725 = vmatmul.bf16.gmra.mxu0 %v3449
        %v3726 = vpop.f32.mrf.mxu0
        %v3727 = vadd.f32 %v3493, %v3726
        %v3728 = vpop.f32.mrf.mxu0
        %v3729 = vadd.f32 %v3493, %v3728
        %3730 = vmatmul.bf16.gmra.mxu0 %v3451
        %v3731 = vpop.f32.mrf.mxu0
        %v3732 = vadd.f32 %v3493, %v3731
        %v3733 = vpop.f32.mrf.mxu0
        %v3734 = vadd.f32 %v3493, %v3733
        %3735 = vmatmul.bf16.gmra.mxu0 %v3453
        %v3736 = vpop.f32.mrf.mxu0
        %v3737 = vadd.f32 %v3493, %v3736
        %v3738 = vpop.f32.mrf.mxu0
        %v3739 = vadd.f32 %v3493, %v3738
        %3740 = vmatmul.bf16.gmra.mxu0 %v3455
        %v3741 = vpop.f32.mrf.mxu0
        %v3742 = vadd.f32 %v3493, %v3741
        %v3743 = vpop.f32.mrf.mxu0
        %v3744 = vadd.f32 %v3493, %v3743
        %3745 = vdwg.mxu0
        %3746 = vmatpush.bf16.msra.mxu0 %v3623
        %3747 = vmatpush.bf16.msra.mxu0 %v3621
        %3748 = vmatpush.bf16.msra.mxu0 %v3619
        %3749 = vmatpush.bf16.msra.mxu0 %v3617
        %3750 = vmatpush.bf16.msra.mxu0 %v3615
        %3751 = vmatpush.bf16.msra.mxu0 %v3613
        %3752 = vmatpush.bf16.msra.mxu0 %v3611
        %3753 = vmatpush.bf16.msra.mxu0 %v3609
        %3754 = vmatmul.bf16.gmra.mxu0 %v3426
        %v3755 = vpop.f32.mrf.mxu0
        %v3756 = vadd.f32 %v3667, %v3755
        %v3757 = vpop.f32.mrf.mxu0
        %v3758 = vadd.f32 %v3669, %v3757
        %3759 = vmatmul.bf16.gmra.mxu0 %v3428
        %v3760 = vpop.f32.mrf.mxu0
        %v3761 = vadd.f32 %v3672, %v3760
        %v3762 = vpop.f32.mrf.mxu0
        %v3763 = vadd.f32 %v3674, %v3762
        %3764 = vmatmul.bf16.gmra.mxu0 %v3430
        %v3765 = vpop.f32.mrf.mxu0
        %v3766 = vadd.f32 %v3677, %v3765
        %v3767 = vpop.f32.mrf.mxu0
        %v3768 = vadd.f32 %v3679, %v3767
        %3769 = vmatmul.bf16.gmra.mxu0 %v3432
        %v3770 = vpop.f32.mrf.mxu0
        %v3771 = vadd.f32 %v3682, %v3770
        %v3772 = vpop.f32.mrf.mxu0
        %v3773 = vadd.f32 %v3684, %v3772
        %3774 = vmatmul.bf16.gmra.mxu0 %v3434
        %v3775 = vpop.f32.mrf.mxu0
        %v3776 = vadd.f32 %v3687, %v3775
        %v3777 = vpop.f32.mrf.mxu0
        %v3778 = vadd.f32 %v3689, %v3777
        %3779 = vmatmul.bf16.gmra.mxu0 %v3436
        %v3780 = vpop.f32.mrf.mxu0
        %v3781 = vadd.f32 %v3692, %v3780
        %v3782 = vpop.f32.mrf.mxu0
        %v3783 = vadd.f32 %v3694, %v3782
        %3784 = vmatmul.bf16.gmra.mxu0 %v3438
        %v3785 = vpop.f32.mrf.mxu0
        %v3786 = vadd.f32 %v3697, %v3785
        %v3787 = vpop.f32.mrf.mxu0
        %v3788 = vadd.f32 %v3699, %v3787
        %3789 = vmatmul.bf16.gmra.mxu0 %v3440
        %v3790 = vpop.f32.mrf.mxu0
        %v3791 = vadd.f32 %v3702, %v3790
        %v3792 = vpop.f32.mrf.mxu0
        %v3793 = vadd.f32 %v3704, %v3792
        %3794 = vmatmul.bf16.gmra.mxu0 %v3442
        %v3795 = vpop.f32.mrf.mxu0
        %v3796 = vadd.f32 %v3707, %v3795
        %v3797 = vpop.f32.mrf.mxu0
        %v3798 = vadd.f32 %v3709, %v3797
        %3799 = vmatmul.bf16.gmra.mxu0 %v3444
        %v3800 = vpop.f32.mrf.mxu0
        %v3801 = vadd.f32 %v3712, %v3800
        %v3802 = vpop.f32.mrf.mxu0
        %v3803 = vadd.f32 %v3714, %v3802
        %3804 = vmatmul.bf16.gmra.mxu0 %v3446
        %v3805 = vpop.f32.mrf.mxu0
        %v3806 = vadd.f32 %v3717, %v3805
        %v3807 = vpop.f32.mrf.mxu0
        %v3808 = vadd.f32 %v3719, %v3807
        %3809 = vmatmul.bf16.gmra.mxu0 %v3448
        %v3810 = vpop.f32.mrf.mxu0
        %v3811 = vadd.f32 %v3722, %v3810
        %v3812 = vpop.f32.mrf.mxu0
        %v3813 = vadd.f32 %v3724, %v3812
        %3814 = vmatmul.bf16.gmra.mxu0 %v3450
        %v3815 = vpop.f32.mrf.mxu0
        %v3816 = vadd.f32 %v3727, %v3815
        %v3817 = vpop.f32.mrf.mxu0
        %v3818 = vadd.f32 %v3729, %v3817
        %3819 = vmatmul.bf16.gmra.mxu0 %v3452
        %v3820 = vpop.f32.mrf.mxu0
        %v3821 = vadd.f32 %v3732, %v3820
        %v3822 = vpop.f32.mrf.mxu0
        %v3823 = vadd.f32 %v3734, %v3822
        %3824 = vmatmul.bf16.gmra.mxu0 %v3454
        %v3825 = vpop.f32.mrf.mxu0
        %v3826 = vadd.f32 %v3737, %v3825
        %v3827 = vpop.f32.mrf.mxu0
        %v3828 = vadd.f32 %v3739, %v3827
        %3829 = vmatmul.bf16.gmra.mxu0 %v3456
        %v3830 = vpop.f32.mrf.mxu0
        %v3831 = vadd.f32 %v3742, %v3830
        %v3832 = vpop.f32.mrf.mxu0
        %v3833 = vadd.f32 %v3744, %v3832
        %3834 = vdwg.mxu0
        %3835 = vmatpush.bf16.msra.mxu0 %v3608
        %3836 = vmatpush.bf16.msra.mxu0 %v3606
        %3837 = vmatpush.bf16.msra.mxu0 %v3604
        %3838 = vmatpush.bf16.msra.mxu0 %v3602
        %3839 = vmatpush.bf16.msra.mxu0 %v3600
        %3840 = vmatpush.bf16.msra.mxu0 %v3598
        %3841 = vmatpush.bf16.msra.mxu0 %v3596
        %3842 = vmatpush.bf16.msra.mxu0 %v3594
        %3843 = vmatmul.bf16.gmra.mxu0 %v3425
        %v3844 = vpop.f32.mrf.mxu0
        %v3845 = vadd.f32 %v3494, %v3844
        %v3846 = vpop.f32.mrf.mxu0
        %v3847 = vadd.f32 %v3494, %v3846
        %3848 = vmatmul.bf16.gmra.mxu0 %v3427
        %v3849 = vpop.f32.mrf.mxu0
        %v3850 = vadd.f32 %v3494, %v3849
        %v3851 = vpop.f32.mrf.mxu0
        %v3852 = vadd.f32 %v3494, %v3851
        %3853 = vmatmul.bf16.gmra.mxu0 %v3429
        %v3854 = vpop.f32.mrf.mxu0
        %v3855 = vadd.f32 %v3494, %v3854
        %v3856 = vpop.f32.mrf.mxu0
        %v3857 = vadd.f32 %v3494, %v3856
        %3858 = vmatmul.bf16.gmra.mxu0 %v3431
        %v3859 = vpop.f32.mrf.mxu0
        %v3860 = vadd.f32 %v3494, %v3859
        %v3861 = vpop.f32.mrf.mxu0
        %v3862 = vadd.f32 %v3494, %v3861
        %3863 = vmatmul.bf16.gmra.mxu0 %v3433
        %v3864 = vpop.f32.mrf.mxu0
        %v3865 = vadd.f32 %v3494, %v3864
        %v3866 = vpop.f32.mrf.mxu0
        %v3867 = vadd.f32 %v3494, %v3866
        %3868 = vmatmul.bf16.gmra.mxu0 %v3435
        %v3869 = vpop.f32.mrf.mxu0
        %v3870 = vadd.f32 %v3494, %v3869
        %v3871 = vpop.f32.mrf.mxu0
        %v3872 = vadd.f32 %v3494, %v3871
        %3873 = vmatmul.bf16.gmra.mxu0 %v3437
        %v3874 = vpop.f32.mrf.mxu0
        %v3875 = vadd.f32 %v3494, %v3874
        %v3876 = vpop.f32.mrf.mxu0
        %v3877 = vadd.f32 %v3494, %v3876
        %3878 = vmatmul.bf16.gmra.mxu0 %v3439
        %v3879 = vpop.f32.mrf.mxu0
        %v3880 = vadd.f32 %v3494, %v3879
        %v3881 = vpop.f32.mrf.mxu0
        %v3882 = vadd.f32 %v3494, %v3881
        %3883 = vmatmul.bf16.gmra.mxu0 %v3441
        %v3884 = vpop.f32.mrf.mxu0
        %v3885 = vadd.f32 %v3494, %v3884
        %v3886 = vpop.f32.mrf.mxu0
        %v3887 = vadd.f32 %v3494, %v3886
        %3888 = vmatmul.bf16.gmra.mxu0 %v3443
        %v3889 = vpop.f32.mrf.mxu0
        %v3890 = vadd.f32 %v3494, %v3889
        %v3891 = vpop.f32.mrf.mxu0
        %v3892 = vadd.f32 %v3494, %v3891
        %3893 = vmatmul.bf16.gmra.mxu0 %v3445
        %v3894 = vpop.f32.mrf.mxu0
        %v3895 = vadd.f32 %v3494, %v3894
        %v3896 = vpop.f32.mrf.mxu0
        %v3897 = vadd.f32 %v3494, %v3896
        %3898 = vmatmul.bf16.gmra.mxu0 %v3447
        %v3899 = vpop.f32.mrf.mxu0
        %v3900 = vadd.f32 %v3494, %v3899
        %v3901 = vpop.f32.mrf.mxu0
        %v3902 = vadd.f32 %v3494, %v3901
        %3903 = vmatmul.bf16.gmra.mxu0 %v3449
        %v3904 = vpop.f32.mrf.mxu0
        %v3905 = vadd.f32 %v3494, %v3904
        %v3906 = vpop.f32.mrf.mxu0
        %v3907 = vadd.f32 %v3494, %v3906
        %3908 = vmatmul.bf16.gmra.mxu0 %v3451
        %v3909 = vpop.f32.mrf.mxu0
        %v3910 = vadd.f32 %v3494, %v3909
        %v3911 = vpop.f32.mrf.mxu0
        %v3912 = vadd.f32 %v3494, %v3911
        %3913 = vmatmul.bf16.gmra.mxu0 %v3453
        %v3914 = vpop.f32.mrf.mxu0
        %v3915 = vadd.f32 %v3494, %v3914
        %v3916 = vpop.f32.mrf.mxu0
        %v3917 = vadd.f32 %v3494, %v3916
        %3918 = vmatmul.bf16.gmra.mxu0 %v3455
        %v3919 = vpop.f32.mrf.mxu0
        %v3920 = vadd.f32 %v3494, %v3919
        %v3921 = vpop.f32.mrf.mxu0
        %v3922 = vadd.f32 %v3494, %v3921
        %3923 = vdwg.mxu0
        %3924 = vmatpush.bf16.msra.mxu0 %v3624
        %3925 = vmatpush.bf16.msra.mxu0 %v3622
        %3926 = vmatpush.bf16.msra.mxu0 %v3620
        %3927 = vmatpush.bf16.msra.mxu0 %v3618
        %3928 = vmatpush.bf16.msra.mxu0 %v3616
        %3929 = vmatpush.bf16.msra.mxu0 %v3614
        %3930 = vmatpush.bf16.msra.mxu0 %v3612
        %3931 = vmatpush.bf16.msra.mxu0 %v3610
        %3932 = vmatmul.bf16.gmra.mxu0 %v3426
        %v3933 = vpop.f32.mrf.mxu0
        %v3934 = vadd.f32 %v3845, %v3933
        %v3935 = vpop.f32.mrf.mxu0
        %v3936 = vadd.f32 %v3847, %v3935
        %3937 = vmatmul.bf16.gmra.mxu0 %v3428
        %v3938 = vpop.f32.mrf.mxu0
        %v3939 = vadd.f32 %v3850, %v3938
        %v3940 = vpop.f32.mrf.mxu0
        %v3941 = vadd.f32 %v3852, %v3940
        %3942 = vmatmul.bf16.gmra.mxu0 %v3430
        %v3943 = vpop.f32.mrf.mxu0
        %v3944 = vadd.f32 %v3855, %v3943
        %v3945 = vpop.f32.mrf.mxu0
        %v3946 = vadd.f32 %v3857, %v3945
        %3947 = vmatmul.bf16.gmra.mxu0 %v3432
        %v3948 = vpop.f32.mrf.mxu0
        %v3949 = vadd.f32 %v3860, %v3948
        %v3950 = vpop.f32.mrf.mxu0
        %v3951 = vadd.f32 %v3862, %v3950
        %3952 = vmatmul.bf16.gmra.mxu0 %v3434
        %v3953 = vpop.f32.mrf.mxu0
        %v3954 = vadd.f32 %v3865, %v3953
        %v3955 = vpop.f32.mrf.mxu0
        %v3956 = vadd.f32 %v3867, %v3955
        %3957 = vmatmul.bf16.gmra.mxu0 %v3436
        %v3958 = vpop.f32.mrf.mxu0
        %v3959 = vadd.f32 %v3870, %v3958
        %v3960 = vpop.f32.mrf.mxu0
        %v3961 = vadd.f32 %v3872, %v3960
        %3962 = vmatmul.bf16.gmra.mxu0 %v3438
        %v3963 = vpop.f32.mrf.mxu0
        %v3964 = vadd.f32 %v3875, %v3963
        %v3965 = vpop.f32.mrf.mxu0
        %v3966 = vadd.f32 %v3877, %v3965
        %3967 = vmatmul.bf16.gmra.mxu0 %v3440
        %v3968 = vpop.f32.mrf.mxu0
        %v3969 = vadd.f32 %v3880, %v3968
        %v3970 = vpop.f32.mrf.mxu0
        %v3971 = vadd.f32 %v3882, %v3970
        %3972 = vmatmul.bf16.gmra.mxu0 %v3442
        %v3973 = vpop.f32.mrf.mxu0
        %v3974 = vadd.f32 %v3885, %v3973
        %v3975 = vpop.f32.mrf.mxu0
        %v3976 = vadd.f32 %v3887, %v3975
        %3977 = vmatmul.bf16.gmra.mxu0 %v3444
        %v3978 = vpop.f32.mrf.mxu0
        %v3979 = vadd.f32 %v3890, %v3978
        %v3980 = vpop.f32.mrf.mxu0
        %v3981 = vadd.f32 %v3892, %v3980
        %3982 = vmatmul.bf16.gmra.mxu0 %v3446
        %v3983 = vpop.f32.mrf.mxu0
        %v3984 = vadd.f32 %v3895, %v3983
        %v3985 = vpop.f32.mrf.mxu0
        %v3986 = vadd.f32 %v3897, %v3985
        %3987 = vmatmul.bf16.gmra.mxu0 %v3448
        %v3988 = vpop.f32.mrf.mxu0
        %v3989 = vadd.f32 %v3900, %v3988
        %v3990 = vpop.f32.mrf.mxu0
        %v3991 = vadd.f32 %v3902, %v3990
        %3992 = vmatmul.bf16.gmra.mxu0 %v3450
        %v3993 = vpop.f32.mrf.mxu0
        %v3994 = vadd.f32 %v3905, %v3993
        %v3995 = vpop.f32.mrf.mxu0
        %v3996 = vadd.f32 %v3907, %v3995
        %3997 = vmatmul.bf16.gmra.mxu0 %v3452
        %v3998 = vpop.f32.mrf.mxu0
        %v3999 = vadd.f32 %v3910, %v3998
        %v4000 = vpop.f32.mrf.mxu0
        %v4001 = vadd.f32 %v3912, %v4000
        %4002 = vmatmul.bf16.gmra.mxu0 %v3454
        %v4003 = vpop.f32.mrf.mxu0
        %v4004 = vadd.f32 %v3915, %v4003
        %v4005 = vpop.f32.mrf.mxu0
        %v4006 = vadd.f32 %v3917, %v4005
        %4007 = vmatmul.bf16.gmra.mxu0 %v3456
        %v4008 = vpop.f32.mrf.mxu0
        %v4009 = vadd.f32 %v3920, %v4008
        %v4010 = vpop.f32.mrf.mxu0
        %v4011 = vadd.f32 %v3922, %v4010
        %4012 = vdwg.mxu0
        %v4013 = vmax.f32 %v3756, 0.0
        %v4014 = vmax.f32 %v3934, 0.0
        %v4015 = vmax.f32 %v3758, 0.0
        %v4016 = vmax.f32 %v3936, 0.0
        %v4017 = vmax.f32 %v3761, 0.0
        %v4018 = vmax.f32 %v3939, 0.0
        %v4019 = vmax.f32 %v3763, 0.0
        %v4020 = vmax.f32 %v3941, 0.0
        %v4021 = vmax.f32 %v3766, 0.0
        %v4022 = vmax.f32 %v3944, 0.0
        %v4023 = vmax.f32 %v3768, 0.0
        %v4024 = vmax.f32 %v3946, 0.0
        %v4025 = vmax.f32 %v3771, 0.0
        %v4026 = vmax.f32 %v3949, 0.0
        %v4027 = vmax.f32 %v3773, 0.0
        %v4028 = vmax.f32 %v3951, 0.0
        %v4029 = vmax.f32 %v3776, 0.0
        %v4030 = vmax.f32 %v3954, 0.0
        %v4031 = vmax.f32 %v3778, 0.0
        %v4032 = vmax.f32 %v3956, 0.0
        %v4033 = vmax.f32 %v3781, 0.0
        %v4034 = vmax.f32 %v3959, 0.0
        %v4035 = vmax.f32 %v3783, 0.0
        %v4036 = vmax.f32 %v3961, 0.0
        %v4037 = vmax.f32 %v3786, 0.0
        %v4038 = vmax.f32 %v3964, 0.0
        %v4039 = vmax.f32 %v3788, 0.0
        %v4040 = vmax.f32 %v3966, 0.0
        %v4041 = vmax.f32 %v3791, 0.0
        %v4042 = vmax.f32 %v3969, 0.0
        %v4043 = vmax.f32 %v3793, 0.0
        %v4044 = vmax.f32 %v3971, 0.0
        %v4045 = vmax.f32 %v3796, 0.0
        %v4046 = vmax.f32 %v3974, 0.0
        %v4047 = vmax.f32 %v3798, 0.0
        %v4048 = vmax.f32 %v3976, 0.0
        %v4049 = vmax.f32 %v3801, 0.0
        %v4050 = vmax.f32 %v3979, 0.0
        %v4051 = vmax.f32 %v3803, 0.0
        %v4052 = vmax.f32 %v3981, 0.0
        %v4053 = vmax.f32 %v3806, 0.0
        %v4054 = vmax.f32 %v3984, 0.0
        %v4055 = vmax.f32 %v3808, 0.0
        %v4056 = vmax.f32 %v3986, 0.0
        %v4057 = vmax.f32 %v3811, 0.0
        %v4058 = vmax.f32 %v3989, 0.0
        %v4059 = vmax.f32 %v3813, 0.0
        %v4060 = vmax.f32 %v3991, 0.0
        %v4061 = vmax.f32 %v3816, 0.0
        %v4062 = vmax.f32 %v3994, 0.0
        %v4063 = vmax.f32 %v3818, 0.0
        %v4064 = vmax.f32 %v3996, 0.0
        %v4065 = vmax.f32 %v3821, 0.0
        %v4066 = vmax.f32 %v3999, 0.0
        %v4067 = vmax.f32 %v3823, 0.0
        %v4068 = vmax.f32 %v4001, 0.0
        %v4069 = vmax.f32 %v3826, 0.0
        %v4070 = vmax.f32 %v4004, 0.0
        %v4071 = vmax.f32 %v3828, 0.0
        %v4072 = vmax.f32 %v4006, 0.0
        %v4073 = vmax.f32 %v3831, 0.0
        %v4074 = vmax.f32 %v4009, 0.0
        %v4075 = vmax.f32 %v3833, 0.0
        %v4076 = vmax.f32 %v4011, 0.0
        %v4077 = vpack.c.bf16 %v4015, %v4013
        %v4078 = vpack.c.bf16 %v4016, %v4014
        %v4079 = vpack.c.bf16 %v4019, %v4017
        %v4080 = vpack.c.bf16 %v4020, %v4018
        %v4081 = vpack.c.bf16 %v4023, %v4021
        %v4082 = vpack.c.bf16 %v4024, %v4022
        %v4083 = vpack.c.bf16 %v4027, %v4025
        %v4084 = vpack.c.bf16 %v4028, %v4026
        %v4085 = vpack.c.bf16 %v4031, %v4029
        %v4086 = vpack.c.bf16 %v4032, %v4030
        %v4087 = vpack.c.bf16 %v4035, %v4033
        %v4088 = vpack.c.bf16 %v4036, %v4034
        %v4089 = vpack.c.bf16 %v4039, %v4037
        %v4090 = vpack.c.bf16 %v4040, %v4038
        %v4091 = vpack.c.bf16 %v4043, %v4041
        %v4092 = vpack.c.bf16 %v4044, %v4042
        %v4093 = vpack.c.bf16 %v4047, %v4045
        %v4094 = vpack.c.bf16 %v4048, %v4046
        %v4095 = vpack.c.bf16 %v4051, %v4049
        %v4096 = vpack.c.bf16 %v4052, %v4050
        %v4097 = vpack.c.bf16 %v4055, %v4053
        %v4098 = vpack.c.bf16 %v4056, %v4054
        %v4099 = vpack.c.bf16 %v4059, %v4057
        %v4100 = vpack.c.bf16 %v4060, %v4058
        %v4101 = vpack.c.bf16 %v4063, %v4061
        %v4102 = vpack.c.bf16 %v4064, %v4062
        %v4103 = vpack.c.bf16 %v4067, %v4065
        %v4104 = vpack.c.bf16 %v4068, %v4066
        %v4105 = vpack.c.bf16 %v4071, %v4069
        %v4106 = vpack.c.bf16 %v4072, %v4070
        %v4107 = vpack.c.bf16 %v4075, %v4073
        %v4108 = vpack.c.bf16 %v4076, %v4074
        %s4109 = scalar_lea.vmem [#allocation2], 1280
        %v4110 = vld [vmem:[%s4109] sm:$0xff]
        %v4111 = vld [vmem:[%s4109 + $0x8] sm:$0xff]
        %v4112 = vld [vmem:[%s4109 + $0x10] sm:$0xff]
        %v4113 = vld [vmem:[%s4109 + $0x18] sm:$0xff]
        %v4114 = vld [vmem:[%s4109 + $0x20] sm:$0xff]
        %v4115 = vld [vmem:[%s4109 + $0x28] sm:$0xff]
        %v4116 = vld [vmem:[%s4109 + $0x30] sm:$0xff]
        %v4117 = vld [vmem:[%s4109 + $0x38] sm:$0xff]
        %v4118 = vld [vmem:[%s4109 + $0x40] sm:$0xff]
        %v4119 = vld [vmem:[%s4109 + $0x48] sm:$0xff]
        %v4120 = vld [vmem:[%s4109 + $0x50] sm:$0xff]
        %v4121 = vld [vmem:[%s4109 + $0x58] sm:$0xff]
        %v4122 = vld [vmem:[%s4109 + $0x60] sm:$0xff]
        %v4123 = vld [vmem:[%s4109 + $0x68] sm:$0xff]
        %v4124 = vld [vmem:[%s4109 + $0x70] sm:$0xff]
        %v4125 = vld [vmem:[%s4109 + $0x78] sm:$0xff]
        %v4126 = vld [vmem:[%s4109 + $0x80] sm:$0xff]
        %v4127 = vld [vmem:[%s4109 + $0x88] sm:$0xff]
        %v4128 = vld [vmem:[%s4109 + $0x90] sm:$0xff]
        %v4129 = vld [vmem:[%s4109 + $0x98] sm:$0xff]
        %v4130 = vld [vmem:[%s4109 + $0xa0] sm:$0xff]
        %v4131 = vld [vmem:[%s4109 + $0xa8] sm:$0xff]
        %v4132 = vld [vmem:[%s4109 + $0xb0] sm:$0xff]
        %v4133 = vld [vmem:[%s4109 + $0xb8] sm:$0xff]
        %v4134 = vld [vmem:[%s4109 + $0xc0] sm:$0xff]
        %v4135 = vld [vmem:[%s4109 + $0xc8] sm:$0xff]
        %v4136 = vld [vmem:[%s4109 + $0xd0] sm:$0xff]
        %v4137 = vld [vmem:[%s4109 + $0xd8] sm:$0xff]
        %v4138 = vld [vmem:[%s4109 + $0xe0] sm:$0xff]
        %v4139 = vld [vmem:[%s4109 + $0xe8] sm:$0xff]
        %v4140 = vld [vmem:[%s4109 + $0xf0] sm:$0xff]
        %v4141 = vld [vmem:[%s4109 + $0xf8] sm:$0xff]
        %s4142 = scalar_lea.vmem %s4, 5
        %v4143 = vld [vmem:[%s4142] ss:$8 sm:$0x3]
        %v4145 = vperm.slane %v4143, 0
        %v4146 = vperm.slane %v4143, 1
        %v4181 = vunpack.c.l.b16 %v4110
        %v4182 = vunpack.c.h.b16 %v4110
        %v4183 = vunpack.c.l.b16 %v4111
        %v4184 = vunpack.c.h.b16 %v4111
        %v4185 = vunpack.c.l.b16 %v4112
        %v4186 = vunpack.c.h.b16 %v4112
        %v4187 = vunpack.c.l.b16 %v4113
        %v4188 = vunpack.c.h.b16 %v4113
        %v4189 = vunpack.c.l.b16 %v4114
        %v4190 = vunpack.c.h.b16 %v4114
        %v4191 = vunpack.c.l.b16 %v4115
        %v4192 = vunpack.c.h.b16 %v4115
        %v4193 = vunpack.c.l.b16 %v4116
        %v4194 = vunpack.c.h.b16 %v4116
        %v4195 = vunpack.c.l.b16 %v4117
        %v4196 = vunpack.c.h.b16 %v4117
        %v4197 = vunpack.c.l.b16 %v4118
        %v4198 = vunpack.c.h.b16 %v4118
        %v4199 = vunpack.c.l.b16 %v4119
        %v4200 = vunpack.c.h.b16 %v4119
        %v4201 = vunpack.c.l.b16 %v4120
        %v4202 = vunpack.c.h.b16 %v4120
        %v4203 = vunpack.c.l.b16 %v4121
        %v4204 = vunpack.c.h.b16 %v4121
        %v4205 = vunpack.c.l.b16 %v4122
        %v4206 = vunpack.c.h.b16 %v4122
        %v4207 = vunpack.c.l.b16 %v4123
        %v4208 = vunpack.c.h.b16 %v4123
        %v4209 = vunpack.c.l.b16 %v4124
        %v4210 = vunpack.c.h.b16 %v4124
        %v4211 = vunpack.c.l.b16 %v4125
        %v4212 = vunpack.c.h.b16 %v4125
        %v4213 = vunpack.c.l.b16 %v4126
        %v4214 = vunpack.c.h.b16 %v4126
        %v4215 = vunpack.c.l.b16 %v4127
        %v4216 = vunpack.c.h.b16 %v4127
        %v4217 = vunpack.c.l.b16 %v4128
        %v4218 = vunpack.c.h.b16 %v4128
        %v4219 = vunpack.c.l.b16 %v4129
        %v4220 = vunpack.c.h.b16 %v4129
        %v4221 = vunpack.c.l.b16 %v4130
        %v4222 = vunpack.c.h.b16 %v4130
        %v4223 = vunpack.c.l.b16 %v4131
        %v4224 = vunpack.c.h.b16 %v4131
        %v4225 = vunpack.c.l.b16 %v4132
        %v4226 = vunpack.c.h.b16 %v4132
        %v4227 = vunpack.c.l.b16 %v4133
        %v4228 = vunpack.c.h.b16 %v4133
        %v4229 = vunpack.c.l.b16 %v4134
        %v4230 = vunpack.c.h.b16 %v4134
        %v4231 = vunpack.c.l.b16 %v4135
        %v4232 = vunpack.c.h.b16 %v4135
        %v4233 = vunpack.c.l.b16 %v4136
        %v4234 = vunpack.c.h.b16 %v4136
        %v4235 = vunpack.c.l.b16 %v4137
        %v4236 = vunpack.c.h.b16 %v4137
        %v4237 = vunpack.c.l.b16 %v4138
        %v4238 = vunpack.c.h.b16 %v4138
        %v4239 = vunpack.c.l.b16 %v4139
        %v4240 = vunpack.c.h.b16 %v4139
        %v4241 = vunpack.c.l.b16 %v4140
        %v4242 = vunpack.c.h.b16 %v4140
        %v4243 = vunpack.c.l.b16 %v4141
        %v4244 = vunpack.c.h.b16 %v4141
        %v4245 = vpack.c.b16 %v4183, %v4181
        %v4246 = vpack.c.b16 %v4184, %v4182
        %v4247 = vpack.c.b16 %v4187, %v4185
        %v4248 = vpack.c.b16 %v4188, %v4186
        %v4249 = vpack.c.b16 %v4191, %v4189
        %v4250 = vpack.c.b16 %v4192, %v4190
        %v4251 = vpack.c.b16 %v4195, %v4193
        %v4252 = vpack.c.b16 %v4196, %v4194
        %v4253 = vpack.c.b16 %v4199, %v4197
        %v4254 = vpack.c.b16 %v4200, %v4198
        %v4255 = vpack.c.b16 %v4203, %v4201
        %v4256 = vpack.c.b16 %v4204, %v4202
        %v4257 = vpack.c.b16 %v4207, %v4205
        %v4258 = vpack.c.b16 %v4208, %v4206
        %v4259 = vpack.c.b16 %v4211, %v4209
        %v4260 = vpack.c.b16 %v4212, %v4210
        %v4261 = vpack.c.b16 %v4215, %v4213
        %v4262 = vpack.c.b16 %v4216, %v4214
        %v4263 = vpack.c.b16 %v4219, %v4217
        %v4264 = vpack.c.b16 %v4220, %v4218
        %v4265 = vpack.c.b16 %v4223, %v4221
        %v4266 = vpack.c.b16 %v4224, %v4222
        %v4267 = vpack.c.b16 %v4227, %v4225
        %v4268 = vpack.c.b16 %v4228, %v4226
        %v4269 = vpack.c.b16 %v4231, %v4229
        %v4270 = vpack.c.b16 %v4232, %v4230
        %v4271 = vpack.c.b16 %v4235, %v4233
        %v4272 = vpack.c.b16 %v4236, %v4234
        %v4273 = vpack.c.b16 %v4239, %v4237
        %v4274 = vpack.c.b16 %v4240, %v4238
        %v4275 = vpack.c.b16 %v4243, %v4241
        %v4276 = vpack.c.b16 %v4244, %v4242
        %4309 = vmatpush.bf16.msra.mxu0 %v4259
        %4310 = vmatpush.bf16.msra.mxu0 %v4257
        %4311 = vmatpush.bf16.msra.mxu0 %v4255
        %4312 = vmatpush.bf16.msra.mxu0 %v4253
        %4313 = vmatpush.bf16.msra.mxu0 %v4251
        %4314 = vmatpush.bf16.msra.mxu0 %v4249
        %4315 = vmatpush.bf16.msra.mxu0 %v4247
        %4316 = vmatpush.bf16.msra.mxu0 %v4245
        %4317 = vmatmul.bf16.gmra.mxu0 %v4077
        %v4318 = vpop.f32.mrf.mxu0
        %v4319 = vadd.f32 %v4145, %v4318
        %v4320 = vpop.f32.mrf.mxu0
        %v4321 = vadd.f32 %v4145, %v4320
        %4322 = vmatmul.bf16.gmra.mxu0 %v4079
        %v4323 = vpop.f32.mrf.mxu0
        %v4324 = vadd.f32 %v4145, %v4323
        %v4325 = vpop.f32.mrf.mxu0
        %v4326 = vadd.f32 %v4145, %v4325
        %4327 = vmatmul.bf16.gmra.mxu0 %v4081
        %v4328 = vpop.f32.mrf.mxu0
        %v4329 = vadd.f32 %v4145, %v4328
        %v4330 = vpop.f32.mrf.mxu0
        %v4331 = vadd.f32 %v4145, %v4330
        %4332 = vmatmul.bf16.gmra.mxu0 %v4083
        %v4333 = vpop.f32.mrf.mxu0
        %v4334 = vadd.f32 %v4145, %v4333
        %v4335 = vpop.f32.mrf.mxu0
        %v4336 = vadd.f32 %v4145, %v4335
        %4337 = vmatmul.bf16.gmra.mxu0 %v4085
        %v4338 = vpop.f32.mrf.mxu0
        %v4339 = vadd.f32 %v4145, %v4338
        %v4340 = vpop.f32.mrf.mxu0
        %v4341 = vadd.f32 %v4145, %v4340
        %4342 = vmatmul.bf16.gmra.mxu0 %v4087
        %v4343 = vpop.f32.mrf.mxu0
        %v4344 = vadd.f32 %v4145, %v4343
        %v4345 = vpop.f32.mrf.mxu0
        %v4346 = vadd.f32 %v4145, %v4345
        %4347 = vmatmul.bf16.gmra.mxu0 %v4089
        %v4348 = vpop.f32.mrf.mxu0
        %v4349 = vadd.f32 %v4145, %v4348
        %v4350 = vpop.f32.mrf.mxu0
        %v4351 = vadd.f32 %v4145, %v4350
        %4352 = vmatmul.bf16.gmra.mxu0 %v4091
        %v4353 = vpop.f32.mrf.mxu0
        %v4354 = vadd.f32 %v4145, %v4353
        %v4355 = vpop.f32.mrf.mxu0
        %v4356 = vadd.f32 %v4145, %v4355
        %4357 = vmatmul.bf16.gmra.mxu0 %v4093
        %v4358 = vpop.f32.mrf.mxu0
        %v4359 = vadd.f32 %v4145, %v4358
        %v4360 = vpop.f32.mrf.mxu0
        %v4361 = vadd.f32 %v4145, %v4360
        %4362 = vmatmul.bf16.gmra.mxu0 %v4095
        %v4363 = vpop.f32.mrf.mxu0
        %v4364 = vadd.f32 %v4145, %v4363
        %v4365 = vpop.f32.mrf.mxu0
        %v4366 = vadd.f32 %v4145, %v4365
        %4367 = vmatmul.bf16.gmra.mxu0 %v4097
        %v4368 = vpop.f32.mrf.mxu0
        %v4369 = vadd.f32 %v4145, %v4368
        %v4370 = vpop.f32.mrf.mxu0
        %v4371 = vadd.f32 %v4145, %v4370
        %4372 = vmatmul.bf16.gmra.mxu0 %v4099
        %v4373 = vpop.f32.mrf.mxu0
        %v4374 = vadd.f32 %v4145, %v4373
        %v4375 = vpop.f32.mrf.mxu0
        %v4376 = vadd.f32 %v4145, %v4375
        %4377 = vmatmul.bf16.gmra.mxu0 %v4101
        %v4378 = vpop.f32.mrf.mxu0
        %v4379 = vadd.f32 %v4145, %v4378
        %v4380 = vpop.f32.mrf.mxu0
        %v4381 = vadd.f32 %v4145, %v4380
        %4382 = vmatmul.bf16.gmra.mxu0 %v4103
        %v4383 = vpop.f32.mrf.mxu0
        %v4384 = vadd.f32 %v4145, %v4383
        %v4385 = vpop.f32.mrf.mxu0
        %v4386 = vadd.f32 %v4145, %v4385
        %4387 = vmatmul.bf16.gmra.mxu0 %v4105
        %v4388 = vpop.f32.mrf.mxu0
        %v4389 = vadd.f32 %v4145, %v4388
        %v4390 = vpop.f32.mrf.mxu0
        %v4391 = vadd.f32 %v4145, %v4390
        %4392 = vmatmul.bf16.gmra.mxu0 %v4107
        %v4393 = vpop.f32.mrf.mxu0
        %v4394 = vadd.f32 %v4145, %v4393
        %v4395 = vpop.f32.mrf.mxu0
        %v4396 = vadd.f32 %v4145, %v4395
        %4397 = vdwg.mxu0
        %4398 = vmatpush.bf16.msra.mxu0 %v4275
        %4399 = vmatpush.bf16.msra.mxu0 %v4273
        %4400 = vmatpush.bf16.msra.mxu0 %v4271
        %4401 = vmatpush.bf16.msra.mxu0 %v4269
        %4402 = vmatpush.bf16.msra.mxu0 %v4267
        %4403 = vmatpush.bf16.msra.mxu0 %v4265
        %4404 = vmatpush.bf16.msra.mxu0 %v4263
        %4405 = vmatpush.bf16.msra.mxu0 %v4261
        %4406 = vmatmul.bf16.gmra.mxu0 %v4078
        %v4407 = vpop.f32.mrf.mxu0
        %v4408 = vadd.f32 %v4319, %v4407
        %v4409 = vpop.f32.mrf.mxu0
        %v4410 = vadd.f32 %v4321, %v4409
        %4411 = vmatmul.bf16.gmra.mxu0 %v4080
        %v4412 = vpop.f32.mrf.mxu0
        %v4413 = vadd.f32 %v4324, %v4412
        %v4414 = vpop.f32.mrf.mxu0
        %v4415 = vadd.f32 %v4326, %v4414
        %4416 = vmatmul.bf16.gmra.mxu0 %v4082
        %v4417 = vpop.f32.mrf.mxu0
        %v4418 = vadd.f32 %v4329, %v4417
        %v4419 = vpop.f32.mrf.mxu0
        %v4420 = vadd.f32 %v4331, %v4419
        %4421 = vmatmul.bf16.gmra.mxu0 %v4084
        %v4422 = vpop.f32.mrf.mxu0
        %v4423 = vadd.f32 %v4334, %v4422
        %v4424 = vpop.f32.mrf.mxu0
        %v4425 = vadd.f32 %v4336, %v4424
        %4426 = vmatmul.bf16.gmra.mxu0 %v4086
        %v4427 = vpop.f32.mrf.mxu0
        %v4428 = vadd.f32 %v4339, %v4427
        %v4429 = vpop.f32.mrf.mxu0
        %v4430 = vadd.f32 %v4341, %v4429
        %4431 = vmatmul.bf16.gmra.mxu0 %v4088
        %v4432 = vpop.f32.mrf.mxu0
        %v4433 = vadd.f32 %v4344, %v4432
        %v4434 = vpop.f32.mrf.mxu0
        %v4435 = vadd.f32 %v4346, %v4434
        %4436 = vmatmul.bf16.gmra.mxu0 %v4090
        %v4437 = vpop.f32.mrf.mxu0
        %v4438 = vadd.f32 %v4349, %v4437
        %v4439 = vpop.f32.mrf.mxu0
        %v4440 = vadd.f32 %v4351, %v4439
        %4441 = vmatmul.bf16.gmra.mxu0 %v4092
        %v4442 = vpop.f32.mrf.mxu0
        %v4443 = vadd.f32 %v4354, %v4442
        %v4444 = vpop.f32.mrf.mxu0
        %v4445 = vadd.f32 %v4356, %v4444
        %4446 = vmatmul.bf16.gmra.mxu0 %v4094
        %v4447 = vpop.f32.mrf.mxu0
        %v4448 = vadd.f32 %v4359, %v4447
        %v4449 = vpop.f32.mrf.mxu0
        %v4450 = vadd.f32 %v4361, %v4449
        %4451 = vmatmul.bf16.gmra.mxu0 %v4096
        %v4452 = vpop.f32.mrf.mxu0
        %v4453 = vadd.f32 %v4364, %v4452
        %v4454 = vpop.f32.mrf.mxu0
        %v4455 = vadd.f32 %v4366, %v4454
        %4456 = vmatmul.bf16.gmra.mxu0 %v4098
        %v4457 = vpop.f32.mrf.mxu0
        %v4458 = vadd.f32 %v4369, %v4457
        %v4459 = vpop.f32.mrf.mxu0
        %v4460 = vadd.f32 %v4371, %v4459
        %4461 = vmatmul.bf16.gmra.mxu0 %v4100
        %v4462 = vpop.f32.mrf.mxu0
        %v4463 = vadd.f32 %v4374, %v4462
        %v4464 = vpop.f32.mrf.mxu0
        %v4465 = vadd.f32 %v4376, %v4464
        %4466 = vmatmul.bf16.gmra.mxu0 %v4102
        %v4467 = vpop.f32.mrf.mxu0
        %v4468 = vadd.f32 %v4379, %v4467
        %v4469 = vpop.f32.mrf.mxu0
        %v4470 = vadd.f32 %v4381, %v4469
        %4471 = vmatmul.bf16.gmra.mxu0 %v4104
        %v4472 = vpop.f32.mrf.mxu0
        %v4473 = vadd.f32 %v4384, %v4472
        %v4474 = vpop.f32.mrf.mxu0
        %v4475 = vadd.f32 %v4386, %v4474
        %4476 = vmatmul.bf16.gmra.mxu0 %v4106
        %v4477 = vpop.f32.mrf.mxu0
        %v4478 = vadd.f32 %v4389, %v4477
        %v4479 = vpop.f32.mrf.mxu0
        %v4480 = vadd.f32 %v4391, %v4479
        %4481 = vmatmul.bf16.gmra.mxu0 %v4108
        %v4482 = vpop.f32.mrf.mxu0
        %v4483 = vadd.f32 %v4394, %v4482
        %v4484 = vpop.f32.mrf.mxu0
        %v4485 = vadd.f32 %v4396, %v4484
        %4486 = vdwg.mxu0
        %4487 = vmatpush.bf16.msra.mxu0 %v4260
        %4488 = vmatpush.bf16.msra.mxu0 %v4258
        %4489 = vmatpush.bf16.msra.mxu0 %v4256
        %4490 = vmatpush.bf16.msra.mxu0 %v4254
        %4491 = vmatpush.bf16.msra.mxu0 %v4252
        %4492 = vmatpush.bf16.msra.mxu0 %v4250
        %4493 = vmatpush.bf16.msra.mxu0 %v4248
        %4494 = vmatpush.bf16.msra.mxu0 %v4246
        %4495 = vmatmul.bf16.gmra.mxu0 %v4077
        %v4496 = vpop.f32.mrf.mxu0
        %v4497 = vadd.f32 %v4146, %v4496
        %v4498 = vpop.f32.mrf.mxu0
        %v4499 = vadd.f32 %v4146, %v4498
        %4500 = vmatmul.bf16.gmra.mxu0 %v4079
        %v4501 = vpop.f32.mrf.mxu0
        %v4502 = vadd.f32 %v4146, %v4501
        %v4503 = vpop.f32.mrf.mxu0
        %v4504 = vadd.f32 %v4146, %v4503
        %4505 = vmatmul.bf16.gmra.mxu0 %v4081
        %v4506 = vpop.f32.mrf.mxu0
        %v4507 = vadd.f32 %v4146, %v4506
        %v4508 = vpop.f32.mrf.mxu0
        %v4509 = vadd.f32 %v4146, %v4508
        %4510 = vmatmul.bf16.gmra.mxu0 %v4083
        %v4511 = vpop.f32.mrf.mxu0
        %v4512 = vadd.f32 %v4146, %v4511
        %v4513 = vpop.f32.mrf.mxu0
        %v4514 = vadd.f32 %v4146, %v4513
        %4515 = vmatmul.bf16.gmra.mxu0 %v4085
        %v4516 = vpop.f32.mrf.mxu0
        %v4517 = vadd.f32 %v4146, %v4516
        %v4518 = vpop.f32.mrf.mxu0
        %v4519 = vadd.f32 %v4146, %v4518
        %4520 = vmatmul.bf16.gmra.mxu0 %v4087
        %v4521 = vpop.f32.mrf.mxu0
        %v4522 = vadd.f32 %v4146, %v4521
        %v4523 = vpop.f32.mrf.mxu0
        %v4524 = vadd.f32 %v4146, %v4523
        %4525 = vmatmul.bf16.gmra.mxu0 %v4089
        %v4526 = vpop.f32.mrf.mxu0
        %v4527 = vadd.f32 %v4146, %v4526
        %v4528 = vpop.f32.mrf.mxu0
        %v4529 = vadd.f32 %v4146, %v4528
        %4530 = vmatmul.bf16.gmra.mxu0 %v4091
        %v4531 = vpop.f32.mrf.mxu0
        %v4532 = vadd.f32 %v4146, %v4531
        %v4533 = vpop.f32.mrf.mxu0
        %v4534 = vadd.f32 %v4146, %v4533
        %4535 = vmatmul.bf16.gmra.mxu0 %v4093
        %v4536 = vpop.f32.mrf.mxu0
        %v4537 = vadd.f32 %v4146, %v4536
        %v4538 = vpop.f32.mrf.mxu0
        %v4539 = vadd.f32 %v4146, %v4538
        %4540 = vmatmul.bf16.gmra.mxu0 %v4095
        %v4541 = vpop.f32.mrf.mxu0
        %v4542 = vadd.f32 %v4146, %v4541
        %v4543 = vpop.f32.mrf.mxu0
        %v4544 = vadd.f32 %v4146, %v4543
        %4545 = vmatmul.bf16.gmra.mxu0 %v4097
        %v4546 = vpop.f32.mrf.mxu0
        %v4547 = vadd.f32 %v4146, %v4546
        %v4548 = vpop.f32.mrf.mxu0
        %v4549 = vadd.f32 %v4146, %v4548
        %4550 = vmatmul.bf16.gmra.mxu0 %v4099
        %v4551 = vpop.f32.mrf.mxu0
        %v4552 = vadd.f32 %v4146, %v4551
        %v4553 = vpop.f32.mrf.mxu0
        %v4554 = vadd.f32 %v4146, %v4553
        %4555 = vmatmul.bf16.gmra.mxu0 %v4101
        %v4556 = vpop.f32.mrf.mxu0
        %v4557 = vadd.f32 %v4146, %v4556
        %v4558 = vpop.f32.mrf.mxu0
        %v4559 = vadd.f32 %v4146, %v4558
        %4560 = vmatmul.bf16.gmra.mxu0 %v4103
        %v4561 = vpop.f32.mrf.mxu0
        %v4562 = vadd.f32 %v4146, %v4561
        %v4563 = vpop.f32.mrf.mxu0
        %v4564 = vadd.f32 %v4146, %v4563
        %4565 = vmatmul.bf16.gmra.mxu0 %v4105
        %v4566 = vpop.f32.mrf.mxu0
        %v4567 = vadd.f32 %v4146, %v4566
        %v4568 = vpop.f32.mrf.mxu0
        %v4569 = vadd.f32 %v4146, %v4568
        %4570 = vmatmul.bf16.gmra.mxu0 %v4107
        %v4571 = vpop.f32.mrf.mxu0
        %v4572 = vadd.f32 %v4146, %v4571
        %v4573 = vpop.f32.mrf.mxu0
        %v4574 = vadd.f32 %v4146, %v4573
        %4575 = vdwg.mxu0
        %4576 = vmatpush.bf16.msra.mxu0 %v4276
        %4577 = vmatpush.bf16.msra.mxu0 %v4274
        %4578 = vmatpush.bf16.msra.mxu0 %v4272
        %4579 = vmatpush.bf16.msra.mxu0 %v4270
        %4580 = vmatpush.bf16.msra.mxu0 %v4268
        %4581 = vmatpush.bf16.msra.mxu0 %v4266
        %4582 = vmatpush.bf16.msra.mxu0 %v4264
        %4583 = vmatpush.bf16.msra.mxu0 %v4262
        %4584 = vmatmul.bf16.gmra.mxu0 %v4078
        %v4585 = vpop.f32.mrf.mxu0
        %v4586 = vadd.f32 %v4497, %v4585
        %v4587 = vpop.f32.mrf.mxu0
        %v4588 = vadd.f32 %v4499, %v4587
        %4589 = vmatmul.bf16.gmra.mxu0 %v4080
        %v4590 = vpop.f32.mrf.mxu0
        %v4591 = vadd.f32 %v4502, %v4590
        %v4592 = vpop.f32.mrf.mxu0
        %v4593 = vadd.f32 %v4504, %v4592
        %4594 = vmatmul.bf16.gmra.mxu0 %v4082
        %v4595 = vpop.f32.mrf.mxu0
        %v4596 = vadd.f32 %v4507, %v4595
        %v4597 = vpop.f32.mrf.mxu0
        %v4598 = vadd.f32 %v4509, %v4597
        %4599 = vmatmul.bf16.gmra.mxu0 %v4084
        %v4600 = vpop.f32.mrf.mxu0
        %v4601 = vadd.f32 %v4512, %v4600
        %v4602 = vpop.f32.mrf.mxu0
        %v4603 = vadd.f32 %v4514, %v4602
        %4604 = vmatmul.bf16.gmra.mxu0 %v4086
        %v4605 = vpop.f32.mrf.mxu0
        %v4606 = vadd.f32 %v4517, %v4605
        %v4607 = vpop.f32.mrf.mxu0
        %v4608 = vadd.f32 %v4519, %v4607
        %4609 = vmatmul.bf16.gmra.mxu0 %v4088
        %v4610 = vpop.f32.mrf.mxu0
        %v4611 = vadd.f32 %v4522, %v4610
        %v4612 = vpop.f32.mrf.mxu0
        %v4613 = vadd.f32 %v4524, %v4612
        %4614 = vmatmul.bf16.gmra.mxu0 %v4090
        %v4615 = vpop.f32.mrf.mxu0
        %v4616 = vadd.f32 %v4527, %v4615
        %v4617 = vpop.f32.mrf.mxu0
        %v4618 = vadd.f32 %v4529, %v4617
        %4619 = vmatmul.bf16.gmra.mxu0 %v4092
        %v4620 = vpop.f32.mrf.mxu0
        %v4621 = vadd.f32 %v4532, %v4620
        %v4622 = vpop.f32.mrf.mxu0
        %v4623 = vadd.f32 %v4534, %v4622
        %4624 = vmatmul.bf16.gmra.mxu0 %v4094
        %v4625 = vpop.f32.mrf.mxu0
        %v4626 = vadd.f32 %v4537, %v4625
        %v4627 = vpop.f32.mrf.mxu0
        %v4628 = vadd.f32 %v4539, %v4627
        %4629 = vmatmul.bf16.gmra.mxu0 %v4096
        %v4630 = vpop.f32.mrf.mxu0
        %v4631 = vadd.f32 %v4542, %v4630
        %v4632 = vpop.f32.mrf.mxu0
        %v4633 = vadd.f32 %v4544, %v4632
        %4634 = vmatmul.bf16.gmra.mxu0 %v4098
        %v4635 = vpop.f32.mrf.mxu0
        %v4636 = vadd.f32 %v4547, %v4635
        %v4637 = vpop.f32.mrf.mxu0
        %v4638 = vadd.f32 %v4549, %v4637
        %4639 = vmatmul.bf16.gmra.mxu0 %v4100
        %v4640 = vpop.f32.mrf.mxu0
        %v4641 = vadd.f32 %v4552, %v4640
        %v4642 = vpop.f32.mrf.mxu0
        %v4643 = vadd.f32 %v4554, %v4642
        %4644 = vmatmul.bf16.gmra.mxu0 %v4102
        %v4645 = vpop.f32.mrf.mxu0
        %v4646 = vadd.f32 %v4557, %v4645
        %v4647 = vpop.f32.mrf.mxu0
        %v4648 = vadd.f32 %v4559, %v4647
        %4649 = vmatmul.bf16.gmra.mxu0 %v4104
        %v4650 = vpop.f32.mrf.mxu0
        %v4651 = vadd.f32 %v4562, %v4650
        %v4652 = vpop.f32.mrf.mxu0
        %v4653 = vadd.f32 %v4564, %v4652
        %4654 = vmatmul.bf16.gmra.mxu0 %v4106
        %v4655 = vpop.f32.mrf.mxu0
        %v4656 = vadd.f32 %v4567, %v4655
        %v4657 = vpop.f32.mrf.mxu0
        %v4658 = vadd.f32 %v4569, %v4657
        %4659 = vmatmul.bf16.gmra.mxu0 %v4108
        %v4660 = vpop.f32.mrf.mxu0
        %v4661 = vadd.f32 %v4572, %v4660
        %v4662 = vpop.f32.mrf.mxu0
        %v4663 = vadd.f32 %v4574, %v4662
        %4664 = vdwg.mxu0
        %v4665 = vmax.f32 %v4408, 0.0
        %v4666 = vmax.f32 %v4586, 0.0
        %v4667 = vmax.f32 %v4410, 0.0
        %v4668 = vmax.f32 %v4588, 0.0
        %v4669 = vmax.f32 %v4413, 0.0
        %v4670 = vmax.f32 %v4591, 0.0
        %v4671 = vmax.f32 %v4415, 0.0
        %v4672 = vmax.f32 %v4593, 0.0
        %v4673 = vmax.f32 %v4418, 0.0
        %v4674 = vmax.f32 %v4596, 0.0
        %v4675 = vmax.f32 %v4420, 0.0
        %v4676 = vmax.f32 %v4598, 0.0
        %v4677 = vmax.f32 %v4423, 0.0
        %v4678 = vmax.f32 %v4601, 0.0
        %v4679 = vmax.f32 %v4425, 0.0
        %v4680 = vmax.f32 %v4603, 0.0
        %v4681 = vmax.f32 %v4428, 0.0
        %v4682 = vmax.f32 %v4606, 0.0
        %v4683 = vmax.f32 %v4430, 0.0
        %v4684 = vmax.f32 %v4608, 0.0
        %v4685 = vmax.f32 %v4433, 0.0
        %v4686 = vmax.f32 %v4611, 0.0
        %v4687 = vmax.f32 %v4435, 0.0
        %v4688 = vmax.f32 %v4613, 0.0
        %v4689 = vmax.f32 %v4438, 0.0
        %v4690 = vmax.f32 %v4616, 0.0
        %v4691 = vmax.f32 %v4440, 0.0
        %v4692 = vmax.f32 %v4618, 0.0
        %v4693 = vmax.f32 %v4443, 0.0
        %v4694 = vmax.f32 %v4621, 0.0
        %v4695 = vmax.f32 %v4445, 0.0
        %v4696 = vmax.f32 %v4623, 0.0
        %v4697 = vmax.f32 %v4448, 0.0
        %v4698 = vmax.f32 %v4626, 0.0
        %v4699 = vmax.f32 %v4450, 0.0
        %v4700 = vmax.f32 %v4628, 0.0
        %v4701 = vmax.f32 %v4453, 0.0
        %v4702 = vmax.f32 %v4631, 0.0
        %v4703 = vmax.f32 %v4455, 0.0
        %v4704 = vmax.f32 %v4633, 0.0
        %v4705 = vmax.f32 %v4458, 0.0
        %v4706 = vmax.f32 %v4636, 0.0
        %v4707 = vmax.f32 %v4460, 0.0
        %v4708 = vmax.f32 %v4638, 0.0
        %v4709 = vmax.f32 %v4463, 0.0
        %v4710 = vmax.f32 %v4641, 0.0
        %v4711 = vmax.f32 %v4465, 0.0
        %v4712 = vmax.f32 %v4643, 0.0
        %v4713 = vmax.f32 %v4468, 0.0
        %v4714 = vmax.f32 %v4646, 0.0
        %v4715 = vmax.f32 %v4470, 0.0
        %v4716 = vmax.f32 %v4648, 0.0
        %v4717 = vmax.f32 %v4473, 0.0
        %v4718 = vmax.f32 %v4651, 0.0
        %v4719 = vmax.f32 %v4475, 0.0
        %v4720 = vmax.f32 %v4653, 0.0
        %v4721 = vmax.f32 %v4478, 0.0
        %v4722 = vmax.f32 %v4656, 0.0
        %v4723 = vmax.f32 %v4480, 0.0
        %v4724 = vmax.f32 %v4658, 0.0
        %v4725 = vmax.f32 %v4483, 0.0
        %v4726 = vmax.f32 %v4661, 0.0
        %v4727 = vmax.f32 %v4485, 0.0
        %v4728 = vmax.f32 %v4663, 0.0
        %v4729 = vpack.c.bf16 %v4667, %v4665
        %v4730 = vpack.c.bf16 %v4668, %v4666
        %v4731 = vpack.c.bf16 %v4671, %v4669
        %v4732 = vpack.c.bf16 %v4672, %v4670
        %v4733 = vpack.c.bf16 %v4675, %v4673
        %v4734 = vpack.c.bf16 %v4676, %v4674
        %v4735 = vpack.c.bf16 %v4679, %v4677
        %v4736 = vpack.c.bf16 %v4680, %v4678
        %v4737 = vpack.c.bf16 %v4683, %v4681
        %v4738 = vpack.c.bf16 %v4684, %v4682
        %v4739 = vpack.c.bf16 %v4687, %v4685
        %v4740 = vpack.c.bf16 %v4688, %v4686
        %v4741 = vpack.c.bf16 %v4691, %v4689
        %v4742 = vpack.c.bf16 %v4692, %v4690
        %v4743 = vpack.c.bf16 %v4695, %v4693
        %v4744 = vpack.c.bf16 %v4696, %v4694
        %v4745 = vpack.c.bf16 %v4699, %v4697
        %v4746 = vpack.c.bf16 %v4700, %v4698
        %v4747 = vpack.c.bf16 %v4703, %v4701
        %v4748 = vpack.c.bf16 %v4704, %v4702
        %v4749 = vpack.c.bf16 %v4707, %v4705
        %v4750 = vpack.c.bf16 %v4708, %v4706
        %v4751 = vpack.c.bf16 %v4711, %v4709
        %v4752 = vpack.c.bf16 %v4712, %v4710
        %v4753 = vpack.c.bf16 %v4715, %v4713
        %v4754 = vpack.c.bf16 %v4716, %v4714
        %v4755 = vpack.c.bf16 %v4719, %v4717
        %v4756 = vpack.c.bf16 %v4720, %v4718
        %v4757 = vpack.c.bf16 %v4723, %v4721
        %v4758 = vpack.c.bf16 %v4724, %v4722
        %v4759 = vpack.c.bf16 %v4727, %v4725
        %v4760 = vpack.c.bf16 %v4728, %v4726
        %s4761 = scalar_lea.vmem [#allocation2], 1536
        %v4762 = vld [vmem:[%s4761] sm:$0xff]
        %v4763 = vld [vmem:[%s4761 + $0x8] sm:$0xff]
        %v4764 = vld [vmem:[%s4761 + $0x10] sm:$0xff]
        %v4765 = vld [vmem:[%s4761 + $0x18] sm:$0xff]
        %v4766 = vld [vmem:[%s4761 + $0x20] sm:$0xff]
        %v4767 = vld [vmem:[%s4761 + $0x28] sm:$0xff]
        %v4768 = vld [vmem:[%s4761 + $0x30] sm:$0xff]
        %v4769 = vld [vmem:[%s4761 + $0x38] sm:$0xff]
        %v4770 = vld [vmem:[%s4761 + $0x40] sm:$0xff]
        %v4771 = vld [vmem:[%s4761 + $0x48] sm:$0xff]
        %v4772 = vld [vmem:[%s4761 + $0x50] sm:$0xff]
        %v4773 = vld [vmem:[%s4761 + $0x58] sm:$0xff]
        %v4774 = vld [vmem:[%s4761 + $0x60] sm:$0xff]
        %v4775 = vld [vmem:[%s4761 + $0x68] sm:$0xff]
        %v4776 = vld [vmem:[%s4761 + $0x70] sm:$0xff]
        %v4777 = vld [vmem:[%s4761 + $0x78] sm:$0xff]
        %v4778 = vld [vmem:[%s4761 + $0x80] sm:$0xff]
        %v4779 = vld [vmem:[%s4761 + $0x88] sm:$0xff]
        %v4780 = vld [vmem:[%s4761 + $0x90] sm:$0xff]
        %v4781 = vld [vmem:[%s4761 + $0x98] sm:$0xff]
        %v4782 = vld [vmem:[%s4761 + $0xa0] sm:$0xff]
        %v4783 = vld [vmem:[%s4761 + $0xa8] sm:$0xff]
        %v4784 = vld [vmem:[%s4761 + $0xb0] sm:$0xff]
        %v4785 = vld [vmem:[%s4761 + $0xb8] sm:$0xff]
        %v4786 = vld [vmem:[%s4761 + $0xc0] sm:$0xff]
        %v4787 = vld [vmem:[%s4761 + $0xc8] sm:$0xff]
        %v4788 = vld [vmem:[%s4761 + $0xd0] sm:$0xff]
        %v4789 = vld [vmem:[%s4761 + $0xd8] sm:$0xff]
        %v4790 = vld [vmem:[%s4761 + $0xe0] sm:$0xff]
        %v4791 = vld [vmem:[%s4761 + $0xe8] sm:$0xff]
        %v4792 = vld [vmem:[%s4761 + $0xf0] sm:$0xff]
        %v4793 = vld [vmem:[%s4761 + $0xf8] sm:$0xff]
        %s4794 = scalar_lea.vmem %s4, 6
        %v4795 = vld [vmem:[%s4794] ss:$8 sm:$0x3]
        %v4797 = vperm.slane %v4795, 0
        %v4798 = vperm.slane %v4795, 1
        %v4833 = vunpack.c.l.b16 %v4762
        %v4834 = vunpack.c.h.b16 %v4762
        %v4835 = vunpack.c.l.b16 %v4763
        %v4836 = vunpack.c.h.b16 %v4763
        %v4837 = vunpack.c.l.b16 %v4764
        %v4838 = vunpack.c.h.b16 %v4764
        %v4839 = vunpack.c.l.b16 %v4765
        %v4840 = vunpack.c.h.b16 %v4765
        %v4841 = vunpack.c.l.b16 %v4766
        %v4842 = vunpack.c.h.b16 %v4766
        %v4843 = vunpack.c.l.b16 %v4767
        %v4844 = vunpack.c.h.b16 %v4767
        %v4845 = vunpack.c.l.b16 %v4768
        %v4846 = vunpack.c.h.b16 %v4768
        %v4847 = vunpack.c.l.b16 %v4769
        %v4848 = vunpack.c.h.b16 %v4769
        %v4849 = vunpack.c.l.b16 %v4770
        %v4850 = vunpack.c.h.b16 %v4770
        %v4851 = vunpack.c.l.b16 %v4771
        %v4852 = vunpack.c.h.b16 %v4771
        %v4853 = vunpack.c.l.b16 %v4772
        %v4854 = vunpack.c.h.b16 %v4772
        %v4855 = vunpack.c.l.b16 %v4773
        %v4856 = vunpack.c.h.b16 %v4773
        %v4857 = vunpack.c.l.b16 %v4774
        %v4858 = vunpack.c.h.b16 %v4774
        %v4859 = vunpack.c.l.b16 %v4775
        %v4860 = vunpack.c.h.b16 %v4775
        %v4861 = vunpack.c.l.b16 %v4776
        %v4862 = vunpack.c.h.b16 %v4776
        %v4863 = vunpack.c.l.b16 %v4777
        %v4864 = vunpack.c.h.b16 %v4777
        %v4865 = vunpack.c.l.b16 %v4778
        %v4866 = vunpack.c.h.b16 %v4778
        %v4867 = vunpack.c.l.b16 %v4779
        %v4868 = vunpack.c.h.b16 %v4779
        %v4869 = vunpack.c.l.b16 %v4780
        %v4870 = vunpack.c.h.b16 %v4780
        %v4871 = vunpack.c.l.b16 %v4781
        %v4872 = vunpack.c.h.b16 %v4781
        %v4873 = vunpack.c.l.b16 %v4782
        %v4874 = vunpack.c.h.b16 %v4782
        %v4875 = vunpack.c.l.b16 %v4783
        %v4876 = vunpack.c.h.b16 %v4783
        %v4877 = vunpack.c.l.b16 %v4784
        %v4878 = vunpack.c.h.b16 %v4784
        %v4879 = vunpack.c.l.b16 %v4785
        %v4880 = vunpack.c.h.b16 %v4785
        %v4881 = vunpack.c.l.b16 %v4786
        %v4882 = vunpack.c.h.b16 %v4786
        %v4883 = vunpack.c.l.b16 %v4787
        %v4884 = vunpack.c.h.b16 %v4787
        %v4885 = vunpack.c.l.b16 %v4788
        %v4886 = vunpack.c.h.b16 %v4788
        %v4887 = vunpack.c.l.b16 %v4789
        %v4888 = vunpack.c.h.b16 %v4789
        %v4889 = vunpack.c.l.b16 %v4790
        %v4890 = vunpack.c.h.b16 %v4790
        %v4891 = vunpack.c.l.b16 %v4791
        %v4892 = vunpack.c.h.b16 %v4791
        %v4893 = vunpack.c.l.b16 %v4792
        %v4894 = vunpack.c.h.b16 %v4792
        %v4895 = vunpack.c.l.b16 %v4793
        %v4896 = vunpack.c.h.b16 %v4793
        %v4897 = vpack.c.b16 %v4835, %v4833
        %v4898 = vpack.c.b16 %v4836, %v4834
        %v4899 = vpack.c.b16 %v4839, %v4837
        %v4900 = vpack.c.b16 %v4840, %v4838
        %v4901 = vpack.c.b16 %v4843, %v4841
        %v4902 = vpack.c.b16 %v4844, %v4842
        %v4903 = vpack.c.b16 %v4847, %v4845
        %v4904 = vpack.c.b16 %v4848, %v4846
        %v4905 = vpack.c.b16 %v4851, %v4849
        %v4906 = vpack.c.b16 %v4852, %v4850
        %v4907 = vpack.c.b16 %v4855, %v4853
        %v4908 = vpack.c.b16 %v4856, %v4854
        %v4909 = vpack.c.b16 %v4859, %v4857
        %v4910 = vpack.c.b16 %v4860, %v4858
        %v4911 = vpack.c.b16 %v4863, %v4861
        %v4912 = vpack.c.b16 %v4864, %v4862
        %v4913 = vpack.c.b16 %v4867, %v4865
        %v4914 = vpack.c.b16 %v4868, %v4866
        %v4915 = vpack.c.b16 %v4871, %v4869
        %v4916 = vpack.c.b16 %v4872, %v4870
        %v4917 = vpack.c.b16 %v4875, %v4873
        %v4918 = vpack.c.b16 %v4876, %v4874
        %v4919 = vpack.c.b16 %v4879, %v4877
        %v4920 = vpack.c.b16 %v4880, %v4878
        %v4921 = vpack.c.b16 %v4883, %v4881
        %v4922 = vpack.c.b16 %v4884, %v4882
        %v4923 = vpack.c.b16 %v4887, %v4885
        %v4924 = vpack.c.b16 %v4888, %v4886
        %v4925 = vpack.c.b16 %v4891, %v4889
        %v4926 = vpack.c.b16 %v4892, %v4890
        %v4927 = vpack.c.b16 %v4895, %v4893
        %v4928 = vpack.c.b16 %v4896, %v4894
        %4961 = vmatpush.bf16.msra.mxu0 %v4911
        %4962 = vmatpush.bf16.msra.mxu0 %v4909
        %4963 = vmatpush.bf16.msra.mxu0 %v4907
        %4964 = vmatpush.bf16.msra.mxu0 %v4905
        %4965 = vmatpush.bf16.msra.mxu0 %v4903
        %4966 = vmatpush.bf16.msra.mxu0 %v4901
        %4967 = vmatpush.bf16.msra.mxu0 %v4899
        %4968 = vmatpush.bf16.msra.mxu0 %v4897
        %4969 = vmatmul.bf16.gmra.mxu0 %v4729
        %v4970 = vpop.f32.mrf.mxu0
        %v4971 = vadd.f32 %v4797, %v4970
        %v4972 = vpop.f32.mrf.mxu0
        %v4973 = vadd.f32 %v4797, %v4972
        %4974 = vmatmul.bf16.gmra.mxu0 %v4731
        %v4975 = vpop.f32.mrf.mxu0
        %v4976 = vadd.f32 %v4797, %v4975
        %v4977 = vpop.f32.mrf.mxu0
        %v4978 = vadd.f32 %v4797, %v4977
        %4979 = vmatmul.bf16.gmra.mxu0 %v4733
        %v4980 = vpop.f32.mrf.mxu0
        %v4981 = vadd.f32 %v4797, %v4980
        %v4982 = vpop.f32.mrf.mxu0
        %v4983 = vadd.f32 %v4797, %v4982
        %4984 = vmatmul.bf16.gmra.mxu0 %v4735
        %v4985 = vpop.f32.mrf.mxu0
        %v4986 = vadd.f32 %v4797, %v4985
        %v4987 = vpop.f32.mrf.mxu0
        %v4988 = vadd.f32 %v4797, %v4987
        %4989 = vmatmul.bf16.gmra.mxu0 %v4737
        %v4990 = vpop.f32.mrf.mxu0
        %v4991 = vadd.f32 %v4797, %v4990
        %v4992 = vpop.f32.mrf.mxu0
        %v4993 = vadd.f32 %v4797, %v4992
        %4994 = vmatmul.bf16.gmra.mxu0 %v4739
        %v4995 = vpop.f32.mrf.mxu0
        %v4996 = vadd.f32 %v4797, %v4995
        %v4997 = vpop.f32.mrf.mxu0
        %v4998 = vadd.f32 %v4797, %v4997
        %4999 = vmatmul.bf16.gmra.mxu0 %v4741
        %v5000 = vpop.f32.mrf.mxu0
        %v5001 = vadd.f32 %v4797, %v5000
        %v5002 = vpop.f32.mrf.mxu0
        %v5003 = vadd.f32 %v4797, %v5002
        %5004 = vmatmul.bf16.gmra.mxu0 %v4743
        %v5005 = vpop.f32.mrf.mxu0
        %v5006 = vadd.f32 %v4797, %v5005
        %v5007 = vpop.f32.mrf.mxu0
        %v5008 = vadd.f32 %v4797, %v5007
        %5009 = vmatmul.bf16.gmra.mxu0 %v4745
        %v5010 = vpop.f32.mrf.mxu0
        %v5011 = vadd.f32 %v4797, %v5010
        %v5012 = vpop.f32.mrf.mxu0
        %v5013 = vadd.f32 %v4797, %v5012
        %5014 = vmatmul.bf16.gmra.mxu0 %v4747
        %v5015 = vpop.f32.mrf.mxu0
        %v5016 = vadd.f32 %v4797, %v5015
        %v5017 = vpop.f32.mrf.mxu0
        %v5018 = vadd.f32 %v4797, %v5017
        %5019 = vmatmul.bf16.gmra.mxu0 %v4749
        %v5020 = vpop.f32.mrf.mxu0
        %v5021 = vadd.f32 %v4797, %v5020
        %v5022 = vpop.f32.mrf.mxu0
        %v5023 = vadd.f32 %v4797, %v5022
        %5024 = vmatmul.bf16.gmra.mxu0 %v4751
        %v5025 = vpop.f32.mrf.mxu0
        %v5026 = vadd.f32 %v4797, %v5025
        %v5027 = vpop.f32.mrf.mxu0
        %v5028 = vadd.f32 %v4797, %v5027
        %5029 = vmatmul.bf16.gmra.mxu0 %v4753
        %v5030 = vpop.f32.mrf.mxu0
        %v5031 = vadd.f32 %v4797, %v5030
        %v5032 = vpop.f32.mrf.mxu0
        %v5033 = vadd.f32 %v4797, %v5032
        %5034 = vmatmul.bf16.gmra.mxu0 %v4755
        %v5035 = vpop.f32.mrf.mxu0
        %v5036 = vadd.f32 %v4797, %v5035
        %v5037 = vpop.f32.mrf.mxu0
        %v5038 = vadd.f32 %v4797, %v5037
        %5039 = vmatmul.bf16.gmra.mxu0 %v4757
        %v5040 = vpop.f32.mrf.mxu0
        %v5041 = vadd.f32 %v4797, %v5040
        %v5042 = vpop.f32.mrf.mxu0
        %v5043 = vadd.f32 %v4797, %v5042
        %5044 = vmatmul.bf16.gmra.mxu0 %v4759
        %v5045 = vpop.f32.mrf.mxu0
        %v5046 = vadd.f32 %v4797, %v5045
        %v5047 = vpop.f32.mrf.mxu0
        %v5048 = vadd.f32 %v4797, %v5047
        %5049 = vdwg.mxu0
        %5050 = vmatpush.bf16.msra.mxu0 %v4927
        %5051 = vmatpush.bf16.msra.mxu0 %v4925
        %5052 = vmatpush.bf16.msra.mxu0 %v4923
        %5053 = vmatpush.bf16.msra.mxu0 %v4921
        %5054 = vmatpush.bf16.msra.mxu0 %v4919
        %5055 = vmatpush.bf16.msra.mxu0 %v4917
        %5056 = vmatpush.bf16.msra.mxu0 %v4915
        %5057 = vmatpush.bf16.msra.mxu0 %v4913
        %5058 = vmatmul.bf16.gmra.mxu0 %v4730
        %v5059 = vpop.f32.mrf.mxu0
        %v5060 = vadd.f32 %v4971, %v5059
        %v5061 = vpop.f32.mrf.mxu0
        %v5062 = vadd.f32 %v4973, %v5061
        %5063 = vmatmul.bf16.gmra.mxu0 %v4732
        %v5064 = vpop.f32.mrf.mxu0
        %v5065 = vadd.f32 %v4976, %v5064
        %v5066 = vpop.f32.mrf.mxu0
        %v5067 = vadd.f32 %v4978, %v5066
        %5068 = vmatmul.bf16.gmra.mxu0 %v4734
        %v5069 = vpop.f32.mrf.mxu0
        %v5070 = vadd.f32 %v4981, %v5069
        %v5071 = vpop.f32.mrf.mxu0
        %v5072 = vadd.f32 %v4983, %v5071
        %5073 = vmatmul.bf16.gmra.mxu0 %v4736
        %v5074 = vpop.f32.mrf.mxu0
        %v5075 = vadd.f32 %v4986, %v5074
        %v5076 = vpop.f32.mrf.mxu0
        %v5077 = vadd.f32 %v4988, %v5076
        %5078 = vmatmul.bf16.gmra.mxu0 %v4738
        %v5079 = vpop.f32.mrf.mxu0
        %v5080 = vadd.f32 %v4991, %v5079
        %v5081 = vpop.f32.mrf.mxu0
        %v5082 = vadd.f32 %v4993, %v5081
        %5083 = vmatmul.bf16.gmra.mxu0 %v4740
        %v5084 = vpop.f32.mrf.mxu0
        %v5085 = vadd.f32 %v4996, %v5084
        %v5086 = vpop.f32.mrf.mxu0
        %v5087 = vadd.f32 %v4998, %v5086
        %5088 = vmatmul.bf16.gmra.mxu0 %v4742
        %v5089 = vpop.f32.mrf.mxu0
        %v5090 = vadd.f32 %v5001, %v5089
        %v5091 = vpop.f32.mrf.mxu0
        %v5092 = vadd.f32 %v5003, %v5091
        %5093 = vmatmul.bf16.gmra.mxu0 %v4744
        %v5094 = vpop.f32.mrf.mxu0
        %v5095 = vadd.f32 %v5006, %v5094
        %v5096 = vpop.f32.mrf.mxu0
        %v5097 = vadd.f32 %v5008, %v5096
        %5098 = vmatmul.bf16.gmra.mxu0 %v4746
        %v5099 = vpop.f32.mrf.mxu0
        %v5100 = vadd.f32 %v5011, %v5099
        %v5101 = vpop.f32.mrf.mxu0
        %v5102 = vadd.f32 %v5013, %v5101
        %5103 = vmatmul.bf16.gmra.mxu0 %v4748
        %v5104 = vpop.f32.mrf.mxu0
        %v5105 = vadd.f32 %v5016, %v5104
        %v5106 = vpop.f32.mrf.mxu0
        %v5107 = vadd.f32 %v5018, %v5106
        %5108 = vmatmul.bf16.gmra.mxu0 %v4750
        %v5109 = vpop.f32.mrf.mxu0
        %v5110 = vadd.f32 %v5021, %v5109
        %v5111 = vpop.f32.mrf.mxu0
        %v5112 = vadd.f32 %v5023, %v5111
        %5113 = vmatmul.bf16.gmra.mxu0 %v4752
        %v5114 = vpop.f32.mrf.mxu0
        %v5115 = vadd.f32 %v5026, %v5114
        %v5116 = vpop.f32.mrf.mxu0
        %v5117 = vadd.f32 %v5028, %v5116
        %5118 = vmatmul.bf16.gmra.mxu0 %v4754
        %v5119 = vpop.f32.mrf.mxu0
        %v5120 = vadd.f32 %v5031, %v5119
        %v5121 = vpop.f32.mrf.mxu0
        %v5122 = vadd.f32 %v5033, %v5121
        %5123 = vmatmul.bf16.gmra.mxu0 %v4756
        %v5124 = vpop.f32.mrf.mxu0
        %v5125 = vadd.f32 %v5036, %v5124
        %v5126 = vpop.f32.mrf.mxu0
        %v5127 = vadd.f32 %v5038, %v5126
        %5128 = vmatmul.bf16.gmra.mxu0 %v4758
        %v5129 = vpop.f32.mrf.mxu0
        %v5130 = vadd.f32 %v5041, %v5129
        %v5131 = vpop.f32.mrf.mxu0
        %v5132 = vadd.f32 %v5043, %v5131
        %5133 = vmatmul.bf16.gmra.mxu0 %v4760
        %v5134 = vpop.f32.mrf.mxu0
        %v5135 = vadd.f32 %v5046, %v5134
        %v5136 = vpop.f32.mrf.mxu0
        %v5137 = vadd.f32 %v5048, %v5136
        %5138 = vdwg.mxu0
        %5139 = vmatpush.bf16.msra.mxu0 %v4912
        %5140 = vmatpush.bf16.msra.mxu0 %v4910
        %5141 = vmatpush.bf16.msra.mxu0 %v4908
        %5142 = vmatpush.bf16.msra.mxu0 %v4906
        %5143 = vmatpush.bf16.msra.mxu0 %v4904
        %5144 = vmatpush.bf16.msra.mxu0 %v4902
        %5145 = vmatpush.bf16.msra.mxu0 %v4900
        %5146 = vmatpush.bf16.msra.mxu0 %v4898
        %5147 = vmatmul.bf16.gmra.mxu0 %v4729
        %v5148 = vpop.f32.mrf.mxu0
        %v5149 = vadd.f32 %v4798, %v5148
        %v5150 = vpop.f32.mrf.mxu0
        %v5151 = vadd.f32 %v4798, %v5150
        %5152 = vmatmul.bf16.gmra.mxu0 %v4731
        %v5153 = vpop.f32.mrf.mxu0
        %v5154 = vadd.f32 %v4798, %v5153
        %v5155 = vpop.f32.mrf.mxu0
        %v5156 = vadd.f32 %v4798, %v5155
        %5157 = vmatmul.bf16.gmra.mxu0 %v4733
        %v5158 = vpop.f32.mrf.mxu0
        %v5159 = vadd.f32 %v4798, %v5158
        %v5160 = vpop.f32.mrf.mxu0
        %v5161 = vadd.f32 %v4798, %v5160
        %5162 = vmatmul.bf16.gmra.mxu0 %v4735
        %v5163 = vpop.f32.mrf.mxu0
        %v5164 = vadd.f32 %v4798, %v5163
        %v5165 = vpop.f32.mrf.mxu0
        %v5166 = vadd.f32 %v4798, %v5165
        %5167 = vmatmul.bf16.gmra.mxu0 %v4737
        %v5168 = vpop.f32.mrf.mxu0
        %v5169 = vadd.f32 %v4798, %v5168
        %v5170 = vpop.f32.mrf.mxu0
        %v5171 = vadd.f32 %v4798, %v5170
        %5172 = vmatmul.bf16.gmra.mxu0 %v4739
        %v5173 = vpop.f32.mrf.mxu0
        %v5174 = vadd.f32 %v4798, %v5173
        %v5175 = vpop.f32.mrf.mxu0
        %v5176 = vadd.f32 %v4798, %v5175
        %5177 = vmatmul.bf16.gmra.mxu0 %v4741
        %v5178 = vpop.f32.mrf.mxu0
        %v5179 = vadd.f32 %v4798, %v5178
        %v5180 = vpop.f32.mrf.mxu0
        %v5181 = vadd.f32 %v4798, %v5180
        %5182 = vmatmul.bf16.gmra.mxu0 %v4743
        %v5183 = vpop.f32.mrf.mxu0
        %v5184 = vadd.f32 %v4798, %v5183
        %v5185 = vpop.f32.mrf.mxu0
        %v5186 = vadd.f32 %v4798, %v5185
        %5187 = vmatmul.bf16.gmra.mxu0 %v4745
        %v5188 = vpop.f32.mrf.mxu0
        %v5189 = vadd.f32 %v4798, %v5188
        %v5190 = vpop.f32.mrf.mxu0
        %v5191 = vadd.f32 %v4798, %v5190
        %5192 = vmatmul.bf16.gmra.mxu0 %v4747
        %v5193 = vpop.f32.mrf.mxu0
        %v5194 = vadd.f32 %v4798, %v5193
        %v5195 = vpop.f32.mrf.mxu0
        %v5196 = vadd.f32 %v4798, %v5195
        %5197 = vmatmul.bf16.gmra.mxu0 %v4749
        %v5198 = vpop.f32.mrf.mxu0
        %v5199 = vadd.f32 %v4798, %v5198
        %v5200 = vpop.f32.mrf.mxu0
        %v5201 = vadd.f32 %v4798, %v5200
        %5202 = vmatmul.bf16.gmra.mxu0 %v4751
        %v5203 = vpop.f32.mrf.mxu0
        %v5204 = vadd.f32 %v4798, %v5203
        %v5205 = vpop.f32.mrf.mxu0
        %v5206 = vadd.f32 %v4798, %v5205
        %5207 = vmatmul.bf16.gmra.mxu0 %v4753
        %v5208 = vpop.f32.mrf.mxu0
        %v5209 = vadd.f32 %v4798, %v5208
        %v5210 = vpop.f32.mrf.mxu0
        %v5211 = vadd.f32 %v4798, %v5210
        %5212 = vmatmul.bf16.gmra.mxu0 %v4755
        %v5213 = vpop.f32.mrf.mxu0
        %v5214 = vadd.f32 %v4798, %v5213
        %v5215 = vpop.f32.mrf.mxu0
        %v5216 = vadd.f32 %v4798, %v5215
        %5217 = vmatmul.bf16.gmra.mxu0 %v4757
        %v5218 = vpop.f32.mrf.mxu0
        %v5219 = vadd.f32 %v4798, %v5218
        %v5220 = vpop.f32.mrf.mxu0
        %v5221 = vadd.f32 %v4798, %v5220
        %5222 = vmatmul.bf16.gmra.mxu0 %v4759
        %v5223 = vpop.f32.mrf.mxu0
        %v5224 = vadd.f32 %v4798, %v5223
        %v5225 = vpop.f32.mrf.mxu0
        %v5226 = vadd.f32 %v4798, %v5225
        %5227 = vdwg.mxu0
        %5228 = vmatpush.bf16.msra.mxu0 %v4928
        %5229 = vmatpush.bf16.msra.mxu0 %v4926
        %5230 = vmatpush.bf16.msra.mxu0 %v4924
        %5231 = vmatpush.bf16.msra.mxu0 %v4922
        %5232 = vmatpush.bf16.msra.mxu0 %v4920
        %5233 = vmatpush.bf16.msra.mxu0 %v4918
        %5234 = vmatpush.bf16.msra.mxu0 %v4916
        %5235 = vmatpush.bf16.msra.mxu0 %v4914
        %5236 = vmatmul.bf16.gmra.mxu0 %v4730
        %v5237 = vpop.f32.mrf.mxu0
        %v5238 = vadd.f32 %v5149, %v5237
        %v5239 = vpop.f32.mrf.mxu0
        %v5240 = vadd.f32 %v5151, %v5239
        %5241 = vmatmul.bf16.gmra.mxu0 %v4732
        %v5242 = vpop.f32.mrf.mxu0
        %v5243 = vadd.f32 %v5154, %v5242
        %v5244 = vpop.f32.mrf.mxu0
        %v5245 = vadd.f32 %v5156, %v5244
        %5246 = vmatmul.bf16.gmra.mxu0 %v4734
        %v5247 = vpop.f32.mrf.mxu0
        %v5248 = vadd.f32 %v5159, %v5247
        %v5249 = vpop.f32.mrf.mxu0
        %v5250 = vadd.f32 %v5161, %v5249
        %5251 = vmatmul.bf16.gmra.mxu0 %v4736
        %v5252 = vpop.f32.mrf.mxu0
        %v5253 = vadd.f32 %v5164, %v5252
        %v5254 = vpop.f32.mrf.mxu0
        %v5255 = vadd.f32 %v5166, %v5254
        %5256 = vmatmul.bf16.gmra.mxu0 %v4738
        %v5257 = vpop.f32.mrf.mxu0
        %v5258 = vadd.f32 %v5169, %v5257
        %v5259 = vpop.f32.mrf.mxu0
        %v5260 = vadd.f32 %v5171, %v5259
        %5261 = vmatmul.bf16.gmra.mxu0 %v4740
        %v5262 = vpop.f32.mrf.mxu0
        %v5263 = vadd.f32 %v5174, %v5262
        %v5264 = vpop.f32.mrf.mxu0
        %v5265 = vadd.f32 %v5176, %v5264
        %5266 = vmatmul.bf16.gmra.mxu0 %v4742
        %v5267 = vpop.f32.mrf.mxu0
        %v5268 = vadd.f32 %v5179, %v5267
        %v5269 = vpop.f32.mrf.mxu0
        %v5270 = vadd.f32 %v5181, %v5269
        %5271 = vmatmul.bf16.gmra.mxu0 %v4744
        %v5272 = vpop.f32.mrf.mxu0
        %v5273 = vadd.f32 %v5184, %v5272
        %v5274 = vpop.f32.mrf.mxu0
        %v5275 = vadd.f32 %v5186, %v5274
        %5276 = vmatmul.bf16.gmra.mxu0 %v4746
        %v5277 = vpop.f32.mrf.mxu0
        %v5278 = vadd.f32 %v5189, %v5277
        %v5279 = vpop.f32.mrf.mxu0
        %v5280 = vadd.f32 %v5191, %v5279
        %5281 = vmatmul.bf16.gmra.mxu0 %v4748
        %v5282 = vpop.f32.mrf.mxu0
        %v5283 = vadd.f32 %v5194, %v5282
        %v5284 = vpop.f32.mrf.mxu0
        %v5285 = vadd.f32 %v5196, %v5284
        %5286 = vmatmul.bf16.gmra.mxu0 %v4750
        %v5287 = vpop.f32.mrf.mxu0
        %v5288 = vadd.f32 %v5199, %v5287
        %v5289 = vpop.f32.mrf.mxu0
        %v5290 = vadd.f32 %v5201, %v5289
        %5291 = vmatmul.bf16.gmra.mxu0 %v4752
        %v5292 = vpop.f32.mrf.mxu0
        %v5293 = vadd.f32 %v5204, %v5292
        %v5294 = vpop.f32.mrf.mxu0
        %v5295 = vadd.f32 %v5206, %v5294
        %5296 = vmatmul.bf16.gmra.mxu0 %v4754
        %v5297 = vpop.f32.mrf.mxu0
        %v5298 = vadd.f32 %v5209, %v5297
        %v5299 = vpop.f32.mrf.mxu0
        %v5300 = vadd.f32 %v5211, %v5299
        %5301 = vmatmul.bf16.gmra.mxu0 %v4756
        %v5302 = vpop.f32.mrf.mxu0
        %v5303 = vadd.f32 %v5214, %v5302
        %v5304 = vpop.f32.mrf.mxu0
        %v5305 = vadd.f32 %v5216, %v5304
        %5306 = vmatmul.bf16.gmra.mxu0 %v4758
        %v5307 = vpop.f32.mrf.mxu0
        %v5308 = vadd.f32 %v5219, %v5307
        %v5309 = vpop.f32.mrf.mxu0
        %v5310 = vadd.f32 %v5221, %v5309
        %5311 = vmatmul.bf16.gmra.mxu0 %v4760
        %v5312 = vpop.f32.mrf.mxu0
        %v5313 = vadd.f32 %v5224, %v5312
        %v5314 = vpop.f32.mrf.mxu0
        %v5315 = vadd.f32 %v5226, %v5314
        %5316 = vdwg.mxu0
        %v5317 = vmax.f32 %v5060, 0.0
        %v5318 = vmax.f32 %v5238, 0.0
        %v5319 = vmax.f32 %v5062, 0.0
        %v5320 = vmax.f32 %v5240, 0.0
        %v5321 = vmax.f32 %v5065, 0.0
        %v5322 = vmax.f32 %v5243, 0.0
        %v5323 = vmax.f32 %v5067, 0.0
        %v5324 = vmax.f32 %v5245, 0.0
        %v5325 = vmax.f32 %v5070, 0.0
        %v5326 = vmax.f32 %v5248, 0.0
        %v5327 = vmax.f32 %v5072, 0.0
        %v5328 = vmax.f32 %v5250, 0.0
        %v5329 = vmax.f32 %v5075, 0.0
        %v5330 = vmax.f32 %v5253, 0.0
        %v5331 = vmax.f32 %v5077, 0.0
        %v5332 = vmax.f32 %v5255, 0.0
        %v5333 = vmax.f32 %v5080, 0.0
        %v5334 = vmax.f32 %v5258, 0.0
        %v5335 = vmax.f32 %v5082, 0.0
        %v5336 = vmax.f32 %v5260, 0.0
        %v5337 = vmax.f32 %v5085, 0.0
        %v5338 = vmax.f32 %v5263, 0.0
        %v5339 = vmax.f32 %v5087, 0.0
        %v5340 = vmax.f32 %v5265, 0.0
        %v5341 = vmax.f32 %v5090, 0.0
        %v5342 = vmax.f32 %v5268, 0.0
        %v5343 = vmax.f32 %v5092, 0.0
        %v5344 = vmax.f32 %v5270, 0.0
        %v5345 = vmax.f32 %v5095, 0.0
        %v5346 = vmax.f32 %v5273, 0.0
        %v5347 = vmax.f32 %v5097, 0.0
        %v5348 = vmax.f32 %v5275, 0.0
        %v5349 = vmax.f32 %v5100, 0.0
        %v5350 = vmax.f32 %v5278, 0.0
        %v5351 = vmax.f32 %v5102, 0.0
        %v5352 = vmax.f32 %v5280, 0.0
        %v5353 = vmax.f32 %v5105, 0.0
        %v5354 = vmax.f32 %v5283, 0.0
        %v5355 = vmax.f32 %v5107, 0.0
        %v5356 = vmax.f32 %v5285, 0.0
        %v5357 = vmax.f32 %v5110, 0.0
        %v5358 = vmax.f32 %v5288, 0.0
        %v5359 = vmax.f32 %v5112, 0.0
        %v5360 = vmax.f32 %v5290, 0.0
        %v5361 = vmax.f32 %v5115, 0.0
        %v5362 = vmax.f32 %v5293, 0.0
        %v5363 = vmax.f32 %v5117, 0.0
        %v5364 = vmax.f32 %v5295, 0.0
        %v5365 = vmax.f32 %v5120, 0.0
        %v5366 = vmax.f32 %v5298, 0.0
        %v5367 = vmax.f32 %v5122, 0.0
        %v5368 = vmax.f32 %v5300, 0.0
        %v5369 = vmax.f32 %v5125, 0.0
        %v5370 = vmax.f32 %v5303, 0.0
        %v5371 = vmax.f32 %v5127, 0.0
        %v5372 = vmax.f32 %v5305, 0.0
        %v5373 = vmax.f32 %v5130, 0.0
        %v5374 = vmax.f32 %v5308, 0.0
        %v5375 = vmax.f32 %v5132, 0.0
        %v5376 = vmax.f32 %v5310, 0.0
        %v5377 = vmax.f32 %v5135, 0.0
        %v5378 = vmax.f32 %v5313, 0.0
        %v5379 = vmax.f32 %v5137, 0.0
        %v5380 = vmax.f32 %v5315, 0.0
        %v5381 = vpack.c.bf16 %v5319, %v5317
        %v5382 = vpack.c.bf16 %v5320, %v5318
        %v5383 = vpack.c.bf16 %v5323, %v5321
        %v5384 = vpack.c.bf16 %v5324, %v5322
        %v5385 = vpack.c.bf16 %v5327, %v5325
        %v5386 = vpack.c.bf16 %v5328, %v5326
        %v5387 = vpack.c.bf16 %v5331, %v5329
        %v5388 = vpack.c.bf16 %v5332, %v5330
        %v5389 = vpack.c.bf16 %v5335, %v5333
        %v5390 = vpack.c.bf16 %v5336, %v5334
        %v5391 = vpack.c.bf16 %v5339, %v5337
        %v5392 = vpack.c.bf16 %v5340, %v5338
        %v5393 = vpack.c.bf16 %v5343, %v5341
        %v5394 = vpack.c.bf16 %v5344, %v5342
        %v5395 = vpack.c.bf16 %v5347, %v5345
        %v5396 = vpack.c.bf16 %v5348, %v5346
        %v5397 = vpack.c.bf16 %v5351, %v5349
        %v5398 = vpack.c.bf16 %v5352, %v5350
        %v5399 = vpack.c.bf16 %v5355, %v5353
        %v5400 = vpack.c.bf16 %v5356, %v5354
        %v5401 = vpack.c.bf16 %v5359, %v5357
        %v5402 = vpack.c.bf16 %v5360, %v5358
        %v5403 = vpack.c.bf16 %v5363, %v5361
        %v5404 = vpack.c.bf16 %v5364, %v5362
        %v5405 = vpack.c.bf16 %v5367, %v5365
        %v5406 = vpack.c.bf16 %v5368, %v5366
        %v5407 = vpack.c.bf16 %v5371, %v5369
        %v5408 = vpack.c.bf16 %v5372, %v5370
        %v5409 = vpack.c.bf16 %v5375, %v5373
        %v5410 = vpack.c.bf16 %v5376, %v5374
        %v5411 = vpack.c.bf16 %v5379, %v5377
        %v5412 = vpack.c.bf16 %v5380, %v5378
        %v5413 = vld [vmem:[#allocation5] sm:$0xff]
        %v5414 = vld [vmem:[#allocation5 + $0x8] sm:$0xff]
        %v5415 = vld [vmem:[#allocation5 + $0x10] sm:$0xff]
        %v5416 = vld [vmem:[#allocation5 + $0x18] sm:$0xff]
        %v5417 = vld [vmem:[#allocation5 + $0x20] sm:$0xff]
        %v5418 = vld [vmem:[#allocation5 + $0x28] sm:$0xff]
        %v5419 = vld [vmem:[#allocation5 + $0x30] sm:$0xff]
        %v5420 = vld [vmem:[#allocation5 + $0x38] sm:$0xff]
        %v5421 = vld [vmem:[#allocation5 + $0x40] sm:$0xff]
        %v5422 = vld [vmem:[#allocation5 + $0x48] sm:$0xff]
        %v5423 = vld [vmem:[#allocation5 + $0x50] sm:$0xff]
        %v5424 = vld [vmem:[#allocation5 + $0x58] sm:$0xff]
        %v5425 = vld [vmem:[#allocation5 + $0x60] sm:$0xff]
        %v5426 = vld [vmem:[#allocation5 + $0x68] sm:$0xff]
        %v5427 = vld [vmem:[#allocation5 + $0x70] sm:$0xff]
        %v5428 = vld [vmem:[#allocation5 + $0x78] sm:$0xff]
        %v5429 = vld [vmem:[#allocation5 + $0x80] sm:$0xff]
        %v5430 = vld [vmem:[#allocation5 + $0x88] sm:$0xff]
        %v5431 = vld [vmem:[#allocation5 + $0x90] sm:$0xff]
        %v5432 = vld [vmem:[#allocation5 + $0x98] sm:$0xff]
        %v5433 = vld [vmem:[#allocation5 + $0xa0] sm:$0xff]
        %v5434 = vld [vmem:[#allocation5 + $0xa8] sm:$0xff]
        %v5435 = vld [vmem:[#allocation5 + $0xb0] sm:$0xff]
        %v5436 = vld [vmem:[#allocation5 + $0xb8] sm:$0xff]
        %v5437 = vld [vmem:[#allocation5 + $0xc0] sm:$0xff]
        %v5438 = vld [vmem:[#allocation5 + $0xc8] sm:$0xff]
        %v5439 = vld [vmem:[#allocation5 + $0xd0] sm:$0xff]
        %v5440 = vld [vmem:[#allocation5 + $0xd8] sm:$0xff]
        %v5441 = vld [vmem:[#allocation5 + $0xe0] sm:$0xff]
        %v5442 = vld [vmem:[#allocation5 + $0xe8] sm:$0xff]
        %v5443 = vld [vmem:[#allocation5 + $0xf0] sm:$0xff]
        %v5444 = vld [vmem:[#allocation5 + $0xf8] sm:$0xff]
        %v5445 = vld [vmem:[#allocation5 + $0x100] sm:$0xff]
        %v5446 = vld [vmem:[#allocation5 + $0x108] sm:$0xff]
        %v5447 = vld [vmem:[#allocation5 + $0x110] sm:$0xff]
        %v5448 = vld [vmem:[#allocation5 + $0x118] sm:$0xff]
        %v5449 = vld [vmem:[#allocation5 + $0x120] sm:$0xff]
        %v5450 = vld [vmem:[#allocation5 + $0x128] sm:$0xff]
        %v5451 = vld [vmem:[#allocation5 + $0x130] sm:$0xff]
        %v5452 = vld [vmem:[#allocation5 + $0x138] sm:$0xff]
        %v5453 = vld [vmem:[#allocation5 + $0x140] sm:$0xff]
        %v5454 = vld [vmem:[#allocation5 + $0x148] sm:$0xff]
        %v5455 = vld [vmem:[#allocation5 + $0x150] sm:$0xff]
        %v5456 = vld [vmem:[#allocation5 + $0x158] sm:$0xff]
        %v5457 = vld [vmem:[#allocation5 + $0x160] sm:$0xff]
        %v5458 = vld [vmem:[#allocation5 + $0x168] sm:$0xff]
        %v5459 = vld [vmem:[#allocation5 + $0x170] sm:$0xff]
        %v5460 = vld [vmem:[#allocation5 + $0x178] sm:$0xff]
        %v5461 = vld [vmem:[#allocation5 + $0x180] sm:$0xff]
        %v5462 = vld [vmem:[#allocation5 + $0x188] sm:$0xff]
        %v5463 = vld [vmem:[#allocation5 + $0x190] sm:$0xff]
        %v5464 = vld [vmem:[#allocation5 + $0x198] sm:$0xff]
        %v5465 = vld [vmem:[#allocation5 + $0x1a0] sm:$0xff]
        %v5466 = vld [vmem:[#allocation5 + $0x1a8] sm:$0xff]
        %v5467 = vld [vmem:[#allocation5 + $0x1b0] sm:$0xff]
        %v5468 = vld [vmem:[#allocation5 + $0x1b8] sm:$0xff]
        %v5469 = vld [vmem:[#allocation5 + $0x1c0] sm:$0xff]
        %v5470 = vld [vmem:[#allocation5 + $0x1c8] sm:$0xff]
        %v5471 = vld [vmem:[#allocation5 + $0x1d0] sm:$0xff]
        %v5472 = vld [vmem:[#allocation5 + $0x1d8] sm:$0xff]
        %v5473 = vld [vmem:[#allocation5 + $0x1e0] sm:$0xff]
        %v5474 = vld [vmem:[#allocation5 + $0x1e8] sm:$0xff]
        %v5475 = vld [vmem:[#allocation5 + $0x1f0] sm:$0xff]
        %v5476 = vld [vmem:[#allocation5 + $0x1f8] sm:$0xff]
        %v5477 = vld [vmem:[#allocation5 + $0x200] sm:$0xff]
        %v5478 = vld [vmem:[#allocation5 + $0x208] sm:$0xff]
        %v5479 = vld [vmem:[#allocation5 + $0x210] sm:$0xff]
        %v5480 = vld [vmem:[#allocation5 + $0x218] sm:$0xff]
        %v5481 = vld [vmem:[#allocation5 + $0x220] sm:$0xff]
        %v5482 = vld [vmem:[#allocation5 + $0x228] sm:$0xff]
        %v5483 = vld [vmem:[#allocation5 + $0x230] sm:$0xff]
        %v5484 = vld [vmem:[#allocation5 + $0x238] sm:$0xff]
        %v5485 = vld [vmem:[#allocation5 + $0x240] sm:$0xff]
        %v5486 = vld [vmem:[#allocation5 + $0x248] sm:$0xff]
        %v5487 = vld [vmem:[#allocation5 + $0x250] sm:$0xff]
        %v5488 = vld [vmem:[#allocation5 + $0x258] sm:$0xff]
        %v5489 = vld [vmem:[#allocation5 + $0x260] sm:$0xff]
        %v5490 = vld [vmem:[#allocation5 + $0x268] sm:$0xff]
        %v5491 = vld [vmem:[#allocation5 + $0x270] sm:$0xff]
        %v5492 = vld [vmem:[#allocation5 + $0x278] sm:$0xff]
        %v5493 = vld [vmem:[#allocation5 + $0x280] sm:$0xff]
        %v5494 = vld [vmem:[#allocation5 + $0x288] sm:$0xff]
        %v5495 = vld [vmem:[#allocation5 + $0x290] sm:$0xff]
        %v5496 = vld [vmem:[#allocation5 + $0x298] sm:$0xff]
        %v5497 = vld [vmem:[#allocation5 + $0x2a0] sm:$0xff]
        %v5498 = vld [vmem:[#allocation5 + $0x2a8] sm:$0xff]
        %v5499 = vld [vmem:[#allocation5 + $0x2b0] sm:$0xff]
        %v5500 = vld [vmem:[#allocation5 + $0x2b8] sm:$0xff]
        %v5501 = vld [vmem:[#allocation5 + $0x2c0] sm:$0xff]
        %v5502 = vld [vmem:[#allocation5 + $0x2c8] sm:$0xff]
        %v5503 = vld [vmem:[#allocation5 + $0x2d0] sm:$0xff]
        %v5504 = vld [vmem:[#allocation5 + $0x2d8] sm:$0xff]
        %v5505 = vld [vmem:[#allocation5 + $0x2e0] sm:$0xff]
        %v5506 = vld [vmem:[#allocation5 + $0x2e8] sm:$0xff]
        %v5507 = vld [vmem:[#allocation5 + $0x2f0] sm:$0xff]
        %v5508 = vld [vmem:[#allocation5 + $0x2f8] sm:$0xff]
        %v5509 = vld [vmem:[#allocation5 + $0x300] sm:$0xff]
        %v5510 = vld [vmem:[#allocation5 + $0x308] sm:$0xff]
        %v5511 = vld [vmem:[#allocation5 + $0x310] sm:$0xff]
        %v5512 = vld [vmem:[#allocation5 + $0x318] sm:$0xff]
        %v5513 = vld [vmem:[#allocation5 + $0x320] sm:$0xff]
        %v5514 = vld [vmem:[#allocation5 + $0x328] sm:$0xff]
        %v5515 = vld [vmem:[#allocation5 + $0x330] sm:$0xff]
        %v5516 = vld [vmem:[#allocation5 + $0x338] sm:$0xff]
        %v5517 = vld [vmem:[#allocation5 + $0x340] sm:$0xff]
        %v5518 = vld [vmem:[#allocation5 + $0x348] sm:$0xff]
        %v5519 = vld [vmem:[#allocation5 + $0x350] sm:$0xff]
        %v5520 = vld [vmem:[#allocation5 + $0x358] sm:$0xff]
        %v5521 = vld [vmem:[#allocation5 + $0x360] sm:$0xff]
        %v5522 = vld [vmem:[#allocation5 + $0x368] sm:$0xff]
        %v5523 = vld [vmem:[#allocation5 + $0x370] sm:$0xff]
        %v5524 = vld [vmem:[#allocation5 + $0x378] sm:$0xff]
        %v5525 = vld [vmem:[#allocation5 + $0x380] sm:$0xff]
        %v5526 = vld [vmem:[#allocation5 + $0x388] sm:$0xff]
        %v5527 = vld [vmem:[#allocation5 + $0x390] sm:$0xff]
        %v5528 = vld [vmem:[#allocation5 + $0x398] sm:$0xff]
        %v5529 = vld [vmem:[#allocation5 + $0x3a0] sm:$0xff]
        %v5530 = vld [vmem:[#allocation5 + $0x3a8] sm:$0xff]
        %v5531 = vld [vmem:[#allocation5 + $0x3b0] sm:$0xff]
        %v5532 = vld [vmem:[#allocation5 + $0x3b8] sm:$0xff]
        %v5533 = vld [vmem:[#allocation5 + $0x3c0] sm:$0xff]
        %v5534 = vld [vmem:[#allocation5 + $0x3c8] sm:$0xff]
        %v5535 = vld [vmem:[#allocation5 + $0x3d0] sm:$0xff]
        %v5536 = vld [vmem:[#allocation5 + $0x3d8] sm:$0xff]
        %v5537 = vld [vmem:[#allocation5 + $0x3e0] sm:$0xff]
        %v5538 = vld [vmem:[#allocation5 + $0x3e8] sm:$0xff]
        %v5539 = vld [vmem:[#allocation5 + $0x3f0] sm:$0xff]
        %v5540 = vld [vmem:[#allocation5 + $0x3f8] sm:$0xff]
        %v5541 = vld [vmem:[%s6] sm:$0xff]
        %v5543 = vperm.slane %v5541, 0
        %v5544 = vperm.slane %v5541, 1
        %v5545 = vperm.slane %v5541, 2
        %v5546 = vperm.slane %v5541, 3
        %v5547 = vperm.slane %v5541, 4
        %v5548 = vperm.slane %v5541, 5
        %v5549 = vperm.slane %v5541, 6
        %v5550 = vperm.slane %v5541, 7
        %v5687 = vunpack.c.l.b16 %v5413
        %v5688 = vunpack.c.h.b16 %v5413
        %v5689 = vunpack.c.l.b16 %v5414
        %v5690 = vunpack.c.h.b16 %v5414
        %v5691 = vunpack.c.l.b16 %v5415
        %v5692 = vunpack.c.h.b16 %v5415
        %v5693 = vunpack.c.l.b16 %v5416
        %v5694 = vunpack.c.h.b16 %v5416
        %v5695 = vunpack.c.l.b16 %v5417
        %v5696 = vunpack.c.h.b16 %v5417
        %v5697 = vunpack.c.l.b16 %v5418
        %v5698 = vunpack.c.h.b16 %v5418
        %v5699 = vunpack.c.l.b16 %v5419
        %v5700 = vunpack.c.h.b16 %v5419
        %v5701 = vunpack.c.l.b16 %v5420
        %v5702 = vunpack.c.h.b16 %v5420
        %v5703 = vunpack.c.l.b16 %v5421
        %v5704 = vunpack.c.h.b16 %v5421
        %v5705 = vunpack.c.l.b16 %v5422
        %v5706 = vunpack.c.h.b16 %v5422
        %v5707 = vunpack.c.l.b16 %v5423
        %v5708 = vunpack.c.h.b16 %v5423
        %v5709 = vunpack.c.l.b16 %v5424
        %v5710 = vunpack.c.h.b16 %v5424
        %v5711 = vunpack.c.l.b16 %v5425
        %v5712 = vunpack.c.h.b16 %v5425
        %v5713 = vunpack.c.l.b16 %v5426
        %v5714 = vunpack.c.h.b16 %v5426
        %v5715 = vunpack.c.l.b16 %v5427
        %v5716 = vunpack.c.h.b16 %v5427
        %v5717 = vunpack.c.l.b16 %v5428
        %v5718 = vunpack.c.h.b16 %v5428
        %v5719 = vunpack.c.l.b16 %v5429
        %v5720 = vunpack.c.h.b16 %v5429
        %v5721 = vunpack.c.l.b16 %v5430
        %v5722 = vunpack.c.h.b16 %v5430
        %v5723 = vunpack.c.l.b16 %v5431
        %v5724 = vunpack.c.h.b16 %v5431
        %v5725 = vunpack.c.l.b16 %v5432
        %v5726 = vunpack.c.h.b16 %v5432
        %v5727 = vunpack.c.l.b16 %v5433
        %v5728 = vunpack.c.h.b16 %v5433
        %v5729 = vunpack.c.l.b16 %v5434
        %v5730 = vunpack.c.h.b16 %v5434
        %v5731 = vunpack.c.l.b16 %v5435
        %v5732 = vunpack.c.h.b16 %v5435
        %v5733 = vunpack.c.l.b16 %v5436
        %v5734 = vunpack.c.h.b16 %v5436
        %v5735 = vunpack.c.l.b16 %v5437
        %v5736 = vunpack.c.h.b16 %v5437
        %v5737 = vunpack.c.l.b16 %v5438
        %v5738 = vunpack.c.h.b16 %v5438
        %v5739 = vunpack.c.l.b16 %v5439
        %v5740 = vunpack.c.h.b16 %v5439
        %v5741 = vunpack.c.l.b16 %v5440
        %v5742 = vunpack.c.h.b16 %v5440
        %v5743 = vunpack.c.l.b16 %v5441
        %v5744 = vunpack.c.h.b16 %v5441
        %v5745 = vunpack.c.l.b16 %v5442
        %v5746 = vunpack.c.h.b16 %v5442
        %v5747 = vunpack.c.l.b16 %v5443
        %v5748 = vunpack.c.h.b16 %v5443
        %v5749 = vunpack.c.l.b16 %v5444
        %v5750 = vunpack.c.h.b16 %v5444
        %v5751 = vunpack.c.l.b16 %v5445
        %v5752 = vunpack.c.h.b16 %v5445
        %v5753 = vunpack.c.l.b16 %v5446
        %v5754 = vunpack.c.h.b16 %v5446
        %v5755 = vunpack.c.l.b16 %v5447
        %v5756 = vunpack.c.h.b16 %v5447
        %v5757 = vunpack.c.l.b16 %v5448
        %v5758 = vunpack.c.h.b16 %v5448
        %v5759 = vunpack.c.l.b16 %v5449
        %v5760 = vunpack.c.h.b16 %v5449
        %v5761 = vunpack.c.l.b16 %v5450
        %v5762 = vunpack.c.h.b16 %v5450
        %v5763 = vunpack.c.l.b16 %v5451
        %v5764 = vunpack.c.h.b16 %v5451
        %v5765 = vunpack.c.l.b16 %v5452
        %v5766 = vunpack.c.h.b16 %v5452
        %v5767 = vunpack.c.l.b16 %v5453
        %v5768 = vunpack.c.h.b16 %v5453
        %v5769 = vunpack.c.l.b16 %v5454
        %v5770 = vunpack.c.h.b16 %v5454
        %v5771 = vunpack.c.l.b16 %v5455
        %v5772 = vunpack.c.h.b16 %v5455
        %v5773 = vunpack.c.l.b16 %v5456
        %v5774 = vunpack.c.h.b16 %v5456
        %v5775 = vunpack.c.l.b16 %v5457
        %v5776 = vunpack.c.h.b16 %v5457
        %v5777 = vunpack.c.l.b16 %v5458
        %v5778 = vunpack.c.h.b16 %v5458
        %v5779 = vunpack.c.l.b16 %v5459
        %v5780 = vunpack.c.h.b16 %v5459
        %v5781 = vunpack.c.l.b16 %v5460
        %v5782 = vunpack.c.h.b16 %v5460
        %v5783 = vunpack.c.l.b16 %v5461
        %v5784 = vunpack.c.h.b16 %v5461
        %v5785 = vunpack.c.l.b16 %v5462
        %v5786 = vunpack.c.h.b16 %v5462
        %v5787 = vunpack.c.l.b16 %v5463
        %v5788 = vunpack.c.h.b16 %v5463
        %v5789 = vunpack.c.l.b16 %v5464
        %v5790 = vunpack.c.h.b16 %v5464
        %v5791 = vunpack.c.l.b16 %v5465
        %v5792 = vunpack.c.h.b16 %v5465
        %v5793 = vunpack.c.l.b16 %v5466
        %v5794 = vunpack.c.h.b16 %v5466
        %v5795 = vunpack.c.l.b16 %v5467
        %v5796 = vunpack.c.h.b16 %v5467
        %v5797 = vunpack.c.l.b16 %v5468
        %v5798 = vunpack.c.h.b16 %v5468
        %v5799 = vunpack.c.l.b16 %v5469
        %v5800 = vunpack.c.h.b16 %v5469
        %v5801 = vunpack.c.l.b16 %v5470
        %v5802 = vunpack.c.h.b16 %v5470
        %v5803 = vunpack.c.l.b16 %v5471
        %v5804 = vunpack.c.h.b16 %v5471
        %v5805 = vunpack.c.l.b16 %v5472
        %v5806 = vunpack.c.h.b16 %v5472
        %v5807 = vunpack.c.l.b16 %v5473
        %v5808 = vunpack.c.h.b16 %v5473
        %v5809 = vunpack.c.l.b16 %v5474
        %v5810 = vunpack.c.h.b16 %v5474
        %v5811 = vunpack.c.l.b16 %v5475
        %v5812 = vunpack.c.h.b16 %v5475
        %v5813 = vunpack.c.l.b16 %v5476
        %v5814 = vunpack.c.h.b16 %v5476
        %v5815 = vunpack.c.l.b16 %v5477
        %v5816 = vunpack.c.h.b16 %v5477
        %v5817 = vunpack.c.l.b16 %v5478
        %v5818 = vunpack.c.h.b16 %v5478
        %v5819 = vunpack.c.l.b16 %v5479
        %v5820 = vunpack.c.h.b16 %v5479
        %v5821 = vunpack.c.l.b16 %v5480
        %v5822 = vunpack.c.h.b16 %v5480
        %v5823 = vunpack.c.l.b16 %v5481
        %v5824 = vunpack.c.h.b16 %v5481
        %v5825 = vunpack.c.l.b16 %v5482
        %v5826 = vunpack.c.h.b16 %v5482
        %v5827 = vunpack.c.l.b16 %v5483
        %v5828 = vunpack.c.h.b16 %v5483
        %v5829 = vunpack.c.l.b16 %v5484
        %v5830 = vunpack.c.h.b16 %v5484
        %v5831 = vunpack.c.l.b16 %v5485
        %v5832 = vunpack.c.h.b16 %v5485
        %v5833 = vunpack.c.l.b16 %v5486
        %v5834 = vunpack.c.h.b16 %v5486
        %v5835 = vunpack.c.l.b16 %v5487
        %v5836 = vunpack.c.h.b16 %v5487
        %v5837 = vunpack.c.l.b16 %v5488
        %v5838 = vunpack.c.h.b16 %v5488
        %v5839 = vunpack.c.l.b16 %v5489
        %v5840 = vunpack.c.h.b16 %v5489
        %v5841 = vunpack.c.l.b16 %v5490
        %v5842 = vunpack.c.h.b16 %v5490
        %v5843 = vunpack.c.l.b16 %v5491
        %v5844 = vunpack.c.h.b16 %v5491
        %v5845 = vunpack.c.l.b16 %v5492
        %v5846 = vunpack.c.h.b16 %v5492
        %v5847 = vunpack.c.l.b16 %v5493
        %v5848 = vunpack.c.h.b16 %v5493
        %v5849 = vunpack.c.l.b16 %v5494
        %v5850 = vunpack.c.h.b16 %v5494
        %v5851 = vunpack.c.l.b16 %v5495
        %v5852 = vunpack.c.h.b16 %v5495
        %v5853 = vunpack.c.l.b16 %v5496
        %v5854 = vunpack.c.h.b16 %v5496
        %v5855 = vunpack.c.l.b16 %v5497
        %v5856 = vunpack.c.h.b16 %v5497
        %v5857 = vunpack.c.l.b16 %v5498
        %v5858 = vunpack.c.h.b16 %v5498
        %v5859 = vunpack.c.l.b16 %v5499
        %v5860 = vunpack.c.h.b16 %v5499
        %v5861 = vunpack.c.l.b16 %v5500
        %v5862 = vunpack.c.h.b16 %v5500
        %v5863 = vunpack.c.l.b16 %v5501
        %v5864 = vunpack.c.h.b16 %v5501
        %v5865 = vunpack.c.l.b16 %v5502
        %v5866 = vunpack.c.h.b16 %v5502
        %v5867 = vunpack.c.l.b16 %v5503
        %v5868 = vunpack.c.h.b16 %v5503
        %v5869 = vunpack.c.l.b16 %v5504
        %v5870 = vunpack.c.h.b16 %v5504
        %v5871 = vunpack.c.l.b16 %v5505
        %v5872 = vunpack.c.h.b16 %v5505
        %v5873 = vunpack.c.l.b16 %v5506
        %v5874 = vunpack.c.h.b16 %v5506
        %v5875 = vunpack.c.l.b16 %v5507
        %v5876 = vunpack.c.h.b16 %v5507
        %v5877 = vunpack.c.l.b16 %v5508
        %v5878 = vunpack.c.h.b16 %v5508
        %v5879 = vunpack.c.l.b16 %v5509
        %v5880 = vunpack.c.h.b16 %v5509
        %v5881 = vunpack.c.l.b16 %v5510
        %v5882 = vunpack.c.h.b16 %v5510
        %v5883 = vunpack.c.l.b16 %v5511
        %v5884 = vunpack.c.h.b16 %v5511
        %v5885 = vunpack.c.l.b16 %v5512
        %v5886 = vunpack.c.h.b16 %v5512
        %v5887 = vunpack.c.l.b16 %v5513
        %v5888 = vunpack.c.h.b16 %v5513
        %v5889 = vunpack.c.l.b16 %v5514
        %v5890 = vunpack.c.h.b16 %v5514
        %v5891 = vunpack.c.l.b16 %v5515
        %v5892 = vunpack.c.h.b16 %v5515
        %v5893 = vunpack.c.l.b16 %v5516
        %v5894 = vunpack.c.h.b16 %v5516
        %v5895 = vunpack.c.l.b16 %v5517
        %v5896 = vunpack.c.h.b16 %v5517
        %v5897 = vunpack.c.l.b16 %v5518
        %v5898 = vunpack.c.h.b16 %v5518
        %v5899 = vunpack.c.l.b16 %v5519
        %v5900 = vunpack.c.h.b16 %v5519
        %v5901 = vunpack.c.l.b16 %v5520
        %v5902 = vunpack.c.h.b16 %v5520
        %v5903 = vunpack.c.l.b16 %v5521
        %v5904 = vunpack.c.h.b16 %v5521
        %v5905 = vunpack.c.l.b16 %v5522
        %v5906 = vunpack.c.h.b16 %v5522
        %v5907 = vunpack.c.l.b16 %v5523
        %v5908 = vunpack.c.h.b16 %v5523
        %v5909 = vunpack.c.l.b16 %v5524
        %v5910 = vunpack.c.h.b16 %v5524
        %v5911 = vunpack.c.l.b16 %v5525
        %v5912 = vunpack.c.h.b16 %v5525
        %v5913 = vunpack.c.l.b16 %v5526
        %v5914 = vunpack.c.h.b16 %v5526
        %v5915 = vunpack.c.l.b16 %v5527
        %v5916 = vunpack.c.h.b16 %v5527
        %v5917 = vunpack.c.l.b16 %v5528
        %v5918 = vunpack.c.h.b16 %v5528
        %v5919 = vunpack.c.l.b16 %v5529
        %v5920 = vunpack.c.h.b16 %v5529
        %v5921 = vunpack.c.l.b16 %v5530
        %v5922 = vunpack.c.h.b16 %v5530
        %v5923 = vunpack.c.l.b16 %v5531
        %v5924 = vunpack.c.h.b16 %v5531
        %v5925 = vunpack.c.l.b16 %v5532
        %v5926 = vunpack.c.h.b16 %v5532
        %v5927 = vunpack.c.l.b16 %v5533
        %v5928 = vunpack.c.h.b16 %v5533
        %v5929 = vunpack.c.l.b16 %v5534
        %v5930 = vunpack.c.h.b16 %v5534
        %v5931 = vunpack.c.l.b16 %v5535
        %v5932 = vunpack.c.h.b16 %v5535
        %v5933 = vunpack.c.l.b16 %v5536
        %v5934 = vunpack.c.h.b16 %v5536
        %v5935 = vunpack.c.l.b16 %v5537
        %v5936 = vunpack.c.h.b16 %v5537
        %v5937 = vunpack.c.l.b16 %v5538
        %v5938 = vunpack.c.h.b16 %v5538
        %v5939 = vunpack.c.l.b16 %v5539
        %v5940 = vunpack.c.h.b16 %v5539
        %v5941 = vunpack.c.l.b16 %v5540
        %v5942 = vunpack.c.h.b16 %v5540
        %v5943 = vpack.c.b16 %v5695, %v5687
        %v5944 = vpack.c.b16 %v5696, %v5688
        %v5945 = vpack.c.b16 %v5697, %v5689
        %v5946 = vpack.c.b16 %v5698, %v5690
        %v5947 = vpack.c.b16 %v5699, %v5691
        %v5948 = vpack.c.b16 %v5700, %v5692
        %v5949 = vpack.c.b16 %v5701, %v5693
        %v5950 = vpack.c.b16 %v5702, %v5694
        %v5951 = vpack.c.b16 %v5711, %v5703
        %v5952 = vpack.c.b16 %v5712, %v5704
        %v5953 = vpack.c.b16 %v5713, %v5705
        %v5954 = vpack.c.b16 %v5714, %v5706
        %v5955 = vpack.c.b16 %v5715, %v5707
        %v5956 = vpack.c.b16 %v5716, %v5708
        %v5957 = vpack.c.b16 %v5717, %v5709
        %v5958 = vpack.c.b16 %v5718, %v5710
        %v5959 = vpack.c.b16 %v5727, %v5719
        %v5960 = vpack.c.b16 %v5728, %v5720
        %v5961 = vpack.c.b16 %v5729, %v5721
        %v5962 = vpack.c.b16 %v5730, %v5722
        %v5963 = vpack.c.b16 %v5731, %v5723
        %v5964 = vpack.c.b16 %v5732, %v5724
        %v5965 = vpack.c.b16 %v5733, %v5725
        %v5966 = vpack.c.b16 %v5734, %v5726
        %v5967 = vpack.c.b16 %v5743, %v5735
        %v5968 = vpack.c.b16 %v5744, %v5736
        %v5969 = vpack.c.b16 %v5745, %v5737
        %v5970 = vpack.c.b16 %v5746, %v5738
        %v5971 = vpack.c.b16 %v5747, %v5739
        %v5972 = vpack.c.b16 %v5748, %v5740
        %v5973 = vpack.c.b16 %v5749, %v5741
        %v5974 = vpack.c.b16 %v5750, %v5742
        %v5975 = vpack.c.b16 %v5759, %v5751
        %v5976 = vpack.c.b16 %v5760, %v5752
        %v5977 = vpack.c.b16 %v5761, %v5753
        %v5978 = vpack.c.b16 %v5762, %v5754
        %v5979 = vpack.c.b16 %v5763, %v5755
        %v5980 = vpack.c.b16 %v5764, %v5756
        %v5981 = vpack.c.b16 %v5765, %v5757
        %v5982 = vpack.c.b16 %v5766, %v5758
        %v5983 = vpack.c.b16 %v5775, %v5767
        %v5984 = vpack.c.b16 %v5776, %v5768
        %v5985 = vpack.c.b16 %v5777, %v5769
        %v5986 = vpack.c.b16 %v5778, %v5770
        %v5987 = vpack.c.b16 %v5779, %v5771
        %v5988 = vpack.c.b16 %v5780, %v5772
        %v5989 = vpack.c.b16 %v5781, %v5773
        %v5990 = vpack.c.b16 %v5782, %v5774
        %v5991 = vpack.c.b16 %v5791, %v5783
        %v5992 = vpack.c.b16 %v5792, %v5784
        %v5993 = vpack.c.b16 %v5793, %v5785
        %v5994 = vpack.c.b16 %v5794, %v5786
        %v5995 = vpack.c.b16 %v5795, %v5787
        %v5996 = vpack.c.b16 %v5796, %v5788
        %v5997 = vpack.c.b16 %v5797, %v5789
        %v5998 = vpack.c.b16 %v5798, %v5790
        %v5999 = vpack.c.b16 %v5807, %v5799
        %v6000 = vpack.c.b16 %v5808, %v5800
        %v6001 = vpack.c.b16 %v5809, %v5801
        %v6002 = vpack.c.b16 %v5810, %v5802
        %v6003 = vpack.c.b16 %v5811, %v5803
        %v6004 = vpack.c.b16 %v5812, %v5804
        %v6005 = vpack.c.b16 %v5813, %v5805
        %v6006 = vpack.c.b16 %v5814, %v5806
        %v6007 = vpack.c.b16 %v5823, %v5815
        %v6008 = vpack.c.b16 %v5824, %v5816
        %v6009 = vpack.c.b16 %v5825, %v5817
        %v6010 = vpack.c.b16 %v5826, %v5818
        %v6011 = vpack.c.b16 %v5827, %v5819
        %v6012 = vpack.c.b16 %v5828, %v5820
        %v6013 = vpack.c.b16 %v5829, %v5821
        %v6014 = vpack.c.b16 %v5830, %v5822
        %v6015 = vpack.c.b16 %v5839, %v5831
        %v6016 = vpack.c.b16 %v5840, %v5832
        %v6017 = vpack.c.b16 %v5841, %v5833
        %v6018 = vpack.c.b16 %v5842, %v5834
        %v6019 = vpack.c.b16 %v5843, %v5835
        %v6020 = vpack.c.b16 %v5844, %v5836
        %v6021 = vpack.c.b16 %v5845, %v5837
        %v6022 = vpack.c.b16 %v5846, %v5838
        %v6023 = vpack.c.b16 %v5855, %v5847
        %v6024 = vpack.c.b16 %v5856, %v5848
        %v6025 = vpack.c.b16 %v5857, %v5849
        %v6026 = vpack.c.b16 %v5858, %v5850
        %v6027 = vpack.c.b16 %v5859, %v5851
        %v6028 = vpack.c.b16 %v5860, %v5852
        %v6029 = vpack.c.b16 %v5861, %v5853
        %v6030 = vpack.c.b16 %v5862, %v5854
        %v6031 = vpack.c.b16 %v5871, %v5863
        %v6032 = vpack.c.b16 %v5872, %v5864
        %v6033 = vpack.c.b16 %v5873, %v5865
        %v6034 = vpack.c.b16 %v5874, %v5866
        %v6035 = vpack.c.b16 %v5875, %v5867
        %v6036 = vpack.c.b16 %v5876, %v5868
        %v6037 = vpack.c.b16 %v5877, %v5869
        %v6038 = vpack.c.b16 %v5878, %v5870
        %v6039 = vpack.c.b16 %v5887, %v5879
        %v6040 = vpack.c.b16 %v5888, %v5880
        %v6041 = vpack.c.b16 %v5889, %v5881
        %v6042 = vpack.c.b16 %v5890, %v5882
        %v6043 = vpack.c.b16 %v5891, %v5883
        %v6044 = vpack.c.b16 %v5892, %v5884
        %v6045 = vpack.c.b16 %v5893, %v5885
        %v6046 = vpack.c.b16 %v5894, %v5886
        %v6047 = vpack.c.b16 %v5903, %v5895
        %v6048 = vpack.c.b16 %v5904, %v5896
        %v6049 = vpack.c.b16 %v5905, %v5897
        %v6050 = vpack.c.b16 %v5906, %v5898
        %v6051 = vpack.c.b16 %v5907, %v5899
        %v6052 = vpack.c.b16 %v5908, %v5900
        %v6053 = vpack.c.b16 %v5909, %v5901
        %v6054 = vpack.c.b16 %v5910, %v5902
        %v6055 = vpack.c.b16 %v5919, %v5911
        %v6056 = vpack.c.b16 %v5920, %v5912
        %v6057 = vpack.c.b16 %v5921, %v5913
        %v6058 = vpack.c.b16 %v5922, %v5914
        %v6059 = vpack.c.b16 %v5923, %v5915
        %v6060 = vpack.c.b16 %v5924, %v5916
        %v6061 = vpack.c.b16 %v5925, %v5917
        %v6062 = vpack.c.b16 %v5926, %v5918
        %v6063 = vpack.c.b16 %v5935, %v5927
        %v6064 = vpack.c.b16 %v5936, %v5928
        %v6065 = vpack.c.b16 %v5937, %v5929
        %v6066 = vpack.c.b16 %v5938, %v5930
        %v6067 = vpack.c.b16 %v5939, %v5931
        %v6068 = vpack.c.b16 %v5940, %v5932
        %v6069 = vpack.c.b16 %v5941, %v5933
        %v6070 = vpack.c.b16 %v5942, %v5934
        %6199 = vmatpush.bf16.msra.mxu0 %v5999
        %6200 = vmatpush.bf16.msra.mxu0 %v5991
        %6201 = vmatpush.bf16.msra.mxu0 %v5983
        %6202 = vmatpush.bf16.msra.mxu0 %v5975
        %6203 = vmatpush.bf16.msra.mxu0 %v5967
        %6204 = vmatpush.bf16.msra.mxu0 %v5959
        %6205 = vmatpush.bf16.msra.mxu0 %v5951
        %6206 = vmatpush.bf16.msra.mxu0 %v5943
        %6207 = vmatmul.bf16.gmra.mxu0 %v5381
        %v6208 = vpop.f32.mrf.mxu0
        %v6209 = vadd.f32 %v5543, %v6208
        %v6210 = vpop.f32.mrf.mxu0
        %v6211 = vadd.f32 %v5543, %v6210
        %6212 = vmatmul.bf16.gmra.mxu0 %v5383
        %v6213 = vpop.f32.mrf.mxu0
        %v6214 = vadd.f32 %v5543, %v6213
        %v6215 = vpop.f32.mrf.mxu0
        %v6216 = vadd.f32 %v5543, %v6215
        %6217 = vmatmul.bf16.gmra.mxu0 %v5385
        %v6218 = vpop.f32.mrf.mxu0
        %v6219 = vadd.f32 %v5543, %v6218
        %v6220 = vpop.f32.mrf.mxu0
        %v6221 = vadd.f32 %v5543, %v6220
        %6222 = vmatmul.bf16.gmra.mxu0 %v5387
        %v6223 = vpop.f32.mrf.mxu0
        %v6224 = vadd.f32 %v5543, %v6223
        %v6225 = vpop.f32.mrf.mxu0
        %v6226 = vadd.f32 %v5543, %v6225
        %6227 = vmatmul.bf16.gmra.mxu0 %v5389
        %v6228 = vpop.f32.mrf.mxu0
        %v6229 = vadd.f32 %v5543, %v6228
        %v6230 = vpop.f32.mrf.mxu0
        %v6231 = vadd.f32 %v5543, %v6230
        %6232 = vmatmul.bf16.gmra.mxu0 %v5391
        %v6233 = vpop.f32.mrf.mxu0
        %v6234 = vadd.f32 %v5543, %v6233
        %v6235 = vpop.f32.mrf.mxu0
        %v6236 = vadd.f32 %v5543, %v6235
        %6237 = vmatmul.bf16.gmra.mxu0 %v5393
        %v6238 = vpop.f32.mrf.mxu0
        %v6239 = vadd.f32 %v5543, %v6238
        %v6240 = vpop.f32.mrf.mxu0
        %v6241 = vadd.f32 %v5543, %v6240
        %6242 = vmatmul.bf16.gmra.mxu0 %v5395
        %v6243 = vpop.f32.mrf.mxu0
        %v6244 = vadd.f32 %v5543, %v6243
        %v6245 = vpop.f32.mrf.mxu0
        %v6246 = vadd.f32 %v5543, %v6245
        %6247 = vmatmul.bf16.gmra.mxu0 %v5397
        %v6248 = vpop.f32.mrf.mxu0
        %v6249 = vadd.f32 %v5543, %v6248
        %v6250 = vpop.f32.mrf.mxu0
        %v6251 = vadd.f32 %v5543, %v6250
        %6252 = vmatmul.bf16.gmra.mxu0 %v5399
        %v6253 = vpop.f32.mrf.mxu0
        %v6254 = vadd.f32 %v5543, %v6253
        %v6255 = vpop.f32.mrf.mxu0
        %v6256 = vadd.f32 %v5543, %v6255
        %6257 = vmatmul.bf16.gmra.mxu0 %v5401
        %v6258 = vpop.f32.mrf.mxu0
        %v6259 = vadd.f32 %v5543, %v6258
        %v6260 = vpop.f32.mrf.mxu0
        %v6261 = vadd.f32 %v5543, %v6260
        %6262 = vmatmul.bf16.gmra.mxu0 %v5403
        %v6263 = vpop.f32.mrf.mxu0
        %v6264 = vadd.f32 %v5543, %v6263
        %v6265 = vpop.f32.mrf.mxu0
        %v6266 = vadd.f32 %v5543, %v6265
        %6267 = vmatmul.bf16.gmra.mxu0 %v5405
        %v6268 = vpop.f32.mrf.mxu0
        %v6269 = vadd.f32 %v5543, %v6268
        %v6270 = vpop.f32.mrf.mxu0
        %v6271 = vadd.f32 %v5543, %v6270
        %6272 = vmatmul.bf16.gmra.mxu0 %v5407
        %v6273 = vpop.f32.mrf.mxu0
        %v6274 = vadd.f32 %v5543, %v6273
        %v6275 = vpop.f32.mrf.mxu0
        %v6276 = vadd.f32 %v5543, %v6275
        %6277 = vmatmul.bf16.gmra.mxu0 %v5409
        %v6278 = vpop.f32.mrf.mxu0
        %v6279 = vadd.f32 %v5543, %v6278
        %v6280 = vpop.f32.mrf.mxu0
        %v6281 = vadd.f32 %v5543, %v6280
        %6282 = vmatmul.bf16.gmra.mxu0 %v5411
        %v6283 = vpop.f32.mrf.mxu0
        %v6284 = vadd.f32 %v5543, %v6283
        %v6285 = vpop.f32.mrf.mxu0
        %v6286 = vadd.f32 %v5543, %v6285
        %6287 = vdwg.mxu0
        %6288 = vmatpush.bf16.msra.mxu0 %v6063
        %6289 = vmatpush.bf16.msra.mxu0 %v6055
        %6290 = vmatpush.bf16.msra.mxu0 %v6047
        %6291 = vmatpush.bf16.msra.mxu0 %v6039
        %6292 = vmatpush.bf16.msra.mxu0 %v6031
        %6293 = vmatpush.bf16.msra.mxu0 %v6023
        %6294 = vmatpush.bf16.msra.mxu0 %v6015
        %6295 = vmatpush.bf16.msra.mxu0 %v6007
        %6296 = vmatmul.bf16.gmra.mxu0 %v5382
        %v6297 = vpop.f32.mrf.mxu0
        %v6298 = vadd.f32 %v6209, %v6297
        %v6299 = vpop.f32.mrf.mxu0
        %v6300 = vadd.f32 %v6211, %v6299
        %6301 = vmatmul.bf16.gmra.mxu0 %v5384
        %v6302 = vpop.f32.mrf.mxu0
        %v6303 = vadd.f32 %v6214, %v6302
        %v6304 = vpop.f32.mrf.mxu0
        %v6305 = vadd.f32 %v6216, %v6304
        %6306 = vmatmul.bf16.gmra.mxu0 %v5386
        %v6307 = vpop.f32.mrf.mxu0
        %v6308 = vadd.f32 %v6219, %v6307
        %v6309 = vpop.f32.mrf.mxu0
        %v6310 = vadd.f32 %v6221, %v6309
        %6311 = vmatmul.bf16.gmra.mxu0 %v5388
        %v6312 = vpop.f32.mrf.mxu0
        %v6313 = vadd.f32 %v6224, %v6312
        %v6314 = vpop.f32.mrf.mxu0
        %v6315 = vadd.f32 %v6226, %v6314
        %6316 = vmatmul.bf16.gmra.mxu0 %v5390
        %v6317 = vpop.f32.mrf.mxu0
        %v6318 = vadd.f32 %v6229, %v6317
        %v6319 = vpop.f32.mrf.mxu0
        %v6320 = vadd.f32 %v6231, %v6319
        %6321 = vmatmul.bf16.gmra.mxu0 %v5392
        %v6322 = vpop.f32.mrf.mxu0
        %v6323 = vadd.f32 %v6234, %v6322
        %v6324 = vpop.f32.mrf.mxu0
        %v6325 = vadd.f32 %v6236, %v6324
        %6326 = vmatmul.bf16.gmra.mxu0 %v5394
        %v6327 = vpop.f32.mrf.mxu0
        %v6328 = vadd.f32 %v6239, %v6327
        %v6329 = vpop.f32.mrf.mxu0
        %v6330 = vadd.f32 %v6241, %v6329
        %6331 = vmatmul.bf16.gmra.mxu0 %v5396
        %v6332 = vpop.f32.mrf.mxu0
        %v6333 = vadd.f32 %v6244, %v6332
        %v6334 = vpop.f32.mrf.mxu0
        %v6335 = vadd.f32 %v6246, %v6334
        %6336 = vmatmul.bf16.gmra.mxu0 %v5398
        %v6337 = vpop.f32.mrf.mxu0
        %v6338 = vadd.f32 %v6249, %v6337
        %v6339 = vpop.f32.mrf.mxu0
        %v6340 = vadd.f32 %v6251, %v6339
        %6341 = vmatmul.bf16.gmra.mxu0 %v5400
        %v6342 = vpop.f32.mrf.mxu0
        %v6343 = vadd.f32 %v6254, %v6342
        %v6344 = vpop.f32.mrf.mxu0
        %v6345 = vadd.f32 %v6256, %v6344
        %6346 = vmatmul.bf16.gmra.mxu0 %v5402
        %v6347 = vpop.f32.mrf.mxu0
        %v6348 = vadd.f32 %v6259, %v6347
        %v6349 = vpop.f32.mrf.mxu0
        %v6350 = vadd.f32 %v6261, %v6349
        %6351 = vmatmul.bf16.gmra.mxu0 %v5404
        %v6352 = vpop.f32.mrf.mxu0
        %v6353 = vadd.f32 %v6264, %v6352
        %v6354 = vpop.f32.mrf.mxu0
        %v6355 = vadd.f32 %v6266, %v6354
        %6356 = vmatmul.bf16.gmra.mxu0 %v5406
        %v6357 = vpop.f32.mrf.mxu0
        %v6358 = vadd.f32 %v6269, %v6357
        %v6359 = vpop.f32.mrf.mxu0
        %v6360 = vadd.f32 %v6271, %v6359
        %6361 = vmatmul.bf16.gmra.mxu0 %v5408
        %v6362 = vpop.f32.mrf.mxu0
        %v6363 = vadd.f32 %v6274, %v6362
        %v6364 = vpop.f32.mrf.mxu0
        %v6365 = vadd.f32 %v6276, %v6364
        %6366 = vmatmul.bf16.gmra.mxu0 %v5410
        %v6367 = vpop.f32.mrf.mxu0
        %v6368 = vadd.f32 %v6279, %v6367
        %v6369 = vpop.f32.mrf.mxu0
        %v6370 = vadd.f32 %v6281, %v6369
        %6371 = vmatmul.bf16.gmra.mxu0 %v5412
        %v6372 = vpop.f32.mrf.mxu0
        %v6373 = vadd.f32 %v6284, %v6372
        %v6374 = vpop.f32.mrf.mxu0
        %v6375 = vadd.f32 %v6286, %v6374
        %6376 = vdwg.mxu0
        %6377 = vmatpush.bf16.msra.mxu0 %v6000
        %6378 = vmatpush.bf16.msra.mxu0 %v5992
        %6379 = vmatpush.bf16.msra.mxu0 %v5984
        %6380 = vmatpush.bf16.msra.mxu0 %v5976
        %6381 = vmatpush.bf16.msra.mxu0 %v5968
        %6382 = vmatpush.bf16.msra.mxu0 %v5960
        %6383 = vmatpush.bf16.msra.mxu0 %v5952
        %6384 = vmatpush.bf16.msra.mxu0 %v5944
        %6385 = vmatmul.bf16.gmra.mxu0 %v5381
        %v6386 = vpop.f32.mrf.mxu0
        %v6387 = vadd.f32 %v5544, %v6386
        %v6388 = vpop.f32.mrf.mxu0
        %v6389 = vadd.f32 %v5544, %v6388
        %6390 = vmatmul.bf16.gmra.mxu0 %v5383
        %v6391 = vpop.f32.mrf.mxu0
        %v6392 = vadd.f32 %v5544, %v6391
        %v6393 = vpop.f32.mrf.mxu0
        %v6394 = vadd.f32 %v5544, %v6393
        %6395 = vmatmul.bf16.gmra.mxu0 %v5385
        %v6396 = vpop.f32.mrf.mxu0
        %v6397 = vadd.f32 %v5544, %v6396
        %v6398 = vpop.f32.mrf.mxu0
        %v6399 = vadd.f32 %v5544, %v6398
        %6400 = vmatmul.bf16.gmra.mxu0 %v5387
        %v6401 = vpop.f32.mrf.mxu0
        %v6402 = vadd.f32 %v5544, %v6401
        %v6403 = vpop.f32.mrf.mxu0
        %v6404 = vadd.f32 %v5544, %v6403
        %6405 = vmatmul.bf16.gmra.mxu0 %v5389
        %v6406 = vpop.f32.mrf.mxu0
        %v6407 = vadd.f32 %v5544, %v6406
        %v6408 = vpop.f32.mrf.mxu0
        %v6409 = vadd.f32 %v5544, %v6408
        %6410 = vmatmul.bf16.gmra.mxu0 %v5391
        %v6411 = vpop.f32.mrf.mxu0
        %v6412 = vadd.f32 %v5544, %v6411
        %v6413 = vpop.f32.mrf.mxu0
        %v6414 = vadd.f32 %v5544, %v6413
        %6415 = vmatmul.bf16.gmra.mxu0 %v5393
        %v6416 = vpop.f32.mrf.mxu0
        %v6417 = vadd.f32 %v5544, %v6416
        %v6418 = vpop.f32.mrf.mxu0
        %v6419 = vadd.f32 %v5544, %v6418
        %6420 = vmatmul.bf16.gmra.mxu0 %v5395
        %v6421 = vpop.f32.mrf.mxu0
        %v6422 = vadd.f32 %v5544, %v6421
        %v6423 = vpop.f32.mrf.mxu0
        %v6424 = vadd.f32 %v5544, %v6423
        %6425 = vmatmul.bf16.gmra.mxu0 %v5397
        %v6426 = vpop.f32.mrf.mxu0
        %v6427 = vadd.f32 %v5544, %v6426
        %v6428 = vpop.f32.mrf.mxu0
        %v6429 = vadd.f32 %v5544, %v6428
        %6430 = vmatmul.bf16.gmra.mxu0 %v5399
        %v6431 = vpop.f32.mrf.mxu0
        %v6432 = vadd.f32 %v5544, %v6431
        %v6433 = vpop.f32.mrf.mxu0
        %v6434 = vadd.f32 %v5544, %v6433
        %6435 = vmatmul.bf16.gmra.mxu0 %v5401
        %v6436 = vpop.f32.mrf.mxu0
        %v6437 = vadd.f32 %v5544, %v6436
        %v6438 = vpop.f32.mrf.mxu0
        %v6439 = vadd.f32 %v5544, %v6438
        %6440 = vmatmul.bf16.gmra.mxu0 %v5403
        %v6441 = vpop.f32.mrf.mxu0
        %v6442 = vadd.f32 %v5544, %v6441
        %v6443 = vpop.f32.mrf.mxu0
        %v6444 = vadd.f32 %v5544, %v6443
        %6445 = vmatmul.bf16.gmra.mxu0 %v5405
        %v6446 = vpop.f32.mrf.mxu0
        %v6447 = vadd.f32 %v5544, %v6446
        %v6448 = vpop.f32.mrf.mxu0
        %v6449 = vadd.f32 %v5544, %v6448
        %6450 = vmatmul.bf16.gmra.mxu0 %v5407
        %v6451 = vpop.f32.mrf.mxu0
        %v6452 = vadd.f32 %v5544, %v6451
        %v6453 = vpop.f32.mrf.mxu0
        %v6454 = vadd.f32 %v5544, %v6453
        %6455 = vmatmul.bf16.gmra.mxu0 %v5409
        %v6456 = vpop.f32.mrf.mxu0
        %v6457 = vadd.f32 %v5544, %v6456
        %v6458 = vpop.f32.mrf.mxu0
        %v6459 = vadd.f32 %v5544, %v6458
        %6460 = vmatmul.bf16.gmra.mxu0 %v5411
        %v6461 = vpop.f32.mrf.mxu0
        %v6462 = vadd.f32 %v5544, %v6461
        %v6463 = vpop.f32.mrf.mxu0
        %v6464 = vadd.f32 %v5544, %v6463
        %6465 = vdwg.mxu0
        %6466 = vmatpush.bf16.msra.mxu0 %v6064
        %6467 = vmatpush.bf16.msra.mxu0 %v6056
        %6468 = vmatpush.bf16.msra.mxu0 %v6048
        %6469 = vmatpush.bf16.msra.mxu0 %v6040
        %6470 = vmatpush.bf16.msra.mxu0 %v6032
        %6471 = vmatpush.bf16.msra.mxu0 %v6024
        %6472 = vmatpush.bf16.msra.mxu0 %v6016
        %6473 = vmatpush.bf16.msra.mxu0 %v6008
        %6474 = vmatmul.bf16.gmra.mxu0 %v5382
        %v6475 = vpop.f32.mrf.mxu0
        %v6476 = vadd.f32 %v6387, %v6475
        %v6477 = vpop.f32.mrf.mxu0
        %v6478 = vadd.f32 %v6389, %v6477
        %6479 = vmatmul.bf16.gmra.mxu0 %v5384
        %v6480 = vpop.f32.mrf.mxu0
        %v6481 = vadd.f32 %v6392, %v6480
        %v6482 = vpop.f32.mrf.mxu0
        %v6483 = vadd.f32 %v6394, %v6482
        %6484 = vmatmul.bf16.gmra.mxu0 %v5386
        %v6485 = vpop.f32.mrf.mxu0
        %v6486 = vadd.f32 %v6397, %v6485
        %v6487 = vpop.f32.mrf.mxu0
        %v6488 = vadd.f32 %v6399, %v6487
        %6489 = vmatmul.bf16.gmra.mxu0 %v5388
        %v6490 = vpop.f32.mrf.mxu0
        %v6491 = vadd.f32 %v6402, %v6490
        %v6492 = vpop.f32.mrf.mxu0
        %v6493 = vadd.f32 %v6404, %v6492
        %6494 = vmatmul.bf16.gmra.mxu0 %v5390
        %v6495 = vpop.f32.mrf.mxu0
        %v6496 = vadd.f32 %v6407, %v6495
        %v6497 = vpop.f32.mrf.mxu0
        %v6498 = vadd.f32 %v6409, %v6497
        %6499 = vmatmul.bf16.gmra.mxu0 %v5392
        %v6500 = vpop.f32.mrf.mxu0
        %v6501 = vadd.f32 %v6412, %v6500
        %v6502 = vpop.f32.mrf.mxu0
        %v6503 = vadd.f32 %v6414, %v6502
        %6504 = vmatmul.bf16.gmra.mxu0 %v5394
        %v6505 = vpop.f32.mrf.mxu0
        %v6506 = vadd.f32 %v6417, %v6505
        %v6507 = vpop.f32.mrf.mxu0
        %v6508 = vadd.f32 %v6419, %v6507
        %6509 = vmatmul.bf16.gmra.mxu0 %v5396
        %v6510 = vpop.f32.mrf.mxu0
        %v6511 = vadd.f32 %v6422, %v6510
        %v6512 = vpop.f32.mrf.mxu0
        %v6513 = vadd.f32 %v6424, %v6512
        %6514 = vmatmul.bf16.gmra.mxu0 %v5398
        %v6515 = vpop.f32.mrf.mxu0
        %v6516 = vadd.f32 %v6427, %v6515
        %v6517 = vpop.f32.mrf.mxu0
        %v6518 = vadd.f32 %v6429, %v6517
        %6519 = vmatmul.bf16.gmra.mxu0 %v5400
        %v6520 = vpop.f32.mrf.mxu0
        %v6521 = vadd.f32 %v6432, %v6520
        %v6522 = vpop.f32.mrf.mxu0
        %v6523 = vadd.f32 %v6434, %v6522
        %6524 = vmatmul.bf16.gmra.mxu0 %v5402
        %v6525 = vpop.f32.mrf.mxu0
        %v6526 = vadd.f32 %v6437, %v6525
        %v6527 = vpop.f32.mrf.mxu0
        %v6528 = vadd.f32 %v6439, %v6527
        %6529 = vmatmul.bf16.gmra.mxu0 %v5404
        %v6530 = vpop.f32.mrf.mxu0
        %v6531 = vadd.f32 %v6442, %v6530
        %v6532 = vpop.f32.mrf.mxu0
        %v6533 = vadd.f32 %v6444, %v6532
        %6534 = vmatmul.bf16.gmra.mxu0 %v5406
        %v6535 = vpop.f32.mrf.mxu0
        %v6536 = vadd.f32 %v6447, %v6535
        %v6537 = vpop.f32.mrf.mxu0
        %v6538 = vadd.f32 %v6449, %v6537
        %6539 = vmatmul.bf16.gmra.mxu0 %v5408
        %v6540 = vpop.f32.mrf.mxu0
        %v6541 = vadd.f32 %v6452, %v6540
        %v6542 = vpop.f32.mrf.mxu0
        %v6543 = vadd.f32 %v6454, %v6542
        %6544 = vmatmul.bf16.gmra.mxu0 %v5410
        %v6545 = vpop.f32.mrf.mxu0
        %v6546 = vadd.f32 %v6457, %v6545
        %v6547 = vpop.f32.mrf.mxu0
        %v6548 = vadd.f32 %v6459, %v6547
        %6549 = vmatmul.bf16.gmra.mxu0 %v5412
        %v6550 = vpop.f32.mrf.mxu0
        %v6551 = vadd.f32 %v6462, %v6550
        %v6552 = vpop.f32.mrf.mxu0
        %v6553 = vadd.f32 %v6464, %v6552
        %6554 = vdwg.mxu0
        %6555 = vmatpush.bf16.msra.mxu0 %v6001
        %6556 = vmatpush.bf16.msra.mxu0 %v5993
        %6557 = vmatpush.bf16.msra.mxu0 %v5985
        %6558 = vmatpush.bf16.msra.mxu0 %v5977
        %6559 = vmatpush.bf16.msra.mxu0 %v5969
        %6560 = vmatpush.bf16.msra.mxu0 %v5961
        %6561 = vmatpush.bf16.msra.mxu0 %v5953
        %6562 = vmatpush.bf16.msra.mxu0 %v5945
        %6563 = vmatmul.bf16.gmra.mxu0 %v5381
        %v6564 = vpop.f32.mrf.mxu0
        %v6565 = vadd.f32 %v5545, %v6564
        %v6566 = vpop.f32.mrf.mxu0
        %v6567 = vadd.f32 %v5545, %v6566
        %6568 = vmatmul.bf16.gmra.mxu0 %v5383
        %v6569 = vpop.f32.mrf.mxu0
        %v6570 = vadd.f32 %v5545, %v6569
        %v6571 = vpop.f32.mrf.mxu0
        %v6572 = vadd.f32 %v5545, %v6571
        %6573 = vmatmul.bf16.gmra.mxu0 %v5385
        %v6574 = vpop.f32.mrf.mxu0
        %v6575 = vadd.f32 %v5545, %v6574
        %v6576 = vpop.f32.mrf.mxu0
        %v6577 = vadd.f32 %v5545, %v6576
        %6578 = vmatmul.bf16.gmra.mxu0 %v5387
        %v6579 = vpop.f32.mrf.mxu0
        %v6580 = vadd.f32 %v5545, %v6579
        %v6581 = vpop.f32.mrf.mxu0
        %v6582 = vadd.f32 %v5545, %v6581
        %6583 = vmatmul.bf16.gmra.mxu0 %v5389
        %v6584 = vpop.f32.mrf.mxu0
        %v6585 = vadd.f32 %v5545, %v6584
        %v6586 = vpop.f32.mrf.mxu0
        %v6587 = vadd.f32 %v5545, %v6586
        %6588 = vmatmul.bf16.gmra.mxu0 %v5391
        %v6589 = vpop.f32.mrf.mxu0
        %v6590 = vadd.f32 %v5545, %v6589
        %v6591 = vpop.f32.mrf.mxu0
        %v6592 = vadd.f32 %v5545, %v6591
        %6593 = vmatmul.bf16.gmra.mxu0 %v5393
        %v6594 = vpop.f32.mrf.mxu0
        %v6595 = vadd.f32 %v5545, %v6594
        %v6596 = vpop.f32.mrf.mxu0
        %v6597 = vadd.f32 %v5545, %v6596
        %6598 = vmatmul.bf16.gmra.mxu0 %v5395
        %v6599 = vpop.f32.mrf.mxu0
        %v6600 = vadd.f32 %v5545, %v6599
        %v6601 = vpop.f32.mrf.mxu0
        %v6602 = vadd.f32 %v5545, %v6601
        %6603 = vmatmul.bf16.gmra.mxu0 %v5397
        %v6604 = vpop.f32.mrf.mxu0
        %v6605 = vadd.f32 %v5545, %v6604
        %v6606 = vpop.f32.mrf.mxu0
        %v6607 = vadd.f32 %v5545, %v6606
        %6608 = vmatmul.bf16.gmra.mxu0 %v5399
        %v6609 = vpop.f32.mrf.mxu0
        %v6610 = vadd.f32 %v5545, %v6609
        %v6611 = vpop.f32.mrf.mxu0
        %v6612 = vadd.f32 %v5545, %v6611
        %6613 = vmatmul.bf16.gmra.mxu0 %v5401
        %v6614 = vpop.f32.mrf.mxu0
        %v6615 = vadd.f32 %v5545, %v6614
        %v6616 = vpop.f32.mrf.mxu0
        %v6617 = vadd.f32 %v5545, %v6616
        %6618 = vmatmul.bf16.gmra.mxu0 %v5403
        %v6619 = vpop.f32.mrf.mxu0
        %v6620 = vadd.f32 %v5545, %v6619
        %v6621 = vpop.f32.mrf.mxu0
        %v6622 = vadd.f32 %v5545, %v6621
        %6623 = vmatmul.bf16.gmra.mxu0 %v5405
        %v6624 = vpop.f32.mrf.mxu0
        %v6625 = vadd.f32 %v5545, %v6624
        %v6626 = vpop.f32.mrf.mxu0
        %v6627 = vadd.f32 %v5545, %v6626
        %6628 = vmatmul.bf16.gmra.mxu0 %v5407
        %v6629 = vpop.f32.mrf.mxu0
        %v6630 = vadd.f32 %v5545, %v6629
        %v6631 = vpop.f32.mrf.mxu0
        %v6632 = vadd.f32 %v5545, %v6631
        %6633 = vmatmul.bf16.gmra.mxu0 %v5409
        %v6634 = vpop.f32.mrf.mxu0
        %v6635 = vadd.f32 %v5545, %v6634
        %v6636 = vpop.f32.mrf.mxu0
        %v6637 = vadd.f32 %v5545, %v6636
        %6638 = vmatmul.bf16.gmra.mxu0 %v5411
        %v6639 = vpop.f32.mrf.mxu0
        %v6640 = vadd.f32 %v5545, %v6639
        %v6641 = vpop.f32.mrf.mxu0
        %v6642 = vadd.f32 %v5545, %v6641
        %6643 = vdwg.mxu0
        %6644 = vmatpush.bf16.msra.mxu0 %v6065
        %6645 = vmatpush.bf16.msra.mxu0 %v6057
        %6646 = vmatpush.bf16.msra.mxu0 %v6049
        %6647 = vmatpush.bf16.msra.mxu0 %v6041
        %6648 = vmatpush.bf16.msra.mxu0 %v6033
        %6649 = vmatpush.bf16.msra.mxu0 %v6025
        %6650 = vmatpush.bf16.msra.mxu0 %v6017
        %6651 = vmatpush.bf16.msra.mxu0 %v6009
        %6652 = vmatmul.bf16.gmra.mxu0 %v5382
        %v6653 = vpop.f32.mrf.mxu0
        %v6654 = vadd.f32 %v6565, %v6653
        %v6655 = vpop.f32.mrf.mxu0
        %v6656 = vadd.f32 %v6567, %v6655
        %6657 = vmatmul.bf16.gmra.mxu0 %v5384
        %v6658 = vpop.f32.mrf.mxu0
        %v6659 = vadd.f32 %v6570, %v6658
        %v6660 = vpop.f32.mrf.mxu0
        %v6661 = vadd.f32 %v6572, %v6660
        %6662 = vmatmul.bf16.gmra.mxu0 %v5386
        %v6663 = vpop.f32.mrf.mxu0
        %v6664 = vadd.f32 %v6575, %v6663
        %v6665 = vpop.f32.mrf.mxu0
        %v6666 = vadd.f32 %v6577, %v6665
        %6667 = vmatmul.bf16.gmra.mxu0 %v5388
        %v6668 = vpop.f32.mrf.mxu0
        %v6669 = vadd.f32 %v6580, %v6668
        %v6670 = vpop.f32.mrf.mxu0
        %v6671 = vadd.f32 %v6582, %v6670
        %6672 = vmatmul.bf16.gmra.mxu0 %v5390
        %v6673 = vpop.f32.mrf.mxu0
        %v6674 = vadd.f32 %v6585, %v6673
        %v6675 = vpop.f32.mrf.mxu0
        %v6676 = vadd.f32 %v6587, %v6675
        %6677 = vmatmul.bf16.gmra.mxu0 %v5392
        %v6678 = vpop.f32.mrf.mxu0
        %v6679 = vadd.f32 %v6590, %v6678
        %v6680 = vpop.f32.mrf.mxu0
        %v6681 = vadd.f32 %v6592, %v6680
        %6682 = vmatmul.bf16.gmra.mxu0 %v5394
        %v6683 = vpop.f32.mrf.mxu0
        %v6684 = vadd.f32 %v6595, %v6683
        %v6685 = vpop.f32.mrf.mxu0
        %v6686 = vadd.f32 %v6597, %v6685
        %6687 = vmatmul.bf16.gmra.mxu0 %v5396
        %v6688 = vpop.f32.mrf.mxu0
        %v6689 = vadd.f32 %v6600, %v6688
        %v6690 = vpop.f32.mrf.mxu0
        %v6691 = vadd.f32 %v6602, %v6690
        %6692 = vmatmul.bf16.gmra.mxu0 %v5398
        %v6693 = vpop.f32.mrf.mxu0
        %v6694 = vadd.f32 %v6605, %v6693
        %v6695 = vpop.f32.mrf.mxu0
        %v6696 = vadd.f32 %v6607, %v6695
        %6697 = vmatmul.bf16.gmra.mxu0 %v5400
        %v6698 = vpop.f32.mrf.mxu0
        %v6699 = vadd.f32 %v6610, %v6698
        %v6700 = vpop.f32.mrf.mxu0
        %v6701 = vadd.f32 %v6612, %v6700
        %6702 = vmatmul.bf16.gmra.mxu0 %v5402
        %v6703 = vpop.f32.mrf.mxu0
        %v6704 = vadd.f32 %v6615, %v6703
        %v6705 = vpop.f32.mrf.mxu0
        %v6706 = vadd.f32 %v6617, %v6705
        %6707 = vmatmul.bf16.gmra.mxu0 %v5404
        %v6708 = vpop.f32.mrf.mxu0
        %v6709 = vadd.f32 %v6620, %v6708
        %v6710 = vpop.f32.mrf.mxu0
        %v6711 = vadd.f32 %v6622, %v6710
        %6712 = vmatmul.bf16.gmra.mxu0 %v5406
        %v6713 = vpop.f32.mrf.mxu0
        %v6714 = vadd.f32 %v6625, %v6713
        %v6715 = vpop.f32.mrf.mxu0
        %v6716 = vadd.f32 %v6627, %v6715
        %6717 = vmatmul.bf16.gmra.mxu0 %v5408
        %v6718 = vpop.f32.mrf.mxu0
        %v6719 = vadd.f32 %v6630, %v6718
        %v6720 = vpop.f32.mrf.mxu0
        %v6721 = vadd.f32 %v6632, %v6720
        %6722 = vmatmul.bf16.gmra.mxu0 %v5410
        %v6723 = vpop.f32.mrf.mxu0
        %v6724 = vadd.f32 %v6635, %v6723
        %v6725 = vpop.f32.mrf.mxu0
        %v6726 = vadd.f32 %v6637, %v6725
        %6727 = vmatmul.bf16.gmra.mxu0 %v5412
        %v6728 = vpop.f32.mrf.mxu0
        %v6729 = vadd.f32 %v6640, %v6728
        %v6730 = vpop.f32.mrf.mxu0
        %v6731 = vadd.f32 %v6642, %v6730
        %6732 = vdwg.mxu0
        %6733 = vmatpush.bf16.msra.mxu0 %v6002
        %6734 = vmatpush.bf16.msra.mxu0 %v5994
        %6735 = vmatpush.bf16.msra.mxu0 %v5986
        %6736 = vmatpush.bf16.msra.mxu0 %v5978
        %6737 = vmatpush.bf16.msra.mxu0 %v5970
        %6738 = vmatpush.bf16.msra.mxu0 %v5962
        %6739 = vmatpush.bf16.msra.mxu0 %v5954
        %6740 = vmatpush.bf16.msra.mxu0 %v5946
        %6741 = vmatmul.bf16.gmra.mxu0 %v5381
        %v6742 = vpop.f32.mrf.mxu0
        %v6743 = vadd.f32 %v5546, %v6742
        %v6744 = vpop.f32.mrf.mxu0
        %v6745 = vadd.f32 %v5546, %v6744
        %6746 = vmatmul.bf16.gmra.mxu0 %v5383
        %v6747 = vpop.f32.mrf.mxu0
        %v6748 = vadd.f32 %v5546, %v6747
        %v6749 = vpop.f32.mrf.mxu0
        %v6750 = vadd.f32 %v5546, %v6749
        %6751 = vmatmul.bf16.gmra.mxu0 %v5385
        %v6752 = vpop.f32.mrf.mxu0
        %v6753 = vadd.f32 %v5546, %v6752
        %v6754 = vpop.f32.mrf.mxu0
        %v6755 = vadd.f32 %v5546, %v6754
        %6756 = vmatmul.bf16.gmra.mxu0 %v5387
        %v6757 = vpop.f32.mrf.mxu0
        %v6758 = vadd.f32 %v5546, %v6757
        %v6759 = vpop.f32.mrf.mxu0
        %v6760 = vadd.f32 %v5546, %v6759
        %6761 = vmatmul.bf16.gmra.mxu0 %v5389
        %v6762 = vpop.f32.mrf.mxu0
        %v6763 = vadd.f32 %v5546, %v6762
        %v6764 = vpop.f32.mrf.mxu0
        %v6765 = vadd.f32 %v5546, %v6764
        %6766 = vmatmul.bf16.gmra.mxu0 %v5391
        %v6767 = vpop.f32.mrf.mxu0
        %v6768 = vadd.f32 %v5546, %v6767
        %v6769 = vpop.f32.mrf.mxu0
        %v6770 = vadd.f32 %v5546, %v6769
        %6771 = vmatmul.bf16.gmra.mxu0 %v5393
        %v6772 = vpop.f32.mrf.mxu0
        %v6773 = vadd.f32 %v5546, %v6772
        %v6774 = vpop.f32.mrf.mxu0
        %v6775 = vadd.f32 %v5546, %v6774
        %6776 = vmatmul.bf16.gmra.mxu0 %v5395
        %v6777 = vpop.f32.mrf.mxu0
        %v6778 = vadd.f32 %v5546, %v6777
        %v6779 = vpop.f32.mrf.mxu0
        %v6780 = vadd.f32 %v5546, %v6779
        %6781 = vmatmul.bf16.gmra.mxu0 %v5397
        %v6782 = vpop.f32.mrf.mxu0
        %v6783 = vadd.f32 %v5546, %v6782
        %v6784 = vpop.f32.mrf.mxu0
        %v6785 = vadd.f32 %v5546, %v6784
        %6786 = vmatmul.bf16.gmra.mxu0 %v5399
        %v6787 = vpop.f32.mrf.mxu0
        %v6788 = vadd.f32 %v5546, %v6787
        %v6789 = vpop.f32.mrf.mxu0
        %v6790 = vadd.f32 %v5546, %v6789
        %6791 = vmatmul.bf16.gmra.mxu0 %v5401
        %v6792 = vpop.f32.mrf.mxu0
        %v6793 = vadd.f32 %v5546, %v6792
        %v6794 = vpop.f32.mrf.mxu0
        %v6795 = vadd.f32 %v5546, %v6794
        %6796 = vmatmul.bf16.gmra.mxu0 %v5403
        %v6797 = vpop.f32.mrf.mxu0
        %v6798 = vadd.f32 %v5546, %v6797
        %v6799 = vpop.f32.mrf.mxu0
        %v6800 = vadd.f32 %v5546, %v6799
        %6801 = vmatmul.bf16.gmra.mxu0 %v5405
        %v6802 = vpop.f32.mrf.mxu0
        %v6803 = vadd.f32 %v5546, %v6802
        %v6804 = vpop.f32.mrf.mxu0
        %v6805 = vadd.f32 %v5546, %v6804
        %6806 = vmatmul.bf16.gmra.mxu0 %v5407
        %v6807 = vpop.f32.mrf.mxu0
        %v6808 = vadd.f32 %v5546, %v6807
        %v6809 = vpop.f32.mrf.mxu0
        %v6810 = vadd.f32 %v5546, %v6809
        %6811 = vmatmul.bf16.gmra.mxu0 %v5409
        %v6812 = vpop.f32.mrf.mxu0
        %v6813 = vadd.f32 %v5546, %v6812
        %v6814 = vpop.f32.mrf.mxu0
        %v6815 = vadd.f32 %v5546, %v6814
        %6816 = vmatmul.bf16.gmra.mxu0 %v5411
        %v6817 = vpop.f32.mrf.mxu0
        %v6818 = vadd.f32 %v5546, %v6817
        %v6819 = vpop.f32.mrf.mxu0
        %v6820 = vadd.f32 %v5546, %v6819
        %6821 = vdwg.mxu0
        %6822 = vmatpush.bf16.msra.mxu0 %v6066
        %6823 = vmatpush.bf16.msra.mxu0 %v6058
        %6824 = vmatpush.bf16.msra.mxu0 %v6050
        %6825 = vmatpush.bf16.msra.mxu0 %v6042
        %6826 = vmatpush.bf16.msra.mxu0 %v6034
        %6827 = vmatpush.bf16.msra.mxu0 %v6026
        %6828 = vmatpush.bf16.msra.mxu0 %v6018
        %6829 = vmatpush.bf16.msra.mxu0 %v6010
        %6830 = vmatmul.bf16.gmra.mxu0 %v5382
        %v6831 = vpop.f32.mrf.mxu0
        %v6832 = vadd.f32 %v6743, %v6831
        %v6833 = vpop.f32.mrf.mxu0
        %v6834 = vadd.f32 %v6745, %v6833
        %6835 = vmatmul.bf16.gmra.mxu0 %v5384
        %v6836 = vpop.f32.mrf.mxu0
        %v6837 = vadd.f32 %v6748, %v6836
        %v6838 = vpop.f32.mrf.mxu0
        %v6839 = vadd.f32 %v6750, %v6838
        %6840 = vmatmul.bf16.gmra.mxu0 %v5386
        %v6841 = vpop.f32.mrf.mxu0
        %v6842 = vadd.f32 %v6753, %v6841
        %v6843 = vpop.f32.mrf.mxu0
        %v6844 = vadd.f32 %v6755, %v6843
        %6845 = vmatmul.bf16.gmra.mxu0 %v5388
        %v6846 = vpop.f32.mrf.mxu0
        %v6847 = vadd.f32 %v6758, %v6846
        %v6848 = vpop.f32.mrf.mxu0
        %v6849 = vadd.f32 %v6760, %v6848
        %6850 = vmatmul.bf16.gmra.mxu0 %v5390
        %v6851 = vpop.f32.mrf.mxu0
        %v6852 = vadd.f32 %v6763, %v6851
        %v6853 = vpop.f32.mrf.mxu0
        %v6854 = vadd.f32 %v6765, %v6853
        %6855 = vmatmul.bf16.gmra.mxu0 %v5392
        %v6856 = vpop.f32.mrf.mxu0
        %v6857 = vadd.f32 %v6768, %v6856
        %v6858 = vpop.f32.mrf.mxu0
        %v6859 = vadd.f32 %v6770, %v6858
        %6860 = vmatmul.bf16.gmra.mxu0 %v5394
        %v6861 = vpop.f32.mrf.mxu0
        %v6862 = vadd.f32 %v6773, %v6861
        %v6863 = vpop.f32.mrf.mxu0
        %v6864 = vadd.f32 %v6775, %v6863
        %6865 = vmatmul.bf16.gmra.mxu0 %v5396
        %v6866 = vpop.f32.mrf.mxu0
        %v6867 = vadd.f32 %v6778, %v6866
        %v6868 = vpop.f32.mrf.mxu0
        %v6869 = vadd.f32 %v6780, %v6868
        %6870 = vmatmul.bf16.gmra.mxu0 %v5398
        %v6871 = vpop.f32.mrf.mxu0
        %v6872 = vadd.f32 %v6783, %v6871
        %v6873 = vpop.f32.mrf.mxu0
        %v6874 = vadd.f32 %v6785, %v6873
        %6875 = vmatmul.bf16.gmra.mxu0 %v5400
        %v6876 = vpop.f32.mrf.mxu0
        %v6877 = vadd.f32 %v6788, %v6876
        %v6878 = vpop.f32.mrf.mxu0
        %v6879 = vadd.f32 %v6790, %v6878
        %6880 = vmatmul.bf16.gmra.mxu0 %v5402
        %v6881 = vpop.f32.mrf.mxu0
        %v6882 = vadd.f32 %v6793, %v6881
        %v6883 = vpop.f32.mrf.mxu0
        %v6884 = vadd.f32 %v6795, %v6883
        %6885 = vmatmul.bf16.gmra.mxu0 %v5404
        %v6886 = vpop.f32.mrf.mxu0
        %v6887 = vadd.f32 %v6798, %v6886
        %v6888 = vpop.f32.mrf.mxu0
        %v6889 = vadd.f32 %v6800, %v6888
        %6890 = vmatmul.bf16.gmra.mxu0 %v5406
        %v6891 = vpop.f32.mrf.mxu0
        %v6892 = vadd.f32 %v6803, %v6891
        %v6893 = vpop.f32.mrf.mxu0
        %v6894 = vadd.f32 %v6805, %v6893
        %6895 = vmatmul.bf16.gmra.mxu0 %v5408
        %v6896 = vpop.f32.mrf.mxu0
        %v6897 = vadd.f32 %v6808, %v6896
        %v6898 = vpop.f32.mrf.mxu0
        %v6899 = vadd.f32 %v6810, %v6898
        %6900 = vmatmul.bf16.gmra.mxu0 %v5410
        %v6901 = vpop.f32.mrf.mxu0
        %v6902 = vadd.f32 %v6813, %v6901
        %v6903 = vpop.f32.mrf.mxu0
        %v6904 = vadd.f32 %v6815, %v6903
        %6905 = vmatmul.bf16.gmra.mxu0 %v5412
        %v6906 = vpop.f32.mrf.mxu0
        %v6907 = vadd.f32 %v6818, %v6906
        %v6908 = vpop.f32.mrf.mxu0
        %v6909 = vadd.f32 %v6820, %v6908
        %6910 = vdwg.mxu0
        %6911 = vmatpush.bf16.msra.mxu0 %v6003
        %6912 = vmatpush.bf16.msra.mxu0 %v5995
        %6913 = vmatpush.bf16.msra.mxu0 %v5987
        %6914 = vmatpush.bf16.msra.mxu0 %v5979
        %6915 = vmatpush.bf16.msra.mxu0 %v5971
        %6916 = vmatpush.bf16.msra.mxu0 %v5963
        %6917 = vmatpush.bf16.msra.mxu0 %v5955
        %6918 = vmatpush.bf16.msra.mxu0 %v5947
        %6919 = vmatmul.bf16.gmra.mxu0 %v5381
        %v6920 = vpop.f32.mrf.mxu0
        %v6921 = vadd.f32 %v5547, %v6920
        %v6922 = vpop.f32.mrf.mxu0
        %v6923 = vadd.f32 %v5547, %v6922
        %6924 = vmatmul.bf16.gmra.mxu0 %v5383
        %v6925 = vpop.f32.mrf.mxu0
        %v6926 = vadd.f32 %v5547, %v6925
        %v6927 = vpop.f32.mrf.mxu0
        %v6928 = vadd.f32 %v5547, %v6927
        %6929 = vmatmul.bf16.gmra.mxu0 %v5385
        %v6930 = vpop.f32.mrf.mxu0
        %v6931 = vadd.f32 %v5547, %v6930
        %v6932 = vpop.f32.mrf.mxu0
        %v6933 = vadd.f32 %v5547, %v6932
        %6934 = vmatmul.bf16.gmra.mxu0 %v5387
        %v6935 = vpop.f32.mrf.mxu0
        %v6936 = vadd.f32 %v5547, %v6935
        %v6937 = vpop.f32.mrf.mxu0
        %v6938 = vadd.f32 %v5547, %v6937
        %6939 = vmatmul.bf16.gmra.mxu0 %v5389
        %v6940 = vpop.f32.mrf.mxu0
        %v6941 = vadd.f32 %v5547, %v6940
        %v6942 = vpop.f32.mrf.mxu0
        %v6943 = vadd.f32 %v5547, %v6942
        %6944 = vmatmul.bf16.gmra.mxu0 %v5391
        %v6945 = vpop.f32.mrf.mxu0
        %v6946 = vadd.f32 %v5547, %v6945
        %v6947 = vpop.f32.mrf.mxu0
        %v6948 = vadd.f32 %v5547, %v6947
        %6949 = vmatmul.bf16.gmra.mxu0 %v5393
        %v6950 = vpop.f32.mrf.mxu0
        %v6951 = vadd.f32 %v5547, %v6950
        %v6952 = vpop.f32.mrf.mxu0
        %v6953 = vadd.f32 %v5547, %v6952
        %6954 = vmatmul.bf16.gmra.mxu0 %v5395
        %v6955 = vpop.f32.mrf.mxu0
        %v6956 = vadd.f32 %v5547, %v6955
        %v6957 = vpop.f32.mrf.mxu0
        %v6958 = vadd.f32 %v5547, %v6957
        %6959 = vmatmul.bf16.gmra.mxu0 %v5397
        %v6960 = vpop.f32.mrf.mxu0
        %v6961 = vadd.f32 %v5547, %v6960
        %v6962 = vpop.f32.mrf.mxu0
        %v6963 = vadd.f32 %v5547, %v6962
        %6964 = vmatmul.bf16.gmra.mxu0 %v5399
        %v6965 = vpop.f32.mrf.mxu0
        %v6966 = vadd.f32 %v5547, %v6965
        %v6967 = vpop.f32.mrf.mxu0
        %v6968 = vadd.f32 %v5547, %v6967
        %6969 = vmatmul.bf16.gmra.mxu0 %v5401
        %v6970 = vpop.f32.mrf.mxu0
        %v6971 = vadd.f32 %v5547, %v6970
        %v6972 = vpop.f32.mrf.mxu0
        %v6973 = vadd.f32 %v5547, %v6972
        %6974 = vmatmul.bf16.gmra.mxu0 %v5403
        %v6975 = vpop.f32.mrf.mxu0
        %v6976 = vadd.f32 %v5547, %v6975
        %v6977 = vpop.f32.mrf.mxu0
        %v6978 = vadd.f32 %v5547, %v6977
        %6979 = vmatmul.bf16.gmra.mxu0 %v5405
        %v6980 = vpop.f32.mrf.mxu0
        %v6981 = vadd.f32 %v5547, %v6980
        %v6982 = vpop.f32.mrf.mxu0
        %v6983 = vadd.f32 %v5547, %v6982
        %6984 = vmatmul.bf16.gmra.mxu0 %v5407
        %v6985 = vpop.f32.mrf.mxu0
        %v6986 = vadd.f32 %v5547, %v6985
        %v6987 = vpop.f32.mrf.mxu0
        %v6988 = vadd.f32 %v5547, %v6987
        %6989 = vmatmul.bf16.gmra.mxu0 %v5409
        %v6990 = vpop.f32.mrf.mxu0
        %v6991 = vadd.f32 %v5547, %v6990
        %v6992 = vpop.f32.mrf.mxu0
        %v6993 = vadd.f32 %v5547, %v6992
        %6994 = vmatmul.bf16.gmra.mxu0 %v5411
        %v6995 = vpop.f32.mrf.mxu0
        %v6996 = vadd.f32 %v5547, %v6995
        %v6997 = vpop.f32.mrf.mxu0
        %v6998 = vadd.f32 %v5547, %v6997
        %6999 = vdwg.mxu0
        %7000 = vmatpush.bf16.msra.mxu0 %v6067
        %7001 = vmatpush.bf16.msra.mxu0 %v6059
        %7002 = vmatpush.bf16.msra.mxu0 %v6051
        %7003 = vmatpush.bf16.msra.mxu0 %v6043
        %7004 = vmatpush.bf16.msra.mxu0 %v6035
        %7005 = vmatpush.bf16.msra.mxu0 %v6027
        %7006 = vmatpush.bf16.msra.mxu0 %v6019
        %7007 = vmatpush.bf16.msra.mxu0 %v6011
        %7008 = vmatmul.bf16.gmra.mxu0 %v5382
        %v7009 = vpop.f32.mrf.mxu0
        %v7010 = vadd.f32 %v6921, %v7009
        %v7011 = vpop.f32.mrf.mxu0
        %v7012 = vadd.f32 %v6923, %v7011
        %7013 = vmatmul.bf16.gmra.mxu0 %v5384
        %v7014 = vpop.f32.mrf.mxu0
        %v7015 = vadd.f32 %v6926, %v7014
        %v7016 = vpop.f32.mrf.mxu0
        %v7017 = vadd.f32 %v6928, %v7016
        %7018 = vmatmul.bf16.gmra.mxu0 %v5386
        %v7019 = vpop.f32.mrf.mxu0
        %v7020 = vadd.f32 %v6931, %v7019
        %v7021 = vpop.f32.mrf.mxu0
        %v7022 = vadd.f32 %v6933, %v7021
        %7023 = vmatmul.bf16.gmra.mxu0 %v5388
        %v7024 = vpop.f32.mrf.mxu0
        %v7025 = vadd.f32 %v6936, %v7024
        %v7026 = vpop.f32.mrf.mxu0
        %v7027 = vadd.f32 %v6938, %v7026
        %7028 = vmatmul.bf16.gmra.mxu0 %v5390
        %v7029 = vpop.f32.mrf.mxu0
        %v7030 = vadd.f32 %v6941, %v7029
        %v7031 = vpop.f32.mrf.mxu0
        %v7032 = vadd.f32 %v6943, %v7031
        %7033 = vmatmul.bf16.gmra.mxu0 %v5392
        %v7034 = vpop.f32.mrf.mxu0
        %v7035 = vadd.f32 %v6946, %v7034
        %v7036 = vpop.f32.mrf.mxu0
        %v7037 = vadd.f32 %v6948, %v7036
        %7038 = vmatmul.bf16.gmra.mxu0 %v5394
        %v7039 = vpop.f32.mrf.mxu0
        %v7040 = vadd.f32 %v6951, %v7039
        %v7041 = vpop.f32.mrf.mxu0
        %v7042 = vadd.f32 %v6953, %v7041
        %7043 = vmatmul.bf16.gmra.mxu0 %v5396
        %v7044 = vpop.f32.mrf.mxu0
        %v7045 = vadd.f32 %v6956, %v7044
        %v7046 = vpop.f32.mrf.mxu0
        %v7047 = vadd.f32 %v6958, %v7046
        %7048 = vmatmul.bf16.gmra.mxu0 %v5398
        %v7049 = vpop.f32.mrf.mxu0
        %v7050 = vadd.f32 %v6961, %v7049
        %v7051 = vpop.f32.mrf.mxu0
        %v7052 = vadd.f32 %v6963, %v7051
        %7053 = vmatmul.bf16.gmra.mxu0 %v5400
        %v7054 = vpop.f32.mrf.mxu0
        %v7055 = vadd.f32 %v6966, %v7054
        %v7056 = vpop.f32.mrf.mxu0
        %v7057 = vadd.f32 %v6968, %v7056
        %7058 = vmatmul.bf16.gmra.mxu0 %v5402
        %v7059 = vpop.f32.mrf.mxu0
        %v7060 = vadd.f32 %v6971, %v7059
        %v7061 = vpop.f32.mrf.mxu0
        %v7062 = vadd.f32 %v6973, %v7061
        %7063 = vmatmul.bf16.gmra.mxu0 %v5404
        %v7064 = vpop.f32.mrf.mxu0
        %v7065 = vadd.f32 %v6976, %v7064
        %v7066 = vpop.f32.mrf.mxu0
        %v7067 = vadd.f32 %v6978, %v7066
        %7068 = vmatmul.bf16.gmra.mxu0 %v5406
        %v7069 = vpop.f32.mrf.mxu0
        %v7070 = vadd.f32 %v6981, %v7069
        %v7071 = vpop.f32.mrf.mxu0
        %v7072 = vadd.f32 %v6983, %v7071
        %7073 = vmatmul.bf16.gmra.mxu0 %v5408
        %v7074 = vpop.f32.mrf.mxu0
        %v7075 = vadd.f32 %v6986, %v7074
        %v7076 = vpop.f32.mrf.mxu0
        %v7077 = vadd.f32 %v6988, %v7076
        %7078 = vmatmul.bf16.gmra.mxu0 %v5410
        %v7079 = vpop.f32.mrf.mxu0
        %v7080 = vadd.f32 %v6991, %v7079
        %v7081 = vpop.f32.mrf.mxu0
        %v7082 = vadd.f32 %v6993, %v7081
        %7083 = vmatmul.bf16.gmra.mxu0 %v5412
        %v7084 = vpop.f32.mrf.mxu0
        %v7085 = vadd.f32 %v6996, %v7084
        %v7086 = vpop.f32.mrf.mxu0
        %v7087 = vadd.f32 %v6998, %v7086
        %7088 = vdwg.mxu0
        %7089 = vmatpush.bf16.msra.mxu0 %v6004
        %7090 = vmatpush.bf16.msra.mxu0 %v5996
        %7091 = vmatpush.bf16.msra.mxu0 %v5988
        %7092 = vmatpush.bf16.msra.mxu0 %v5980
        %7093 = vmatpush.bf16.msra.mxu0 %v5972
        %7094 = vmatpush.bf16.msra.mxu0 %v5964
        %7095 = vmatpush.bf16.msra.mxu0 %v5956
        %7096 = vmatpush.bf16.msra.mxu0 %v5948
        %7097 = vmatmul.bf16.gmra.mxu0 %v5381
        %v7098 = vpop.f32.mrf.mxu0
        %v7099 = vadd.f32 %v5548, %v7098
        %v7100 = vpop.f32.mrf.mxu0
        %v7101 = vadd.f32 %v5548, %v7100
        %7102 = vmatmul.bf16.gmra.mxu0 %v5383
        %v7103 = vpop.f32.mrf.mxu0
        %v7104 = vadd.f32 %v5548, %v7103
        %v7105 = vpop.f32.mrf.mxu0
        %v7106 = vadd.f32 %v5548, %v7105
        %7107 = vmatmul.bf16.gmra.mxu0 %v5385
        %v7108 = vpop.f32.mrf.mxu0
        %v7109 = vadd.f32 %v5548, %v7108
        %v7110 = vpop.f32.mrf.mxu0
        %v7111 = vadd.f32 %v5548, %v7110
        %7112 = vmatmul.bf16.gmra.mxu0 %v5387
        %v7113 = vpop.f32.mrf.mxu0
        %v7114 = vadd.f32 %v5548, %v7113
        %v7115 = vpop.f32.mrf.mxu0
        %v7116 = vadd.f32 %v5548, %v7115
        %7117 = vmatmul.bf16.gmra.mxu0 %v5389
        %v7118 = vpop.f32.mrf.mxu0
        %v7119 = vadd.f32 %v5548, %v7118
        %v7120 = vpop.f32.mrf.mxu0
        %v7121 = vadd.f32 %v5548, %v7120
        %7122 = vmatmul.bf16.gmra.mxu0 %v5391
        %v7123 = vpop.f32.mrf.mxu0
        %v7124 = vadd.f32 %v5548, %v7123
        %v7125 = vpop.f32.mrf.mxu0
        %v7126 = vadd.f32 %v5548, %v7125
        %7127 = vmatmul.bf16.gmra.mxu0 %v5393
        %v7128 = vpop.f32.mrf.mxu0
        %v7129 = vadd.f32 %v5548, %v7128
        %v7130 = vpop.f32.mrf.mxu0
        %v7131 = vadd.f32 %v5548, %v7130
        %7132 = vmatmul.bf16.gmra.mxu0 %v5395
        %v7133 = vpop.f32.mrf.mxu0
        %v7134 = vadd.f32 %v5548, %v7133
        %v7135 = vpop.f32.mrf.mxu0
        %v7136 = vadd.f32 %v5548, %v7135
        %7137 = vmatmul.bf16.gmra.mxu0 %v5397
        %v7138 = vpop.f32.mrf.mxu0
        %v7139 = vadd.f32 %v5548, %v7138
        %v7140 = vpop.f32.mrf.mxu0
        %v7141 = vadd.f32 %v5548, %v7140
        %7142 = vmatmul.bf16.gmra.mxu0 %v5399
        %v7143 = vpop.f32.mrf.mxu0
        %v7144 = vadd.f32 %v5548, %v7143
        %v7145 = vpop.f32.mrf.mxu0
        %v7146 = vadd.f32 %v5548, %v7145
        %7147 = vmatmul.bf16.gmra.mxu0 %v5401
        %v7148 = vpop.f32.mrf.mxu0
        %v7149 = vadd.f32 %v5548, %v7148
        %v7150 = vpop.f32.mrf.mxu0
        %v7151 = vadd.f32 %v5548, %v7150
        %7152 = vmatmul.bf16.gmra.mxu0 %v5403
        %v7153 = vpop.f32.mrf.mxu0
        %v7154 = vadd.f32 %v5548, %v7153
        %v7155 = vpop.f32.mrf.mxu0
        %v7156 = vadd.f32 %v5548, %v7155
        %7157 = vmatmul.bf16.gmra.mxu0 %v5405
        %v7158 = vpop.f32.mrf.mxu0
        %v7159 = vadd.f32 %v5548, %v7158
        %v7160 = vpop.f32.mrf.mxu0
        %v7161 = vadd.f32 %v5548, %v7160
        %7162 = vmatmul.bf16.gmra.mxu0 %v5407
        %v7163 = vpop.f32.mrf.mxu0
        %v7164 = vadd.f32 %v5548, %v7163
        %v7165 = vpop.f32.mrf.mxu0
        %v7166 = vadd.f32 %v5548, %v7165
        %7167 = vmatmul.bf16.gmra.mxu0 %v5409
        %v7168 = vpop.f32.mrf.mxu0
        %v7169 = vadd.f32 %v5548, %v7168
        %v7170 = vpop.f32.mrf.mxu0
        %v7171 = vadd.f32 %v5548, %v7170
        %7172 = vmatmul.bf16.gmra.mxu0 %v5411
        %v7173 = vpop.f32.mrf.mxu0
        %v7174 = vadd.f32 %v5548, %v7173
        %v7175 = vpop.f32.mrf.mxu0
        %v7176 = vadd.f32 %v5548, %v7175
        %7177 = vdwg.mxu0
        %7178 = vmatpush.bf16.msra.mxu0 %v6068
        %7179 = vmatpush.bf16.msra.mxu0 %v6060
        %7180 = vmatpush.bf16.msra.mxu0 %v6052
        %7181 = vmatpush.bf16.msra.mxu0 %v6044
        %7182 = vmatpush.bf16.msra.mxu0 %v6036
        %7183 = vmatpush.bf16.msra.mxu0 %v6028
        %7184 = vmatpush.bf16.msra.mxu0 %v6020
        %7185 = vmatpush.bf16.msra.mxu0 %v6012
        %7186 = vmatmul.bf16.gmra.mxu0 %v5382
        %v7187 = vpop.f32.mrf.mxu0
        %v7188 = vadd.f32 %v7099, %v7187
        %v7189 = vpop.f32.mrf.mxu0
        %v7190 = vadd.f32 %v7101, %v7189
        %7191 = vmatmul.bf16.gmra.mxu0 %v5384
        %v7192 = vpop.f32.mrf.mxu0
        %v7193 = vadd.f32 %v7104, %v7192
        %v7194 = vpop.f32.mrf.mxu0
        %v7195 = vadd.f32 %v7106, %v7194
        %7196 = vmatmul.bf16.gmra.mxu0 %v5386
        %v7197 = vpop.f32.mrf.mxu0
        %v7198 = vadd.f32 %v7109, %v7197
        %v7199 = vpop.f32.mrf.mxu0
        %v7200 = vadd.f32 %v7111, %v7199
        %7201 = vmatmul.bf16.gmra.mxu0 %v5388
        %v7202 = vpop.f32.mrf.mxu0
        %v7203 = vadd.f32 %v7114, %v7202
        %v7204 = vpop.f32.mrf.mxu0
        %v7205 = vadd.f32 %v7116, %v7204
        %7206 = vmatmul.bf16.gmra.mxu0 %v5390
        %v7207 = vpop.f32.mrf.mxu0
        %v7208 = vadd.f32 %v7119, %v7207
        %v7209 = vpop.f32.mrf.mxu0
        %v7210 = vadd.f32 %v7121, %v7209
        %7211 = vmatmul.bf16.gmra.mxu0 %v5392
        %v7212 = vpop.f32.mrf.mxu0
        %v7213 = vadd.f32 %v7124, %v7212
        %v7214 = vpop.f32.mrf.mxu0
        %v7215 = vadd.f32 %v7126, %v7214
        %7216 = vmatmul.bf16.gmra.mxu0 %v5394
        %v7217 = vpop.f32.mrf.mxu0
        %v7218 = vadd.f32 %v7129, %v7217
        %v7219 = vpop.f32.mrf.mxu0
        %v7220 = vadd.f32 %v7131, %v7219
        %7221 = vmatmul.bf16.gmra.mxu0 %v5396
        %v7222 = vpop.f32.mrf.mxu0
        %v7223 = vadd.f32 %v7134, %v7222
        %v7224 = vpop.f32.mrf.mxu0
        %v7225 = vadd.f32 %v7136, %v7224
        %7226 = vmatmul.bf16.gmra.mxu0 %v5398
        %v7227 = vpop.f32.mrf.mxu0
        %v7228 = vadd.f32 %v7139, %v7227
        %v7229 = vpop.f32.mrf.mxu0
        %v7230 = vadd.f32 %v7141, %v7229
        %7231 = vmatmul.bf16.gmra.mxu0 %v5400
        %v7232 = vpop.f32.mrf.mxu0
        %v7233 = vadd.f32 %v7144, %v7232
        %v7234 = vpop.f32.mrf.mxu0
        %v7235 = vadd.f32 %v7146, %v7234
        %7236 = vmatmul.bf16.gmra.mxu0 %v5402
        %v7237 = vpop.f32.mrf.mxu0
        %v7238 = vadd.f32 %v7149, %v7237
        %v7239 = vpop.f32.mrf.mxu0
        %v7240 = vadd.f32 %v7151, %v7239
        %7241 = vmatmul.bf16.gmra.mxu0 %v5404
        %v7242 = vpop.f32.mrf.mxu0
        %v7243 = vadd.f32 %v7154, %v7242
        %v7244 = vpop.f32.mrf.mxu0
        %v7245 = vadd.f32 %v7156, %v7244
        %7246 = vmatmul.bf16.gmra.mxu0 %v5406
        %v7247 = vpop.f32.mrf.mxu0
        %v7248 = vadd.f32 %v7159, %v7247
        %v7249 = vpop.f32.mrf.mxu0
        %v7250 = vadd.f32 %v7161, %v7249
        %7251 = vmatmul.bf16.gmra.mxu0 %v5408
        %v7252 = vpop.f32.mrf.mxu0
        %v7253 = vadd.f32 %v7164, %v7252
        %v7254 = vpop.f32.mrf.mxu0
        %v7255 = vadd.f32 %v7166, %v7254
        %7256 = vmatmul.bf16.gmra.mxu0 %v5410
        %v7257 = vpop.f32.mrf.mxu0
        %v7258 = vadd.f32 %v7169, %v7257
        %v7259 = vpop.f32.mrf.mxu0
        %v7260 = vadd.f32 %v7171, %v7259
        %7261 = vmatmul.bf16.gmra.mxu0 %v5412
        %v7262 = vpop.f32.mrf.mxu0
        %v7263 = vadd.f32 %v7174, %v7262
        %v7264 = vpop.f32.mrf.mxu0
        %v7265 = vadd.f32 %v7176, %v7264
        %7266 = vdwg.mxu0
        %7267 = vmatpush.bf16.msra.mxu0 %v6005
        %7268 = vmatpush.bf16.msra.mxu0 %v5997
        %7269 = vmatpush.bf16.msra.mxu0 %v5989
        %7270 = vmatpush.bf16.msra.mxu0 %v5981
        %7271 = vmatpush.bf16.msra.mxu0 %v5973
        %7272 = vmatpush.bf16.msra.mxu0 %v5965
        %7273 = vmatpush.bf16.msra.mxu0 %v5957
        %7274 = vmatpush.bf16.msra.mxu0 %v5949
        %7275 = vmatmul.bf16.gmra.mxu0 %v5381
        %v7276 = vpop.f32.mrf.mxu0
        %v7277 = vadd.f32 %v5549, %v7276
        %v7278 = vpop.f32.mrf.mxu0
        %v7279 = vadd.f32 %v5549, %v7278
        %7280 = vmatmul.bf16.gmra.mxu0 %v5383
        %v7281 = vpop.f32.mrf.mxu0
        %v7282 = vadd.f32 %v5549, %v7281
        %v7283 = vpop.f32.mrf.mxu0
        %v7284 = vadd.f32 %v5549, %v7283
        %7285 = vmatmul.bf16.gmra.mxu0 %v5385
        %v7286 = vpop.f32.mrf.mxu0
        %v7287 = vadd.f32 %v5549, %v7286
        %v7288 = vpop.f32.mrf.mxu0
        %v7289 = vadd.f32 %v5549, %v7288
        %7290 = vmatmul.bf16.gmra.mxu0 %v5387
        %v7291 = vpop.f32.mrf.mxu0
        %v7292 = vadd.f32 %v5549, %v7291
        %v7293 = vpop.f32.mrf.mxu0
        %v7294 = vadd.f32 %v5549, %v7293
        %7295 = vmatmul.bf16.gmra.mxu0 %v5389
        %v7296 = vpop.f32.mrf.mxu0
        %v7297 = vadd.f32 %v5549, %v7296
        %v7298 = vpop.f32.mrf.mxu0
        %v7299 = vadd.f32 %v5549, %v7298
        %7300 = vmatmul.bf16.gmra.mxu0 %v5391
        %v7301 = vpop.f32.mrf.mxu0
        %v7302 = vadd.f32 %v5549, %v7301
        %v7303 = vpop.f32.mrf.mxu0
        %v7304 = vadd.f32 %v5549, %v7303
        %7305 = vmatmul.bf16.gmra.mxu0 %v5393
        %v7306 = vpop.f32.mrf.mxu0
        %v7307 = vadd.f32 %v5549, %v7306
        %v7308 = vpop.f32.mrf.mxu0
        %v7309 = vadd.f32 %v5549, %v7308
        %7310 = vmatmul.bf16.gmra.mxu0 %v5395
        %v7311 = vpop.f32.mrf.mxu0
        %v7312 = vadd.f32 %v5549, %v7311
        %v7313 = vpop.f32.mrf.mxu0
        %v7314 = vadd.f32 %v5549, %v7313
        %7315 = vmatmul.bf16.gmra.mxu0 %v5397
        %v7316 = vpop.f32.mrf.mxu0
        %v7317 = vadd.f32 %v5549, %v7316
        %v7318 = vpop.f32.mrf.mxu0
        %v7319 = vadd.f32 %v5549, %v7318
        %7320 = vmatmul.bf16.gmra.mxu0 %v5399
        %v7321 = vpop.f32.mrf.mxu0
        %v7322 = vadd.f32 %v5549, %v7321
        %v7323 = vpop.f32.mrf.mxu0
        %v7324 = vadd.f32 %v5549, %v7323
        %7325 = vmatmul.bf16.gmra.mxu0 %v5401
        %v7326 = vpop.f32.mrf.mxu0
        %v7327 = vadd.f32 %v5549, %v7326
        %v7328 = vpop.f32.mrf.mxu0
        %v7329 = vadd.f32 %v5549, %v7328
        %7330 = vmatmul.bf16.gmra.mxu0 %v5403
        %v7331 = vpop.f32.mrf.mxu0
        %v7332 = vadd.f32 %v5549, %v7331
        %v7333 = vpop.f32.mrf.mxu0
        %v7334 = vadd.f32 %v5549, %v7333
        %7335 = vmatmul.bf16.gmra.mxu0 %v5405
        %v7336 = vpop.f32.mrf.mxu0
        %v7337 = vadd.f32 %v5549, %v7336
        %v7338 = vpop.f32.mrf.mxu0
        %v7339 = vadd.f32 %v5549, %v7338
        %7340 = vmatmul.bf16.gmra.mxu0 %v5407
        %v7341 = vpop.f32.mrf.mxu0
        %v7342 = vadd.f32 %v5549, %v7341
        %v7343 = vpop.f32.mrf.mxu0
        %v7344 = vadd.f32 %v5549, %v7343
        %7345 = vmatmul.bf16.gmra.mxu0 %v5409
        %v7346 = vpop.f32.mrf.mxu0
        %v7347 = vadd.f32 %v5549, %v7346
        %v7348 = vpop.f32.mrf.mxu0
        %v7349 = vadd.f32 %v5549, %v7348
        %7350 = vmatmul.bf16.gmra.mxu0 %v5411
        %v7351 = vpop.f32.mrf.mxu0
        %v7352 = vadd.f32 %v5549, %v7351
        %v7353 = vpop.f32.mrf.mxu0
        %v7354 = vadd.f32 %v5549, %v7353
        %7355 = vdwg.mxu0
        %7356 = vmatpush.bf16.msra.mxu0 %v6069
        %7357 = vmatpush.bf16.msra.mxu0 %v6061
        %7358 = vmatpush.bf16.msra.mxu0 %v6053
        %7359 = vmatpush.bf16.msra.mxu0 %v6045
        %7360 = vmatpush.bf16.msra.mxu0 %v6037
        %7361 = vmatpush.bf16.msra.mxu0 %v6029
        %7362 = vmatpush.bf16.msra.mxu0 %v6021
        %7363 = vmatpush.bf16.msra.mxu0 %v6013
        %7364 = vmatmul.bf16.gmra.mxu0 %v5382
        %v7365 = vpop.f32.mrf.mxu0
        %v7366 = vadd.f32 %v7277, %v7365
        %v7367 = vpop.f32.mrf.mxu0
        %v7368 = vadd.f32 %v7279, %v7367
        %7369 = vmatmul.bf16.gmra.mxu0 %v5384
        %v7370 = vpop.f32.mrf.mxu0
        %v7371 = vadd.f32 %v7282, %v7370
        %v7372 = vpop.f32.mrf.mxu0
        %v7373 = vadd.f32 %v7284, %v7372
        %7374 = vmatmul.bf16.gmra.mxu0 %v5386
        %v7375 = vpop.f32.mrf.mxu0
        %v7376 = vadd.f32 %v7287, %v7375
        %v7377 = vpop.f32.mrf.mxu0
        %v7378 = vadd.f32 %v7289, %v7377
        %7379 = vmatmul.bf16.gmra.mxu0 %v5388
        %v7380 = vpop.f32.mrf.mxu0
        %v7381 = vadd.f32 %v7292, %v7380
        %v7382 = vpop.f32.mrf.mxu0
        %v7383 = vadd.f32 %v7294, %v7382
        %7384 = vmatmul.bf16.gmra.mxu0 %v5390
        %v7385 = vpop.f32.mrf.mxu0
        %v7386 = vadd.f32 %v7297, %v7385
        %v7387 = vpop.f32.mrf.mxu0
        %v7388 = vadd.f32 %v7299, %v7387
        %7389 = vmatmul.bf16.gmra.mxu0 %v5392
        %v7390 = vpop.f32.mrf.mxu0
        %v7391 = vadd.f32 %v7302, %v7390
        %v7392 = vpop.f32.mrf.mxu0
        %v7393 = vadd.f32 %v7304, %v7392
        %7394 = vmatmul.bf16.gmra.mxu0 %v5394
        %v7395 = vpop.f32.mrf.mxu0
        %v7396 = vadd.f32 %v7307, %v7395
        %v7397 = vpop.f32.mrf.mxu0
        %v7398 = vadd.f32 %v7309, %v7397
        %7399 = vmatmul.bf16.gmra.mxu0 %v5396
        %v7400 = vpop.f32.mrf.mxu0
        %v7401 = vadd.f32 %v7312, %v7400
        %v7402 = vpop.f32.mrf.mxu0
        %v7403 = vadd.f32 %v7314, %v7402
        %7404 = vmatmul.bf16.gmra.mxu0 %v5398
        %v7405 = vpop.f32.mrf.mxu0
        %v7406 = vadd.f32 %v7317, %v7405
        %v7407 = vpop.f32.mrf.mxu0
        %v7408 = vadd.f32 %v7319, %v7407
        %7409 = vmatmul.bf16.gmra.mxu0 %v5400
        %v7410 = vpop.f32.mrf.mxu0
        %v7411 = vadd.f32 %v7322, %v7410
        %v7412 = vpop.f32.mrf.mxu0
        %v7413 = vadd.f32 %v7324, %v7412
        %7414 = vmatmul.bf16.gmra.mxu0 %v5402
        %v7415 = vpop.f32.mrf.mxu0
        %v7416 = vadd.f32 %v7327, %v7415
        %v7417 = vpop.f32.mrf.mxu0
        %v7418 = vadd.f32 %v7329, %v7417
        %7419 = vmatmul.bf16.gmra.mxu0 %v5404
        %v7420 = vpop.f32.mrf.mxu0
        %v7421 = vadd.f32 %v7332, %v7420
        %v7422 = vpop.f32.mrf.mxu0
        %v7423 = vadd.f32 %v7334, %v7422
        %7424 = vmatmul.bf16.gmra.mxu0 %v5406
        %v7425 = vpop.f32.mrf.mxu0
        %v7426 = vadd.f32 %v7337, %v7425
        %v7427 = vpop.f32.mrf.mxu0
        %v7428 = vadd.f32 %v7339, %v7427
        %7429 = vmatmul.bf16.gmra.mxu0 %v5408
        %v7430 = vpop.f32.mrf.mxu0
        %v7431 = vadd.f32 %v7342, %v7430
        %v7432 = vpop.f32.mrf.mxu0
        %v7433 = vadd.f32 %v7344, %v7432
        %7434 = vmatmul.bf16.gmra.mxu0 %v5410
        %v7435 = vpop.f32.mrf.mxu0
        %v7436 = vadd.f32 %v7347, %v7435
        %v7437 = vpop.f32.mrf.mxu0
        %v7438 = vadd.f32 %v7349, %v7437
        %7439 = vmatmul.bf16.gmra.mxu0 %v5412
        %v7440 = vpop.f32.mrf.mxu0
        %v7441 = vadd.f32 %v7352, %v7440
        %v7442 = vpop.f32.mrf.mxu0
        %v7443 = vadd.f32 %v7354, %v7442
        %7444 = vdwg.mxu0
        %7445 = vmatpush.bf16.msra.mxu0 %v6006
        %7446 = vmatpush.bf16.msra.mxu0 %v5998
        %7447 = vmatpush.bf16.msra.mxu0 %v5990
        %7448 = vmatpush.bf16.msra.mxu0 %v5982
        %7449 = vmatpush.bf16.msra.mxu0 %v5974
        %7450 = vmatpush.bf16.msra.mxu0 %v5966
        %7451 = vmatpush.bf16.msra.mxu0 %v5958
        %7452 = vmatpush.bf16.msra.mxu0 %v5950
        %7453 = vmatmul.bf16.gmra.mxu0 %v5381
        %v7454 = vpop.f32.mrf.mxu0
        %v7455 = vadd.f32 %v5550, %v7454
        %v7456 = vpop.f32.mrf.mxu0
        %v7457 = vadd.f32 %v5550, %v7456
        %7458 = vmatmul.bf16.gmra.mxu0 %v5383
        %v7459 = vpop.f32.mrf.mxu0
        %v7460 = vadd.f32 %v5550, %v7459
        %v7461 = vpop.f32.mrf.mxu0
        %v7462 = vadd.f32 %v5550, %v7461
        %7463 = vmatmul.bf16.gmra.mxu0 %v5385
        %v7464 = vpop.f32.mrf.mxu0
        %v7465 = vadd.f32 %v5550, %v7464
        %v7466 = vpop.f32.mrf.mxu0
        %v7467 = vadd.f32 %v5550, %v7466
        %7468 = vmatmul.bf16.gmra.mxu0 %v5387
        %v7469 = vpop.f32.mrf.mxu0
        %v7470 = vadd.f32 %v5550, %v7469
        %v7471 = vpop.f32.mrf.mxu0
        %v7472 = vadd.f32 %v5550, %v7471
        %7473 = vmatmul.bf16.gmra.mxu0 %v5389
        %v7474 = vpop.f32.mrf.mxu0
        %v7475 = vadd.f32 %v5550, %v7474
        %v7476 = vpop.f32.mrf.mxu0
        %v7477 = vadd.f32 %v5550, %v7476
        %7478 = vmatmul.bf16.gmra.mxu0 %v5391
        %v7479 = vpop.f32.mrf.mxu0
        %v7480 = vadd.f32 %v5550, %v7479
        %v7481 = vpop.f32.mrf.mxu0
        %v7482 = vadd.f32 %v5550, %v7481
        %7483 = vmatmul.bf16.gmra.mxu0 %v5393
        %v7484 = vpop.f32.mrf.mxu0
        %v7485 = vadd.f32 %v5550, %v7484
        %v7486 = vpop.f32.mrf.mxu0
        %v7487 = vadd.f32 %v5550, %v7486
        %7488 = vmatmul.bf16.gmra.mxu0 %v5395
        %v7489 = vpop.f32.mrf.mxu0
        %v7490 = vadd.f32 %v5550, %v7489
        %v7491 = vpop.f32.mrf.mxu0
        %v7492 = vadd.f32 %v5550, %v7491
        %7493 = vmatmul.bf16.gmra.mxu0 %v5397
        %v7494 = vpop.f32.mrf.mxu0
        %v7495 = vadd.f32 %v5550, %v7494
        %v7496 = vpop.f32.mrf.mxu0
        %v7497 = vadd.f32 %v5550, %v7496
        %7498 = vmatmul.bf16.gmra.mxu0 %v5399
        %v7499 = vpop.f32.mrf.mxu0
        %v7500 = vadd.f32 %v5550, %v7499
        %v7501 = vpop.f32.mrf.mxu0
        %v7502 = vadd.f32 %v5550, %v7501
        %7503 = vmatmul.bf16.gmra.mxu0 %v5401
        %v7504 = vpop.f32.mrf.mxu0
        %v7505 = vadd.f32 %v5550, %v7504
        %v7506 = vpop.f32.mrf.mxu0
        %v7507 = vadd.f32 %v5550, %v7506
        %7508 = vmatmul.bf16.gmra.mxu0 %v5403
        %v7509 = vpop.f32.mrf.mxu0
        %v7510 = vadd.f32 %v5550, %v7509
        %v7511 = vpop.f32.mrf.mxu0
        %v7512 = vadd.f32 %v5550, %v7511
        %7513 = vmatmul.bf16.gmra.mxu0 %v5405
        %v7514 = vpop.f32.mrf.mxu0
        %v7515 = vadd.f32 %v5550, %v7514
        %v7516 = vpop.f32.mrf.mxu0
        %v7517 = vadd.f32 %v5550, %v7516
        %7518 = vmatmul.bf16.gmra.mxu0 %v5407
        %v7519 = vpop.f32.mrf.mxu0
        %v7520 = vadd.f32 %v5550, %v7519
        %v7521 = vpop.f32.mrf.mxu0
        %v7522 = vadd.f32 %v5550, %v7521
        %7523 = vmatmul.bf16.gmra.mxu0 %v5409
        %v7524 = vpop.f32.mrf.mxu0
        %v7525 = vadd.f32 %v5550, %v7524
        %v7526 = vpop.f32.mrf.mxu0
        %v7527 = vadd.f32 %v5550, %v7526
        %7528 = vmatmul.bf16.gmra.mxu0 %v5411
        %v7529 = vpop.f32.mrf.mxu0
        %v7530 = vadd.f32 %v5550, %v7529
        %v7531 = vpop.f32.mrf.mxu0
        %v7532 = vadd.f32 %v5550, %v7531
        %7533 = vdwg.mxu0
        %7534 = vmatpush.bf16.msra.mxu0 %v6070
        %7535 = vmatpush.bf16.msra.mxu0 %v6062
        %7536 = vmatpush.bf16.msra.mxu0 %v6054
        %7537 = vmatpush.bf16.msra.mxu0 %v6046
        %7538 = vmatpush.bf16.msra.mxu0 %v6038
        %7539 = vmatpush.bf16.msra.mxu0 %v6030
        %7540 = vmatpush.bf16.msra.mxu0 %v6022
        %7541 = vmatpush.bf16.msra.mxu0 %v6014
        %7542 = vmatmul.bf16.gmra.mxu0 %v5382
        %v7543 = vpop.f32.mrf.mxu0
        %v7544 = vadd.f32 %v7455, %v7543
        %v7545 = vpop.f32.mrf.mxu0
        %v7546 = vadd.f32 %v7457, %v7545
        %7547 = vmatmul.bf16.gmra.mxu0 %v5384
        %v7548 = vpop.f32.mrf.mxu0
        %v7549 = vadd.f32 %v7460, %v7548
        %v7550 = vpop.f32.mrf.mxu0
        %v7551 = vadd.f32 %v7462, %v7550
        %7552 = vmatmul.bf16.gmra.mxu0 %v5386
        %v7553 = vpop.f32.mrf.mxu0
        %v7554 = vadd.f32 %v7465, %v7553
        %v7555 = vpop.f32.mrf.mxu0
        %v7556 = vadd.f32 %v7467, %v7555
        %7557 = vmatmul.bf16.gmra.mxu0 %v5388
        %v7558 = vpop.f32.mrf.mxu0
        %v7559 = vadd.f32 %v7470, %v7558
        %v7560 = vpop.f32.mrf.mxu0
        %v7561 = vadd.f32 %v7472, %v7560
        %7562 = vmatmul.bf16.gmra.mxu0 %v5390
        %v7563 = vpop.f32.mrf.mxu0
        %v7564 = vadd.f32 %v7475, %v7563
        %v7565 = vpop.f32.mrf.mxu0
        %v7566 = vadd.f32 %v7477, %v7565
        %7567 = vmatmul.bf16.gmra.mxu0 %v5392
        %v7568 = vpop.f32.mrf.mxu0
        %v7569 = vadd.f32 %v7480, %v7568
        %v7570 = vpop.f32.mrf.mxu0
        %v7571 = vadd.f32 %v7482, %v7570
        %7572 = vmatmul.bf16.gmra.mxu0 %v5394
        %v7573 = vpop.f32.mrf.mxu0
        %v7574 = vadd.f32 %v7485, %v7573
        %v7575 = vpop.f32.mrf.mxu0
        %v7576 = vadd.f32 %v7487, %v7575
        %7577 = vmatmul.bf16.gmra.mxu0 %v5396
        %v7578 = vpop.f32.mrf.mxu0
        %v7579 = vadd.f32 %v7490, %v7578
        %v7580 = vpop.f32.mrf.mxu0
        %v7581 = vadd.f32 %v7492, %v7580
        %7582 = vmatmul.bf16.gmra.mxu0 %v5398
        %v7583 = vpop.f32.mrf.mxu0
        %v7584 = vadd.f32 %v7495, %v7583
        %v7585 = vpop.f32.mrf.mxu0
        %v7586 = vadd.f32 %v7497, %v7585
        %7587 = vmatmul.bf16.gmra.mxu0 %v5400
        %v7588 = vpop.f32.mrf.mxu0
        %v7589 = vadd.f32 %v7500, %v7588
        %v7590 = vpop.f32.mrf.mxu0
        %v7591 = vadd.f32 %v7502, %v7590
        %7592 = vmatmul.bf16.gmra.mxu0 %v5402
        %v7593 = vpop.f32.mrf.mxu0
        %v7594 = vadd.f32 %v7505, %v7593
        %v7595 = vpop.f32.mrf.mxu0
        %v7596 = vadd.f32 %v7507, %v7595
        %7597 = vmatmul.bf16.gmra.mxu0 %v5404
        %v7598 = vpop.f32.mrf.mxu0
        %v7599 = vadd.f32 %v7510, %v7598
        %v7600 = vpop.f32.mrf.mxu0
        %v7601 = vadd.f32 %v7512, %v7600
        %7602 = vmatmul.bf16.gmra.mxu0 %v5406
        %v7603 = vpop.f32.mrf.mxu0
        %v7604 = vadd.f32 %v7515, %v7603
        %v7605 = vpop.f32.mrf.mxu0
        %v7606 = vadd.f32 %v7517, %v7605
        %7607 = vmatmul.bf16.gmra.mxu0 %v5408
        %v7608 = vpop.f32.mrf.mxu0
        %v7609 = vadd.f32 %v7520, %v7608
        %v7610 = vpop.f32.mrf.mxu0
        %v7611 = vadd.f32 %v7522, %v7610
        %7612 = vmatmul.bf16.gmra.mxu0 %v5410
        %v7613 = vpop.f32.mrf.mxu0
        %v7614 = vadd.f32 %v7525, %v7613
        %v7615 = vpop.f32.mrf.mxu0
        %v7616 = vadd.f32 %v7527, %v7615
        %7617 = vmatmul.bf16.gmra.mxu0 %v5412
        %v7618 = vpop.f32.mrf.mxu0
        %v7619 = vadd.f32 %v7530, %v7618
        %v7620 = vpop.f32.mrf.mxu0
        %v7621 = vadd.f32 %v7532, %v7620
        %7622 = vdwg.mxu0
        %v7623 = vmax.f32 %v6298, 0.0
        %v7624 = vmax.f32 %v6476, 0.0
        %v7625 = vmax.f32 %v6654, 0.0
        %v7626 = vmax.f32 %v6832, 0.0
        %v7627 = vmax.f32 %v7010, 0.0
        %v7628 = vmax.f32 %v7188, 0.0
        %v7629 = vmax.f32 %v7366, 0.0
        %v7630 = vmax.f32 %v7544, 0.0
        %v7631 = vmax.f32 %v6300, 0.0
        %v7632 = vmax.f32 %v6478, 0.0
        %v7633 = vmax.f32 %v6656, 0.0
        %v7634 = vmax.f32 %v6834, 0.0
        %v7635 = vmax.f32 %v7012, 0.0
        %v7636 = vmax.f32 %v7190, 0.0
        %v7637 = vmax.f32 %v7368, 0.0
        %v7638 = vmax.f32 %v7546, 0.0
        %v7639 = vmax.f32 %v6303, 0.0
        %v7640 = vmax.f32 %v6481, 0.0
        %v7641 = vmax.f32 %v6659, 0.0
        %v7642 = vmax.f32 %v6837, 0.0
        %v7643 = vmax.f32 %v7015, 0.0
        %v7644 = vmax.f32 %v7193, 0.0
        %v7645 = vmax.f32 %v7371, 0.0
        %v7646 = vmax.f32 %v7549, 0.0
        %v7647 = vmax.f32 %v6305, 0.0
        %v7648 = vmax.f32 %v6483, 0.0
        %v7649 = vmax.f32 %v6661, 0.0
        %v7650 = vmax.f32 %v6839, 0.0
        %v7651 = vmax.f32 %v7017, 0.0
        %v7652 = vmax.f32 %v7195, 0.0
        %v7653 = vmax.f32 %v7373, 0.0
        %v7654 = vmax.f32 %v7551, 0.0
        %v7655 = vmax.f32 %v6308, 0.0
        %v7656 = vmax.f32 %v6486, 0.0
        %v7657 = vmax.f32 %v6664, 0.0
        %v7658 = vmax.f32 %v6842, 0.0
        %v7659 = vmax.f32 %v7020, 0.0
        %v7660 = vmax.f32 %v7198, 0.0
        %v7661 = vmax.f32 %v7376, 0.0
        %v7662 = vmax.f32 %v7554, 0.0
        %v7663 = vmax.f32 %v6310, 0.0
        %v7664 = vmax.f32 %v6488, 0.0
        %v7665 = vmax.f32 %v6666, 0.0
        %v7666 = vmax.f32 %v6844, 0.0
        %v7667 = vmax.f32 %v7022, 0.0
        %v7668 = vmax.f32 %v7200, 0.0
        %v7669 = vmax.f32 %v7378, 0.0
        %v7670 = vmax.f32 %v7556, 0.0
        %v7671 = vmax.f32 %v6313, 0.0
        %v7672 = vmax.f32 %v6491, 0.0
        %v7673 = vmax.f32 %v6669, 0.0
        %v7674 = vmax.f32 %v6847, 0.0
        %v7675 = vmax.f32 %v7025, 0.0
        %v7676 = vmax.f32 %v7203, 0.0
        %v7677 = vmax.f32 %v7381, 0.0
        %v7678 = vmax.f32 %v7559, 0.0
        %v7679 = vmax.f32 %v6315, 0.0
        %v7680 = vmax.f32 %v6493, 0.0
        %v7681 = vmax.f32 %v6671, 0.0
        %v7682 = vmax.f32 %v6849, 0.0
        %v7683 = vmax.f32 %v7027, 0.0
        %v7684 = vmax.f32 %v7205, 0.0
        %v7685 = vmax.f32 %v7383, 0.0
        %v7686 = vmax.f32 %v7561, 0.0
        %v7687 = vmax.f32 %v6318, 0.0
        %v7688 = vmax.f32 %v6496, 0.0
        %v7689 = vmax.f32 %v6674, 0.0
        %v7690 = vmax.f32 %v6852, 0.0
        %v7691 = vmax.f32 %v7030, 0.0
        %v7692 = vmax.f32 %v7208, 0.0
        %v7693 = vmax.f32 %v7386, 0.0
        %v7694 = vmax.f32 %v7564, 0.0
        %v7695 = vmax.f32 %v6320, 0.0
        %v7696 = vmax.f32 %v6498, 0.0
        %v7697 = vmax.f32 %v6676, 0.0
        %v7698 = vmax.f32 %v6854, 0.0
        %v7699 = vmax.f32 %v7032, 0.0
        %v7700 = vmax.f32 %v7210, 0.0
        %v7701 = vmax.f32 %v7388, 0.0
        %v7702 = vmax.f32 %v7566, 0.0
        %v7703 = vmax.f32 %v6323, 0.0
        %v7704 = vmax.f32 %v6501, 0.0
        %v7705 = vmax.f32 %v6679, 0.0
        %v7706 = vmax.f32 %v6857, 0.0
        %v7707 = vmax.f32 %v7035, 0.0
        %v7708 = vmax.f32 %v7213, 0.0
        %v7709 = vmax.f32 %v7391, 0.0
        %v7710 = vmax.f32 %v7569, 0.0
        %v7711 = vmax.f32 %v6325, 0.0
        %v7712 = vmax.f32 %v6503, 0.0
        %v7713 = vmax.f32 %v6681, 0.0
        %v7714 = vmax.f32 %v6859, 0.0
        %v7715 = vmax.f32 %v7037, 0.0
        %v7716 = vmax.f32 %v7215, 0.0
        %v7717 = vmax.f32 %v7393, 0.0
        %v7718 = vmax.f32 %v7571, 0.0
        %v7719 = vmax.f32 %v6328, 0.0
        %v7720 = vmax.f32 %v6506, 0.0
        %v7721 = vmax.f32 %v6684, 0.0
        %v7722 = vmax.f32 %v6862, 0.0
        %v7723 = vmax.f32 %v7040, 0.0
        %v7724 = vmax.f32 %v7218, 0.0
        %v7725 = vmax.f32 %v7396, 0.0
        %v7726 = vmax.f32 %v7574, 0.0
        %v7727 = vmax.f32 %v6330, 0.0
        %v7728 = vmax.f32 %v6508, 0.0
        %v7729 = vmax.f32 %v6686, 0.0
        %v7730 = vmax.f32 %v6864, 0.0
        %v7731 = vmax.f32 %v7042, 0.0
        %v7732 = vmax.f32 %v7220, 0.0
        %v7733 = vmax.f32 %v7398, 0.0
        %v7734 = vmax.f32 %v7576, 0.0
        %v7735 = vmax.f32 %v6333, 0.0
        %v7736 = vmax.f32 %v6511, 0.0
        %v7737 = vmax.f32 %v6689, 0.0
        %v7738 = vmax.f32 %v6867, 0.0
        %v7739 = vmax.f32 %v7045, 0.0
        %v7740 = vmax.f32 %v7223, 0.0
        %v7741 = vmax.f32 %v7401, 0.0
        %v7742 = vmax.f32 %v7579, 0.0
        %v7743 = vmax.f32 %v6335, 0.0
        %v7744 = vmax.f32 %v6513, 0.0
        %v7745 = vmax.f32 %v6691, 0.0
        %v7746 = vmax.f32 %v6869, 0.0
        %v7747 = vmax.f32 %v7047, 0.0
        %v7748 = vmax.f32 %v7225, 0.0
        %v7749 = vmax.f32 %v7403, 0.0
        %v7750 = vmax.f32 %v7581, 0.0
        %v7751 = vmax.f32 %v6338, 0.0
        %v7752 = vmax.f32 %v6516, 0.0
        %v7753 = vmax.f32 %v6694, 0.0
        %v7754 = vmax.f32 %v6872, 0.0
        %v7755 = vmax.f32 %v7050, 0.0
        %v7756 = vmax.f32 %v7228, 0.0
        %v7757 = vmax.f32 %v7406, 0.0
        %v7758 = vmax.f32 %v7584, 0.0
        %v7759 = vmax.f32 %v6340, 0.0
        %v7760 = vmax.f32 %v6518, 0.0
        %v7761 = vmax.f32 %v6696, 0.0
        %v7762 = vmax.f32 %v6874, 0.0
        %v7763 = vmax.f32 %v7052, 0.0
        %v7764 = vmax.f32 %v7230, 0.0
        %v7765 = vmax.f32 %v7408, 0.0
        %v7766 = vmax.f32 %v7586, 0.0
        %v7767 = vmax.f32 %v6343, 0.0
        %v7768 = vmax.f32 %v6521, 0.0
        %v7769 = vmax.f32 %v6699, 0.0
        %v7770 = vmax.f32 %v6877, 0.0
        %v7771 = vmax.f32 %v7055, 0.0
        %v7772 = vmax.f32 %v7233, 0.0
        %v7773 = vmax.f32 %v7411, 0.0
        %v7774 = vmax.f32 %v7589, 0.0
        %v7775 = vmax.f32 %v6345, 0.0
        %v7776 = vmax.f32 %v6523, 0.0
        %v7777 = vmax.f32 %v6701, 0.0
        %v7778 = vmax.f32 %v6879, 0.0
        %v7779 = vmax.f32 %v7057, 0.0
        %v7780 = vmax.f32 %v7235, 0.0
        %v7781 = vmax.f32 %v7413, 0.0
        %v7782 = vmax.f32 %v7591, 0.0
        %v7783 = vmax.f32 %v6348, 0.0
        %v7784 = vmax.f32 %v6526, 0.0
        %v7785 = vmax.f32 %v6704, 0.0
        %v7786 = vmax.f32 %v6882, 0.0
        %v7787 = vmax.f32 %v7060, 0.0
        %v7788 = vmax.f32 %v7238, 0.0
        %v7789 = vmax.f32 %v7416, 0.0
        %v7790 = vmax.f32 %v7594, 0.0
        %v7791 = vmax.f32 %v6350, 0.0
        %v7792 = vmax.f32 %v6528, 0.0
        %v7793 = vmax.f32 %v6706, 0.0
        %v7794 = vmax.f32 %v6884, 0.0
        %v7795 = vmax.f32 %v7062, 0.0
        %v7796 = vmax.f32 %v7240, 0.0
        %v7797 = vmax.f32 %v7418, 0.0
        %v7798 = vmax.f32 %v7596, 0.0
        %v7799 = vmax.f32 %v6353, 0.0
        %v7800 = vmax.f32 %v6531, 0.0
        %v7801 = vmax.f32 %v6709, 0.0
        %v7802 = vmax.f32 %v6887, 0.0
        %v7803 = vmax.f32 %v7065, 0.0
        %v7804 = vmax.f32 %v7243, 0.0
        %v7805 = vmax.f32 %v7421, 0.0
        %v7806 = vmax.f32 %v7599, 0.0
        %v7807 = vmax.f32 %v6355, 0.0
        %v7808 = vmax.f32 %v6533, 0.0
        %v7809 = vmax.f32 %v6711, 0.0
        %v7810 = vmax.f32 %v6889, 0.0
        %v7811 = vmax.f32 %v7067, 0.0
        %v7812 = vmax.f32 %v7245, 0.0
        %v7813 = vmax.f32 %v7423, 0.0
        %v7814 = vmax.f32 %v7601, 0.0
        %v7815 = vmax.f32 %v6358, 0.0
        %v7816 = vmax.f32 %v6536, 0.0
        %v7817 = vmax.f32 %v6714, 0.0
        %v7818 = vmax.f32 %v6892, 0.0
        %v7819 = vmax.f32 %v7070, 0.0
        %v7820 = vmax.f32 %v7248, 0.0
        %v7821 = vmax.f32 %v7426, 0.0
        %v7822 = vmax.f32 %v7604, 0.0
        %v7823 = vmax.f32 %v6360, 0.0
        %v7824 = vmax.f32 %v6538, 0.0
        %v7825 = vmax.f32 %v6716, 0.0
        %v7826 = vmax.f32 %v6894, 0.0
        %v7827 = vmax.f32 %v7072, 0.0
        %v7828 = vmax.f32 %v7250, 0.0
        %v7829 = vmax.f32 %v7428, 0.0
        %v7830 = vmax.f32 %v7606, 0.0
        %v7831 = vmax.f32 %v6363, 0.0
        %v7832 = vmax.f32 %v6541, 0.0
        %v7833 = vmax.f32 %v6719, 0.0
        %v7834 = vmax.f32 %v6897, 0.0
        %v7835 = vmax.f32 %v7075, 0.0
        %v7836 = vmax.f32 %v7253, 0.0
        %v7837 = vmax.f32 %v7431, 0.0
        %v7838 = vmax.f32 %v7609, 0.0
        %v7839 = vmax.f32 %v6365, 0.0
        %v7840 = vmax.f32 %v6543, 0.0
        %v7841 = vmax.f32 %v6721, 0.0
        %v7842 = vmax.f32 %v6899, 0.0
        %v7843 = vmax.f32 %v7077, 0.0
        %v7844 = vmax.f32 %v7255, 0.0
        %v7845 = vmax.f32 %v7433, 0.0
        %v7846 = vmax.f32 %v7611, 0.0
        %v7847 = vmax.f32 %v6368, 0.0
        %v7848 = vmax.f32 %v6546, 0.0
        %v7849 = vmax.f32 %v6724, 0.0
        %v7850 = vmax.f32 %v6902, 0.0
        %v7851 = vmax.f32 %v7080, 0.0
        %v7852 = vmax.f32 %v7258, 0.0
        %v7853 = vmax.f32 %v7436, 0.0
        %v7854 = vmax.f32 %v7614, 0.0
        %v7855 = vmax.f32 %v6370, 0.0
        %v7856 = vmax.f32 %v6548, 0.0
        %v7857 = vmax.f32 %v6726, 0.0
        %v7858 = vmax.f32 %v6904, 0.0
        %v7859 = vmax.f32 %v7082, 0.0
        %v7860 = vmax.f32 %v7260, 0.0
        %v7861 = vmax.f32 %v7438, 0.0
        %v7862 = vmax.f32 %v7616, 0.0
        %v7863 = vmax.f32 %v6373, 0.0
        %v7864 = vmax.f32 %v6551, 0.0
        %v7865 = vmax.f32 %v6729, 0.0
        %v7866 = vmax.f32 %v6907, 0.0
        %v7867 = vmax.f32 %v7085, 0.0
        %v7868 = vmax.f32 %v7263, 0.0
        %v7869 = vmax.f32 %v7441, 0.0
        %v7870 = vmax.f32 %v7619, 0.0
        %v7871 = vmax.f32 %v6375, 0.0
        %v7872 = vmax.f32 %v6553, 0.0
        %v7873 = vmax.f32 %v6731, 0.0
        %v7874 = vmax.f32 %v6909, 0.0
        %v7875 = vmax.f32 %v7087, 0.0
        %v7876 = vmax.f32 %v7265, 0.0
        %v7877 = vmax.f32 %v7443, 0.0
        %v7878 = vmax.f32 %v7621, 0.0
        %v7879 = vpack.c.bf16 %v7631, %v7623
        %v7880 = vpack.c.bf16 %v7632, %v7624
        %v7881 = vpack.c.bf16 %v7633, %v7625
        %v7882 = vpack.c.bf16 %v7634, %v7626
        %v7883 = vpack.c.bf16 %v7635, %v7627
        %v7884 = vpack.c.bf16 %v7636, %v7628
        %v7885 = vpack.c.bf16 %v7637, %v7629
        %v7886 = vpack.c.bf16 %v7638, %v7630
        %v7887 = vpack.c.bf16 %v7647, %v7639
        %v7888 = vpack.c.bf16 %v7648, %v7640
        %v7889 = vpack.c.bf16 %v7649, %v7641
        %v7890 = vpack.c.bf16 %v7650, %v7642
        %v7891 = vpack.c.bf16 %v7651, %v7643
        %v7892 = vpack.c.bf16 %v7652, %v7644
        %v7893 = vpack.c.bf16 %v7653, %v7645
        %v7894 = vpack.c.bf16 %v7654, %v7646
        %v7895 = vpack.c.bf16 %v7663, %v7655
        %v7896 = vpack.c.bf16 %v7664, %v7656
        %v7897 = vpack.c.bf16 %v7665, %v7657
        %v7898 = vpack.c.bf16 %v7666, %v7658
        %v7899 = vpack.c.bf16 %v7667, %v7659
        %v7900 = vpack.c.bf16 %v7668, %v7660
        %v7901 = vpack.c.bf16 %v7669, %v7661
        %v7902 = vpack.c.bf16 %v7670, %v7662
        %v7903 = vpack.c.bf16 %v7679, %v7671
        %v7904 = vpack.c.bf16 %v7680, %v7672
        %v7905 = vpack.c.bf16 %v7681, %v7673
        %v7906 = vpack.c.bf16 %v7682, %v7674
        %v7907 = vpack.c.bf16 %v7683, %v7675
        %v7908 = vpack.c.bf16 %v7684, %v7676
        %v7909 = vpack.c.bf16 %v7685, %v7677
        %v7910 = vpack.c.bf16 %v7686, %v7678
        %v7911 = vpack.c.bf16 %v7695, %v7687
        %v7912 = vpack.c.bf16 %v7696, %v7688
        %v7913 = vpack.c.bf16 %v7697, %v7689
        %v7914 = vpack.c.bf16 %v7698, %v7690
        %v7915 = vpack.c.bf16 %v7699, %v7691
        %v7916 = vpack.c.bf16 %v7700, %v7692
        %v7917 = vpack.c.bf16 %v7701, %v7693
        %v7918 = vpack.c.bf16 %v7702, %v7694
        %v7919 = vpack.c.bf16 %v7711, %v7703
        %v7920 = vpack.c.bf16 %v7712, %v7704
        %v7921 = vpack.c.bf16 %v7713, %v7705
        %v7922 = vpack.c.bf16 %v7714, %v7706
        %v7923 = vpack.c.bf16 %v7715, %v7707
        %v7924 = vpack.c.bf16 %v7716, %v7708
        %v7925 = vpack.c.bf16 %v7717, %v7709
        %v7926 = vpack.c.bf16 %v7718, %v7710
        %v7927 = vpack.c.bf16 %v7727, %v7719
        %v7928 = vpack.c.bf16 %v7728, %v7720
        %v7929 = vpack.c.bf16 %v7729, %v7721
        %v7930 = vpack.c.bf16 %v7730, %v7722
        %v7931 = vpack.c.bf16 %v7731, %v7723
        %v7932 = vpack.c.bf16 %v7732, %v7724
        %v7933 = vpack.c.bf16 %v7733, %v7725
        %v7934 = vpack.c.bf16 %v7734, %v7726
        %v7935 = vpack.c.bf16 %v7743, %v7735
        %v7936 = vpack.c.bf16 %v7744, %v7736
        %v7937 = vpack.c.bf16 %v7745, %v7737
        %v7938 = vpack.c.bf16 %v7746, %v7738
        %v7939 = vpack.c.bf16 %v7747, %v7739
        %v7940 = vpack.c.bf16 %v7748, %v7740
        %v7941 = vpack.c.bf16 %v7749, %v7741
        %v7942 = vpack.c.bf16 %v7750, %v7742
        %v7943 = vpack.c.bf16 %v7759, %v7751
        %v7944 = vpack.c.bf16 %v7760, %v7752
        %v7945 = vpack.c.bf16 %v7761, %v7753
        %v7946 = vpack.c.bf16 %v7762, %v7754
        %v7947 = vpack.c.bf16 %v7763, %v7755
        %v7948 = vpack.c.bf16 %v7764, %v7756
        %v7949 = vpack.c.bf16 %v7765, %v7757
        %v7950 = vpack.c.bf16 %v7766, %v7758
        %v7951 = vpack.c.bf16 %v7775, %v7767
        %v7952 = vpack.c.bf16 %v7776, %v7768
        %v7953 = vpack.c.bf16 %v7777, %v7769
        %v7954 = vpack.c.bf16 %v7778, %v7770
        %v7955 = vpack.c.bf16 %v7779, %v7771
        %v7956 = vpack.c.bf16 %v7780, %v7772
        %v7957 = vpack.c.bf16 %v7781, %v7773
        %v7958 = vpack.c.bf16 %v7782, %v7774
        %v7959 = vpack.c.bf16 %v7791, %v7783
        %v7960 = vpack.c.bf16 %v7792, %v7784
        %v7961 = vpack.c.bf16 %v7793, %v7785
        %v7962 = vpack.c.bf16 %v7794, %v7786
        %v7963 = vpack.c.bf16 %v7795, %v7787
        %v7964 = vpack.c.bf16 %v7796, %v7788
        %v7965 = vpack.c.bf16 %v7797, %v7789
        %v7966 = vpack.c.bf16 %v7798, %v7790
        %v7967 = vpack.c.bf16 %v7807, %v7799
        %v7968 = vpack.c.bf16 %v7808, %v7800
        %v7969 = vpack.c.bf16 %v7809, %v7801
        %v7970 = vpack.c.bf16 %v7810, %v7802
        %v7971 = vpack.c.bf16 %v7811, %v7803
        %v7972 = vpack.c.bf16 %v7812, %v7804
        %v7973 = vpack.c.bf16 %v7813, %v7805
        %v7974 = vpack.c.bf16 %v7814, %v7806
        %v7975 = vpack.c.bf16 %v7823, %v7815
        %v7976 = vpack.c.bf16 %v7824, %v7816
        %v7977 = vpack.c.bf16 %v7825, %v7817
        %v7978 = vpack.c.bf16 %v7826, %v7818
        %v7979 = vpack.c.bf16 %v7827, %v7819
        %v7980 = vpack.c.bf16 %v7828, %v7820
        %v7981 = vpack.c.bf16 %v7829, %v7821
        %v7982 = vpack.c.bf16 %v7830, %v7822
        %v7983 = vpack.c.bf16 %v7839, %v7831
        %v7984 = vpack.c.bf16 %v7840, %v7832
        %v7985 = vpack.c.bf16 %v7841, %v7833
        %v7986 = vpack.c.bf16 %v7842, %v7834
        %v7987 = vpack.c.bf16 %v7843, %v7835
        %v7988 = vpack.c.bf16 %v7844, %v7836
        %v7989 = vpack.c.bf16 %v7845, %v7837
        %v7990 = vpack.c.bf16 %v7846, %v7838
        %v7991 = vpack.c.bf16 %v7855, %v7847
        %v7992 = vpack.c.bf16 %v7856, %v7848
        %v7993 = vpack.c.bf16 %v7857, %v7849
        %v7994 = vpack.c.bf16 %v7858, %v7850
        %v7995 = vpack.c.bf16 %v7859, %v7851
        %v7996 = vpack.c.bf16 %v7860, %v7852
        %v7997 = vpack.c.bf16 %v7861, %v7853
        %v7998 = vpack.c.bf16 %v7862, %v7854
        %v7999 = vpack.c.bf16 %v7871, %v7863
        %v8000 = vpack.c.bf16 %v7872, %v7864
        %v8001 = vpack.c.bf16 %v7873, %v7865
        %v8002 = vpack.c.bf16 %v7874, %v7866
        %v8003 = vpack.c.bf16 %v7875, %v7867
        %v8004 = vpack.c.bf16 %v7876, %v7868
        %v8005 = vpack.c.bf16 %v7877, %v7869
        %v8006 = vpack.c.bf16 %v7878, %v7870
        %v8007 = vld [vmem:[#allocation7] sm:$0xf]
        %v8008 = vld [vmem:[#allocation7 + $0x4] sm:$0xf]
        %v8009 = vld [vmem:[#allocation7 + $0x8] sm:$0xf]
        %v8010 = vld [vmem:[#allocation7 + $0xc] sm:$0xf]
        %v8011 = vld [vmem:[#allocation7 + $0x10] sm:$0xf]
        %v8012 = vld [vmem:[#allocation7 + $0x14] sm:$0xf]
        %v8013 = vld [vmem:[#allocation7 + $0x18] sm:$0xf]
        %v8014 = vld [vmem:[#allocation7 + $0x1c] sm:$0xf]
        %v8015 = vld [vmem:[#allocation7 + $0x20] sm:$0xf]
        %v8016 = vld [vmem:[#allocation7 + $0x24] sm:$0xf]
        %v8017 = vld [vmem:[#allocation7 + $0x28] sm:$0xf]
        %v8018 = vld [vmem:[#allocation7 + $0x2c] sm:$0xf]
        %v8019 = vld [vmem:[#allocation7 + $0x30] sm:$0xf]
        %v8020 = vld [vmem:[#allocation7 + $0x34] sm:$0xf]
        %v8021 = vld [vmem:[#allocation7 + $0x38] sm:$0xf]
        %v8022 = vld [vmem:[#allocation7 + $0x3c] sm:$0xf]
        %v8023 = vld [vmem:[#allocation7 + $0x40] sm:$0xf]
        %v8024 = vld [vmem:[#allocation7 + $0x44] sm:$0xf]
        %v8025 = vld [vmem:[#allocation7 + $0x48] sm:$0xf]
        %v8026 = vld [vmem:[#allocation7 + $0x4c] sm:$0xf]
        %v8027 = vld [vmem:[#allocation7 + $0x50] sm:$0xf]
        %v8028 = vld [vmem:[#allocation7 + $0x54] sm:$0xf]
        %v8029 = vld [vmem:[#allocation7 + $0x58] sm:$0xf]
        %v8030 = vld [vmem:[#allocation7 + $0x5c] sm:$0xf]
        %v8031 = vld [vmem:[#allocation7 + $0x60] sm:$0xf]
        %v8032 = vld [vmem:[#allocation7 + $0x64] sm:$0xf]
        %v8033 = vld [vmem:[#allocation7 + $0x68] sm:$0xf]
        %v8034 = vld [vmem:[#allocation7 + $0x6c] sm:$0xf]
        %v8035 = vld [vmem:[#allocation7 + $0x70] sm:$0xf]
        %v8036 = vld [vmem:[#allocation7 + $0x74] sm:$0xf]
        %v8037 = vld [vmem:[#allocation7 + $0x78] sm:$0xf]
        %v8038 = vld [vmem:[#allocation7 + $0x7c] sm:$0xf]
        %v8039 = vld [vmem:[#allocation7 + $0x80] sm:$0xf]
        %v8040 = vld [vmem:[#allocation7 + $0x84] sm:$0xf]
        %v8041 = vld [vmem:[#allocation7 + $0x88] sm:$0xf]
        %v8042 = vld [vmem:[#allocation7 + $0x8c] sm:$0xf]
        %v8043 = vld [vmem:[#allocation7 + $0x90] sm:$0xf]
        %v8044 = vld [vmem:[#allocation7 + $0x94] sm:$0xf]
        %v8045 = vld [vmem:[#allocation7 + $0x98] sm:$0xf]
        %v8046 = vld [vmem:[#allocation7 + $0x9c] sm:$0xf]
        %v8047 = vld [vmem:[#allocation7 + $0xa0] sm:$0xf]
        %v8048 = vld [vmem:[#allocation7 + $0xa4] sm:$0xf]
        %v8049 = vld [vmem:[#allocation7 + $0xa8] sm:$0xf]
        %v8050 = vld [vmem:[#allocation7 + $0xac] sm:$0xf]
        %v8051 = vld [vmem:[#allocation7 + $0xb0] sm:$0xf]
        %v8052 = vld [vmem:[#allocation7 + $0xb4] sm:$0xf]
        %v8053 = vld [vmem:[#allocation7 + $0xb8] sm:$0xf]
        %v8054 = vld [vmem:[#allocation7 + $0xbc] sm:$0xf]
        %v8055 = vld [vmem:[#allocation7 + $0xc0] sm:$0xf]
        %v8056 = vld [vmem:[#allocation7 + $0xc4] sm:$0xf]
        %v8057 = vld [vmem:[#allocation7 + $0xc8] sm:$0xf]
        %v8058 = vld [vmem:[#allocation7 + $0xcc] sm:$0xf]
        %v8059 = vld [vmem:[#allocation7 + $0xd0] sm:$0xf]
        %v8060 = vld [vmem:[#allocation7 + $0xd4] sm:$0xf]
        %v8061 = vld [vmem:[#allocation7 + $0xd8] sm:$0xf]
        %v8062 = vld [vmem:[#allocation7 + $0xdc] sm:$0xf]
        %v8063 = vld [vmem:[#allocation7 + $0xe0] sm:$0xf]
        %v8064 = vld [vmem:[#allocation7 + $0xe4] sm:$0xf]
        %v8065 = vld [vmem:[#allocation7 + $0xe8] sm:$0xf]
        %v8066 = vld [vmem:[#allocation7 + $0xec] sm:$0xf]
        %v8067 = vld [vmem:[#allocation7 + $0xf0] sm:$0xf]
        %v8068 = vld [vmem:[#allocation7 + $0xf4] sm:$0xf]
        %v8069 = vld [vmem:[#allocation7 + $0xf8] sm:$0xf]
        %v8070 = vld [vmem:[#allocation7 + $0xfc] sm:$0xf]
        %v8071 = vld [vmem:[#allocation7 + $0x100] sm:$0xf]
        %v8072 = vld [vmem:[#allocation7 + $0x104] sm:$0xf]
        %v8073 = vld [vmem:[#allocation7 + $0x108] sm:$0xf]
        %v8074 = vld [vmem:[#allocation7 + $0x10c] sm:$0xf]
        %v8075 = vld [vmem:[#allocation7 + $0x110] sm:$0xf]
        %v8076 = vld [vmem:[#allocation7 + $0x114] sm:$0xf]
        %v8077 = vld [vmem:[#allocation7 + $0x118] sm:$0xf]
        %v8078 = vld [vmem:[#allocation7 + $0x11c] sm:$0xf]
        %v8079 = vld [vmem:[#allocation7 + $0x120] sm:$0xf]
        %v8080 = vld [vmem:[#allocation7 + $0x124] sm:$0xf]
        %v8081 = vld [vmem:[#allocation7 + $0x128] sm:$0xf]
        %v8082 = vld [vmem:[#allocation7 + $0x12c] sm:$0xf]
        %v8083 = vld [vmem:[#allocation7 + $0x130] sm:$0xf]
        %v8084 = vld [vmem:[#allocation7 + $0x134] sm:$0xf]
        %v8085 = vld [vmem:[#allocation7 + $0x138] sm:$0xf]
        %v8086 = vld [vmem:[#allocation7 + $0x13c] sm:$0xf]
        %v8087 = vld [vmem:[#allocation7 + $0x140] sm:$0xf]
        %v8088 = vld [vmem:[#allocation7 + $0x144] sm:$0xf]
        %v8089 = vld [vmem:[#allocation7 + $0x148] sm:$0xf]
        %v8090 = vld [vmem:[#allocation7 + $0x14c] sm:$0xf]
        %v8091 = vld [vmem:[#allocation7 + $0x150] sm:$0xf]
        %v8092 = vld [vmem:[#allocation7 + $0x154] sm:$0xf]
        %v8093 = vld [vmem:[#allocation7 + $0x158] sm:$0xf]
        %v8094 = vld [vmem:[#allocation7 + $0x15c] sm:$0xf]
        %v8095 = vld [vmem:[#allocation7 + $0x160] sm:$0xf]
        %v8096 = vld [vmem:[#allocation7 + $0x164] sm:$0xf]
        %v8097 = vld [vmem:[#allocation7 + $0x168] sm:$0xf]
        %v8098 = vld [vmem:[#allocation7 + $0x16c] sm:$0xf]
        %v8099 = vld [vmem:[#allocation7 + $0x170] sm:$0xf]
        %v8100 = vld [vmem:[#allocation7 + $0x174] sm:$0xf]
        %v8101 = vld [vmem:[#allocation7 + $0x178] sm:$0xf]
        %v8102 = vld [vmem:[#allocation7 + $0x17c] sm:$0xf]
        %v8103 = vld [vmem:[#allocation7 + $0x180] sm:$0xf]
        %v8104 = vld [vmem:[#allocation7 + $0x184] sm:$0xf]
        %v8105 = vld [vmem:[#allocation7 + $0x188] sm:$0xf]
        %v8106 = vld [vmem:[#allocation7 + $0x18c] sm:$0xf]
        %v8107 = vld [vmem:[#allocation7 + $0x190] sm:$0xf]
        %v8108 = vld [vmem:[#allocation7 + $0x194] sm:$0xf]
        %v8109 = vld [vmem:[#allocation7 + $0x198] sm:$0xf]
        %v8110 = vld [vmem:[#allocation7 + $0x19c] sm:$0xf]
        %v8111 = vld [vmem:[#allocation7 + $0x1a0] sm:$0xf]
        %v8112 = vld [vmem:[#allocation7 + $0x1a4] sm:$0xf]
        %v8113 = vld [vmem:[#allocation7 + $0x1a8] sm:$0xf]
        %v8114 = vld [vmem:[#allocation7 + $0x1ac] sm:$0xf]
        %v8115 = vld [vmem:[#allocation7 + $0x1b0] sm:$0xf]
        %v8116 = vld [vmem:[#allocation7 + $0x1b4] sm:$0xf]
        %v8117 = vld [vmem:[#allocation7 + $0x1b8] sm:$0xf]
        %v8118 = vld [vmem:[#allocation7 + $0x1bc] sm:$0xf]
        %v8119 = vld [vmem:[#allocation7 + $0x1c0] sm:$0xf]
        %v8120 = vld [vmem:[#allocation7 + $0x1c4] sm:$0xf]
        %v8121 = vld [vmem:[#allocation7 + $0x1c8] sm:$0xf]
        %v8122 = vld [vmem:[#allocation7 + $0x1cc] sm:$0xf]
        %v8123 = vld [vmem:[#allocation7 + $0x1d0] sm:$0xf]
        %v8124 = vld [vmem:[#allocation7 + $0x1d4] sm:$0xf]
        %v8125 = vld [vmem:[#allocation7 + $0x1d8] sm:$0xf]
        %v8126 = vld [vmem:[#allocation7 + $0x1dc] sm:$0xf]
        %v8127 = vld [vmem:[#allocation7 + $0x1e0] sm:$0xf]
        %v8128 = vld [vmem:[#allocation7 + $0x1e4] sm:$0xf]
        %v8129 = vld [vmem:[#allocation7 + $0x1e8] sm:$0xf]
        %v8130 = vld [vmem:[#allocation7 + $0x1ec] sm:$0xf]
        %v8131 = vld [vmem:[#allocation7 + $0x1f0] sm:$0xf]
        %v8132 = vld [vmem:[#allocation7 + $0x1f4] sm:$0xf]
        %v8133 = vld [vmem:[#allocation7 + $0x1f8] sm:$0xf]
        %v8134 = vld [vmem:[#allocation7 + $0x1fc] sm:$0xf]
        %v8135 = vld [vmem:[%s8] sm:$0x1]
        %v8137 = vperm.slane %v8135, 0
        %v8267 = vunpack.c.l.b16 %v8007
        %v8268 = vunpack.c.l.b16 %v8008
        %v8269 = vunpack.c.l.b16 %v8009
        %v8270 = vunpack.c.l.b16 %v8010
        %v8271 = vunpack.c.l.b16 %v8011
        %v8272 = vunpack.c.l.b16 %v8012
        %v8273 = vunpack.c.l.b16 %v8013
        %v8274 = vunpack.c.l.b16 %v8014
        %v8275 = vunpack.c.l.b16 %v8015
        %v8276 = vunpack.c.l.b16 %v8016
        %v8277 = vunpack.c.l.b16 %v8017
        %v8278 = vunpack.c.l.b16 %v8018
        %v8279 = vunpack.c.l.b16 %v8019
        %v8280 = vunpack.c.l.b16 %v8020
        %v8281 = vunpack.c.l.b16 %v8021
        %v8282 = vunpack.c.l.b16 %v8022
        %v8283 = vunpack.c.l.b16 %v8023
        %v8284 = vunpack.c.l.b16 %v8024
        %v8285 = vunpack.c.l.b16 %v8025
        %v8286 = vunpack.c.l.b16 %v8026
        %v8287 = vunpack.c.l.b16 %v8027
        %v8288 = vunpack.c.l.b16 %v8028
        %v8289 = vunpack.c.l.b16 %v8029
        %v8290 = vunpack.c.l.b16 %v8030
        %v8291 = vunpack.c.l.b16 %v8031
        %v8292 = vunpack.c.l.b16 %v8032
        %v8293 = vunpack.c.l.b16 %v8033
        %v8294 = vunpack.c.l.b16 %v8034
        %v8295 = vunpack.c.l.b16 %v8035
        %v8296 = vunpack.c.l.b16 %v8036
        %v8297 = vunpack.c.l.b16 %v8037
        %v8298 = vunpack.c.l.b16 %v8038
        %v8299 = vunpack.c.l.b16 %v8039
        %v8300 = vunpack.c.l.b16 %v8040
        %v8301 = vunpack.c.l.b16 %v8041
        %v8302 = vunpack.c.l.b16 %v8042
        %v8303 = vunpack.c.l.b16 %v8043
        %v8304 = vunpack.c.l.b16 %v8044
        %v8305 = vunpack.c.l.b16 %v8045
        %v8306 = vunpack.c.l.b16 %v8046
        %v8307 = vunpack.c.l.b16 %v8047
        %v8308 = vunpack.c.l.b16 %v8048
        %v8309 = vunpack.c.l.b16 %v8049
        %v8310 = vunpack.c.l.b16 %v8050
        %v8311 = vunpack.c.l.b16 %v8051
        %v8312 = vunpack.c.l.b16 %v8052
        %v8313 = vunpack.c.l.b16 %v8053
        %v8314 = vunpack.c.l.b16 %v8054
        %v8315 = vunpack.c.l.b16 %v8055
        %v8316 = vunpack.c.l.b16 %v8056
        %v8317 = vunpack.c.l.b16 %v8057
        %v8318 = vunpack.c.l.b16 %v8058
        %v8319 = vunpack.c.l.b16 %v8059
        %v8320 = vunpack.c.l.b16 %v8060
        %v8321 = vunpack.c.l.b16 %v8061
        %v8322 = vunpack.c.l.b16 %v8062
        %v8323 = vunpack.c.l.b16 %v8063
        %v8324 = vunpack.c.l.b16 %v8064
        %v8325 = vunpack.c.l.b16 %v8065
        %v8326 = vunpack.c.l.b16 %v8066
        %v8327 = vunpack.c.l.b16 %v8067
        %v8328 = vunpack.c.l.b16 %v8068
        %v8329 = vunpack.c.l.b16 %v8069
        %v8330 = vunpack.c.l.b16 %v8070
        %v8331 = vunpack.c.l.b16 %v8071
        %v8332 = vunpack.c.l.b16 %v8072
        %v8333 = vunpack.c.l.b16 %v8073
        %v8334 = vunpack.c.l.b16 %v8074
        %v8335 = vunpack.c.l.b16 %v8075
        %v8336 = vunpack.c.l.b16 %v8076
        %v8337 = vunpack.c.l.b16 %v8077
        %v8338 = vunpack.c.l.b16 %v8078
        %v8339 = vunpack.c.l.b16 %v8079
        %v8340 = vunpack.c.l.b16 %v8080
        %v8341 = vunpack.c.l.b16 %v8081
        %v8342 = vunpack.c.l.b16 %v8082
        %v8343 = vunpack.c.l.b16 %v8083
        %v8344 = vunpack.c.l.b16 %v8084
        %v8345 = vunpack.c.l.b16 %v8085
        %v8346 = vunpack.c.l.b16 %v8086
        %v8347 = vunpack.c.l.b16 %v8087
        %v8348 = vunpack.c.l.b16 %v8088
        %v8349 = vunpack.c.l.b16 %v8089
        %v8350 = vunpack.c.l.b16 %v8090
        %v8351 = vunpack.c.l.b16 %v8091
        %v8352 = vunpack.c.l.b16 %v8092
        %v8353 = vunpack.c.l.b16 %v8093
        %v8354 = vunpack.c.l.b16 %v8094
        %v8355 = vunpack.c.l.b16 %v8095
        %v8356 = vunpack.c.l.b16 %v8096
        %v8357 = vunpack.c.l.b16 %v8097
        %v8358 = vunpack.c.l.b16 %v8098
        %v8359 = vunpack.c.l.b16 %v8099
        %v8360 = vunpack.c.l.b16 %v8100
        %v8361 = vunpack.c.l.b16 %v8101
        %v8362 = vunpack.c.l.b16 %v8102
        %v8363 = vunpack.c.l.b16 %v8103
        %v8364 = vunpack.c.l.b16 %v8104
        %v8365 = vunpack.c.l.b16 %v8105
        %v8366 = vunpack.c.l.b16 %v8106
        %v8367 = vunpack.c.l.b16 %v8107
        %v8368 = vunpack.c.l.b16 %v8108
        %v8369 = vunpack.c.l.b16 %v8109
        %v8370 = vunpack.c.l.b16 %v8110
        %v8371 = vunpack.c.l.b16 %v8111
        %v8372 = vunpack.c.l.b16 %v8112
        %v8373 = vunpack.c.l.b16 %v8113
        %v8374 = vunpack.c.l.b16 %v8114
        %v8375 = vunpack.c.l.b16 %v8115
        %v8376 = vunpack.c.l.b16 %v8116
        %v8377 = vunpack.c.l.b16 %v8117
        %v8378 = vunpack.c.l.b16 %v8118
        %v8379 = vunpack.c.l.b16 %v8119
        %v8380 = vunpack.c.l.b16 %v8120
        %v8381 = vunpack.c.l.b16 %v8121
        %v8382 = vunpack.c.l.b16 %v8122
        %v8383 = vunpack.c.l.b16 %v8123
        %v8384 = vunpack.c.l.b16 %v8124
        %v8385 = vunpack.c.l.b16 %v8125
        %v8386 = vunpack.c.l.b16 %v8126
        %v8387 = vunpack.c.l.b16 %v8127
        %v8388 = vunpack.c.l.b16 %v8128
        %v8389 = vunpack.c.l.b16 %v8129
        %v8390 = vunpack.c.l.b16 %v8130
        %v8391 = vunpack.c.l.b16 %v8131
        %v8392 = vunpack.c.l.b16 %v8132
        %v8393 = vunpack.c.l.b16 %v8133
        %v8394 = vunpack.c.l.b16 %v8134
        %v8395 = vpack.c.b16 %v8268, %v8267
        %v8396 = vpack.c.b16 %v8270, %v8269
        %v8397 = vpack.c.b16 %v8272, %v8271
        %v8398 = vpack.c.b16 %v8274, %v8273
        %v8399 = vpack.c.b16 %v8276, %v8275
        %v8400 = vpack.c.b16 %v8278, %v8277
        %v8401 = vpack.c.b16 %v8280, %v8279
        %v8402 = vpack.c.b16 %v8282, %v8281
        %v8403 = vpack.c.b16 %v8284, %v8283
        %v8404 = vpack.c.b16 %v8286, %v8285
        %v8405 = vpack.c.b16 %v8288, %v8287
        %v8406 = vpack.c.b16 %v8290, %v8289
        %v8407 = vpack.c.b16 %v8292, %v8291
        %v8408 = vpack.c.b16 %v8294, %v8293
        %v8409 = vpack.c.b16 %v8296, %v8295
        %v8410 = vpack.c.b16 %v8298, %v8297
        %v8411 = vpack.c.b16 %v8300, %v8299
        %v8412 = vpack.c.b16 %v8302, %v8301
        %v8413 = vpack.c.b16 %v8304, %v8303
        %v8414 = vpack.c.b16 %v8306, %v8305
        %v8415 = vpack.c.b16 %v8308, %v8307
        %v8416 = vpack.c.b16 %v8310, %v8309
        %v8417 = vpack.c.b16 %v8312, %v8311
        %v8418 = vpack.c.b16 %v8314, %v8313
        %v8419 = vpack.c.b16 %v8316, %v8315
        %v8420 = vpack.c.b16 %v8318, %v8317
        %v8421 = vpack.c.b16 %v8320, %v8319
        %v8422 = vpack.c.b16 %v8322, %v8321
        %v8423 = vpack.c.b16 %v8324, %v8323
        %v8424 = vpack.c.b16 %v8326, %v8325
        %v8425 = vpack.c.b16 %v8328, %v8327
        %v8426 = vpack.c.b16 %v8330, %v8329
        %v8427 = vpack.c.b16 %v8332, %v8331
        %v8428 = vpack.c.b16 %v8334, %v8333
        %v8429 = vpack.c.b16 %v8336, %v8335
        %v8430 = vpack.c.b16 %v8338, %v8337
        %v8431 = vpack.c.b16 %v8340, %v8339
        %v8432 = vpack.c.b16 %v8342, %v8341
        %v8433 = vpack.c.b16 %v8344, %v8343
        %v8434 = vpack.c.b16 %v8346, %v8345
        %v8435 = vpack.c.b16 %v8348, %v8347
        %v8436 = vpack.c.b16 %v8350, %v8349
        %v8437 = vpack.c.b16 %v8352, %v8351
        %v8438 = vpack.c.b16 %v8354, %v8353
        %v8439 = vpack.c.b16 %v8356, %v8355
        %v8440 = vpack.c.b16 %v8358, %v8357
        %v8441 = vpack.c.b16 %v8360, %v8359
        %v8442 = vpack.c.b16 %v8362, %v8361
        %v8443 = vpack.c.b16 %v8364, %v8363
        %v8444 = vpack.c.b16 %v8366, %v8365
        %v8445 = vpack.c.b16 %v8368, %v8367
        %v8446 = vpack.c.b16 %v8370, %v8369
        %v8447 = vpack.c.b16 %v8372, %v8371
        %v8448 = vpack.c.b16 %v8374, %v8373
        %v8449 = vpack.c.b16 %v8376, %v8375
        %v8450 = vpack.c.b16 %v8378, %v8377
        %v8451 = vpack.c.b16 %v8380, %v8379
        %v8452 = vpack.c.b16 %v8382, %v8381
        %v8453 = vpack.c.b16 %v8384, %v8383
        %v8454 = vpack.c.b16 %v8386, %v8385
        %v8455 = vpack.c.b16 %v8388, %v8387
        %v8456 = vpack.c.b16 %v8390, %v8389
        %v8457 = vpack.c.b16 %v8392, %v8391
        %v8458 = vpack.c.b16 %v8394, %v8393
        %8523 = vmatpush.bf16.msra.mxu0 %v8402
        %8524 = vmatpush.bf16.msra.mxu0 %v8401
        %8525 = vmatpush.bf16.msra.mxu0 %v8400
        %8526 = vmatpush.bf16.msra.mxu0 %v8399
        %8527 = vmatpush.bf16.msra.mxu0 %v8398
        %8528 = vmatpush.bf16.msra.mxu0 %v8397
        %8529 = vmatpush.bf16.msra.mxu0 %v8396
        %8530 = vmatpush.bf16.msra.mxu0 %v8395
        %8531 = vmatmul.bf16.gmra.mxu0 %v7879
        %v8532 = vpop.f32.mrf.mxu0
        %v8533 = vadd.f32 %v8137, %v8532
        %v8534 = vpop.f32.mrf.mxu0
        %v8535 = vadd.f32 %v8137, %v8534
        %8536 = vmatmul.bf16.gmra.mxu0 %v7887
        %v8537 = vpop.f32.mrf.mxu0
        %v8538 = vadd.f32 %v8137, %v8537
        %v8539 = vpop.f32.mrf.mxu0
        %v8540 = vadd.f32 %v8137, %v8539
        %8541 = vmatmul.bf16.gmra.mxu0 %v7895
        %v8542 = vpop.f32.mrf.mxu0
        %v8543 = vadd.f32 %v8137, %v8542
        %v8544 = vpop.f32.mrf.mxu0
        %v8545 = vadd.f32 %v8137, %v8544
        %8546 = vmatmul.bf16.gmra.mxu0 %v7903
        %v8547 = vpop.f32.mrf.mxu0
        %v8548 = vadd.f32 %v8137, %v8547
        %v8549 = vpop.f32.mrf.mxu0
        %v8550 = vadd.f32 %v8137, %v8549
        %8551 = vmatmul.bf16.gmra.mxu0 %v7911
        %v8552 = vpop.f32.mrf.mxu0
        %v8553 = vadd.f32 %v8137, %v8552
        %v8554 = vpop.f32.mrf.mxu0
        %v8555 = vadd.f32 %v8137, %v8554
        %8556 = vmatmul.bf16.gmra.mxu0 %v7919
        %v8557 = vpop.f32.mrf.mxu0
        %v8558 = vadd.f32 %v8137, %v8557
        %v8559 = vpop.f32.mrf.mxu0
        %v8560 = vadd.f32 %v8137, %v8559
        %8561 = vmatmul.bf16.gmra.mxu0 %v7927
        %v8562 = vpop.f32.mrf.mxu0
        %v8563 = vadd.f32 %v8137, %v8562
        %v8564 = vpop.f32.mrf.mxu0
        %v8565 = vadd.f32 %v8137, %v8564
        %8566 = vmatmul.bf16.gmra.mxu0 %v7935
        %v8567 = vpop.f32.mrf.mxu0
        %v8568 = vadd.f32 %v8137, %v8567
        %v8569 = vpop.f32.mrf.mxu0
        %v8570 = vadd.f32 %v8137, %v8569
        %8571 = vmatmul.bf16.gmra.mxu0 %v7943
        %v8572 = vpop.f32.mrf.mxu0
        %v8573 = vadd.f32 %v8137, %v8572
        %v8574 = vpop.f32.mrf.mxu0
        %v8575 = vadd.f32 %v8137, %v8574
        %8576 = vmatmul.bf16.gmra.mxu0 %v7951
        %v8577 = vpop.f32.mrf.mxu0
        %v8578 = vadd.f32 %v8137, %v8577
        %v8579 = vpop.f32.mrf.mxu0
        %v8580 = vadd.f32 %v8137, %v8579
        %8581 = vmatmul.bf16.gmra.mxu0 %v7959
        %v8582 = vpop.f32.mrf.mxu0
        %v8583 = vadd.f32 %v8137, %v8582
        %v8584 = vpop.f32.mrf.mxu0
        %v8585 = vadd.f32 %v8137, %v8584
        %8586 = vmatmul.bf16.gmra.mxu0 %v7967
        %v8587 = vpop.f32.mrf.mxu0
        %v8588 = vadd.f32 %v8137, %v8587
        %v8589 = vpop.f32.mrf.mxu0
        %v8590 = vadd.f32 %v8137, %v8589
        %8591 = vmatmul.bf16.gmra.mxu0 %v7975
        %v8592 = vpop.f32.mrf.mxu0
        %v8593 = vadd.f32 %v8137, %v8592
        %v8594 = vpop.f32.mrf.mxu0
        %v8595 = vadd.f32 %v8137, %v8594
        %8596 = vmatmul.bf16.gmra.mxu0 %v7983
        %v8597 = vpop.f32.mrf.mxu0
        %v8598 = vadd.f32 %v8137, %v8597
        %v8599 = vpop.f32.mrf.mxu0
        %v8600 = vadd.f32 %v8137, %v8599
        %8601 = vmatmul.bf16.gmra.mxu0 %v7991
        %v8602 = vpop.f32.mrf.mxu0
        %v8603 = vadd.f32 %v8137, %v8602
        %v8604 = vpop.f32.mrf.mxu0
        %v8605 = vadd.f32 %v8137, %v8604
        %8606 = vmatmul.bf16.gmra.mxu0 %v7999
        %v8607 = vpop.f32.mrf.mxu0
        %v8608 = vadd.f32 %v8137, %v8607
        %v8609 = vpop.f32.mrf.mxu0
        %v8610 = vadd.f32 %v8137, %v8609
        %8611 = vdwg.mxu0
        %8612 = vmatpush.bf16.msra.mxu0 %v8410
        %8613 = vmatpush.bf16.msra.mxu0 %v8409
        %8614 = vmatpush.bf16.msra.mxu0 %v8408
        %8615 = vmatpush.bf16.msra.mxu0 %v8407
        %8616 = vmatpush.bf16.msra.mxu0 %v8406
        %8617 = vmatpush.bf16.msra.mxu0 %v8405
        %8618 = vmatpush.bf16.msra.mxu0 %v8404
        %8619 = vmatpush.bf16.msra.mxu0 %v8403
        %8620 = vmatmul.bf16.gmra.mxu0 %v7880
        %v8621 = vpop.f32.mrf.mxu0
        %v8622 = vadd.f32 %v8533, %v8621
        %v8623 = vpop.f32.mrf.mxu0
        %v8624 = vadd.f32 %v8535, %v8623
        %8625 = vmatmul.bf16.gmra.mxu0 %v7888
        %v8626 = vpop.f32.mrf.mxu0
        %v8627 = vadd.f32 %v8538, %v8626
        %v8628 = vpop.f32.mrf.mxu0
        %v8629 = vadd.f32 %v8540, %v8628
        %8630 = vmatmul.bf16.gmra.mxu0 %v7896
        %v8631 = vpop.f32.mrf.mxu0
        %v8632 = vadd.f32 %v8543, %v8631
        %v8633 = vpop.f32.mrf.mxu0
        %v8634 = vadd.f32 %v8545, %v8633
        %8635 = vmatmul.bf16.gmra.mxu0 %v7904
        %v8636 = vpop.f32.mrf.mxu0
        %v8637 = vadd.f32 %v8548, %v8636
        %v8638 = vpop.f32.mrf.mxu0
        %v8639 = vadd.f32 %v8550, %v8638
        %8640 = vmatmul.bf16.gmra.mxu0 %v7912
        %v8641 = vpop.f32.mrf.mxu0
        %v8642 = vadd.f32 %v8553, %v8641
        %v8643 = vpop.f32.mrf.mxu0
        %v8644 = vadd.f32 %v8555, %v8643
        %8645 = vmatmul.bf16.gmra.mxu0 %v7920
        %v8646 = vpop.f32.mrf.mxu0
        %v8647 = vadd.f32 %v8558, %v8646
        %v8648 = vpop.f32.mrf.mxu0
        %v8649 = vadd.f32 %v8560, %v8648
        %8650 = vmatmul.bf16.gmra.mxu0 %v7928
        %v8651 = vpop.f32.mrf.mxu0
        %v8652 = vadd.f32 %v8563, %v8651
        %v8653 = vpop.f32.mrf.mxu0
        %v8654 = vadd.f32 %v8565, %v8653
        %8655 = vmatmul.bf16.gmra.mxu0 %v7936
        %v8656 = vpop.f32.mrf.mxu0
        %v8657 = vadd.f32 %v8568, %v8656
        %v8658 = vpop.f32.mrf.mxu0
        %v8659 = vadd.f32 %v8570, %v8658
        %8660 = vmatmul.bf16.gmra.mxu0 %v7944
        %v8661 = vpop.f32.mrf.mxu0
        %v8662 = vadd.f32 %v8573, %v8661
        %v8663 = vpop.f32.mrf.mxu0
        %v8664 = vadd.f32 %v8575, %v8663
        %8665 = vmatmul.bf16.gmra.mxu0 %v7952
        %v8666 = vpop.f32.mrf.mxu0
        %v8667 = vadd.f32 %v8578, %v8666
        %v8668 = vpop.f32.mrf.mxu0
        %v8669 = vadd.f32 %v8580, %v8668
        %8670 = vmatmul.bf16.gmra.mxu0 %v7960
        %v8671 = vpop.f32.mrf.mxu0
        %v8672 = vadd.f32 %v8583, %v8671
        %v8673 = vpop.f32.mrf.mxu0
        %v8674 = vadd.f32 %v8585, %v8673
        %8675 = vmatmul.bf16.gmra.mxu0 %v7968
        %v8676 = vpop.f32.mrf.mxu0
        %v8677 = vadd.f32 %v8588, %v8676
        %v8678 = vpop.f32.mrf.mxu0
        %v8679 = vadd.f32 %v8590, %v8678
        %8680 = vmatmul.bf16.gmra.mxu0 %v7976
        %v8681 = vpop.f32.mrf.mxu0
        %v8682 = vadd.f32 %v8593, %v8681
        %v8683 = vpop.f32.mrf.mxu0
        %v8684 = vadd.f32 %v8595, %v8683
        %8685 = vmatmul.bf16.gmra.mxu0 %v7984
        %v8686 = vpop.f32.mrf.mxu0
        %v8687 = vadd.f32 %v8598, %v8686
        %v8688 = vpop.f32.mrf.mxu0
        %v8689 = vadd.f32 %v8600, %v8688
        %8690 = vmatmul.bf16.gmra.mxu0 %v7992
        %v8691 = vpop.f32.mrf.mxu0
        %v8692 = vadd.f32 %v8603, %v8691
        %v8693 = vpop.f32.mrf.mxu0
        %v8694 = vadd.f32 %v8605, %v8693
        %8695 = vmatmul.bf16.gmra.mxu0 %v8000
        %v8696 = vpop.f32.mrf.mxu0
        %v8697 = vadd.f32 %v8608, %v8696
        %v8698 = vpop.f32.mrf.mxu0
        %v8699 = vadd.f32 %v8610, %v8698
        %8700 = vdwg.mxu0
        %8701 = vmatpush.bf16.msra.mxu0 %v8418
        %8702 = vmatpush.bf16.msra.mxu0 %v8417
        %8703 = vmatpush.bf16.msra.mxu0 %v8416
        %8704 = vmatpush.bf16.msra.mxu0 %v8415
        %8705 = vmatpush.bf16.msra.mxu0 %v8414
        %8706 = vmatpush.bf16.msra.mxu0 %v8413
        %8707 = vmatpush.bf16.msra.mxu0 %v8412
        %8708 = vmatpush.bf16.msra.mxu0 %v8411
        %8709 = vmatmul.bf16.gmra.mxu0 %v7881
        %v8710 = vpop.f32.mrf.mxu0
        %v8711 = vadd.f32 %v8622, %v8710
        %v8712 = vpop.f32.mrf.mxu0
        %v8713 = vadd.f32 %v8624, %v8712
        %8714 = vmatmul.bf16.gmra.mxu0 %v7889
        %v8715 = vpop.f32.mrf.mxu0
        %v8716 = vadd.f32 %v8627, %v8715
        %v8717 = vpop.f32.mrf.mxu0
        %v8718 = vadd.f32 %v8629, %v8717
        %8719 = vmatmul.bf16.gmra.mxu0 %v7897
        %v8720 = vpop.f32.mrf.mxu0
        %v8721 = vadd.f32 %v8632, %v8720
        %v8722 = vpop.f32.mrf.mxu0
        %v8723 = vadd.f32 %v8634, %v8722
        %8724 = vmatmul.bf16.gmra.mxu0 %v7905
        %v8725 = vpop.f32.mrf.mxu0
        %v8726 = vadd.f32 %v8637, %v8725
        %v8727 = vpop.f32.mrf.mxu0
        %v8728 = vadd.f32 %v8639, %v8727
        %8729 = vmatmul.bf16.gmra.mxu0 %v7913
        %v8730 = vpop.f32.mrf.mxu0
        %v8731 = vadd.f32 %v8642, %v8730
        %v8732 = vpop.f32.mrf.mxu0
        %v8733 = vadd.f32 %v8644, %v8732
        %8734 = vmatmul.bf16.gmra.mxu0 %v7921
        %v8735 = vpop.f32.mrf.mxu0
        %v8736 = vadd.f32 %v8647, %v8735
        %v8737 = vpop.f32.mrf.mxu0
        %v8738 = vadd.f32 %v8649, %v8737
        %8739 = vmatmul.bf16.gmra.mxu0 %v7929
        %v8740 = vpop.f32.mrf.mxu0
        %v8741 = vadd.f32 %v8652, %v8740
        %v8742 = vpop.f32.mrf.mxu0
        %v8743 = vadd.f32 %v8654, %v8742
        %8744 = vmatmul.bf16.gmra.mxu0 %v7937
        %v8745 = vpop.f32.mrf.mxu0
        %v8746 = vadd.f32 %v8657, %v8745
        %v8747 = vpop.f32.mrf.mxu0
        %v8748 = vadd.f32 %v8659, %v8747
        %8749 = vmatmul.bf16.gmra.mxu0 %v7945
        %v8750 = vpop.f32.mrf.mxu0
        %v8751 = vadd.f32 %v8662, %v8750
        %v8752 = vpop.f32.mrf.mxu0
        %v8753 = vadd.f32 %v8664, %v8752
        %8754 = vmatmul.bf16.gmra.mxu0 %v7953
        %v8755 = vpop.f32.mrf.mxu0
        %v8756 = vadd.f32 %v8667, %v8755
        %v8757 = vpop.f32.mrf.mxu0
        %v8758 = vadd.f32 %v8669, %v8757
        %8759 = vmatmul.bf16.gmra.mxu0 %v7961
        %v8760 = vpop.f32.mrf.mxu0
        %v8761 = vadd.f32 %v8672, %v8760
        %v8762 = vpop.f32.mrf.mxu0
        %v8763 = vadd.f32 %v8674, %v8762
        %8764 = vmatmul.bf16.gmra.mxu0 %v7969
        %v8765 = vpop.f32.mrf.mxu0
        %v8766 = vadd.f32 %v8677, %v8765
        %v8767 = vpop.f32.mrf.mxu0
        %v8768 = vadd.f32 %v8679, %v8767
        %8769 = vmatmul.bf16.gmra.mxu0 %v7977
        %v8770 = vpop.f32.mrf.mxu0
        %v8771 = vadd.f32 %v8682, %v8770
        %v8772 = vpop.f32.mrf.mxu0
        %v8773 = vadd.f32 %v8684, %v8772
        %8774 = vmatmul.bf16.gmra.mxu0 %v7985
        %v8775 = vpop.f32.mrf.mxu0
        %v8776 = vadd.f32 %v8687, %v8775
        %v8777 = vpop.f32.mrf.mxu0
        %v8778 = vadd.f32 %v8689, %v8777
        %8779 = vmatmul.bf16.gmra.mxu0 %v7993
        %v8780 = vpop.f32.mrf.mxu0
        %v8781 = vadd.f32 %v8692, %v8780
        %v8782 = vpop.f32.mrf.mxu0
        %v8783 = vadd.f32 %v8694, %v8782
        %8784 = vmatmul.bf16.gmra.mxu0 %v8001
        %v8785 = vpop.f32.mrf.mxu0
        %v8786 = vadd.f32 %v8697, %v8785
        %v8787 = vpop.f32.mrf.mxu0
        %v8788 = vadd.f32 %v8699, %v8787
        %8789 = vdwg.mxu0
        %8790 = vmatpush.bf16.msra.mxu0 %v8426
        %8791 = vmatpush.bf16.msra.mxu0 %v8425
        %8792 = vmatpush.bf16.msra.mxu0 %v8424
        %8793 = vmatpush.bf16.msra.mxu0 %v8423
        %8794 = vmatpush.bf16.msra.mxu0 %v8422
        %8795 = vmatpush.bf16.msra.mxu0 %v8421
        %8796 = vmatpush.bf16.msra.mxu0 %v8420
        %8797 = vmatpush.bf16.msra.mxu0 %v8419
        %8798 = vmatmul.bf16.gmra.mxu0 %v7882
        %v8799 = vpop.f32.mrf.mxu0
        %v8800 = vadd.f32 %v8711, %v8799
        %v8801 = vpop.f32.mrf.mxu0
        %v8802 = vadd.f32 %v8713, %v8801
        %8803 = vmatmul.bf16.gmra.mxu0 %v7890
        %v8804 = vpop.f32.mrf.mxu0
        %v8805 = vadd.f32 %v8716, %v8804
        %v8806 = vpop.f32.mrf.mxu0
        %v8807 = vadd.f32 %v8718, %v8806
        %8808 = vmatmul.bf16.gmra.mxu0 %v7898
        %v8809 = vpop.f32.mrf.mxu0
        %v8810 = vadd.f32 %v8721, %v8809
        %v8811 = vpop.f32.mrf.mxu0
        %v8812 = vadd.f32 %v8723, %v8811
        %8813 = vmatmul.bf16.gmra.mxu0 %v7906
        %v8814 = vpop.f32.mrf.mxu0
        %v8815 = vadd.f32 %v8726, %v8814
        %v8816 = vpop.f32.mrf.mxu0
        %v8817 = vadd.f32 %v8728, %v8816
        %8818 = vmatmul.bf16.gmra.mxu0 %v7914
        %v8819 = vpop.f32.mrf.mxu0
        %v8820 = vadd.f32 %v8731, %v8819
        %v8821 = vpop.f32.mrf.mxu0
        %v8822 = vadd.f32 %v8733, %v8821
        %8823 = vmatmul.bf16.gmra.mxu0 %v7922
        %v8824 = vpop.f32.mrf.mxu0
        %v8825 = vadd.f32 %v8736, %v8824
        %v8826 = vpop.f32.mrf.mxu0
        %v8827 = vadd.f32 %v8738, %v8826
        %8828 = vmatmul.bf16.gmra.mxu0 %v7930
        %v8829 = vpop.f32.mrf.mxu0
        %v8830 = vadd.f32 %v8741, %v8829
        %v8831 = vpop.f32.mrf.mxu0
        %v8832 = vadd.f32 %v8743, %v8831
        %8833 = vmatmul.bf16.gmra.mxu0 %v7938
        %v8834 = vpop.f32.mrf.mxu0
        %v8835 = vadd.f32 %v8746, %v8834
        %v8836 = vpop.f32.mrf.mxu0
        %v8837 = vadd.f32 %v8748, %v8836
        %8838 = vmatmul.bf16.gmra.mxu0 %v7946
        %v8839 = vpop.f32.mrf.mxu0
        %v8840 = vadd.f32 %v8751, %v8839
        %v8841 = vpop.f32.mrf.mxu0
        %v8842 = vadd.f32 %v8753, %v8841
        %8843 = vmatmul.bf16.gmra.mxu0 %v7954
        %v8844 = vpop.f32.mrf.mxu0
        %v8845 = vadd.f32 %v8756, %v8844
        %v8846 = vpop.f32.mrf.mxu0
        %v8847 = vadd.f32 %v8758, %v8846
        %8848 = vmatmul.bf16.gmra.mxu0 %v7962
        %v8849 = vpop.f32.mrf.mxu0
        %v8850 = vadd.f32 %v8761, %v8849
        %v8851 = vpop.f32.mrf.mxu0
        %v8852 = vadd.f32 %v8763, %v8851
        %8853 = vmatmul.bf16.gmra.mxu0 %v7970
        %v8854 = vpop.f32.mrf.mxu0
        %v8855 = vadd.f32 %v8766, %v8854
        %v8856 = vpop.f32.mrf.mxu0
        %v8857 = vadd.f32 %v8768, %v8856
        %8858 = vmatmul.bf16.gmra.mxu0 %v7978
        %v8859 = vpop.f32.mrf.mxu0
        %v8860 = vadd.f32 %v8771, %v8859
        %v8861 = vpop.f32.mrf.mxu0
        %v8862 = vadd.f32 %v8773, %v8861
        %8863 = vmatmul.bf16.gmra.mxu0 %v7986
        %v8864 = vpop.f32.mrf.mxu0
        %v8865 = vadd.f32 %v8776, %v8864
        %v8866 = vpop.f32.mrf.mxu0
        %v8867 = vadd.f32 %v8778, %v8866
        %8868 = vmatmul.bf16.gmra.mxu0 %v7994
        %v8869 = vpop.f32.mrf.mxu0
        %v8870 = vadd.f32 %v8781, %v8869
        %v8871 = vpop.f32.mrf.mxu0
        %v8872 = vadd.f32 %v8783, %v8871
        %8873 = vmatmul.bf16.gmra.mxu0 %v8002
        %v8874 = vpop.f32.mrf.mxu0
        %v8875 = vadd.f32 %v8786, %v8874
        %v8876 = vpop.f32.mrf.mxu0
        %v8877 = vadd.f32 %v8788, %v8876
        %8878 = vdwg.mxu0
        %8879 = vmatpush.bf16.msra.mxu0 %v8434
        %8880 = vmatpush.bf16.msra.mxu0 %v8433
        %8881 = vmatpush.bf16.msra.mxu0 %v8432
        %8882 = vmatpush.bf16.msra.mxu0 %v8431
        %8883 = vmatpush.bf16.msra.mxu0 %v8430
        %8884 = vmatpush.bf16.msra.mxu0 %v8429
        %8885 = vmatpush.bf16.msra.mxu0 %v8428
        %8886 = vmatpush.bf16.msra.mxu0 %v8427
        %8887 = vmatmul.bf16.gmra.mxu0 %v7883
        %v8888 = vpop.f32.mrf.mxu0
        %v8889 = vadd.f32 %v8800, %v8888
        %v8890 = vpop.f32.mrf.mxu0
        %v8891 = vadd.f32 %v8802, %v8890
        %8892 = vmatmul.bf16.gmra.mxu0 %v7891
        %v8893 = vpop.f32.mrf.mxu0
        %v8894 = vadd.f32 %v8805, %v8893
        %v8895 = vpop.f32.mrf.mxu0
        %v8896 = vadd.f32 %v8807, %v8895
        %8897 = vmatmul.bf16.gmra.mxu0 %v7899
        %v8898 = vpop.f32.mrf.mxu0
        %v8899 = vadd.f32 %v8810, %v8898
        %v8900 = vpop.f32.mrf.mxu0
        %v8901 = vadd.f32 %v8812, %v8900
        %8902 = vmatmul.bf16.gmra.mxu0 %v7907
        %v8903 = vpop.f32.mrf.mxu0
        %v8904 = vadd.f32 %v8815, %v8903
        %v8905 = vpop.f32.mrf.mxu0
        %v8906 = vadd.f32 %v8817, %v8905
        %8907 = vmatmul.bf16.gmra.mxu0 %v7915
        %v8908 = vpop.f32.mrf.mxu0
        %v8909 = vadd.f32 %v8820, %v8908
        %v8910 = vpop.f32.mrf.mxu0
        %v8911 = vadd.f32 %v8822, %v8910
        %8912 = vmatmul.bf16.gmra.mxu0 %v7923
        %v8913 = vpop.f32.mrf.mxu0
        %v8914 = vadd.f32 %v8825, %v8913
        %v8915 = vpop.f32.mrf.mxu0
        %v8916 = vadd.f32 %v8827, %v8915
        %8917 = vmatmul.bf16.gmra.mxu0 %v7931
        %v8918 = vpop.f32.mrf.mxu0
        %v8919 = vadd.f32 %v8830, %v8918
        %v8920 = vpop.f32.mrf.mxu0
        %v8921 = vadd.f32 %v8832, %v8920
        %8922 = vmatmul.bf16.gmra.mxu0 %v7939
        %v8923 = vpop.f32.mrf.mxu0
        %v8924 = vadd.f32 %v8835, %v8923
        %v8925 = vpop.f32.mrf.mxu0
        %v8926 = vadd.f32 %v8837, %v8925
        %8927 = vmatmul.bf16.gmra.mxu0 %v7947
        %v8928 = vpop.f32.mrf.mxu0
        %v8929 = vadd.f32 %v8840, %v8928
        %v8930 = vpop.f32.mrf.mxu0
        %v8931 = vadd.f32 %v8842, %v8930
        %8932 = vmatmul.bf16.gmra.mxu0 %v7955
        %v8933 = vpop.f32.mrf.mxu0
        %v8934 = vadd.f32 %v8845, %v8933
        %v8935 = vpop.f32.mrf.mxu0
        %v8936 = vadd.f32 %v8847, %v8935
        %8937 = vmatmul.bf16.gmra.mxu0 %v7963
        %v8938 = vpop.f32.mrf.mxu0
        %v8939 = vadd.f32 %v8850, %v8938
        %v8940 = vpop.f32.mrf.mxu0
        %v8941 = vadd.f32 %v8852, %v8940
        %8942 = vmatmul.bf16.gmra.mxu0 %v7971
        %v8943 = vpop.f32.mrf.mxu0
        %v8944 = vadd.f32 %v8855, %v8943
        %v8945 = vpop.f32.mrf.mxu0
        %v8946 = vadd.f32 %v8857, %v8945
        %8947 = vmatmul.bf16.gmra.mxu0 %v7979
        %v8948 = vpop.f32.mrf.mxu0
        %v8949 = vadd.f32 %v8860, %v8948
        %v8950 = vpop.f32.mrf.mxu0
        %v8951 = vadd.f32 %v8862, %v8950
        %8952 = vmatmul.bf16.gmra.mxu0 %v7987
        %v8953 = vpop.f32.mrf.mxu0
        %v8954 = vadd.f32 %v8865, %v8953
        %v8955 = vpop.f32.mrf.mxu0
        %v8956 = vadd.f32 %v8867, %v8955
        %8957 = vmatmul.bf16.gmra.mxu0 %v7995
        %v8958 = vpop.f32.mrf.mxu0
        %v8959 = vadd.f32 %v8870, %v8958
        %v8960 = vpop.f32.mrf.mxu0
        %v8961 = vadd.f32 %v8872, %v8960
        %8962 = vmatmul.bf16.gmra.mxu0 %v8003
        %v8963 = vpop.f32.mrf.mxu0
        %v8964 = vadd.f32 %v8875, %v8963
        %v8965 = vpop.f32.mrf.mxu0
        %v8966 = vadd.f32 %v8877, %v8965
        %8967 = vdwg.mxu0
        %8968 = vmatpush.bf16.msra.mxu0 %v8442
        %8969 = vmatpush.bf16.msra.mxu0 %v8441
        %8970 = vmatpush.bf16.msra.mxu0 %v8440
        %8971 = vmatpush.bf16.msra.mxu0 %v8439
        %8972 = vmatpush.bf16.msra.mxu0 %v8438
        %8973 = vmatpush.bf16.msra.mxu0 %v8437
        %8974 = vmatpush.bf16.msra.mxu0 %v8436
        %8975 = vmatpush.bf16.msra.mxu0 %v8435
        %8976 = vmatmul.bf16.gmra.mxu0 %v7884
        %v8977 = vpop.f32.mrf.mxu0
        %v8978 = vadd.f32 %v8889, %v8977
        %v8979 = vpop.f32.mrf.mxu0
        %v8980 = vadd.f32 %v8891, %v8979
        %8981 = vmatmul.bf16.gmra.mxu0 %v7892
        %v8982 = vpop.f32.mrf.mxu0
        %v8983 = vadd.f32 %v8894, %v8982
        %v8984 = vpop.f32.mrf.mxu0
        %v8985 = vadd.f32 %v8896, %v8984
        %8986 = vmatmul.bf16.gmra.mxu0 %v7900
        %v8987 = vpop.f32.mrf.mxu0
        %v8988 = vadd.f32 %v8899, %v8987
        %v8989 = vpop.f32.mrf.mxu0
        %v8990 = vadd.f32 %v8901, %v8989
        %8991 = vmatmul.bf16.gmra.mxu0 %v7908
        %v8992 = vpop.f32.mrf.mxu0
        %v8993 = vadd.f32 %v8904, %v8992
        %v8994 = vpop.f32.mrf.mxu0
        %v8995 = vadd.f32 %v8906, %v8994
        %8996 = vmatmul.bf16.gmra.mxu0 %v7916
        %v8997 = vpop.f32.mrf.mxu0
        %v8998 = vadd.f32 %v8909, %v8997
        %v8999 = vpop.f32.mrf.mxu0
        %v9000 = vadd.f32 %v8911, %v8999
        %9001 = vmatmul.bf16.gmra.mxu0 %v7924
        %v9002 = vpop.f32.mrf.mxu0
        %v9003 = vadd.f32 %v8914, %v9002
        %v9004 = vpop.f32.mrf.mxu0
        %v9005 = vadd.f32 %v8916, %v9004
        %9006 = vmatmul.bf16.gmra.mxu0 %v7932
        %v9007 = vpop.f32.mrf.mxu0
        %v9008 = vadd.f32 %v8919, %v9007
        %v9009 = vpop.f32.mrf.mxu0
        %v9010 = vadd.f32 %v8921, %v9009
        %9011 = vmatmul.bf16.gmra.mxu0 %v7940
        %v9012 = vpop.f32.mrf.mxu0
        %v9013 = vadd.f32 %v8924, %v9012
        %v9014 = vpop.f32.mrf.mxu0
        %v9015 = vadd.f32 %v8926, %v9014
        %9016 = vmatmul.bf16.gmra.mxu0 %v7948
        %v9017 = vpop.f32.mrf.mxu0
        %v9018 = vadd.f32 %v8929, %v9017
        %v9019 = vpop.f32.mrf.mxu0
        %v9020 = vadd.f32 %v8931, %v9019
        %9021 = vmatmul.bf16.gmra.mxu0 %v7956
        %v9022 = vpop.f32.mrf.mxu0
        %v9023 = vadd.f32 %v8934, %v9022
        %v9024 = vpop.f32.mrf.mxu0
        %v9025 = vadd.f32 %v8936, %v9024
        %9026 = vmatmul.bf16.gmra.mxu0 %v7964
        %v9027 = vpop.f32.mrf.mxu0
        %v9028 = vadd.f32 %v8939, %v9027
        %v9029 = vpop.f32.mrf.mxu0
        %v9030 = vadd.f32 %v8941, %v9029
        %9031 = vmatmul.bf16.gmra.mxu0 %v7972
        %v9032 = vpop.f32.mrf.mxu0
        %v9033 = vadd.f32 %v8944, %v9032
        %v9034 = vpop.f32.mrf.mxu0
        %v9035 = vadd.f32 %v8946, %v9034
        %9036 = vmatmul.bf16.gmra.mxu0 %v7980
        %v9037 = vpop.f32.mrf.mxu0
        %v9038 = vadd.f32 %v8949, %v9037
        %v9039 = vpop.f32.mrf.mxu0
        %v9040 = vadd.f32 %v8951, %v9039
        %9041 = vmatmul.bf16.gmra.mxu0 %v7988
        %v9042 = vpop.f32.mrf.mxu0
        %v9043 = vadd.f32 %v8954, %v9042
        %v9044 = vpop.f32.mrf.mxu0
        %v9045 = vadd.f32 %v8956, %v9044
        %9046 = vmatmul.bf16.gmra.mxu0 %v7996
        %v9047 = vpop.f32.mrf.mxu0
        %v9048 = vadd.f32 %v8959, %v9047
        %v9049 = vpop.f32.mrf.mxu0
        %v9050 = vadd.f32 %v8961, %v9049
        %9051 = vmatmul.bf16.gmra.mxu0 %v8004
        %v9052 = vpop.f32.mrf.mxu0
        %v9053 = vadd.f32 %v8964, %v9052
        %v9054 = vpop.f32.mrf.mxu0
        %v9055 = vadd.f32 %v8966, %v9054
        %9056 = vdwg.mxu0
        %9057 = vmatpush.bf16.msra.mxu0 %v8450
        %9058 = vmatpush.bf16.msra.mxu0 %v8449
        %9059 = vmatpush.bf16.msra.mxu0 %v8448
        %9060 = vmatpush.bf16.msra.mxu0 %v8447
        %9061 = vmatpush.bf16.msra.mxu0 %v8446
        %9062 = vmatpush.bf16.msra.mxu0 %v8445
        %9063 = vmatpush.bf16.msra.mxu0 %v8444
        %9064 = vmatpush.bf16.msra.mxu0 %v8443
        %9065 = vmatmul.bf16.gmra.mxu0 %v7885
        %v9066 = vpop.f32.mrf.mxu0
        %v9067 = vadd.f32 %v8978, %v9066
        %v9068 = vpop.f32.mrf.mxu0
        %v9069 = vadd.f32 %v8980, %v9068
        %9070 = vmatmul.bf16.gmra.mxu0 %v7893
        %v9071 = vpop.f32.mrf.mxu0
        %v9072 = vadd.f32 %v8983, %v9071
        %v9073 = vpop.f32.mrf.mxu0
        %v9074 = vadd.f32 %v8985, %v9073
        %9075 = vmatmul.bf16.gmra.mxu0 %v7901
        %v9076 = vpop.f32.mrf.mxu0
        %v9077 = vadd.f32 %v8988, %v9076
        %v9078 = vpop.f32.mrf.mxu0
        %v9079 = vadd.f32 %v8990, %v9078
        %9080 = vmatmul.bf16.gmra.mxu0 %v7909
        %v9081 = vpop.f32.mrf.mxu0
        %v9082 = vadd.f32 %v8993, %v9081
        %v9083 = vpop.f32.mrf.mxu0
        %v9084 = vadd.f32 %v8995, %v9083
        %9085 = vmatmul.bf16.gmra.mxu0 %v7917
        %v9086 = vpop.f32.mrf.mxu0
        %v9087 = vadd.f32 %v8998, %v9086
        %v9088 = vpop.f32.mrf.mxu0
        %v9089 = vadd.f32 %v9000, %v9088
        %9090 = vmatmul.bf16.gmra.mxu0 %v7925
        %v9091 = vpop.f32.mrf.mxu0
        %v9092 = vadd.f32 %v9003, %v9091
        %v9093 = vpop.f32.mrf.mxu0
        %v9094 = vadd.f32 %v9005, %v9093
        %9095 = vmatmul.bf16.gmra.mxu0 %v7933
        %v9096 = vpop.f32.mrf.mxu0
        %v9097 = vadd.f32 %v9008, %v9096
        %v9098 = vpop.f32.mrf.mxu0
        %v9099 = vadd.f32 %v9010, %v9098
        %9100 = vmatmul.bf16.gmra.mxu0 %v7941
        %v9101 = vpop.f32.mrf.mxu0
        %v9102 = vadd.f32 %v9013, %v9101
        %v9103 = vpop.f32.mrf.mxu0
        %v9104 = vadd.f32 %v9015, %v9103
        %9105 = vmatmul.bf16.gmra.mxu0 %v7949
        %v9106 = vpop.f32.mrf.mxu0
        %v9107 = vadd.f32 %v9018, %v9106
        %v9108 = vpop.f32.mrf.mxu0
        %v9109 = vadd.f32 %v9020, %v9108
        %9110 = vmatmul.bf16.gmra.mxu0 %v7957
        %v9111 = vpop.f32.mrf.mxu0
        %v9112 = vadd.f32 %v9023, %v9111
        %v9113 = vpop.f32.mrf.mxu0
        %v9114 = vadd.f32 %v9025, %v9113
        %9115 = vmatmul.bf16.gmra.mxu0 %v7965
        %v9116 = vpop.f32.mrf.mxu0
        %v9117 = vadd.f32 %v9028, %v9116
        %v9118 = vpop.f32.mrf.mxu0
        %v9119 = vadd.f32 %v9030, %v9118
        %9120 = vmatmul.bf16.gmra.mxu0 %v7973
        %v9121 = vpop.f32.mrf.mxu0
        %v9122 = vadd.f32 %v9033, %v9121
        %v9123 = vpop.f32.mrf.mxu0
        %v9124 = vadd.f32 %v9035, %v9123
        %9125 = vmatmul.bf16.gmra.mxu0 %v7981
        %v9126 = vpop.f32.mrf.mxu0
        %v9127 = vadd.f32 %v9038, %v9126
        %v9128 = vpop.f32.mrf.mxu0
        %v9129 = vadd.f32 %v9040, %v9128
        %9130 = vmatmul.bf16.gmra.mxu0 %v7989
        %v9131 = vpop.f32.mrf.mxu0
        %v9132 = vadd.f32 %v9043, %v9131
        %v9133 = vpop.f32.mrf.mxu0
        %v9134 = vadd.f32 %v9045, %v9133
        %9135 = vmatmul.bf16.gmra.mxu0 %v7997
        %v9136 = vpop.f32.mrf.mxu0
        %v9137 = vadd.f32 %v9048, %v9136
        %v9138 = vpop.f32.mrf.mxu0
        %v9139 = vadd.f32 %v9050, %v9138
        %9140 = vmatmul.bf16.gmra.mxu0 %v8005
        %v9141 = vpop.f32.mrf.mxu0
        %v9142 = vadd.f32 %v9053, %v9141
        %v9143 = vpop.f32.mrf.mxu0
        %v9144 = vadd.f32 %v9055, %v9143
        %9145 = vdwg.mxu0
        %9146 = vmatpush.bf16.msra.mxu0 %v8458
        %9147 = vmatpush.bf16.msra.mxu0 %v8457
        %9148 = vmatpush.bf16.msra.mxu0 %v8456
        %9149 = vmatpush.bf16.msra.mxu0 %v8455
        %9150 = vmatpush.bf16.msra.mxu0 %v8454
        %9151 = vmatpush.bf16.msra.mxu0 %v8453
        %9152 = vmatpush.bf16.msra.mxu0 %v8452
        %9153 = vmatpush.bf16.msra.mxu0 %v8451
        %9154 = vmatmul.bf16.gmra.mxu0 %v7886
        %v9155 = vpop.f32.mrf.mxu0
        %v9156 = vadd.f32 %v9067, %v9155
        %v9157 = vpop.f32.mrf.mxu0
        %v9158 = vadd.f32 %v9069, %v9157
        %9159 = vmatmul.bf16.gmra.mxu0 %v7894
        %v9160 = vpop.f32.mrf.mxu0
        %v9161 = vadd.f32 %v9072, %v9160
        %v9162 = vpop.f32.mrf.mxu0
        %v9163 = vadd.f32 %v9074, %v9162
        %9164 = vmatmul.bf16.gmra.mxu0 %v7902
        %v9165 = vpop.f32.mrf.mxu0
        %v9166 = vadd.f32 %v9077, %v9165
        %v9167 = vpop.f32.mrf.mxu0
        %v9168 = vadd.f32 %v9079, %v9167
        %9169 = vmatmul.bf16.gmra.mxu0 %v7910
        %v9170 = vpop.f32.mrf.mxu0
        %v9171 = vadd.f32 %v9082, %v9170
        %v9172 = vpop.f32.mrf.mxu0
        %v9173 = vadd.f32 %v9084, %v9172
        %9174 = vmatmul.bf16.gmra.mxu0 %v7918
        %v9175 = vpop.f32.mrf.mxu0
        %v9176 = vadd.f32 %v9087, %v9175
        %v9177 = vpop.f32.mrf.mxu0
        %v9178 = vadd.f32 %v9089, %v9177
        %9179 = vmatmul.bf16.gmra.mxu0 %v7926
        %v9180 = vpop.f32.mrf.mxu0
        %v9181 = vadd.f32 %v9092, %v9180
        %v9182 = vpop.f32.mrf.mxu0
        %v9183 = vadd.f32 %v9094, %v9182
        %9184 = vmatmul.bf16.gmra.mxu0 %v7934
        %v9185 = vpop.f32.mrf.mxu0
        %v9186 = vadd.f32 %v9097, %v9185
        %v9187 = vpop.f32.mrf.mxu0
        %v9188 = vadd.f32 %v9099, %v9187
        %9189 = vmatmul.bf16.gmra.mxu0 %v7942
        %v9190 = vpop.f32.mrf.mxu0
        %v9191 = vadd.f32 %v9102, %v9190
        %v9192 = vpop.f32.mrf.mxu0
        %v9193 = vadd.f32 %v9104, %v9192
        %9194 = vmatmul.bf16.gmra.mxu0 %v7950
        %v9195 = vpop.f32.mrf.mxu0
        %v9196 = vadd.f32 %v9107, %v9195
        %v9197 = vpop.f32.mrf.mxu0
        %v9198 = vadd.f32 %v9109, %v9197
        %9199 = vmatmul.bf16.gmra.mxu0 %v7958
        %v9200 = vpop.f32.mrf.mxu0
        %v9201 = vadd.f32 %v9112, %v9200
        %v9202 = vpop.f32.mrf.mxu0
        %v9203 = vadd.f32 %v9114, %v9202
        %9204 = vmatmul.bf16.gmra.mxu0 %v7966
        %v9205 = vpop.f32.mrf.mxu0
        %v9206 = vadd.f32 %v9117, %v9205
        %v9207 = vpop.f32.mrf.mxu0
        %v9208 = vadd.f32 %v9119, %v9207
        %9209 = vmatmul.bf16.gmra.mxu0 %v7974
        %v9210 = vpop.f32.mrf.mxu0
        %v9211 = vadd.f32 %v9122, %v9210
        %v9212 = vpop.f32.mrf.mxu0
        %v9213 = vadd.f32 %v9124, %v9212
        %9214 = vmatmul.bf16.gmra.mxu0 %v7982
        %v9215 = vpop.f32.mrf.mxu0
        %v9216 = vadd.f32 %v9127, %v9215
        %v9217 = vpop.f32.mrf.mxu0
        %v9218 = vadd.f32 %v9129, %v9217
        %9219 = vmatmul.bf16.gmra.mxu0 %v7990
        %v9220 = vpop.f32.mrf.mxu0
        %v9221 = vadd.f32 %v9132, %v9220
        %v9222 = vpop.f32.mrf.mxu0
        %v9223 = vadd.f32 %v9134, %v9222
        %9224 = vmatmul.bf16.gmra.mxu0 %v7998
        %v9225 = vpop.f32.mrf.mxu0
        %v9226 = vadd.f32 %v9137, %v9225
        %v9227 = vpop.f32.mrf.mxu0
        %v9228 = vadd.f32 %v9139, %v9227
        %9229 = vmatmul.bf16.gmra.mxu0 %v8006
        %v9230 = vpop.f32.mrf.mxu0
        %v9231 = vadd.f32 %v9142, %v9230
        %v9232 = vpop.f32.mrf.mxu0
        %v9233 = vadd.f32 %v9144, %v9232
        %9234 = vdwg.mxu0
        %9235 = vst [vmem:[%s376] sm:$0xff] %v9156
        %9236 = vst [vmem:[%s376 + $0x8] sm:$0xff] %v9158
        %9237 = vst [vmem:[%s376 + $0x10] sm:$0xff] %v9161
        %9238 = vst [vmem:[%s376 + $0x18] sm:$0xff] %v9163
        %9239 = vst [vmem:[%s376 + $0x20] sm:$0xff] %v9166
        %9240 = vst [vmem:[%s376 + $0x28] sm:$0xff] %v9168
        %9241 = vst [vmem:[%s376 + $0x30] sm:$0xff] %v9171
        %9242 = vst [vmem:[%s376 + $0x38] sm:$0xff] %v9173
        %9243 = vst [vmem:[%s376 + $0x40] sm:$0xff] %v9176
        %9244 = vst [vmem:[%s376 + $0x48] sm:$0xff] %v9178
        %9245 = vst [vmem:[%s376 + $0x50] sm:$0xff] %v9181
        %9246 = vst [vmem:[%s376 + $0x58] sm:$0xff] %v9183
        %9247 = vst [vmem:[%s376 + $0x60] sm:$0xff] %v9186
        %9248 = vst [vmem:[%s376 + $0x68] sm:$0xff] %v9188
        %9249 = vst [vmem:[%s376 + $0x70] sm:$0xff] %v9191
        %9250 = vst [vmem:[%s376 + $0x78] sm:$0xff] %v9193
        %9251 = vst [vmem:[%s376 + $0x80] sm:$0xff] %v9196
        %9252 = vst [vmem:[%s376 + $0x88] sm:$0xff] %v9198
        %9253 = vst [vmem:[%s376 + $0x90] sm:$0xff] %v9201
        %9254 = vst [vmem:[%s376 + $0x98] sm:$0xff] %v9203
        %9255 = vst [vmem:[%s376 + $0xa0] sm:$0xff] %v9206
        %9256 = vst [vmem:[%s376 + $0xa8] sm:$0xff] %v9208
        %9257 = vst [vmem:[%s376 + $0xb0] sm:$0xff] %v9211
        %9258 = vst [vmem:[%s376 + $0xb8] sm:$0xff] %v9213
        %9259 = vst [vmem:[%s376 + $0xc0] sm:$0xff] %v9216
        %9260 = vst [vmem:[%s376 + $0xc8] sm:$0xff] %v9218
        %9261 = vst [vmem:[%s376 + $0xd0] sm:$0xff] %v9221
        %9262 = vst [vmem:[%s376 + $0xd8] sm:$0xff] %v9223
        %9263 = vst [vmem:[%s376 + $0xe0] sm:$0xff] %v9226
        %9264 = vst [vmem:[%s376 + $0xe8] sm:$0xff] %v9228
        %9265 = vst [vmem:[%s376 + $0xf0] sm:$0xff] %v9231
        %9266 = vst [vmem:[%s376 + $0xf8] sm:$0xff] %v9233
        %s9267 = sand.u32 %s227, 1
        %s9268 = scalar_lea.sflag [#allocation4], %s9267
        %s9269 = sand.u32 %s227, 1
        %s9270 = smul.addr %s9269, 256
        %s9271 = scalar_lea.vmem [#allocation8], %s9270
        // Predicated region
        $region69: #{tpu_custom_call.1} parent=55 // pred_check
          %p9272 = pneg %p237
        $region70: #{tpu_custom_call.1} parent=55 // pred_check_branch
          %9274 = sbr.rel (%p9272) target = $region72
        $region71: #{tpu_custom_call.1} parent=55 // pred_region
          %s9275 = smul.u32 32, %s25
          %9277 = vsyncadd %s9268, 0
          %s9278 = smul.addr %s9275, 8
          %s9279 = scalar_lea.hbm %s9, %s9278
          %s9280 = sshll.u32 %s9271, 4
          %s9281 = int_to_ptr.vmem [resolvable:$true] %s9280
          %s9282 = sshll.u32 %s9279, 4
          %s9283 = int_to_ptr.hbm [resolvable:$true] %s9282
          %9288 = dma.vmem_to_hbm [thread:$0]  %s9281, 4096, %s9283, %s9268, 128, 128, 8
        $region72: #{tpu_custom_call.1} parent=55 // pred_fallthru
          _
      $region56: #{tpu_custom_call.1} parent=5 // pred_fallthru
        _
      %p9289 = scmp.le.s32.totalorder 2, %s20
      // Predicated region
      $region73: #{tpu_custom_call.1} parent=5 // pred_check
        %p9290 = pneg %p9289
      $region74: #{tpu_custom_call.1} parent=5 // pred_check_branch
        %9292 = sbr.rel (%p9290) target = $region76
      $region75: #{tpu_custom_call.1} parent=5 // pred_region
        %s9293 = ssub.s32 %s20, 2
        // Predicated region
        $region77: #{tpu_custom_call.1} parent=75 // pred_check
          %p9294 = pneg %p243
        $region78: #{tpu_custom_call.1} parent=75 // pred_check_branch
          %9296 = sbr.rel (%p9294) target = $region80
        $region79: #{tpu_custom_call.1} parent=75 // pred_region
          %s9297 = sand.u32 %s228, 1
          %s9298 = scalar_lea.sflag [#allocation4], %s9297
          %s9299 = sand.u32 %s228, 1
          %s9300 = smul.addr %s9299, 256
          %s9301 = scalar_lea.vmem [#allocation8], %s9300
          %9303 = dma.done %s9298, 4096
        $region80: #{tpu_custom_call.1} parent=75 // pred_fallthru
          _
      $region76: #{tpu_custom_call.1} parent=5 // pred_fallthru
        _
    $region6: #{tpu_custom_call.1} parent=1 // loop_footer
      %s24 = sadd.s32 1, %s20
    $region7: #{tpu_custom_call.1} parent=1 // loop_footer_branch
      %19 = sbr.rel target = $region3
    $region8: #{tpu_custom_call.1} parent=1 // loop_exit
      _
    %9304 = vsyncpa [#allocation3], 1
    %s9305 = scalar_lea.sflag [#allocation3], 1
    %9306 = vsyncpa %s9305, 1
    %9307 = vsyncpa [#allocation6], 1
    %9308 = vsyncpa [#allocation4], 1
    %s9309 = scalar_lea.sflag [#allocation4], 1
    %9310 = vsyncpa %s9309, 1

</llo_original>
